<compile_context>
chip_gen: v7x
topology: tpu7x:2x2x1
jax: 0.10.0
libtpu: 0.0.40
codegen_flags: <defaults>
</compile_context>

<pallas_src>
import functools
import math

import jax
import jax.numpy as jnp
from jax.experimental import pallas as pl
from jax.experimental.pallas import tpu as pltpu


def _aarelu(x, consts_ref, idx):
    """AAReLU with host-precomputed scalars [a, log(a), cutoff, 2a] in SMEM.

    Branch-merged: for x < a the result is max(x, 0); the sine branch and the
    2a plateau are layered on with two selects.
    """
    base = 4 * idx
    a = consts_ref[base + 0]
    log_a = consts_ref[base + 1]
    cutoff = consts_ref[base + 2]
    two_a = consts_ref[base + 3]
    # a*sin(log(x_safe/a)) + a, with the per-element divide folded into log-sub.
    roll_val = a * jnp.sin(jnp.log(jnp.maximum(x, a)) - log_a) + a
    y = jnp.maximum(x, 0.0)
    y = jnp.where(x >= a, roll_val, y)
    y = jnp.where(x >= cutoff, two_a, y)
    return y


def _bottleneck_kernel(consts_ref, x_ref, xh_ref, lmask_ref, rmask_ref,
                       w1_ref, w2_ref, w3_ref,
                       s1_ref, b1_ref, s2_ref, b2_ref, s3_ref, b3_ref,
                       o_ref, hext_ref, *, th, w, planes):
    s = pl.program_id(1)
    n_strips = pl.num_programs(1)
    rows = th * w
    ext_rows = (th + 2) * w

    x_main = x_ref[0]                                       # (TH*W, Cin) f32

    # --- conv1 (1x1) + bn1 + AAReLU on strip and halo separately; stitch the
    #     results at P channel width into the VMEM scratch (no Cin-wide concat).
    def conv1_bn_act(v):
        h = jnp.dot(v.astype(jnp.bfloat16), w1_ref[...],
                    preferred_element_type=jnp.float32)
        return _aarelu(h * s1_ref[...] + b1_ref[...], consts_ref, 0)

    h_halo = conv1_bn_act(xh_ref[0, 0])                     # (2W, P)
    h_main = conv1_bn_act(x_main)                           # (TH*W, P)

    hext_ref[0:w, :] = h_halo[0:w]                          # row above strip
    hext_ref[w:w + rows, :] = h_main                        # strip rows
    hext_ref[w + rows:, :] = h_halo[w:]                     # row below strip

    # conv2's zero padding at the true image boundary applies to its *input*
    # (post-act1 feature), so overwrite the fixed halo row ranges with zeros.
    @pl.when(s == 0)
    def _():
        hext_ref[0:w, :] = jnp.zeros((w, planes), jnp.float32)

    @pl.when(s == n_strips - 1)
    def _():
        hext_ref[w + rows:, :] = jnp.zeros((w, planes), jnp.float32)

    # --- conv2 (3x3, stride 1, pad 1) as 9 accumulated dots (no im2col concat).
    # dx shifts: one XLU roll of the whole extended strip + precomputed edge
    # mask (the circular wrap lands exactly on masked columns).
    # dy shifts: sublane-aligned row slices at offsets 0, W, 2W.
    h_mid = hext_ref[...]                                   # ((TH+2)*W, P)
    h_left = pltpu.roll(h_mid, 1, axis=0) * lmask_ref[...]
    h_right = pltpu.roll(h_mid, ext_rows - 1, axis=0) * rmask_ref[...]
    srcs = (h_left, h_mid, h_right)                         # dx = 0, 1, 2

    h2 = jnp.zeros((rows, planes), jnp.float32)
    for dy in range(3):
        lo = dy * w
        for dx in range(3):
            tap = srcs[dx][lo:lo + rows].astype(jnp.bfloat16)
            h2 = h2 + jnp.dot(tap, w2_ref[dy * 3 + dx],
                              preferred_element_type=jnp.float32)
    h2 = _aarelu(h2 * s2_ref[...] + b2_ref[...], consts_ref, 1)

    # --- conv3 (1x1) + bn3 + residual + AAReLU ---
    out = jnp.dot(h2.astype(jnp.bfloat16), w3_ref[...],
                  preferred_element_type=jnp.float32)
    out = out * s3_ref[...] + b3_ref[...]
    out = out + x_main
    o_ref[0] = _aarelu(out, consts_ref, 2)


def _default_strip_rows(hh, ww, cin, planes, cout, budget_bytes=6 << 20):
    """Largest strip height dividing H whose per-step working set fits ~budget."""
    def est_bytes(th):
        rows, ext = th * ww, (th + 2) * ww
        b = 2 * rows * cin * 4            # x strip (double buffered)
        b += 2 * 2 * ww * cin * 4         # halo rows (double buffered)
        b += 2 * rows * cout * 4          # out strip (double buffered)
        b += ext * planes * 4             # hext scratch
        b += 4 * ext * planes * 4         # rolled taps / conv2 temporaries
        return b
    for th in range(hh, 0, -1):
        if hh % th == 0 and est_bytes(th) <= budget_bytes:
            return th
    return 1


def bottleneck_aa_nhwc(x_nhwc, params, *, strip_rows=None):
    """Fused Bottleneck_AA forward on NHWC input; returns NHWC output."""
    x = x_nhwc.astype(jnp.float32)
    n, hh, ww, cin = x.shape
    planes = params["w1"].shape[1]
    cout = params["w3"].shape[1]
    assert cout == cin, "residual add needs inplanes == 4*planes (downsample=None)"
    assert ww % 8 == 0, "W must be a multiple of 8 for sublane-aligned row taps"
    # TODO(synk): pad W to a multiple of 8 for general shapes instead of asserting.

    th = strip_rows if strip_rows is not None else _default_strip_rows(
        hh, ww, cin, planes, cout)
    assert hh % th == 0, "strip_rows must divide H"
    n_strips = hh // th
    rows = th * ww
    ext_rows = (th + 2) * ww

    # Flattened main input and per-strip 1-row halos (row above / row below).
    x_flat = x.reshape(n, hh * ww, cin)
    x_pad = jnp.pad(x, ((0, 0), (1, 1), (0, 0), (0, 0)))
    tops = x_pad[:, 0:hh:th]                      # (N, S, W, C): row above each strip
    bots = x_pad[:, th + 1:hh + 2:th]             # (N, S, W, C): row below each strip
    x_halo = jnp.concatenate([tops, bots], axis=2)     # (N, S, 2W, C)

    # Precomputed dx edge-validity masks over the extended strip (loaded once,
    # constant index_map) -> no in-kernel iota / remainder per step.
    col = jnp.arange(ext_rows, dtype=jnp.int32) % ww
    lmask = (col != 0).astype(jnp.float32).reshape(ext_rows, 1)
    rmask = (col != ww - 1).astype(jnp.float32).reshape(ext_rows, 1)

    # bf16 weights for the MXU (f32 accumulation in-kernel).
    w1 = params["w1"].astype(jnp.bfloat16)                               # (Cin, P)
    w2 = params["w2"].reshape(9, planes, planes).astype(jnp.bfloat16)    # (9, P, P)
    w3 = params["w3"].astype(jnp.bfloat16)                               # (P, Cout)

    # Per-activation AAReLU scalars: [a, log(a), cutoff, 2a] x 3, flat, in SMEM.
    a = jnp.maximum(params["alphas"].astype(jnp.float32), 1e-6)
    consts = jnp.stack([a, jnp.log(a), a * math.exp(math.pi / 2), 2.0 * a],
                       axis=1).reshape(-1)

    def bcast(shape):
        nd = len(shape)
        return pl.BlockSpec(shape, lambda i, j, _nd=nd: (0,) * _nd)

    kernel = functools.partial(_bottleneck_kernel, th=th, w=ww, planes=planes)
    y = pl.pallas_call(
        kernel,
        out_shape=jax.ShapeDtypeStruct((n, hh * ww, cout), jnp.float32),
        grid=(n, n_strips),
        in_specs=[
            pl.BlockSpec(memory_space=pltpu.MemorySpace.SMEM),              # AAReLU consts
            pl.BlockSpec((1, rows, cin), lambda i, j: (i, j, 0)),           # x strip
            pl.BlockSpec((1, 1, 2 * ww, cin), lambda i, j: (i, j, 0, 0)),   # halo rows
            bcast(lmask.shape), bcast(rmask.shape),                         # dx edge masks
            bcast(w1.shape), bcast(w2.shape), bcast(w3.shape),
            bcast(params["s1"].shape), bcast(params["b1"].shape),
            bcast(params["s2"].shape), bcast(params["b2"].shape),
            bcast(params["s3"].shape), bcast(params["b3"].shape),
        ],
        out_specs=pl.BlockSpec((1, rows, cout), lambda i, j: (i, j, 0)),
        scratch_shapes=[pltpu.VMEM((ext_rows, planes), jnp.float32)],
        compiler_params=pltpu.CompilerParams(
            dimension_semantics=("parallel", "parallel"),
            vmem_limit_bytes=64 * 1024 * 1024),
    )(consts, x_flat, x_halo, lmask, rmask, w1, w2, w3,
      params["s1"], params["b1"], params["s2"], params["b2"],
      params["s3"], params["b3"])

    return y.reshape(n, hh, ww, cout)


def bottleneck_aa(x_nchw, params, *, strip_rows=None):
    # TODO(synk): keep the surrounding model NHWC end-to-end to avoid these two
    # full-tensor HBM transposes; they exist only to match the PyTorch NCHW API.
    x = jnp.transpose(x_nchw, (0, 2, 3, 1))
    y = bottleneck_aa_nhwc(x, params, strip_rows=strip_rows)
    return jnp.transpose(y, (0, 3, 1, 2))


def init_params(key, inplanes, planes):
    expansion = 4
    keys = jax.random.split(key, 15)

    def bn_fold(kg, kb, km, kv, c):
        gamma = 1.0 + 0.1 * jax.random.normal(kg, (c,), jnp.float32)
        beta = 0.1 * jax.random.normal(kb, (c,), jnp.float32)
        mean = 0.1 * jax.random.normal(km, (c,), jnp.float32)
        var = 1.0 + 0.1 * jax.random.uniform(kv, (c,), jnp.float32)
        scale = gamma / jnp.sqrt(var + 1e-5)
        bias = beta - mean * scale
        return scale.reshape(1, c), bias.reshape(1, c)

    w1 = 0.2 * jax.random.normal(keys[0], (inplanes, planes), jnp.float32)
    w2 = 0.2 * jax.random.normal(keys[1], (3, 3, planes, planes), jnp.float32)  # HWIO
    w3 = 0.2 * jax.random.normal(keys[2], (planes, planes * expansion), jnp.float32)

    s1, b1 = bn_fold(keys[3], keys[4], keys[5], keys[6], planes)
    s2, b2 = bn_fold(keys[7], keys[8], keys[9], keys[10], planes)
    s3, b3 = bn_fold(keys[11], keys[12], keys[13], keys[14], planes * expansion)

    alphas = jnp.array([6.0, 6.0, 6.0], dtype=jnp.float32)   # AAReLU init_alpha
    return dict(w1=w1, w2=w2, w3=w3, s1=s1, b1=b1, s2=s2, b2=b2,
                s3=s3, b3=b3, alphas=alphas)


def _aarelu_ref(x, alpha):
    a = jnp.maximum(alpha, 1e-6)
    cutoff = a * math.exp(math.pi / 2)
    y = jnp.where(x > 0, x, 0.0)
    x_safe = jnp.where(x < a, a, x)
    roll_val = a * jnp.sin(jnp.log(x_safe / a)) + a
    y = jnp.where(x >= a, roll_val, y)
    y = jnp.where(x >= cutoff, 2.0 * a, y)
    return y


def bottleneck_ref(x_nchw, params):
    """Pure-JAX reference (same folded-BN + bf16-matmul semantics) for verification."""
    x = jnp.transpose(x_nchw, (0, 2, 3, 1)).astype(jnp.float32)
    a1, a2, a3 = params["alphas"]
    h = jnp.einsum("nhwc,cp->nhwp", x.astype(jnp.bfloat16),
                   params["w1"].astype(jnp.bfloat16),
                   preferred_element_type=jnp.float32)
    h = h * params["s1"][0] + params["b1"][0]
    h = _aarelu_ref(h, a1)
    h = jax.lax.conv_general_dilated(
        h.astype(jnp.bfloat16), params["w2"].astype(jnp.bfloat16),
        window_strides=(1, 1), padding="SAME",
        dimension_numbers=("NHWC", "HWIO", "NHWC"),
        preferred_element_type=jnp.float32)
    h = h * params["s2"][0] + params["b2"][0]
    h = _aarelu_ref(h, a2)
    out = jnp.einsum("nhwp,pc->nhwc", h.astype(jnp.bfloat16),
                     params["w3"].astype(jnp.bfloat16),
                     preferred_element_type=jnp.float32)
    out = out * params["s3"][0] + params["b3"][0]
    out = out + x
    out = _aarelu_ref(out, a3)
    return jnp.transpose(out, (0, 3, 1, 2))


if __name__ == "__main__":
    key = jax.random.PRNGKey(0)
    kx, kp = jax.random.split(key)

    planes = 4
    inplanes = planes * 4        # 16: downsample=None requires inplanes == 4*planes
    N, H, W = 2, 16, 16

    x = 3.0 * jax.random.normal(kx, (N, inplanes, H, W), jnp.float32)
    params = init_params(kp, inplanes, planes)

    # strip_rows=8 -> grid (2 batches, 2 row strips) = 4 steps (exercises halos,
    # pipelining, and keeps the parallel extent even for v7x megacore).
    y = bottleneck_aa(x, params, strip_rows=8)
    y = jax.block_until_ready(y)

    y_ref = bottleneck_ref(x, params)
    assert y.shape == (N, inplanes, H, W)
    err = float(jnp.max(jnp.abs(y - y_ref)))
    if not bool(jnp.allclose(y, y_ref, atol=2e-3, rtol=2e-3)):
        raise AssertionError(f"mismatch vs reference, max err = {err}")

    print("KERNEL_OK")
</pallas_src>

<mosaic_0001>
module attributes {stable_mosaic.version = 11 : i64} {
  func.func @_bottleneck_kernel(%arg0: i32, %arg1: i32, %arg2: memref<12xf32, #tpu.memory_space<smem>>, %arg3: memref<1x128x16xf32, #tpu.memory_space<vmem>>, %arg4: memref<1x1x32x16xf32, #tpu.memory_space<vmem>>, %arg5: memref<160x1xf32, #tpu.memory_space<vmem>>, %arg6: memref<160x1xf32, #tpu.memory_space<vmem>>, %arg7: memref<16x4xbf16, #tpu.memory_space<vmem>>, %arg8: memref<9x4x4xbf16, #tpu.memory_space<vmem>>, %arg9: memref<4x16xbf16, #tpu.memory_space<vmem>>, %arg10: memref<1x4xf32, #tpu.memory_space<vmem>>, %arg11: memref<1x4xf32, #tpu.memory_space<vmem>>, %arg12: memref<1x4xf32, #tpu.memory_space<vmem>>, %arg13: memref<1x4xf32, #tpu.memory_space<vmem>>, %arg14: memref<1x16xf32, #tpu.memory_space<vmem>>, %arg15: memref<1x16xf32, #tpu.memory_space<vmem>>, %arg16: memref<1x128x16xf32, #tpu.memory_space<vmem>>, %arg17: memref<160x4xf32, #tpu.memory_space<vmem>>) attributes {dimension_semantics = [#tpu.dimension_semantics<parallel>, #tpu.dimension_semantics<parallel>], iteration_bounds = array<i64: 2, 2>, scalar_prefetch = 0 : i64, scratch_operands = 1 : i64, tpu.core_type = #tpu.core_type<tc>, window_params = [{transform_indices = @transform_0, window_bounds = array<i64: 12>}, {transform_indices = @transform_1, window_bounds = array<i64: 1, 128, 16>}, {transform_indices = @transform_2, window_bounds = array<i64: 1, 1, 32, 16>}, {pipeline_mode = #tpu.pipeline_mode<synchronous>, transform_indices = @transform_3, window_bounds = array<i64: 160, 1>}, {pipeline_mode = #tpu.pipeline_mode<synchronous>, transform_indices = @transform_4, window_bounds = array<i64: 160, 1>}, {pipeline_mode = #tpu.pipeline_mode<synchronous>, transform_indices = @transform_5, window_bounds = array<i64: 16, 4>}, {pipeline_mode = #tpu.pipeline_mode<synchronous>, transform_indices = @transform_6, window_bounds = array<i64: 9, 4, 4>}, {pipeline_mode = #tpu.pipeline_mode<synchronous>, transform_indices = @transform_7, window_bounds = array<i64: 4, 16>}, {pipeline_mode = #tpu.pipeline_mode<synchronous>, transform_indices = @transform_8, window_bounds = array<i64: 1, 4>}, {pipeline_mode = #tpu.pipeline_mode<synchronous>, transform_indices = @transform_9, window_bounds = array<i64: 1, 4>}, {pipeline_mode = #tpu.pipeline_mode<synchronous>, transform_indices = @transform_10, window_bounds = array<i64: 1, 4>}, {pipeline_mode = #tpu.pipeline_mode<synchronous>, transform_indices = @transform_11, window_bounds = array<i64: 1, 4>}, {pipeline_mode = #tpu.pipeline_mode<synchronous>, transform_indices = @transform_12, window_bounds = array<i64: 1, 16>}, {pipeline_mode = #tpu.pipeline_mode<synchronous>, transform_indices = @transform_13, window_bounds = array<i64: 1, 16>}, {transform_indices = @transform_14, window_bounds = array<i64: 1, 128, 16>}]} {
    %c0 = arith.constant 0 : index
    %c0_0 = arith.constant 0 : index
    %c0_1 = arith.constant 0 : index
    %0 = vector.load %arg3[%c0, %c0_0, %c0_1] : memref<1x128x16xf32, #tpu.memory_space<vmem>>, vector<1x128x16xf32>
    %1 = vector.shape_cast %0 : vector<1x128x16xf32> to vector<128x16xf32>
    %c0_2 = arith.constant 0 : index
    %c0_3 = arith.constant 0 : index
    %c0_4 = arith.constant 0 : index
    %c0_5 = arith.constant 0 : index
    %2 = vector.load %arg4[%c0_2, %c0_3, %c0_4, %c0_5] : memref<1x1x32x16xf32, #tpu.memory_space<vmem>>, vector<1x1x32x16xf32>
    %3 = vector.shape_cast %2 : vector<1x1x32x16xf32> to vector<32x16xf32>
    %4 = arith.truncf %3 : vector<32x16xf32> to vector<32x16xbf16>
    %c0_6 = arith.constant 0 : index
    %c0_7 = arith.constant 0 : index
    %5 = vector.load %arg7[%c0_6, %c0_7] : memref<16x4xbf16, #tpu.memory_space<vmem>>, vector<16x4xbf16>
    %cst = arith.constant dense<0.000000e+00> : vector<32x4xf32>
    %6 = tpu.matmul %4, %5, %cst {dimension_numbers = #tpu.dot_dimension_numbers<[1], [0], [0], [1], [0, 0, 1, 1], [], []>} : vector<32x16xbf16>, vector<16x4xbf16>, vector<32x4xf32> -> vector<32x4xf32>
    %c0_8 = arith.constant 0 : index
    %c0_9 = arith.constant 0 : index
    %7 = vector.load %arg10[%c0_8, %c0_9] : memref<1x4xf32, #tpu.memory_space<vmem>>, vector<1x4xf32>
    %8 = vector.broadcast %7 : vector<1x4xf32> to vector<32x4xf32>
    %9 = arith.mulf %6, %8 : vector<32x4xf32>
    %c0_10 = arith.constant 0 : index
    %c0_11 = arith.constant 0 : index
    %10 = vector.load %arg11[%c0_10, %c0_11] : memref<1x4xf32, #tpu.memory_space<vmem>>, vector<1x4xf32>
    %11 = vector.broadcast %10 : vector<1x4xf32> to vector<32x4xf32>
    %12 = arith.addf %9, %11 : vector<32x4xf32>
    %c0_12 = arith.constant 0 : index
    %13 = memref.load %arg2[%c0_12] : memref<12xf32, #tpu.memory_space<smem>>
    %c1 = arith.constant 1 : index
    %14 = memref.load %arg2[%c1] : memref<12xf32, #tpu.memory_space<smem>>
    %c2 = arith.constant 2 : index
    %15 = memref.load %arg2[%c2] : memref<12xf32, #tpu.memory_space<smem>>
    %c3 = arith.constant 3 : index
    %16 = memref.load %arg2[%c3] : memref<12xf32, #tpu.memory_space<smem>>
    %17 = vector.broadcast %13 : f32 to vector<32x4xf32>
    %18 = arith.maximumf %12, %17 : vector<32x4xf32>
    %19 = math.log %18 : vector<32x4xf32>
    %20 = vector.broadcast %14 : f32 to vector<32x4xf32>
    %21 = arith.subf %19, %20 : vector<32x4xf32>
    %22 = math.sin %21 : vector<32x4xf32>
    %23 = vector.broadcast %13 : f32 to vector<32x4xf32>
    %24 = arith.mulf %23, %22 : vector<32x4xf32>
    %25 = vector.broadcast %13 : f32 to vector<32x4xf32>
    %26 = arith.addf %24, %25 : vector<32x4xf32>
    %cst_13 = arith.constant 0.000000e+00 : f32
    %27 = vector.broadcast %cst_13 : f32 to vector<32x4xf32>
    %28 = arith.maximumf %12, %27 : vector<32x4xf32>
    %29 = vector.broadcast %13 : f32 to vector<32x4xf32>
    %30 = arith.cmpf oge, %12, %29 : vector<32x4xf32>
    %31 = arith.select %30, %26, %28 : vector<32x4xi1>, vector<32x4xf32>
    %32 = vector.broadcast %15 : f32 to vector<32x4xf32>
    %33 = arith.cmpf oge, %12, %32 : vector<32x4xf32>
    %34 = vector.broadcast %16 : f32 to vector<32x4xf32>
    %35 = arith.select %33, %34, %31 : vector<32x4xi1>, vector<32x4xf32>
    %36 = arith.truncf %1 : vector<128x16xf32> to vector<128x16xbf16>
    %c0_14 = arith.constant 0 : index
    %c0_15 = arith.constant 0 : index
    %37 = vector.load %arg7[%c0_14, %c0_15] : memref<16x4xbf16, #tpu.memory_space<vmem>>, vector<16x4xbf16>
    %cst_16 = arith.constant dense<0.000000e+00> : vector<128x4xf32>
    %38 = tpu.matmul %36, %37, %cst_16 {dimension_numbers = #tpu.dot_dimension_numbers<[1], [0], [0], [1], [0, 0, 1, 1], [], []>} : vector<128x16xbf16>, vector<16x4xbf16>, vector<128x4xf32> -> vector<128x4xf32>
    %c0_17 = arith.constant 0 : index
    %c0_18 = arith.constant 0 : index
    %39 = vector.load %arg10[%c0_17, %c0_18] : memref<1x4xf32, #tpu.memory_space<vmem>>, vector<1x4xf32>
    %40 = vector.broadcast %39 : vector<1x4xf32> to vector<128x4xf32>
    %41 = arith.mulf %38, %40 : vector<128x4xf32>
    %c0_19 = arith.constant 0 : index
    %c0_20 = arith.constant 0 : index
    %42 = vector.load %arg11[%c0_19, %c0_20] : memref<1x4xf32, #tpu.memory_space<vmem>>, vector<1x4xf32>
    %43 = vector.broadcast %42 : vector<1x4xf32> to vector<128x4xf32>
    %44 = arith.addf %41, %43 : vector<128x4xf32>
    %c0_21 = arith.constant 0 : index
    %45 = memref.load %arg2[%c0_21] : memref<12xf32, #tpu.memory_space<smem>>
    %c1_22 = arith.constant 1 : index
    %46 = memref.load %arg2[%c1_22] : memref<12xf32, #tpu.memory_space<smem>>
    %c2_23 = arith.constant 2 : index
    %47 = memref.load %arg2[%c2_23] : memref<12xf32, #tpu.memory_space<smem>>
    %c3_24 = arith.constant 3 : index
    %48 = memref.load %arg2[%c3_24] : memref<12xf32, #tpu.memory_space<smem>>
    %49 = vector.broadcast %45 : f32 to vector<128x4xf32>
    %50 = arith.maximumf %44, %49 : vector<128x4xf32>
    %51 = math.log %50 : vector<128x4xf32>
    %52 = vector.broadcast %46 : f32 to vector<128x4xf32>
    %53 = arith.subf %51, %52 : vector<128x4xf32>
    %54 = math.sin %53 : vector<128x4xf32>
    %55 = vector.broadcast %45 : f32 to vector<128x4xf32>
    %56 = arith.mulf %55, %54 : vector<128x4xf32>
    %57 = vector.broadcast %45 : f32 to vector<128x4xf32>
    %58 = arith.addf %56, %57 : vector<128x4xf32>
    %cst_25 = arith.constant 0.000000e+00 : f32
    %59 = vector.broadcast %cst_25 : f32 to vector<128x4xf32>
    %60 = arith.maximumf %44, %59 : vector<128x4xf32>
    %61 = vector.broadcast %45 : f32 to vector<128x4xf32>
    %62 = arith.cmpf oge, %44, %61 : vector<128x4xf32>
    %63 = arith.select %62, %58, %60 : vector<128x4xi1>, vector<128x4xf32>
    %64 = vector.broadcast %47 : f32 to vector<128x4xf32>
    %65 = arith.cmpf oge, %44, %64 : vector<128x4xf32>
    %66 = vector.broadcast %48 : f32 to vector<128x4xf32>
    %67 = arith.select %65, %66, %63 : vector<128x4xi1>, vector<128x4xf32>
    %68 = vector.extract_strided_slice %35 {offsets = [0, 0], sizes = [16, 4], strides = [1, 1]} : vector<32x4xf32> to vector<16x4xf32>
    %c0_26 = arith.constant 0 : index
    %c0_27 = arith.constant 0 : index
    %69 = vector.load %arg17[%c0_26, %c0_27] : memref<160x4xf32, #tpu.memory_space<vmem>>, vector<16x4xf32>
    tpu.vector_store %arg17[%c0_26, %c0_27], %68 {strides = array<i32>} : memref<160x4xf32, #tpu.memory_space<vmem>>, vector<16x4xf32>,
    %c16 = arith.constant 16 : index
    %c0_28 = arith.constant 0 : index
    %70 = vector.load %arg17[%c16, %c0_28] : memref<160x4xf32, #tpu.memory_space<vmem>>, vector<128x4xf32>
    tpu.vector_store %arg17[%c16, %c0_28], %67 {strides = array<i32>} : memref<160x4xf32, #tpu.memory_space<vmem>>, vector<128x4xf32>,
    %71 = vector.extract_strided_slice %35 {offsets = [16, 0], sizes = [16, 4], strides = [1, 1]} : vector<32x4xf32> to vector<16x4xf32>
    %c144 = arith.constant 144 : index
    %c0_29 = arith.constant 0 : index
    %72 = vector.load %arg17[%c144, %c0_29] : memref<160x4xf32, #tpu.memory_space<vmem>>, vector<16x4xf32>
    tpu.vector_store %arg17[%c144, %c0_29], %71 {strides = array<i32>} : memref<160x4xf32, #tpu.memory_space<vmem>>, vector<16x4xf32>,
    %c0_i32 = arith.constant 0 : i32
    %73 = arith.cmpi eq, %arg1, %c0_i32 : i32
    %74 = arith.extui %73 : i1 to i32
    %c0_i32_30 = arith.constant 0 : i32
    %75 = arith.cmpi ne, %74, %c0_i32_30 : i32
    scf.if %75 {
      %cst_92 = arith.constant 0.000000e+00 : f32
      %208 = vector.broadcast %cst_92 : f32 to vector<16x4xf32>
      %c0_93 = arith.constant 0 : index
      %c0_94 = arith.constant 0 : index
      %209 = vector.load %arg17[%c0_93, %c0_94] : memref<160x4xf32, #tpu.memory_space<vmem>>, vector<16x4xf32>
      tpu.vector_store %arg17[%c0_93, %c0_94], %208 {strides = array<i32>} : memref<160x4xf32, #tpu.memory_space<vmem>>, vector<16x4xf32>,
    } else {
    }
    %c1_i32 = arith.constant 1 : i32
    %76 = arith.cmpi eq, %arg1, %c1_i32 : i32
    %77 = arith.extui %76 : i1 to i32
    %c0_i32_31 = arith.constant 0 : i32
    %78 = arith.cmpi ne, %77, %c0_i32_31 : i32
    scf.if %78 {
      %cst_92 = arith.constant 0.000000e+00 : f32
      %208 = vector.broadcast %cst_92 : f32 to vector<16x4xf32>
      %c144_93 = arith.constant 144 : index
      %c0_94 = arith.constant 0 : index
      %209 = vector.load %arg17[%c144_93, %c0_94] : memref<160x4xf32, #tpu.memory_space<vmem>>, vector<16x4xf32>
      tpu.vector_store %arg17[%c144_93, %c0_94], %208 {strides = array<i32>} : memref<160x4xf32, #tpu.memory_space<vmem>>, vector<16x4xf32>,
    } else {
    }
    %c0_32 = arith.constant 0 : index
    %c0_33 = arith.constant 0 : index
    %79 = vector.load %arg17[%c0_32, %c0_33] : memref<160x4xf32, #tpu.memory_space<vmem>>, vector<160x4xf32>
    %c1_i32_34 = arith.constant 1 : i32
    %80 = tpu.dynamic_rotate %79 by %c1_i32_34 dim 0 : vector<160x4xf32>, i32 -> vector<160x4xf32>
    %c0_35 = arith.constant 0 : index
    %c0_36 = arith.constant 0 : index
    %81 = vector.load %arg5[%c0_35, %c0_36] : memref<160x1xf32, #tpu.memory_space<vmem>>, vector<160x1xf32>
    %82 = vector.broadcast %81 : vector<160x1xf32> to vector<160x4xf32>
    %83 = arith.mulf %80, %82 : vector<160x4xf32>
    %c159_i32 = arith.constant 159 : i32
    %84 = tpu.dynamic_rotate %79 by %c159_i32 dim 0 : vector<160x4xf32>, i32 -> vector<160x4xf32>
    %c0_37 = arith.constant 0 : index
    %c0_38 = arith.constant 0 : index
    %85 = vector.load %arg6[%c0_37, %c0_38] : memref<160x1xf32, #tpu.memory_space<vmem>>, vector<160x1xf32>
    %86 = vector.broadcast %85 : vector<160x1xf32> to vector<160x4xf32>
    %87 = arith.mulf %84, %86 : vector<160x4xf32>
    %cst_39 = arith.constant 0.000000e+00 : f32
    %88 = vector.broadcast %cst_39 : f32 to vector<128x4xf32>
    %89 = vector.extract_strided_slice %83 {offsets = [0, 0], sizes = [128, 4], strides = [1, 1]} : vector<160x4xf32> to vector<128x4xf32>
    %90 = arith.truncf %89 : vector<128x4xf32> to vector<128x4xbf16>
    %c0_40 = arith.constant 0 : index
    %c0_41 = arith.constant 0 : index
    %c0_42 = arith.constant 0 : index
    %91 = vector.load %arg8[%c0_40, %c0_41, %c0_42] : memref<9x4x4xbf16, #tpu.memory_space<vmem>>, vector<1x4x4xbf16>
    %92 = vector.shape_cast %91 : vector<1x4x4xbf16> to vector<4x4xbf16>
    %cst_43 = arith.constant dense<0.000000e+00> : vector<128x4xf32>
    %93 = tpu.matmul %90, %92, %cst_43 {dimension_numbers = #tpu.dot_dimension_numbers<[1], [0], [0], [1], [0, 0, 1, 1], [], []>} : vector<128x4xbf16>, vector<4x4xbf16>, vector<128x4xf32> -> vector<128x4xf32>
    %94 = arith.addf %88, %93 : vector<128x4xf32>
    %95 = vector.extract_strided_slice %79 {offsets = [0, 0], sizes = [128, 4], strides = [1, 1]} : vector<160x4xf32> to vector<128x4xf32>
    %96 = arith.truncf %95 : vector<128x4xf32> to vector<128x4xbf16>
    %c1_44 = arith.constant 1 : index
    %c0_45 = arith.constant 0 : index
    %c0_46 = arith.constant 0 : index
    %97 = vector.load %arg8[%c1_44, %c0_45, %c0_46] : memref<9x4x4xbf16, #tpu.memory_space<vmem>>, vector<1x4x4xbf16>
    %98 = vector.shape_cast %97 : vector<1x4x4xbf16> to vector<4x4xbf16>
    %cst_47 = arith.constant dense<0.000000e+00> : vector<128x4xf32>
    %99 = tpu.matmul %96, %98, %cst_47 {dimension_numbers = #tpu.dot_dimension_numbers<[1], [0], [0], [1], [0, 0, 1, 1], [], []>} : vector<128x4xbf16>, vector<4x4xbf16>, vector<128x4xf32> -> vector<128x4xf32>
    %100 = arith.addf %94, %99 : vector<128x4xf32>
    %101 = vector.extract_strided_slice %87 {offsets = [0, 0], sizes = [128, 4], strides = [1, 1]} : vector<160x4xf32> to vector<128x4xf32>
    %102 = arith.truncf %101 : vector<128x4xf32> to vector<128x4xbf16>
    %c2_48 = arith.constant 2 : index
    %c0_49 = arith.constant 0 : index
    %c0_50 = arith.constant 0 : index
    %103 = vector.load %arg8[%c2_48, %c0_49, %c0_50] : memref<9x4x4xbf16, #tpu.memory_space<vmem>>, vector<1x4x4xbf16>
    %104 = vector.shape_cast %103 : vector<1x4x4xbf16> to vector<4x4xbf16>
    %cst_51 = arith.constant dense<0.000000e+00> : vector<128x4xf32>
    %105 = tpu.matmul %102, %104, %cst_51 {dimension_numbers = #tpu.dot_dimension_numbers<[1], [0], [0], [1], [0, 0, 1, 1], [], []>} : vector<128x4xbf16>, vector<4x4xbf16>, vector<128x4xf32> -> vector<128x4xf32>
    %106 = arith.addf %100, %105 : vector<128x4xf32>
    %107 = vector.extract_strided_slice %83 {offsets = [16, 0], sizes = [128, 4], strides = [1, 1]} : vector<160x4xf32> to vector<128x4xf32>
    %108 = arith.truncf %107 : vector<128x4xf32> to vector<128x4xbf16>
    %c3_52 = arith.constant 3 : index
    %c0_53 = arith.constant 0 : index
    %c0_54 = arith.constant 0 : index
    %109 = vector.load %arg8[%c3_52, %c0_53, %c0_54] : memref<9x4x4xbf16, #tpu.memory_space<vmem>>, vector<1x4x4xbf16>
    %110 = vector.shape_cast %109 : vector<1x4x4xbf16> to vector<4x4xbf16>
    %cst_55 = arith.constant dense<0.000000e+00> : vector<128x4xf32>
    %111 = tpu.matmul %108, %110, %cst_55 {dimension_numbers = #tpu.dot_dimension_numbers<[1], [0], [0], [1], [0, 0, 1, 1], [], []>} : vector<128x4xbf16>, vector<4x4xbf16>, vector<128x4xf32> -> vector<128x4xf32>
    %112 = arith.addf %106, %111 : vector<128x4xf32>
    %113 = vector.extract_strided_slice %79 {offsets = [16, 0], sizes = [128, 4], strides = [1, 1]} : vector<160x4xf32> to vector<128x4xf32>
    %114 = arith.truncf %113 : vector<128x4xf32> to vector<128x4xbf16>
    %c4 = arith.constant 4 : index
    %c0_56 = arith.constant 0 : index
    %c0_57 = arith.constant 0 : index
    %115 = vector.load %arg8[%c4, %c0_56, %c0_57] : memref<9x4x4xbf16, #tpu.memory_space<vmem>>, vector<1x4x4xbf16>
    %116 = vector.shape_cast %115 : vector<1x4x4xbf16> to vector<4x4xbf16>
    %cst_58 = arith.constant dense<0.000000e+00> : vector<128x4xf32>
    %117 = tpu.matmul %114, %116, %cst_58 {dimension_numbers = #tpu.dot_dimension_numbers<[1], [0], [0], [1], [0, 0, 1, 1], [], []>} : vector<128x4xbf16>, vector<4x4xbf16>, vector<128x4xf32> -> vector<128x4xf32>
    %118 = arith.addf %112, %117 : vector<128x4xf32>
    %119 = vector.extract_strided_slice %87 {offsets = [16, 0], sizes = [128, 4], strides = [1, 1]} : vector<160x4xf32> to vector<128x4xf32>
    %120 = arith.truncf %119 : vector<128x4xf32> to vector<128x4xbf16>
    %c5 = arith.constant 5 : index
    %c0_59 = arith.constant 0 : index
    %c0_60 = arith.constant 0 : index
    %121 = vector.load %arg8[%c5, %c0_59, %c0_60] : memref<9x4x4xbf16, #tpu.memory_space<vmem>>, vector<1x4x4xbf16>
    %122 = vector.shape_cast %121 : vector<1x4x4xbf16> to vector<4x4xbf16>
    %cst_61 = arith.constant dense<0.000000e+00> : vector<128x4xf32>
    %123 = tpu.matmul %120, %122, %cst_61 {dimension_numbers = #tpu.dot_dimension_numbers<[1], [0], [0], [1], [0, 0, 1, 1], [], []>} : vector<128x4xbf16>, vector<4x4xbf16>, vector<128x4xf32> -> vector<128x4xf32>
    %124 = arith.addf %118, %123 : vector<128x4xf32>
    %125 = vector.extract_strided_slice %83 {offsets = [32, 0], sizes = [128, 4], strides = [1, 1]} : vector<160x4xf32> to vector<128x4xf32>
    %126 = arith.truncf %125 : vector<128x4xf32> to vector<128x4xbf16>
    %c6 = arith.constant 6 : index
    %c0_62 = arith.constant 0 : index
    %c0_63 = arith.constant 0 : index
    %127 = vector.load %arg8[%c6, %c0_62, %c0_63] : memref<9x4x4xbf16, #tpu.memory_space<vmem>>, vector<1x4x4xbf16>
    %128 = vector.shape_cast %127 : vector<1x4x4xbf16> to vector<4x4xbf16>
    %cst_64 = arith.constant dense<0.000000e+00> : vector<128x4xf32>
    %129 = tpu.matmul %126, %128, %cst_64 {dimension_numbers = #tpu.dot_dimension_numbers<[1], [0], [0], [1], [0, 0, 1, 1], [], []>} : vector<128x4xbf16>, vector<4x4xbf16>, vector<128x4xf32> -> vector<128x4xf32>
    %130 = arith.addf %124, %129 : vector<128x4xf32>
    %131 = vector.extract_strided_slice %79 {offsets = [32, 0], sizes = [128, 4], strides = [1, 1]} : vector<160x4xf32> to vector<128x4xf32>
    %132 = arith.truncf %131 : vector<128x4xf32> to vector<128x4xbf16>
    %c7 = arith.constant 7 : index
    %c0_65 = arith.constant 0 : index
    %c0_66 = arith.constant 0 : index
    %133 = vector.load %arg8[%c7, %c0_65, %c0_66] : memref<9x4x4xbf16, #tpu.memory_space<vmem>>, vector<1x4x4xbf16>
    %134 = vector.shape_cast %133 : vector<1x4x4xbf16> to vector<4x4xbf16>
    %cst_67 = arith.constant dense<0.000000e+00> : vector<128x4xf32>
    %135 = tpu.matmul %132, %134, %cst_67 {dimension_numbers = #tpu.dot_dimension_numbers<[1], [0], [0], [1], [0, 0, 1, 1], [], []>} : vector<128x4xbf16>, vector<4x4xbf16>, vector<128x4xf32> -> vector<128x4xf32>
    %136 = arith.addf %130, %135 : vector<128x4xf32>
    %137 = vector.extract_strided_slice %87 {offsets = [32, 0], sizes = [128, 4], strides = [1, 1]} : vector<160x4xf32> to vector<128x4xf32>
    %138 = arith.truncf %137 : vector<128x4xf32> to vector<128x4xbf16>
    %c8 = arith.constant 8 : index
    %c0_68 = arith.constant 0 : index
    %c0_69 = arith.constant 0 : index
    %139 = vector.load %arg8[%c8, %c0_68, %c0_69] : memref<9x4x4xbf16, #tpu.memory_space<vmem>>, vector<1x4x4xbf16>
    %140 = vector.shape_cast %139 : vector<1x4x4xbf16> to vector<4x4xbf16>
    %cst_70 = arith.constant dense<0.000000e+00> : vector<128x4xf32>
    %141 = tpu.matmul %138, %140, %cst_70 {dimension_numbers = #tpu.dot_dimension_numbers<[1], [0], [0], [1], [0, 0, 1, 1], [], []>} : vector<128x4xbf16>, vector<4x4xbf16>, vector<128x4xf32> -> vector<128x4xf32>
    %142 = arith.addf %136, %141 : vector<128x4xf32>
    %c0_71 = arith.constant 0 : index
    %c0_72 = arith.constant 0 : index
    %143 = vector.load %arg12[%c0_71, %c0_72] : memref<1x4xf32, #tpu.memory_space<vmem>>, vector<1x4xf32>
    %144 = vector.broadcast %143 : vector<1x4xf32> to vector<128x4xf32>
    %145 = arith.mulf %142, %144 : vector<128x4xf32>
    %c0_73 = arith.constant 0 : index
    %c0_74 = arith.constant 0 : index
    %146 = vector.load %arg13[%c0_73, %c0_74] : memref<1x4xf32, #tpu.memory_space<vmem>>, vector<1x4xf32>
    %147 = vector.broadcast %146 : vector<1x4xf32> to vector<128x4xf32>
    %148 = arith.addf %145, %147 : vector<128x4xf32>
    %c4_75 = arith.constant 4 : index
    %149 = memref.load %arg2[%c4_75] : memref<12xf32, #tpu.memory_space<smem>>
    %c5_76 = arith.constant 5 : index
    %150 = memref.load %arg2[%c5_76] : memref<12xf32, #tpu.memory_space<smem>>
    %c6_77 = arith.constant 6 : index
    %151 = memref.load %arg2[%c6_77] : memref<12xf32, #tpu.memory_space<smem>>
    %c7_78 = arith.constant 7 : index
    %152 = memref.load %arg2[%c7_78] : memref<12xf32, #tpu.memory_space<smem>>
    %153 = vector.broadcast %149 : f32 to vector<128x4xf32>
    %154 = arith.maximumf %148, %153 : vector<128x4xf32>
    %155 = math.log %154 : vector<128x4xf32>
    %156 = vector.broadcast %150 : f32 to vector<128x4xf32>
    %157 = arith.subf %155, %156 : vector<128x4xf32>
    %158 = math.sin %157 : vector<128x4xf32>
    %159 = vector.broadcast %149 : f32 to vector<128x4xf32>
    %160 = arith.mulf %159, %158 : vector<128x4xf32>
    %161 = vector.broadcast %149 : f32 to vector<128x4xf32>
    %162 = arith.addf %160, %161 : vector<128x4xf32>
    %cst_79 = arith.constant 0.000000e+00 : f32
    %163 = vector.broadcast %cst_79 : f32 to vector<128x4xf32>
    %164 = arith.maximumf %148, %163 : vector<128x4xf32>
    %165 = vector.broadcast %149 : f32 to vector<128x4xf32>
    %166 = arith.cmpf oge, %148, %165 : vector<128x4xf32>
    %167 = arith.select %166, %162, %164 : vector<128x4xi1>, vector<128x4xf32>
    %168 = vector.broadcast %151 : f32 to vector<128x4xf32>
    %169 = arith.cmpf oge, %148, %168 : vector<128x4xf32>
    %170 = vector.broadcast %152 : f32 to vector<128x4xf32>
    %171 = arith.select %169, %170, %167 : vector<128x4xi1>, vector<128x4xf32>
    %172 = arith.truncf %171 : vector<128x4xf32> to vector<128x4xbf16>
    %c0_80 = arith.constant 0 : index
    %c0_81 = arith.constant 0 : index
    %173 = vector.load %arg9[%c0_80, %c0_81] : memref<4x16xbf16, #tpu.memory_space<vmem>>, vector<4x16xbf16>
    %cst_82 = arith.constant dense<0.000000e+00> : vector<128x16xf32>
    %174 = tpu.matmul %172, %173, %cst_82 {dimension_numbers = #tpu.dot_dimension_numbers<[1], [0], [0], [1], [0, 0, 1, 1], [], []>} : vector<128x4xbf16>, vector<4x16xbf16>, vector<128x16xf32> -> vector<128x16xf32>
    %c0_83 = arith.constant 0 : index
    %c0_84 = arith.constant 0 : index
    %175 = vector.load %arg14[%c0_83, %c0_84] : memref<1x16xf32, #tpu.memory_space<vmem>>, vector<1x16xf32>
    %176 = vector.broadcast %175 : vector<1x16xf32> to vector<128x16xf32>
    %177 = arith.mulf %174, %176 : vector<128x16xf32>
    %c0_85 = arith.constant 0 : index
    %c0_86 = arith.constant 0 : index
    %178 = vector.load %arg15[%c0_85, %c0_86] : memref<1x16xf32, #tpu.memory_space<vmem>>, vector<1x16xf32>
    %179 = vector.broadcast %178 : vector<1x16xf32> to vector<128x16xf32>
    %180 = arith.addf %177, %179 : vector<128x16xf32>
    %181 = arith.addf %180, %1 : vector<128x16xf32>
    %c8_87 = arith.constant 8 : index
    %182 = memref.load %arg2[%c8_87] : memref<12xf32, #tpu.memory_space<smem>>
    %c9 = arith.constant 9 : index
    %183 = memref.load %arg2[%c9] : memref<12xf32, #tpu.memory_space<smem>>
    %c10 = arith.constant 10 : index
    %184 = memref.load %arg2[%c10] : memref<12xf32, #tpu.memory_space<smem>>
    %c11 = arith.constant 11 : index
    %185 = memref.load %arg2[%c11] : memref<12xf32, #tpu.memory_space<smem>>
    %186 = vector.broadcast %182 : f32 to vector<128x16xf32>
    %187 = arith.maximumf %181, %186 : vector<128x16xf32>
    %188 = math.log %187 : vector<128x16xf32>
    %189 = vector.broadcast %183 : f32 to vector<128x16xf32>
    %190 = arith.subf %188, %189 : vector<128x16xf32>
    %191 = math.sin %190 : vector<128x16xf32>
    %192 = vector.broadcast %182 : f32 to vector<128x16xf32>
    %193 = arith.mulf %192, %191 : vector<128x16xf32>
    %194 = vector.broadcast %182 : f32 to vector<128x16xf32>
    %195 = arith.addf %193, %194 : vector<128x16xf32>
    %cst_88 = arith.constant 0.000000e+00 : f32
    %196 = vector.broadcast %cst_88 : f32 to vector<128x16xf32>
    %197 = arith.maximumf %181, %196 : vector<128x16xf32>
    %198 = vector.broadcast %182 : f32 to vector<128x16xf32>
    %199 = arith.cmpf oge, %181, %198 : vector<128x16xf32>
    %200 = arith.select %199, %195, %197 : vector<128x16xi1>, vector<128x16xf32>
    %201 = vector.broadcast %184 : f32 to vector<128x16xf32>
    %202 = arith.cmpf oge, %181, %201 : vector<128x16xf32>
    %203 = vector.broadcast %185 : f32 to vector<128x16xf32>
    %204 = arith.select %202, %203, %200 : vector<128x16xi1>, vector<128x16xf32>
    %c0_89 = arith.constant 0 : index
    %c0_90 = arith.constant 0 : index
    %c0_91 = arith.constant 0 : index
    %205 = vector.load %arg16[%c0_89, %c0_90, %c0_91] : memref<1x128x16xf32, #tpu.memory_space<vmem>>, vector<1x128x16xf32>
    %206 = vector.shape_cast %205 : vector<1x128x16xf32> to vector<128x16xf32>
    %207 = vector.shape_cast %204 : vector<128x16xf32> to vector<1x128x16xf32>
    tpu.vector_store %arg16[%c0_89, %c0_90, %c0_91], %207 {strides = array<i32>} : memref<1x128x16xf32, #tpu.memory_space<vmem>>, vector<1x128x16xf32>,
    return
  }
  func.func @transform_0(%arg0: i32, %arg1: i32) -> i32 {
    %c0_i32 = arith.constant 0 : i32
    %c0_i32_0 = arith.constant 0 : i32
    return %c0_i32 : i32
  }
  func.func @transform_1(%arg0: i32, %arg1: i32) -> (i32, i32, i32) {
    %c0_i32 = arith.constant 0 : i32
    %c0_i32_0 = arith.constant 0 : i32
    return %arg0, %arg1, %c0_i32 : i32, i32, i32
  }
  func.func @transform_2(%arg0: i32, %arg1: i32) -> (i32, i32, i32, i32) {
    %c0_i32 = arith.constant 0 : i32
    %c0_i32_0 = arith.constant 0 : i32
    %c0_i32_1 = arith.constant 0 : i32
    return %arg0, %arg1, %c0_i32, %c0_i32_0 : i32, i32, i32, i32
  }
  func.func @transform_3(%arg0: i32, %arg1: i32) -> (i32, i32) {
    %c0_i32 = arith.constant 0 : i32
    %c0_i32_0 = arith.constant 0 : i32
    %c0_i32_1 = arith.constant 0 : i32
    return %c0_i32, %c0_i32_0 : i32, i32
  }
  func.func @transform_4(%arg0: i32, %arg1: i32) -> (i32, i32) {
    %c0_i32 = arith.constant 0 : i32
    %c0_i32_0 = arith.constant 0 : i32
    %c0_i32_1 = arith.constant 0 : i32
    return %c0_i32, %c0_i32_0 : i32, i32
  }
  func.func @transform_5(%arg0: i32, %arg1: i32) -> (i32, i32) {
    %c0_i32 = arith.constant 0 : i32
    %c0_i32_0 = arith.constant 0 : i32
    %c0_i32_1 = arith.constant 0 : i32
    return %c0_i32, %c0_i32_0 : i32, i32
  }
  func.func @transform_6(%arg0: i32, %arg1: i32) -> (i32, i32, i32) {
    %c0_i32 = arith.constant 0 : i32
    %c0_i32_0 = arith.constant 0 : i32
    %c0_i32_1 = arith.constant 0 : i32
    %c0_i32_2 = arith.constant 0 : i32
    return %c0_i32, %c0_i32_0, %c0_i32_1 : i32, i32, i32
  }
  func.func @transform_7(%arg0: i32, %arg1: i32) -> (i32, i32) {
    %c0_i32 = arith.constant 0 : i32
    %c0_i32_0 = arith.constant 0 : i32
    %c0_i32_1 = arith.constant 0 : i32
    return %c0_i32, %c0_i32_0 : i32, i32
  }
  func.func @transform_8(%arg0: i32, %arg1: i32) -> (i32, i32) {
    %c0_i32 = arith.constant 0 : i32
    %c0_i32_0 = arith.constant 0 : i32
    %c0_i32_1 = arith.constant 0 : i32
    return %c0_i32, %c0_i32_0 : i32, i32
  }
  func.func @transform_9(%arg0: i32, %arg1: i32) -> (i32, i32) {
    %c0_i32 = arith.constant 0 : i32
    %c0_i32_0 = arith.constant 0 : i32
    %c0_i32_1 = arith.constant 0 : i32
    return %c0_i32, %c0_i32_0 : i32, i32
  }
  func.func @transform_10(%arg0: i32, %arg1: i32) -> (i32, i32) {
    %c0_i32 = arith.constant 0 : i32
    %c0_i32_0 = arith.constant 0 : i32
    %c0_i32_1 = arith.constant 0 : i32
    return %c0_i32, %c0_i32_0 : i32, i32
  }
  func.func @transform_11(%arg0: i32, %arg1: i32) -> (i32, i32) {
    %c0_i32 = arith.constant 0 : i32
    %c0_i32_0 = arith.constant 0 : i32
    %c0_i32_1 = arith.constant 0 : i32
    return %c0_i32, %c0_i32_0 : i32, i32
  }
  func.func @transform_12(%arg0: i32, %arg1: i32) -> (i32, i32) {
    %c0_i32 = arith.constant 0 : i32
    %c0_i32_0 = arith.constant 0 : i32
    %c0_i32_1 = arith.constant 0 : i32
    return %c0_i32, %c0_i32_0 : i32, i32
  }
  func.func @transform_13(%arg0: i32, %arg1: i32) -> (i32, i32) {
    %c0_i32 = arith.constant 0 : i32
    %c0_i32_0 = arith.constant 0 : i32
    %c0_i32_1 = arith.constant 0 : i32
    return %c0_i32, %c0_i32_0 : i32, i32
  }
  func.func @transform_14(%arg0: i32, %arg1: i32) -> (i32, i32, i32) {
    %c0_i32 = arith.constant 0 : i32
    %c0_i32_0 = arith.constant 0 : i32
    return %arg0, %arg1, %c0_i32 : i32, i32, i32
  }
}

</mosaic_0001>

<llo_original>
// kernel: tpu_custom_call.1
$region0: #{tpu_custom_call.1}
  #allocation0 [shape = 'u32[]', space=smem, size = 0x4, offset = 0x4, fixed_abs, tag = 'smem constant byte address 0x4 - core index']
  #allocation1 [shape = 'u32[144,128]{1,0:T(1,128)}', space=vmem, size = 0x12000, scoped, tag = 'internal scratch']
  #allocation2 [shape = 'f32[160,4]{1,0:T(8,128)}', space=vmem, size = 0x14000, scoped, tag = 'scratch operand']
  %s0 = inlined_call_operand.hbm [shape: f32[12], index: 0, kind: input, shape index: {}]
  %s1 = inlined_call_operand.hbm [shape: f32[2,256,16], index: 1, kind: input, shape index: {}]
  %s2 = inlined_call_operand.hbm [shape: f32[2,2,32,16], index: 2, kind: input, shape index: {}]
  %s3 = inlined_call_operand.hbm [shape: f32[160,1], index: 3, kind: input, shape index: {}]
  %s4 = inlined_call_operand.hbm [shape: f32[160,1], index: 4, kind: input, shape index: {}]
  %s5 = inlined_call_operand.hbm [shape: bf16[16,4], index: 5, kind: input, shape index: {}]
  %s6 = inlined_call_operand.hbm [shape: bf16[9,4,4], index: 6, kind: input, shape index: {}]
  %s7 = inlined_call_operand.hbm [shape: bf16[4,16], index: 7, kind: input, shape index: {}]
  %s8 = inlined_call_operand.hbm [shape: f32[1,4], index: 8, kind: input, shape index: {}]
  %s9 = inlined_call_operand.hbm [shape: f32[1,4], index: 9, kind: input, shape index: {}]
  %s10 = inlined_call_operand.hbm [shape: f32[1,4], index: 10, kind: input, shape index: {}]
  %s11 = inlined_call_operand.hbm [shape: f32[1,4], index: 11, kind: input, shape index: {}]
  %s12 = inlined_call_operand.hbm [shape: f32[1,16], index: 12, kind: input, shape index: {}]
  %s13 = inlined_call_operand.hbm [shape: f32[1,16], index: 13, kind: input, shape index: {}]
  %s14 = inlined_call_operand.hbm [shape: f32[2,256,16], index: 14, kind: output, shape index: {}]
  %s15 = sld [smem:[#allocation0]]
  $region153: #{tpu_custom_call.1} parent=0
    _
  %s17 = ssub.s32 1, %s15
  %s18 = scalar_select 0, %s17, %s15
  $region1: #{tpu_custom_call.1} parent=0
    #allocation3 [shape = 'u8[512]{0}', space=smem, size = 0x200, scoped, tag = 'input window, operand 0, single buffered']
    #allocation4 [shape = 's32[2]{0}', space=sflag, size = 0x8, scoped, tag = 'scoped memory for tpu_custom_call.1']
    #allocation5 [shape = 's32[2]{0}', space=sflag, size = 0x8, scoped, tag = 'scoped memory for tpu_custom_call.1']
    #allocation6 [shape = 's32[2]{0}', space=sflag, size = 0x8, scoped, tag = 'scoped memory for tpu_custom_call.1']
    #allocation7 [shape = 'u8[131072]{0}', space=vmem, size = 0x20000, scoped, tag = 'input window, operand 1']
    #allocation8 [shape = 'u8[32768]{0}', space=vmem, size = 0x8000, scoped, tag = 'input window, operand 2']
    #allocation9 [shape = 's32[2]{0}', space=sflag, size = 0x8, scoped, tag = 'scoped memory for tpu_custom_call.1']
    #allocation10 [shape = 'u8[81920]{0}', space=vmem, size = 0x14000, scoped, tag = 'input window, operand 3, single buffered']
    #allocation11 [shape = 'u8[81920]{0}', space=vmem, size = 0x14000, scoped, tag = 'input window, operand 4, single buffered']
    #allocation12 [shape = 's32[1]{0}', space=sflag, size = 0x4, scoped, tag = 'scoped memory for tpu_custom_call.1']
    #allocation13 [shape = 'u8[4096]{0}', space=vmem, size = 0x1000, scoped, tag = 'input window, operand 5, single buffered']
    #allocation14 [shape = 'u8[9216]{0}', space=vmem, size = 0x2400, scoped, tag = 'input window, operand 6, single buffered']
    #allocation15 [shape = 's32[1]{0}', space=sflag, size = 0x4, scoped, tag = 'scoped memory for tpu_custom_call.1']
    #allocation16 [shape = 'u8[1024]{0}', space=vmem, size = 0x400, scoped, tag = 'input window, operand 7, single buffered']
    #allocation17 [shape = 'u8[512]{0}', space=vmem, size = 0x400, scoped, tag = 'input window, operand 8, single buffered']
    #allocation18 [shape = 's32[1]{0}', space=sflag, size = 0x4, scoped, tag = 'scoped memory for tpu_custom_call.1']
    #allocation19 [shape = 'u8[512]{0}', space=vmem, size = 0x400, scoped, tag = 'input window, operand 9, single buffered']
    #allocation20 [shape = 'u8[512]{0}', space=vmem, size = 0x400, scoped, tag = 'input window, operand 10, single buffered']
    #allocation21 [shape = 's32[1]{0}', space=sflag, size = 0x4, scoped, tag = 'scoped memory for tpu_custom_call.1']
    #allocation22 [shape = 'u8[512]{0}', space=vmem, size = 0x400, scoped, tag = 'input window, operand 11, single buffered']
    #allocation23 [shape = 'u8[512]{0}', space=vmem, size = 0x400, scoped, tag = 'input window, operand 12, single buffered']
    #allocation24 [shape = 's32[1]{0}', space=sflag, size = 0x4, scoped, tag = 'scoped memory for tpu_custom_call.1']
    #allocation25 [shape = 'u8[512]{0}', space=vmem, size = 0x400, scoped, tag = 'input window, operand 13, single buffered']
    #allocation26 [shape = 'u8[131072]{0}', space=vmem, size = 0x20000, scoped, tag = 'output window, operand 0']
    %19 = vsyncpa [#allocation6], 0
    %20 = vsyncpa [#allocation4], 0
    %s21 = scalar_lea.sflag [#allocation4], 1
    %22 = vsyncpa %s21, 0
    %23 = vsyncpa [#allocation9], 0
    %s24 = scalar_lea.sflag [#allocation9], 1
    %25 = vsyncpa %s24, 0
    %26 = vsyncpa [#allocation12], 0
    %27 = vsyncpa [#allocation15], 0
    %28 = vsyncpa [#allocation18], 0
    %29 = vsyncpa [#allocation21], 0
    %30 = vsyncpa [#allocation24], 0
    %31 = vsyncpa [#allocation5], 0
    %s32 = scalar_lea.sflag [#allocation5], 1
    %33 = vsyncpa %s32, 0
    loop: start=0, step=1, limit=6
    $region2: #{tpu_custom_call.1} parent=1 // loop_pre_header
      _
    $region3: #{tpu_custom_call.1} parent=1 // loop_header
      %s35 = sphi 0, %s39
      %p36 = scmp.ge.s32.totalorder %s35, 6
      %s42 = sphi 0, %s54
      %s43 = sphi 0, %s50
      %s44 = sphi 0, %s42
      %s45 = sphi 0, %s43
      %s46 = sphi 0, %s44
      %s47 = sphi 0, %s45
      %s55 = sphi 0, %s55
      %s57 = sphi 0, %s55
      %s58 = sphi 0, %s57
      %s72 = sphi 0, %s58
      %s80 = sphi 0, %s82
      %s83 = sphi 0, %s80
      %s84 = sphi 0, %s83
      %s100 = sphi 0, %s84
      %s108 = sphi 0, %s110
      %s111 = sphi 0, %s108
      %s112 = sphi 0, %s111
      %s128 = sphi 0, %s112
      %s132 = sphi 0, %s132
      %s134 = sphi 0, %s132
      %s135 = sphi 0, %s134
      %s149 = sphi 0, %s135
      %s153 = sphi 0, %s153
      %s155 = sphi 0, %s153
      %s156 = sphi 0, %s155
      %s170 = sphi 0, %s156
      %s174 = sphi 0, %s174
      %s176 = sphi 0, %s174
      %s177 = sphi 0, %s176
      %s191 = sphi 0, %s177
      %s195 = sphi 0, %s195
      %s197 = sphi 0, %s195
      %s198 = sphi 0, %s197
      %s212 = sphi 0, %s198
      %s216 = sphi 0, %s216
      %s218 = sphi 0, %s216
      %s219 = sphi 0, %s218
      %s233 = sphi 0, %s219
      %s237 = sphi 0, %s237
      %s239 = sphi 0, %s237
      %s240 = sphi 0, %s239
      %s254 = sphi 0, %s240
      %s258 = sphi 0, %s258
      %s260 = sphi 0, %s258
      %s261 = sphi 0, %s260
      %s275 = sphi 0, %s261
      %s279 = sphi 0, %s279
      %s281 = sphi 0, %s279
      %s282 = sphi 0, %s281
      %s296 = sphi 0, %s282
      %s300 = sphi 0, %s300
      %s302 = sphi 0, %s300
      %s303 = sphi 0, %s302
      %s317 = sphi 0, %s303
      %s321 = sphi 0, %s321
      %s323 = sphi 0, %s321
      %s324 = sphi 0, %s323
      %s338 = sphi 0, %s324
      %s342 = sphi 0, %s342
      %s344 = sphi 0, %s342
      %s345 = sphi 0, %s344
      %s359 = sphi 0, %s345
      %s367 = sphi 0, %s369
      %s370 = sphi 0, %s367
      %s371 = sphi 0, %s370
      %s387 = sphi 0, %s371
    $region4: #{tpu_custom_call.1} parent=1 // loop_header_branch
      %38 = sbr.rel (%p36) target = $region8
    $region5: #{tpu_custom_call.1} parent=1 // loop_body
      %s40 = ssub.s32 %s35, 1
      %s41 = ssub.s32 %s35, 2
      %s48 = sadd.s32 1, %s43
      %p49 = scmp.ge.s32.totalorder %s48, 2
      %s50 = scalar_select %p49, 0, %s48
      %s51 = sadd.s32 1, %s42
      %s52 = scalar_select %p49, %s51, %s42
      %p53 = scmp.ge.s32.totalorder %s52, 2
      %s54 = scalar_select %p53, 0, %s52
      %s56 = sadd.s32 %s55, 1
      %p59 = scmp.eq.s32.totalorder %s35, 3
      %p60 = scmp.ne.s32.totalorder %s55, %s57
      %p61 = scmp.eq.s32.totalorder %s35, 0
      %p62 = por %p60, %p61
      %p63 = scmp.ne.s32.totalorder %s55, %s57
      %p64 = scmp.eq.s32.totalorder %s40, 3
      %p65 = por %p63, %p64
      %p66 = scmp.ne.s32.totalorder %s57, %s58
      %p67 = scmp.eq.s32.totalorder %s40, 0
      %p68 = por %p66, %p67
      %p69 = scmp.ne.s32.totalorder %s57, %s58
      %p70 = scmp.eq.s32.totalorder %s41, 3
      %p71 = por %p69, %p70
      %p73 = scmp.ne.s32.totalorder %s58, %s72
      %p74 = scmp.eq.s32.totalorder %s41, 0
      %p75 = por %p73, %p74
      %s76 = ssub.s32 %s42, %s54
      %s77 = ssub.s32 %s43, %s50
      %s78 = sor.u32 %s76, %s77
      %p79 = scmp.eq.s32.totalorder %s78, 0
      %s81 = sadd.s32 %s80, 1
      %s82 = scalar_select %p79, %s80, %s81
      %p85 = pneg %p79
      %p86 = scmp.eq.s32.totalorder %s35, 3
      %p87 = por %p85, %p86
      %p88 = scmp.ne.s32.totalorder %s80, %s83
      %p89 = scmp.eq.s32.totalorder %s35, 0
      %p90 = por %p88, %p89
      %p91 = scmp.ne.s32.totalorder %s80, %s83
      %p92 = scmp.eq.s32.totalorder %s40, 3
      %p93 = por %p91, %p92
      %p94 = scmp.ne.s32.totalorder %s83, %s84
      %p95 = scmp.eq.s32.totalorder %s40, 0
      %p96 = por %p94, %p95
      %p97 = scmp.ne.s32.totalorder %s83, %s84
      %p98 = scmp.eq.s32.totalorder %s41, 3
      %p99 = por %p97, %p98
      %p101 = scmp.ne.s32.totalorder %s84, %s100
      %p102 = scmp.eq.s32.totalorder %s41, 0
      %p103 = por %p101, %p102
      %s104 = ssub.s32 %s42, %s54
      %s105 = ssub.s32 %s43, %s50
      %s106 = sor.u32 %s104, %s105
      %p107 = scmp.eq.s32.totalorder %s106, 0
      %s109 = sadd.s32 %s108, 1
      %s110 = scalar_select %p107, %s108, %s109
      %p113 = pneg %p107
      %p114 = scmp.eq.s32.totalorder %s35, 3
      %p115 = por %p113, %p114
      %p116 = scmp.ne.s32.totalorder %s108, %s111
      %p117 = scmp.eq.s32.totalorder %s35, 0
      %p118 = por %p116, %p117
      %p119 = scmp.ne.s32.totalorder %s108, %s111
      %p120 = scmp.eq.s32.totalorder %s40, 3
      %p121 = por %p119, %p120
      %p122 = scmp.ne.s32.totalorder %s111, %s112
      %p123 = scmp.eq.s32.totalorder %s40, 0
      %p124 = por %p122, %p123
      %p125 = scmp.ne.s32.totalorder %s111, %s112
      %p126 = scmp.eq.s32.totalorder %s41, 3
      %p127 = por %p125, %p126
      %p129 = scmp.ne.s32.totalorder %s112, %s128
      %p130 = scmp.eq.s32.totalorder %s41, 0
      %p131 = por %p129, %p130
      %s133 = sadd.s32 %s132, 1
      %p136 = scmp.eq.s32.totalorder %s35, 3
      %p137 = scmp.ne.s32.totalorder %s132, %s134
      %p138 = scmp.eq.s32.totalorder %s35, 0
      %p139 = por %p137, %p138
      %p140 = scmp.ne.s32.totalorder %s132, %s134
      %p141 = scmp.eq.s32.totalorder %s40, 3
      %p142 = por %p140, %p141
      %p143 = scmp.ne.s32.totalorder %s134, %s135
      %p144 = scmp.eq.s32.totalorder %s40, 0
      %p145 = por %p143, %p144
      %p146 = scmp.ne.s32.totalorder %s134, %s135
      %p147 = scmp.eq.s32.totalorder %s41, 3
      %p148 = por %p146, %p147
      %p150 = scmp.ne.s32.totalorder %s135, %s149
      %p151 = scmp.eq.s32.totalorder %s41, 0
      %p152 = por %p150, %p151
      %s154 = sadd.s32 %s153, 1
      %p157 = scmp.eq.s32.totalorder %s35, 3
      %p158 = scmp.ne.s32.totalorder %s153, %s155
      %p159 = scmp.eq.s32.totalorder %s35, 0
      %p160 = por %p158, %p159
      %p161 = scmp.ne.s32.totalorder %s153, %s155
      %p162 = scmp.eq.s32.totalorder %s40, 3
      %p163 = por %p161, %p162
      %p164 = scmp.ne.s32.totalorder %s155, %s156
      %p165 = scmp.eq.s32.totalorder %s40, 0
      %p166 = por %p164, %p165
      %p167 = scmp.ne.s32.totalorder %s155, %s156
      %p168 = scmp.eq.s32.totalorder %s41, 3
      %p169 = por %p167, %p168
      %p171 = scmp.ne.s32.totalorder %s156, %s170
      %p172 = scmp.eq.s32.totalorder %s41, 0
      %p173 = por %p171, %p172
      %s175 = sadd.s32 %s174, 1
      %p178 = scmp.eq.s32.totalorder %s35, 3
      %p179 = scmp.ne.s32.totalorder %s174, %s176
      %p180 = scmp.eq.s32.totalorder %s35, 0
      %p181 = por %p179, %p180
      %p182 = scmp.ne.s32.totalorder %s174, %s176
      %p183 = scmp.eq.s32.totalorder %s40, 3
      %p184 = por %p182, %p183
      %p185 = scmp.ne.s32.totalorder %s176, %s177
      %p186 = scmp.eq.s32.totalorder %s40, 0
      %p187 = por %p185, %p186
      %p188 = scmp.ne.s32.totalorder %s176, %s177
      %p189 = scmp.eq.s32.totalorder %s41, 3
      %p190 = por %p188, %p189
      %p192 = scmp.ne.s32.totalorder %s177, %s191
      %p193 = scmp.eq.s32.totalorder %s41, 0
      %p194 = por %p192, %p193
      %s196 = sadd.s32 %s195, 1
      %p199 = scmp.eq.s32.totalorder %s35, 3
      %p200 = scmp.ne.s32.totalorder %s195, %s197
      %p201 = scmp.eq.s32.totalorder %s35, 0
      %p202 = por %p200, %p201
      %p203 = scmp.ne.s32.totalorder %s195, %s197
      %p204 = scmp.eq.s32.totalorder %s40, 3
      %p205 = por %p203, %p204
      %p206 = scmp.ne.s32.totalorder %s197, %s198
      %p207 = scmp.eq.s32.totalorder %s40, 0
      %p208 = por %p206, %p207
      %p209 = scmp.ne.s32.totalorder %s197, %s198
      %p210 = scmp.eq.s32.totalorder %s41, 3
      %p211 = por %p209, %p210
      %p213 = scmp.ne.s32.totalorder %s198, %s212
      %p214 = scmp.eq.s32.totalorder %s41, 0
      %p215 = por %p213, %p214
      %s217 = sadd.s32 %s216, 1
      %p220 = scmp.eq.s32.totalorder %s35, 3
      %p221 = scmp.ne.s32.totalorder %s216, %s218
      %p222 = scmp.eq.s32.totalorder %s35, 0
      %p223 = por %p221, %p222
      %p224 = scmp.ne.s32.totalorder %s216, %s218
      %p225 = scmp.eq.s32.totalorder %s40, 3
      %p226 = por %p224, %p225
      %p227 = scmp.ne.s32.totalorder %s218, %s219
      %p228 = scmp.eq.s32.totalorder %s40, 0
      %p229 = por %p227, %p228
      %p230 = scmp.ne.s32.totalorder %s218, %s219
      %p231 = scmp.eq.s32.totalorder %s41, 3
      %p232 = por %p230, %p231
      %p234 = scmp.ne.s32.totalorder %s219, %s233
      %p235 = scmp.eq.s32.totalorder %s41, 0
      %p236 = por %p234, %p235
      %s238 = sadd.s32 %s237, 1
      %p241 = scmp.eq.s32.totalorder %s35, 3
      %p242 = scmp.ne.s32.totalorder %s237, %s239
      %p243 = scmp.eq.s32.totalorder %s35, 0
      %p244 = por %p242, %p243
      %p245 = scmp.ne.s32.totalorder %s237, %s239
      %p246 = scmp.eq.s32.totalorder %s40, 3
      %p247 = por %p245, %p246
      %p248 = scmp.ne.s32.totalorder %s239, %s240
      %p249 = scmp.eq.s32.totalorder %s40, 0
      %p250 = por %p248, %p249
      %p251 = scmp.ne.s32.totalorder %s239, %s240
      %p252 = scmp.eq.s32.totalorder %s41, 3
      %p253 = por %p251, %p252
      %p255 = scmp.ne.s32.totalorder %s240, %s254
      %p256 = scmp.eq.s32.totalorder %s41, 0
      %p257 = por %p255, %p256
      %s259 = sadd.s32 %s258, 1
      %p262 = scmp.eq.s32.totalorder %s35, 3
      %p263 = scmp.ne.s32.totalorder %s258, %s260
      %p264 = scmp.eq.s32.totalorder %s35, 0
      %p265 = por %p263, %p264
      %p266 = scmp.ne.s32.totalorder %s258, %s260
      %p267 = scmp.eq.s32.totalorder %s40, 3
      %p268 = por %p266, %p267
      %p269 = scmp.ne.s32.totalorder %s260, %s261
      %p270 = scmp.eq.s32.totalorder %s40, 0
      %p271 = por %p269, %p270
      %p272 = scmp.ne.s32.totalorder %s260, %s261
      %p273 = scmp.eq.s32.totalorder %s41, 3
      %p274 = por %p272, %p273
      %p276 = scmp.ne.s32.totalorder %s261, %s275
      %p277 = scmp.eq.s32.totalorder %s41, 0
      %p278 = por %p276, %p277
      %s280 = sadd.s32 %s279, 1
      %p283 = scmp.eq.s32.totalorder %s35, 3
      %p284 = scmp.ne.s32.totalorder %s279, %s281
      %p285 = scmp.eq.s32.totalorder %s35, 0
      %p286 = por %p284, %p285
      %p287 = scmp.ne.s32.totalorder %s279, %s281
      %p288 = scmp.eq.s32.totalorder %s40, 3
      %p289 = por %p287, %p288
      %p290 = scmp.ne.s32.totalorder %s281, %s282
      %p291 = scmp.eq.s32.totalorder %s40, 0
      %p292 = por %p290, %p291
      %p293 = scmp.ne.s32.totalorder %s281, %s282
      %p294 = scmp.eq.s32.totalorder %s41, 3
      %p295 = por %p293, %p294
      %p297 = scmp.ne.s32.totalorder %s282, %s296
      %p298 = scmp.eq.s32.totalorder %s41, 0
      %p299 = por %p297, %p298
      %s301 = sadd.s32 %s300, 1
      %p304 = scmp.eq.s32.totalorder %s35, 3
      %p305 = scmp.ne.s32.totalorder %s300, %s302
      %p306 = scmp.eq.s32.totalorder %s35, 0
      %p307 = por %p305, %p306
      %p308 = scmp.ne.s32.totalorder %s300, %s302
      %p309 = scmp.eq.s32.totalorder %s40, 3
      %p310 = por %p308, %p309
      %p311 = scmp.ne.s32.totalorder %s302, %s303
      %p312 = scmp.eq.s32.totalorder %s40, 0
      %p313 = por %p311, %p312
      %p314 = scmp.ne.s32.totalorder %s302, %s303
      %p315 = scmp.eq.s32.totalorder %s41, 3
      %p316 = por %p314, %p315
      %p318 = scmp.ne.s32.totalorder %s303, %s317
      %p319 = scmp.eq.s32.totalorder %s41, 0
      %p320 = por %p318, %p319
      %s322 = sadd.s32 %s321, 1
      %p325 = scmp.eq.s32.totalorder %s35, 3
      %p326 = scmp.ne.s32.totalorder %s321, %s323
      %p327 = scmp.eq.s32.totalorder %s35, 0
      %p328 = por %p326, %p327
      %p329 = scmp.ne.s32.totalorder %s321, %s323
      %p330 = scmp.eq.s32.totalorder %s40, 3
      %p331 = por %p329, %p330
      %p332 = scmp.ne.s32.totalorder %s323, %s324
      %p333 = scmp.eq.s32.totalorder %s40, 0
      %p334 = por %p332, %p333
      %p335 = scmp.ne.s32.totalorder %s323, %s324
      %p336 = scmp.eq.s32.totalorder %s41, 3
      %p337 = por %p335, %p336
      %p339 = scmp.ne.s32.totalorder %s324, %s338
      %p340 = scmp.eq.s32.totalorder %s41, 0
      %p341 = por %p339, %p340
      %s343 = sadd.s32 %s342, 1
      %p346 = scmp.eq.s32.totalorder %s35, 3
      %p347 = scmp.ne.s32.totalorder %s342, %s344
      %p348 = scmp.eq.s32.totalorder %s35, 0
      %p349 = por %p347, %p348
      %p350 = scmp.ne.s32.totalorder %s342, %s344
      %p351 = scmp.eq.s32.totalorder %s40, 3
      %p352 = por %p350, %p351
      %p353 = scmp.ne.s32.totalorder %s344, %s345
      %p354 = scmp.eq.s32.totalorder %s40, 0
      %p355 = por %p353, %p354
      %p356 = scmp.ne.s32.totalorder %s344, %s345
      %p357 = scmp.eq.s32.totalorder %s41, 3
      %p358 = por %p356, %p357
      %p360 = scmp.ne.s32.totalorder %s345, %s359
      %p361 = scmp.eq.s32.totalorder %s41, 0
      %p362 = por %p360, %p361
      %s363 = ssub.s32 %s42, %s54
      %s364 = ssub.s32 %s43, %s50
      %s365 = sor.u32 %s363, %s364
      %p366 = scmp.eq.s32.totalorder %s365, 0
      %s368 = sadd.s32 %s367, 1
      %s369 = scalar_select %p366, %s367, %s368
      %p372 = pneg %p366
      %p373 = scmp.eq.s32.totalorder %s35, 3
      %p374 = por %p372, %p373
      %p375 = scmp.ne.s32.totalorder %s367, %s370
      %p376 = scmp.eq.s32.totalorder %s35, 0
      %p377 = por %p375, %p376
      %p378 = scmp.ne.s32.totalorder %s367, %s370
      %p379 = scmp.eq.s32.totalorder %s40, 3
      %p380 = por %p378, %p379
      %p381 = scmp.ne.s32.totalorder %s370, %s371
      %p382 = scmp.eq.s32.totalorder %s40, 0
      %p383 = por %p381, %p382
      %p384 = scmp.ne.s32.totalorder %s370, %s371
      %p385 = scmp.eq.s32.totalorder %s41, 3
      %p386 = por %p384, %p385
      %p388 = scmp.ne.s32.totalorder %s371, %s387
      %p389 = scmp.eq.s32.totalorder %s41, 0
      %p390 = por %p388, %p389
      %p391 = scmp.le.s32.totalorder 1, %s35
      %p392 = scmp.lt.s32.totalorder %s35, 5
      %p393 = pnand %p391, %p392
      %p394 = pneg %p393
      // Predicated region
      $region9: #{tpu_custom_call.1} parent=5 // pred_check
        _
      $region10: #{tpu_custom_call.1} parent=5 // pred_check_branch
        %396 = sbr.rel (%p393) target = $region12
      $region11: #{tpu_custom_call.1} parent=5 // pred_region
        %s397 = ssub.s32 %s35, 1
        // Predicated region
        $region13: #{tpu_custom_call.1} parent=11 // pred_check
          %p398 = pneg %p68
        $region14: #{tpu_custom_call.1} parent=11 // pred_check_branch
          %400 = sbr.rel (%p398) target = $region16
        $region15: #{tpu_custom_call.1} parent=11 // pred_region
          %s402 = ssub.s32 16, 16
          %403 = vsyncadd [#allocation6], %s402
          %406 = dma.hbm_to_smem %s0, 16, [#allocation3], [#allocation6]
        $region16: #{tpu_custom_call.1} parent=11 // pred_fallthru
          _
        // Predicated region
        $region17: #{tpu_custom_call.1} parent=11 // pred_check
          %p407 = pneg %p145
        $region18: #{tpu_custom_call.1} parent=11 // pred_check_branch
          %409 = sbr.rel (%p407) target = $region20
        $region19: #{tpu_custom_call.1} parent=11 // pred_region
          %s411 = ssub.s32 2560, 2560
          %412 = vsyncadd [#allocation9], %s411
          %s413 = sshll.u32 [#allocation10], 4
          %s414 = int_to_ptr.vmem [resolvable:$true] %s413
          %419 = dma.hbm_to_vmem [thread:$0]  %s3, 2560, %s414, [#allocation9], 128, 128, 8
        $region20: #{tpu_custom_call.1} parent=11 // pred_fallthru
          _
        // Predicated region
        $region21: #{tpu_custom_call.1} parent=11 // pred_check
          %p420 = pneg %p166
        $region22: #{tpu_custom_call.1} parent=11 // pred_check_branch
          %422 = sbr.rel (%p420) target = $region24
        $region23: #{tpu_custom_call.1} parent=11 // pred_region
          %s424 = ssub.s32 2560, 2560
          %425 = vsyncadd [#allocation12], %s424
          %s426 = sshll.u32 [#allocation11], 4
          %s427 = int_to_ptr.vmem [resolvable:$true] %s426
          %432 = dma.hbm_to_vmem [thread:$0]  %s4, 2560, %s427, [#allocation12], 128, 128, 8
        $region24: #{tpu_custom_call.1} parent=11 // pred_fallthru
          _
        // Predicated region
        $region25: #{tpu_custom_call.1} parent=11 // pred_check
          %p433 = pneg %p187
        $region26: #{tpu_custom_call.1} parent=11 // pred_check_branch
          %435 = sbr.rel (%p433) target = $region28
        $region27: #{tpu_custom_call.1} parent=11 // pred_region
          %s437 = ssub.s32 128, 128
          %438 = vsyncadd [#allocation12], %s437
          %s439 = sshll.u32 [#allocation13], 4
          %s440 = int_to_ptr.vmem [resolvable:$true] %s439
          %445 = dma.hbm_to_vmem [thread:$0]  %s5, 128, %s440, [#allocation12], 64, 64, 4
        $region28: #{tpu_custom_call.1} parent=11 // pred_fallthru
          _
        // Predicated region
        $region29: #{tpu_custom_call.1} parent=11 // pred_check
          %p446 = pneg %p208
        $region30: #{tpu_custom_call.1} parent=11 // pred_check_branch
          %448 = sbr.rel (%p446) target = $region32
        $region31: #{tpu_custom_call.1} parent=11 // pred_region
          %s450 = ssub.s32 288, 288
          %451 = vsyncadd [#allocation15], %s450
          %s452 = sshll.u32 [#allocation14], 4
          %s453 = int_to_ptr.vmem [resolvable:$true] %s452
          %458 = dma.hbm_to_vmem [thread:$0]  %s6, 288, %s453, [#allocation15], 32, 32, 2
        $region32: #{tpu_custom_call.1} parent=11 // pred_fallthru
          _
        // Predicated region
        $region33: #{tpu_custom_call.1} parent=11 // pred_check
          %p459 = pneg %p229
        $region34: #{tpu_custom_call.1} parent=11 // pred_check_branch
          %461 = sbr.rel (%p459) target = $region36
        $region35: #{tpu_custom_call.1} parent=11 // pred_region
          %s463 = ssub.s32 32, 32
          %464 = vsyncadd [#allocation15], %s463
          %s466 = sshll.u32 [#allocation16], 4
          %s467 = int_to_ptr.vmem [resolvable:$true] %s466
          %469 = dma.hbm_to_vmem [thread:$0]  %s7, 32, %s467, [#allocation15]
        $region36: #{tpu_custom_call.1} parent=11 // pred_fallthru
          _
        // Predicated region
        $region37: #{tpu_custom_call.1} parent=11 // pred_check
          %p470 = pneg %p250
        $region38: #{tpu_custom_call.1} parent=11 // pred_check_branch
          %472 = sbr.rel (%p470) target = $region40
        $region39: #{tpu_custom_call.1} parent=11 // pred_region
          %s474 = ssub.s32 16, 16
          %475 = vsyncadd [#allocation18], %s474
          %s477 = sshll.u32 [#allocation17], 4
          %s478 = int_to_ptr.vmem [resolvable:$true] %s477
          %480 = dma.hbm_to_vmem [thread:$0]  %s8, 16, %s478, [#allocation18]
        $region40: #{tpu_custom_call.1} parent=11 // pred_fallthru
          _
        // Predicated region
        $region41: #{tpu_custom_call.1} parent=11 // pred_check
          %p481 = pneg %p271
        $region42: #{tpu_custom_call.1} parent=11 // pred_check_branch
          %483 = sbr.rel (%p481) target = $region44
        $region43: #{tpu_custom_call.1} parent=11 // pred_region
          %s485 = ssub.s32 16, 16
          %486 = vsyncadd [#allocation18], %s485
          %s488 = sshll.u32 [#allocation19], 4
          %s489 = int_to_ptr.vmem [resolvable:$true] %s488
          %491 = dma.hbm_to_vmem [thread:$0]  %s9, 16, %s489, [#allocation18]
        $region44: #{tpu_custom_call.1} parent=11 // pred_fallthru
          _
        // Predicated region
        $region45: #{tpu_custom_call.1} parent=11 // pred_check
          %p492 = pneg %p292
        $region46: #{tpu_custom_call.1} parent=11 // pred_check_branch
          %494 = sbr.rel (%p492) target = $region48
        $region47: #{tpu_custom_call.1} parent=11 // pred_region
          %s496 = ssub.s32 16, 16
          %497 = vsyncadd [#allocation21], %s496
          %s499 = sshll.u32 [#allocation20], 4
          %s500 = int_to_ptr.vmem [resolvable:$true] %s499
          %502 = dma.hbm_to_vmem [thread:$0]  %s10, 16, %s500, [#allocation21]
        $region48: #{tpu_custom_call.1} parent=11 // pred_fallthru
          _
        // Predicated region
        $region49: #{tpu_custom_call.1} parent=11 // pred_check
          %p503 = pneg %p313
        $region50: #{tpu_custom_call.1} parent=11 // pred_check_branch
          %505 = sbr.rel (%p503) target = $region52
        $region51: #{tpu_custom_call.1} parent=11 // pred_region
          %s507 = ssub.s32 16, 16
          %508 = vsyncadd [#allocation21], %s507
          %s510 = sshll.u32 [#allocation22], 4
          %s511 = int_to_ptr.vmem [resolvable:$true] %s510
          %513 = dma.hbm_to_vmem [thread:$0]  %s11, 16, %s511, [#allocation21]
        $region52: #{tpu_custom_call.1} parent=11 // pred_fallthru
          _
        // Predicated region
        $region53: #{tpu_custom_call.1} parent=11 // pred_check
          %p514 = pneg %p334
        $region54: #{tpu_custom_call.1} parent=11 // pred_check_branch
          %516 = sbr.rel (%p514) target = $region56
        $region55: #{tpu_custom_call.1} parent=11 // pred_region
          %s518 = ssub.s32 16, 16
          %519 = vsyncadd [#allocation24], %s518
          %s521 = sshll.u32 [#allocation23], 4
          %s522 = int_to_ptr.vmem [resolvable:$true] %s521
          %524 = dma.hbm_to_vmem [thread:$0]  %s12, 16, %s522, [#allocation24]
        $region56: #{tpu_custom_call.1} parent=11 // pred_fallthru
          _
        // Predicated region
        $region57: #{tpu_custom_call.1} parent=11 // pred_check
          %p525 = pneg %p355
        $region58: #{tpu_custom_call.1} parent=11 // pred_check_branch
          %527 = sbr.rel (%p525) target = $region60
        $region59: #{tpu_custom_call.1} parent=11 // pred_region
          %s529 = ssub.s32 16, 16
          %530 = vsyncadd [#allocation24], %s529
          %s532 = sshll.u32 [#allocation25], 4
          %s533 = int_to_ptr.vmem [resolvable:$true] %s532
          %535 = dma.hbm_to_vmem [thread:$0]  %s13, 16, %s533, [#allocation24]
        $region60: #{tpu_custom_call.1} parent=11 // pred_fallthru
          _
      $region12: #{tpu_custom_call.1} parent=5 // pred_fallthru
        _
      %p536 = scmp.lt.s32.totalorder %s35, 4
      // Predicated region
      $region61: #{tpu_custom_call.1} parent=5 // pred_check
        %p537 = pneg %p536
      $region62: #{tpu_custom_call.1} parent=5 // pred_check_branch
        %539 = sbr.rel (%p537) target = $region64
      $region63: #{tpu_custom_call.1} parent=5 // pred_region
        // Predicated region
        $region65: #{tpu_custom_call.1} parent=63 // pred_check
          %p540 = pneg %p90
        $region66: #{tpu_custom_call.1} parent=63 // pred_check_branch
          %542 = sbr.rel (%p540) target = $region68
        $region67: #{tpu_custom_call.1} parent=63 // pred_region
          %s543 = sand.u32 %s80, 1
          %s544 = scalar_lea.sflag [#allocation4], %s543
          %s545 = sand.u32 %s80, 1
          %s546 = smul.addr %s545, 128
          %s547 = scalar_lea.vmem [#allocation7], %s546
          %s548 = smul.u32 16, %s43
          %s550 = ssub.s32 2048, 2048
          %551 = vsyncadd %s544, %s550
          %s552 = smul.addr %s42, 32
          %s553 = sadd.s32 %s548, %s552
          %s554 = smul.addr %s553, 128
          %s555 = scalar_lea.hbm %s1, %s554
          %s556 = sshll.u32 %s547, 4
          %s557 = int_to_ptr.vmem [resolvable:$true] %s556
          %562 = dma.hbm_to_vmem [thread:$0]  %s555, 2048, %s557, %s544, 128, 128, 8
        $region68: #{tpu_custom_call.1} parent=63 // pred_fallthru
          _
        // Predicated region
        $region69: #{tpu_custom_call.1} parent=63 // pred_check
          %p563 = pneg %p118
        $region70: #{tpu_custom_call.1} parent=63 // pred_check_branch
          %565 = sbr.rel (%p563) target = $region72
        $region71: #{tpu_custom_call.1} parent=63 // pred_region
          %s566 = sand.u32 %s35, 1
          %s567 = scalar_lea.sflag [#allocation9], %s566
          %s568 = sand.u32 %s108, 1
          %s569 = smul.addr %s568, 32
          %s570 = scalar_lea.vmem [#allocation8], %s569
          %s572 = ssub.s32 512, 512
          %573 = vsyncadd %s567, %s572
          %s574 = smul.addr %s43, 4
          %s575 = smul.addr %s42, 8
          %s576 = sadd.s32 %s574, %s575
          %s577 = smul.addr %s576, 128
          %s578 = scalar_lea.hbm %s2, %s577
          %s579 = sshll.u32 %s570, 4
          %s580 = int_to_ptr.vmem [resolvable:$true] %s579
          %585 = dma.hbm_to_vmem [thread:$0]  %s578, 512, %s580, %s567, 128, 128, 8
        $region72: #{tpu_custom_call.1} parent=63 // pred_fallthru
          _
      $region64: #{tpu_custom_call.1} parent=5 // pred_fallthru
        _
      %p586 = scmp.le.s32.totalorder 1, %s35
      %p587 = scmp.lt.s32.totalorder %s35, 5
      %p588 = pnand %p586, %p587
      %p589 = pneg %p588
      // Predicated region
      $region73: #{tpu_custom_call.1} parent=5 // pred_check
        _
      $region74: #{tpu_custom_call.1} parent=5 // pred_check_branch
        %591 = sbr.rel (%p588) target = $region76
      $region75: #{tpu_custom_call.1} parent=5 // pred_region
        %s592 = ssub.s32 %s35, 1
        // Predicated region
        $region77: #{tpu_custom_call.1} parent=75 // pred_check
          %p593 = pneg %p68
        $region78: #{tpu_custom_call.1} parent=75 // pred_check_branch
          %595 = sbr.rel (%p593) target = $region80
        $region79: #{tpu_custom_call.1} parent=75 // pred_region
          %596 = dma.done [#allocation6], 16
        $region80: #{tpu_custom_call.1} parent=75 // pred_fallthru
          _
        %s597 = sand.u32 %s83, 1
        %s598 = scalar_lea.sflag [#allocation4], %s597
        %s599 = sand.u32 %s83, 1
        %s600 = smul.addr %s599, 128
        %s601 = scalar_lea.vmem [#allocation7], %s600
        // Predicated region
        $region81: #{tpu_custom_call.1} parent=75 // pred_check
          %p602 = pneg %p96
        $region82: #{tpu_custom_call.1} parent=75 // pred_check_branch
          %604 = sbr.rel (%p602) target = $region84
        $region83: #{tpu_custom_call.1} parent=75 // pred_region
          %605 = dma.done %s598, 2048
        $region84: #{tpu_custom_call.1} parent=75 // pred_fallthru
          _
        %s606 = sand.u32 %s40, 1
        %s607 = scalar_lea.sflag [#allocation9], %s606
        %s608 = sand.u32 %s111, 1
        %s609 = smul.addr %s608, 32
        %s610 = scalar_lea.vmem [#allocation8], %s609
        // Predicated region
        $region85: #{tpu_custom_call.1} parent=75 // pred_check
          %p611 = pneg %p124
        $region86: #{tpu_custom_call.1} parent=75 // pred_check_branch
          %613 = sbr.rel (%p611) target = $region88
        $region87: #{tpu_custom_call.1} parent=75 // pred_region
          %614 = dma.done %s607, 512
        $region88: #{tpu_custom_call.1} parent=75 // pred_fallthru
          _
        // Predicated region
        $region89: #{tpu_custom_call.1} parent=75 // pred_check
          %p615 = pneg %p145
        $region90: #{tpu_custom_call.1} parent=75 // pred_check_branch
          %617 = sbr.rel (%p615) target = $region92
        $region91: #{tpu_custom_call.1} parent=75 // pred_region
          %618 = dma.done [#allocation9], 2560
        $region92: #{tpu_custom_call.1} parent=75 // pred_fallthru
          _
        // Predicated region
        $region93: #{tpu_custom_call.1} parent=75 // pred_check
          %p619 = pneg %p166
        $region94: #{tpu_custom_call.1} parent=75 // pred_check_branch
          %621 = sbr.rel (%p619) target = $region96
        $region95: #{tpu_custom_call.1} parent=75 // pred_region
          %622 = dma.done [#allocation12], 2560
        $region96: #{tpu_custom_call.1} parent=75 // pred_fallthru
          _
        // Predicated region
        $region97: #{tpu_custom_call.1} parent=75 // pred_check
          %p623 = pneg %p187
        $region98: #{tpu_custom_call.1} parent=75 // pred_check_branch
          %625 = sbr.rel (%p623) target = $region100
        $region99: #{tpu_custom_call.1} parent=75 // pred_region
          %626 = dma.done [#allocation12], 128
        $region100: #{tpu_custom_call.1} parent=75 // pred_fallthru
          _
        // Predicated region
        $region101: #{tpu_custom_call.1} parent=75 // pred_check
          %p627 = pneg %p208
        $region102: #{tpu_custom_call.1} parent=75 // pred_check_branch
          %629 = sbr.rel (%p627) target = $region104
        $region103: #{tpu_custom_call.1} parent=75 // pred_region
          %630 = dma.done [#allocation15], 288
        $region104: #{tpu_custom_call.1} parent=75 // pred_fallthru
          _
        // Predicated region
        $region105: #{tpu_custom_call.1} parent=75 // pred_check
          %p631 = pneg %p229
        $region106: #{tpu_custom_call.1} parent=75 // pred_check_branch
          %633 = sbr.rel (%p631) target = $region108
        $region107: #{tpu_custom_call.1} parent=75 // pred_region
          %634 = dma.done [#allocation15], 32
        $region108: #{tpu_custom_call.1} parent=75 // pred_fallthru
          _
        // Predicated region
        $region109: #{tpu_custom_call.1} parent=75 // pred_check
          %p635 = pneg %p250
        $region110: #{tpu_custom_call.1} parent=75 // pred_check_branch
          %637 = sbr.rel (%p635) target = $region112
        $region111: #{tpu_custom_call.1} parent=75 // pred_region
          %638 = dma.done [#allocation18], 16
        $region112: #{tpu_custom_call.1} parent=75 // pred_fallthru
          _
        // Predicated region
        $region113: #{tpu_custom_call.1} parent=75 // pred_check
          %p639 = pneg %p271
        $region114: #{tpu_custom_call.1} parent=75 // pred_check_branch
          %641 = sbr.rel (%p639) target = $region116
        $region115: #{tpu_custom_call.1} parent=75 // pred_region
          %642 = dma.done [#allocation18], 16
        $region116: #{tpu_custom_call.1} parent=75 // pred_fallthru
          _
        // Predicated region
        $region117: #{tpu_custom_call.1} parent=75 // pred_check
          %p643 = pneg %p292
        $region118: #{tpu_custom_call.1} parent=75 // pred_check_branch
          %645 = sbr.rel (%p643) target = $region120
        $region119: #{tpu_custom_call.1} parent=75 // pred_region
          %646 = dma.done [#allocation21], 16
        $region120: #{tpu_custom_call.1} parent=75 // pred_fallthru
          _
        // Predicated region
        $region121: #{tpu_custom_call.1} parent=75 // pred_check
          %p647 = pneg %p313
        $region122: #{tpu_custom_call.1} parent=75 // pred_check_branch
          %649 = sbr.rel (%p647) target = $region124
        $region123: #{tpu_custom_call.1} parent=75 // pred_region
          %650 = dma.done [#allocation21], 16
        $region124: #{tpu_custom_call.1} parent=75 // pred_fallthru
          _
        // Predicated region
        $region125: #{tpu_custom_call.1} parent=75 // pred_check
          %p651 = pneg %p334
        $region126: #{tpu_custom_call.1} parent=75 // pred_check_branch
          %653 = sbr.rel (%p651) target = $region128
        $region127: #{tpu_custom_call.1} parent=75 // pred_region
          %654 = dma.done [#allocation24], 16
        $region128: #{tpu_custom_call.1} parent=75 // pred_fallthru
          _
        // Predicated region
        $region129: #{tpu_custom_call.1} parent=75 // pred_check
          %p655 = pneg %p355
        $region130: #{tpu_custom_call.1} parent=75 // pred_check_branch
          %657 = sbr.rel (%p655) target = $region132
        $region131: #{tpu_custom_call.1} parent=75 // pred_region
          %658 = dma.done [#allocation24], 16
        $region132: #{tpu_custom_call.1} parent=75 // pred_fallthru
          _
        %659 = sfence
        %p660 = pneg %p68
        %p661 = pneg %p65
        %s662 = sand.u32 %s83, 1
        %s663 = scalar_lea.sflag [#allocation4], %s662
        %s664 = sand.u32 %s83, 1
        %s665 = smul.addr %s664, 128
        %s666 = scalar_lea.vmem [#allocation7], %s665
        %p667 = pneg %p96
        %p668 = pneg %p93
        %s669 = sand.u32 %s40, 1
        %s670 = scalar_lea.sflag [#allocation9], %s669
        %s671 = sand.u32 %s111, 1
        %s672 = smul.addr %s671, 32
        %s673 = scalar_lea.vmem [#allocation8], %s672
        %p674 = pneg %p124
        %p675 = pneg %p121
        %p676 = pneg %p145
        %p677 = pneg %p142
        %p678 = pneg %p166
        %p679 = pneg %p163
        %p680 = pneg %p187
        %p681 = pneg %p184
        %p682 = pneg %p208
        %p683 = pneg %p205
        %p684 = pneg %p229
        %p685 = pneg %p226
        %p686 = pneg %p250
        %p687 = pneg %p247
        %p688 = pneg %p271
        %p689 = pneg %p268
        %p690 = pneg %p292
        %p691 = pneg %p289
        %p692 = pneg %p313
        %p693 = pneg %p310
        %p694 = pneg %p334
        %p695 = pneg %p331
        %p696 = pneg %p355
        %p697 = pneg %p352
        %p698 = pneg %p383
        %p699 = pneg %p380
        %s700 = sand.u32 %s370, 1
        %s701 = scalar_lea.sflag [#allocation5], %s700
        %s702 = sand.u32 %s370, 1
        %s703 = smul.addr %s702, 128
        %s704 = scalar_lea.vmem [#allocation26], %s703
        %s705 = smul.u32 16, %s45
        %s706 = smul.u32 16, %s45
        %v708 = vld [vmem:[%s601] sm:$0xff]
        %v709 = vld [vmem:[%s601 + $0x8] sm:$0xff]
        %v710 = vld [vmem:[%s601 + $0x10] sm:$0xff]
        %v711 = vld [vmem:[%s601 + $0x18] sm:$0xff]
        %v712 = vld [vmem:[%s601 + $0x20] sm:$0xff]
        %v713 = vld [vmem:[%s601 + $0x28] sm:$0xff]
        %v714 = vld [vmem:[%s601 + $0x30] sm:$0xff]
        %v715 = vld [vmem:[%s601 + $0x38] sm:$0xff]
        %v716 = vld [vmem:[%s601 + $0x40] sm:$0xff]
        %v717 = vld [vmem:[%s601 + $0x48] sm:$0xff]
        %v718 = vld [vmem:[%s601 + $0x50] sm:$0xff]
        %v719 = vld [vmem:[%s601 + $0x58] sm:$0xff]
        %v720 = vld [vmem:[%s601 + $0x60] sm:$0xff]
        %v721 = vld [vmem:[%s601 + $0x68] sm:$0xff]
        %v722 = vld [vmem:[%s601 + $0x70] sm:$0xff]
        %v723 = vld [vmem:[%s601 + $0x78] sm:$0xff]
        %v724 = vld [vmem:[%s610] sm:$0xff]
        %v725 = vld [vmem:[%s610 + $0x8] sm:$0xff]
        %v726 = vld [vmem:[%s610 + $0x10] sm:$0xff]
        %v727 = vld [vmem:[%s610 + $0x18] sm:$0xff]
        %v728 = vpack.c.bf16 %v725, %v724
        %v729 = vpack.c.bf16 %v727, %v726
        %v730 = vld [vmem:[#allocation13] sm:$0xf]
        %v731 = vld [vmem:[#allocation13 + $0x4] sm:$0xf]
        %v734 = vunpack.c.l.b16 %v730
        %v735 = vunpack.c.l.b16 %v731
        %v736 = vpack.c.b16 %v735, %v734
        %vm738 = vcmask 130048
        %v740 = vsel %vm738, %v728, 0
        %v743 = vsel %vm738, %v729, 0
        %745 = vmatprep.subr.bf16.mxu0 0
        %746 = vmatpush1.bf16.msra.mxu0 %v736
        %747 = vmatprep.subr.bf16.mxu0 0
        %748 = vmatpush1.bf16.msra.mxu0 0
        %749 = vmatprep.subr.bf16.mxu0 0
        %750 = vmatpush1.bf16.msra.mxu0 0
        %751 = vmatprep.subr.bf16.mxu0 0
        %752 = vmatpush1.bf16.msra.mxu0 0
        %753 = vmatprep.subr.bf16.mxu0 0
        %754 = vmatpush1.bf16.msra.mxu0 0
        %755 = vmatprep.subr.bf16.mxu0 0
        %756 = vmatpush1.bf16.msra.mxu0 0
        %757 = vmatprep.subr.bf16.mxu0 0
        %758 = vmatpush1.bf16.msra.mxu0 0
        %759 = vmatprep.subr.bf16.mxu0 0
        %760 = vmatpush1.bf16.msra.mxu0 0
        %761 = vmatprep.subr.bf16.mxu0 0
        %762 = vmatpush1.bf16.msra.mxu0 0
        %763 = vmatprep.subr.bf16.mxu0 0
        %764 = vmatpush1.bf16.msra.mxu0 0
        %765 = vmatprep.subr.bf16.mxu0 0
        %766 = vmatpush1.bf16.msra.mxu0 0
        %767 = vmatprep.subr.bf16.mxu0 0
        %768 = vmatpush1.bf16.msra.mxu0 0
        %769 = vmatprep.subr.bf16.mxu0 0
        %770 = vmatpush1.bf16.msra.mxu0 0
        %771 = vmatprep.subr.bf16.mxu0 0
        %772 = vmatpush1.bf16.msra.mxu0 0
        %773 = vmatprep.subr.bf16.mxu0 0
        %774 = vmatpush1.bf16.msra.mxu0 0
        %775 = vmatprep.subr.bf16.mxu0 0
        %776 = vmatpush1.bf16.msra.mxu0 0
        %777 = vmatprep.mubr.bf16.mxu0 0
        %778 = vmatmul.mubr.bf16.gmra.mrb[0].mxu0 %v740
        %v779 = vpop.f32.mrb[0].mxu0
        %v780 = vadd.f32 0.0, %v779
        %v781 = vpop.f32.mrb[0].mxu0
        %v782 = vpop.f32.mrb[0].mxu0
        %v783 = vadd.f32 0.0, %v782
        %v784 = vpop.f32.mrb[0].mxu0
        %785 = vmatprep.mubr.bf16.mxu0 0
        %786 = vmatmul.mubr.bf16.gmra.mrb[0].mxu0 %v743
        %v787 = vpop.f32.mrb[0].mxu0
        %v788 = vadd.f32 0.0, %v787
        %v789 = vpop.f32.mrb[0].mxu0
        %v790 = vpop.f32.mrb[0].mxu0
        %v791 = vadd.f32 0.0, %v790
        %v792 = vpop.f32.mrb[0].mxu0
        %793 = vdwg.mxu0
        %v794 = vld [vmem:[#allocation17] sm:$0x1]
        %v796 = vlaneseq
        %v797 = vshrl.u32 %v796, 7
        %v798 = vsub.s32 0, %v797
        %v799 = vrot.slane %v794, %v798
        %v801 = vmul.f32 %v780, %v799
        %v802 = vmul.f32 %v783, %v799
        %v803 = vmul.f32 %v788, %v799
        %v804 = vmul.f32 %v791, %v799
        %v805 = vld [vmem:[#allocation19] sm:$0x1]
        %v807 = vlaneseq
        %v808 = vshrl.u32 %v807, 7
        %v809 = vsub.s32 0, %v808
        %v810 = vrot.slane %v805, %v809
        %v812 = vadd.f32 %v801, %v810
        %v813 = vadd.f32 %v802, %v810
        %v814 = vadd.f32 %v803, %v810
        %v815 = vadd.f32 %v804, %v810
        %s816 = sld [smem:[#allocation3]]
        %s817 = sld [smem:[#allocation3 + $0x1]]
        %s818 = sld [smem:[#allocation3 + $0x2]]
        %s819 = sld [smem:[#allocation3 + $0x3]]
        %v820 = vstv %s816
        %v821 = vmax.f32 %v812, %v820
        %v822 = vmax.f32 %v813, %v820
        %v823 = vmax.f32 %v814, %v820
        %v824 = vmax.f32 %v815, %v820
        %v825 = vlog2.pop %v821
        %v826 = vmul.f32 %v825, 0.6931472
        %v827 = vlog2.pop %v822
        %v828 = vmul.f32 %v827, 0.6931472
        %v829 = vlog2.pop %v823
        %v830 = vmul.f32 %v829, 0.6931472
        %v831 = vlog2.pop %v824
        %v832 = vmul.f32 %v831, 0.6931472
        %v833 = vstv %s817
        %v834 = vsub.f32 %v826, %v833
        %v835 = vsub.f32 %v828, %v833
        %v836 = vsub.f32 %v830, %v833
        %v837 = vsub.f32 %v832, %v833
        %v838 = vand.u32 2147483647, %v834
        %vm839 = vcmp.le.f32.partialorder %v838, 0.7853982
        %vm840 = vcmp.lt.s32.totalorder %v834, 0
        %v841 = vand.u32 %v834, 2139095040
        %v842 = vshrl.u32 %v841, 23
        %v843 = vsub.s32 %v842, 127
        %v844 = vand.u32 2147483647, %v834
        %v845 = vand.u32 %v844, 8388607
        %v846 = vor.u32 %v845, 8388608
        %v847 = vsub.s32 0, %v846
        %v848 = vadd.s32 %v843, 1
        %vm849 = vcmp.gt.s32.totalorder %v848, 0
        %v850 = vsel %vm849, %v848, 0
        %v851 = vshrl.u32 %v850, 5
        %v852 = vand.u32 %v850, 31
        %v853 = vsub.s32 32, %v852
        %v854 = vshrl.u32 683565275, %v853
        %v855 = vshll.u32 683565275, %v852
        %v856 = vshrl.u32 2475754826, %v853
        %v857 = vor.u32 %v855, %v856
        %v858 = vshll.u32 2475754826, %v852
        %v859 = vshrl.u32 2131351028, %v853
        %v860 = vor.u32 %v858, %v859
        %v861 = vshll.u32 2131351028, %v852
        %v862 = vshrl.u32 2102212464, %v853
        %v863 = vor.u32 %v861, %v862
        %v864 = vshll.u32 2102212464, %v852
        %v865 = vshrl.u32 920167782, %v853
        %v866 = vor.u32 %v864, %v865
        %v867 = vshll.u32 920167782, %v852
        %v868 = vshrl.u32 1326507024, %v853
        %v869 = vor.u32 %v867, %v868
        %vm870 = vcmp.lt.s32.totalorder %v851, 1
        %vm871 = vcmp.lt.s32.totalorder %v851, 2
        %vm872 = vcmp.lt.s32.totalorder %v851, 3
        %vm873 = vcmp.lt.s32.totalorder %v851, 4
        %v874 = vsel %vm870, %v854, %v857
        %v875 = vsel %vm873, %v863, 2102212464
        %v876 = vsel %vm872, %v860, %v875
        %v877 = vsel %vm871, %v874, %v876
        %v878 = vsel %vm870, %v857, %v860
        %v879 = vsel %vm873, %v866, 920167782
        %v880 = vsel %vm872, %v863, %v879
        %v881 = vsel %vm871, %v878, %v880
        %v882 = vsel %vm870, %v860, %v863
        %v883 = vsel %vm873, %v869, 1326507024
        %v884 = vsel %vm872, %v866, %v883
        %v885 = vsel %vm871, %v882, %v884
        %v886 = vshll.u32 %v846, 8
        %v887 = vmul.u32.u64.compose %v886, %v885
        %v888 = vextract.low.u32 %v887
        %v889 = vextract.high.u32 %v887
        %v890 = vmul.u32.u64.compose %v886, %v881
        %v891 = vextract.low.u32 %v890
        %v892 = vextract.high.u32 %v890
        %v893 = vmul.u32 %v886, %v877
        %v894 = vadd.s32 %v889, %v891
        %vm895 = vc.u32 %v889, %v891
        %v896 = vadd.s32 %v892, 1
        %v897 = vsel %vm895, %v896, %v892
        %v898 = vadd.s32 %v893, %v897
        %v899 = vadd.s32 %v898, 536870912
        %v900 = vshrl.u32 %v899, 30
        %v901 = vshll.u32 %v900, 30
        %v902 = vsub.s32 %v898, %v901
        %vm903 = vcmp.lt.s32.totalorder %v902, 0
        %v904 = vsub.s32 0, %v902
        %v905 = vsel %vm903, %v904, %v902
        %v906 = vclz %v905
        %v907 = vsub.s32 %v906, 2
        %vm908 = vcmp.gt.s32.totalorder 0, %v907
        %v909 = vsel %vm908, 0, %v907
        %v910 = vsub.s32 32, %v909
        %v911 = vshll.u32 %v902, %v909
        %v912 = vshrl.u32 %v894, %v910
        %v913 = vor.u32 %v911, %v912
        %v914 = vsub.s32 4294967266, %v909
        %v915 = vadd.s32 %v914, 127
        %v916 = vshll.u32 %v915, 23
        %v917 = vor.u32 4788187, %v916
        %v918 = vand.u32 2147483647, %v917
        %v920 = vcvt.s32.f32 %v913
        %v921 = vmul.f32 %v920, %v918
        %v922 = vxor.u32 %v921, 2147483648
        %v923 = vsel %vm840, %v922, %v921
        %v924 = vsub.s32 4, %v900
        %v925 = vsel %vm840, %v924, %v900
        %v926 = vsel %vm839, %v834, %v923
        %v927 = vsel %vm839, 0, %v925
        %v928 = vcosq.f32.pop %v926
        %v929 = vsinq.f32.pop %v926
        %vm930 = vweird.f32 %v834
        %v931 = vadd.s32 %v927, 3
        %v932 = vand.u32 %v931, 3
        %vm933 = vcmp.lt.s32.totalorder %v932, 2
        %vm934 = vcmp.eq.s32.totalorder %v932, 0
        %v935 = vxor.u32 %v929, 2147483648
        %v936 = vsel %vm934, %v928, %v935
        %vm937 = vcmp.eq.s32.totalorder %v932, 2
        %v938 = vxor.u32 %v928, 2147483648
        %v939 = vsel %vm937, %v938, %v929
        %v940 = vsel %vm933, %v936, %v939
        %v941 = vsel %vm930, nan, %v940
        %v942 = vand.u32 2147483647, %v835
        %vm943 = vcmp.le.f32.partialorder %v942, 0.7853982
        %vm944 = vcmp.lt.s32.totalorder %v835, 0
        %v945 = vand.u32 %v835, 2139095040
        %v946 = vshrl.u32 %v945, 23
        %v947 = vsub.s32 %v946, 127
        %v948 = vand.u32 2147483647, %v835
        %v949 = vand.u32 %v948, 8388607
        %v950 = vor.u32 %v949, 8388608
        %v951 = vsub.s32 0, %v950
        %v952 = vadd.s32 %v947, 1
        %vm953 = vcmp.gt.s32.totalorder %v952, 0
        %v954 = vsel %vm953, %v952, 0
        %v955 = vshrl.u32 %v954, 5
        %v956 = vand.u32 %v954, 31
        %v957 = vsub.s32 32, %v956
        %v958 = vshrl.u32 683565275, %v957
        %v959 = vshll.u32 683565275, %v956
        %v960 = vshrl.u32 2475754826, %v957
        %v961 = vor.u32 %v959, %v960
        %v962 = vshll.u32 2475754826, %v956
        %v963 = vshrl.u32 2131351028, %v957
        %v964 = vor.u32 %v962, %v963
        %v965 = vshll.u32 2131351028, %v956
        %v966 = vshrl.u32 2102212464, %v957
        %v967 = vor.u32 %v965, %v966
        %v968 = vshll.u32 2102212464, %v956
        %v969 = vshrl.u32 920167782, %v957
        %v970 = vor.u32 %v968, %v969
        %v971 = vshll.u32 920167782, %v956
        %v972 = vshrl.u32 1326507024, %v957
        %v973 = vor.u32 %v971, %v972
        %vm974 = vcmp.lt.s32.totalorder %v955, 1
        %vm975 = vcmp.lt.s32.totalorder %v955, 2
        %vm976 = vcmp.lt.s32.totalorder %v955, 3
        %vm977 = vcmp.lt.s32.totalorder %v955, 4
        %v978 = vsel %vm974, %v958, %v961
        %v979 = vsel %vm977, %v967, 2102212464
        %v980 = vsel %vm976, %v964, %v979
        %v981 = vsel %vm975, %v978, %v980
        %v982 = vsel %vm974, %v961, %v964
        %v983 = vsel %vm977, %v970, 920167782
        %v984 = vsel %vm976, %v967, %v983
        %v985 = vsel %vm975, %v982, %v984
        %v986 = vsel %vm974, %v964, %v967
        %v987 = vsel %vm977, %v973, 1326507024
        %v988 = vsel %vm976, %v970, %v987
        %v989 = vsel %vm975, %v986, %v988
        %v990 = vshll.u32 %v950, 8
        %v991 = vmul.u32.u64.compose %v990, %v989
        %v992 = vextract.low.u32 %v991
        %v993 = vextract.high.u32 %v991
        %v994 = vmul.u32.u64.compose %v990, %v985
        %v995 = vextract.low.u32 %v994
        %v996 = vextract.high.u32 %v994
        %v997 = vmul.u32 %v990, %v981
        %v998 = vadd.s32 %v993, %v995
        %vm999 = vc.u32 %v993, %v995
        %v1000 = vadd.s32 %v996, 1
        %v1001 = vsel %vm999, %v1000, %v996
        %v1002 = vadd.s32 %v997, %v1001
        %v1003 = vadd.s32 %v1002, 536870912
        %v1004 = vshrl.u32 %v1003, 30
        %v1005 = vshll.u32 %v1004, 30
        %v1006 = vsub.s32 %v1002, %v1005
        %vm1007 = vcmp.lt.s32.totalorder %v1006, 0
        %v1008 = vsub.s32 0, %v1006
        %v1009 = vsel %vm1007, %v1008, %v1006
        %v1010 = vclz %v1009
        %v1011 = vsub.s32 %v1010, 2
        %vm1012 = vcmp.gt.s32.totalorder 0, %v1011
        %v1013 = vsel %vm1012, 0, %v1011
        %v1014 = vsub.s32 32, %v1013
        %v1015 = vshll.u32 %v1006, %v1013
        %v1016 = vshrl.u32 %v998, %v1014
        %v1017 = vor.u32 %v1015, %v1016
        %v1018 = vsub.s32 4294967266, %v1013
        %v1019 = vadd.s32 %v1018, 127
        %v1020 = vshll.u32 %v1019, 23
        %v1021 = vor.u32 4788187, %v1020
        %v1022 = vand.u32 2147483647, %v1021
        %v1024 = vcvt.s32.f32 %v1017
        %v1025 = vmul.f32 %v1024, %v1022
        %v1026 = vxor.u32 %v1025, 2147483648
        %v1027 = vsel %vm944, %v1026, %v1025
        %v1028 = vsub.s32 4, %v1004
        %v1029 = vsel %vm944, %v1028, %v1004
        %v1030 = vsel %vm943, %v835, %v1027
        %v1031 = vsel %vm943, 0, %v1029
        %v1032 = vcosq.f32.pop %v1030
        %v1033 = vsinq.f32.pop %v1030
        %vm1034 = vweird.f32 %v835
        %v1035 = vadd.s32 %v1031, 3
        %v1036 = vand.u32 %v1035, 3
        %vm1037 = vcmp.lt.s32.totalorder %v1036, 2
        %vm1038 = vcmp.eq.s32.totalorder %v1036, 0
        %v1039 = vxor.u32 %v1033, 2147483648
        %v1040 = vsel %vm1038, %v1032, %v1039
        %vm1041 = vcmp.eq.s32.totalorder %v1036, 2
        %v1042 = vxor.u32 %v1032, 2147483648
        %v1043 = vsel %vm1041, %v1042, %v1033
        %v1044 = vsel %vm1037, %v1040, %v1043
        %v1045 = vsel %vm1034, nan, %v1044
        %v1046 = vand.u32 2147483647, %v836
        %vm1047 = vcmp.le.f32.partialorder %v1046, 0.7853982
        %vm1048 = vcmp.lt.s32.totalorder %v836, 0
        %v1049 = vand.u32 %v836, 2139095040
        %v1050 = vshrl.u32 %v1049, 23
        %v1051 = vsub.s32 %v1050, 127
        %v1052 = vand.u32 2147483647, %v836
        %v1053 = vand.u32 %v1052, 8388607
        %v1054 = vor.u32 %v1053, 8388608
        %v1055 = vsub.s32 0, %v1054
        %v1056 = vadd.s32 %v1051, 1
        %vm1057 = vcmp.gt.s32.totalorder %v1056, 0
        %v1058 = vsel %vm1057, %v1056, 0
        %v1059 = vshrl.u32 %v1058, 5
        %v1060 = vand.u32 %v1058, 31
        %v1061 = vsub.s32 32, %v1060
        %v1062 = vshrl.u32 683565275, %v1061
        %v1063 = vshll.u32 683565275, %v1060
        %v1064 = vshrl.u32 2475754826, %v1061
        %v1065 = vor.u32 %v1063, %v1064
        %v1066 = vshll.u32 2475754826, %v1060
        %v1067 = vshrl.u32 2131351028, %v1061
        %v1068 = vor.u32 %v1066, %v1067
        %v1069 = vshll.u32 2131351028, %v1060
        %v1070 = vshrl.u32 2102212464, %v1061
        %v1071 = vor.u32 %v1069, %v1070
        %v1072 = vshll.u32 2102212464, %v1060
        %v1073 = vshrl.u32 920167782, %v1061
        %v1074 = vor.u32 %v1072, %v1073
        %v1075 = vshll.u32 920167782, %v1060
        %v1076 = vshrl.u32 1326507024, %v1061
        %v1077 = vor.u32 %v1075, %v1076
        %vm1078 = vcmp.lt.s32.totalorder %v1059, 1
        %vm1079 = vcmp.lt.s32.totalorder %v1059, 2
        %vm1080 = vcmp.lt.s32.totalorder %v1059, 3
        %vm1081 = vcmp.lt.s32.totalorder %v1059, 4
        %v1082 = vsel %vm1078, %v1062, %v1065
        %v1083 = vsel %vm1081, %v1071, 2102212464
        %v1084 = vsel %vm1080, %v1068, %v1083
        %v1085 = vsel %vm1079, %v1082, %v1084
        %v1086 = vsel %vm1078, %v1065, %v1068
        %v1087 = vsel %vm1081, %v1074, 920167782
        %v1088 = vsel %vm1080, %v1071, %v1087
        %v1089 = vsel %vm1079, %v1086, %v1088
        %v1090 = vsel %vm1078, %v1068, %v1071
        %v1091 = vsel %vm1081, %v1077, 1326507024
        %v1092 = vsel %vm1080, %v1074, %v1091
        %v1093 = vsel %vm1079, %v1090, %v1092
        %v1094 = vshll.u32 %v1054, 8
        %v1095 = vmul.u32.u64.compose %v1094, %v1093
        %v1096 = vextract.low.u32 %v1095
        %v1097 = vextract.high.u32 %v1095
        %v1098 = vmul.u32.u64.compose %v1094, %v1089
        %v1099 = vextract.low.u32 %v1098
        %v1100 = vextract.high.u32 %v1098
        %v1101 = vmul.u32 %v1094, %v1085
        %v1102 = vadd.s32 %v1097, %v1099
        %vm1103 = vc.u32 %v1097, %v1099
        %v1104 = vadd.s32 %v1100, 1
        %v1105 = vsel %vm1103, %v1104, %v1100
        %v1106 = vadd.s32 %v1101, %v1105
        %v1107 = vadd.s32 %v1106, 536870912
        %v1108 = vshrl.u32 %v1107, 30
        %v1109 = vshll.u32 %v1108, 30
        %v1110 = vsub.s32 %v1106, %v1109
        %vm1111 = vcmp.lt.s32.totalorder %v1110, 0
        %v1112 = vsub.s32 0, %v1110
        %v1113 = vsel %vm1111, %v1112, %v1110
        %v1114 = vclz %v1113
        %v1115 = vsub.s32 %v1114, 2
        %vm1116 = vcmp.gt.s32.totalorder 0, %v1115
        %v1117 = vsel %vm1116, 0, %v1115
        %v1118 = vsub.s32 32, %v1117
        %v1119 = vshll.u32 %v1110, %v1117
        %v1120 = vshrl.u32 %v1102, %v1118
        %v1121 = vor.u32 %v1119, %v1120
        %v1122 = vsub.s32 4294967266, %v1117
        %v1123 = vadd.s32 %v1122, 127
        %v1124 = vshll.u32 %v1123, 23
        %v1125 = vor.u32 4788187, %v1124
        %v1126 = vand.u32 2147483647, %v1125
        %v1128 = vcvt.s32.f32 %v1121
        %v1129 = vmul.f32 %v1128, %v1126
        %v1130 = vxor.u32 %v1129, 2147483648
        %v1131 = vsel %vm1048, %v1130, %v1129
        %v1132 = vsub.s32 4, %v1108
        %v1133 = vsel %vm1048, %v1132, %v1108
        %v1134 = vsel %vm1047, %v836, %v1131
        %v1135 = vsel %vm1047, 0, %v1133
        %v1136 = vcosq.f32.pop %v1134
        %v1137 = vsinq.f32.pop %v1134
        %vm1138 = vweird.f32 %v836
        %v1139 = vadd.s32 %v1135, 3
        %v1140 = vand.u32 %v1139, 3
        %vm1141 = vcmp.lt.s32.totalorder %v1140, 2
        %vm1142 = vcmp.eq.s32.totalorder %v1140, 0
        %v1143 = vxor.u32 %v1137, 2147483648
        %v1144 = vsel %vm1142, %v1136, %v1143
        %vm1145 = vcmp.eq.s32.totalorder %v1140, 2
        %v1146 = vxor.u32 %v1136, 2147483648
        %v1147 = vsel %vm1145, %v1146, %v1137
        %v1148 = vsel %vm1141, %v1144, %v1147
        %v1149 = vsel %vm1138, nan, %v1148
        %v1150 = vand.u32 2147483647, %v837
        %vm1151 = vcmp.le.f32.partialorder %v1150, 0.7853982
        %vm1152 = vcmp.lt.s32.totalorder %v837, 0
        %v1153 = vand.u32 %v837, 2139095040
        %v1154 = vshrl.u32 %v1153, 23
        %v1155 = vsub.s32 %v1154, 127
        %v1156 = vand.u32 2147483647, %v837
        %v1157 = vand.u32 %v1156, 8388607
        %v1158 = vor.u32 %v1157, 8388608
        %v1159 = vsub.s32 0, %v1158
        %v1160 = vadd.s32 %v1155, 1
        %vm1161 = vcmp.gt.s32.totalorder %v1160, 0
        %v1162 = vsel %vm1161, %v1160, 0
        %v1163 = vshrl.u32 %v1162, 5
        %v1164 = vand.u32 %v1162, 31
        %v1165 = vsub.s32 32, %v1164
        %v1166 = vshrl.u32 683565275, %v1165
        %v1167 = vshll.u32 683565275, %v1164
        %v1168 = vshrl.u32 2475754826, %v1165
        %v1169 = vor.u32 %v1167, %v1168
        %v1170 = vshll.u32 2475754826, %v1164
        %v1171 = vshrl.u32 2131351028, %v1165
        %v1172 = vor.u32 %v1170, %v1171
        %v1173 = vshll.u32 2131351028, %v1164
        %v1174 = vshrl.u32 2102212464, %v1165
        %v1175 = vor.u32 %v1173, %v1174
        %v1176 = vshll.u32 2102212464, %v1164
        %v1177 = vshrl.u32 920167782, %v1165
        %v1178 = vor.u32 %v1176, %v1177
        %v1179 = vshll.u32 920167782, %v1164
        %v1180 = vshrl.u32 1326507024, %v1165
        %v1181 = vor.u32 %v1179, %v1180
        %vm1182 = vcmp.lt.s32.totalorder %v1163, 1
        %vm1183 = vcmp.lt.s32.totalorder %v1163, 2
        %vm1184 = vcmp.lt.s32.totalorder %v1163, 3
        %vm1185 = vcmp.lt.s32.totalorder %v1163, 4
        %v1186 = vsel %vm1182, %v1166, %v1169
        %v1187 = vsel %vm1185, %v1175, 2102212464
        %v1188 = vsel %vm1184, %v1172, %v1187
        %v1189 = vsel %vm1183, %v1186, %v1188
        %v1190 = vsel %vm1182, %v1169, %v1172
        %v1191 = vsel %vm1185, %v1178, 920167782
        %v1192 = vsel %vm1184, %v1175, %v1191
        %v1193 = vsel %vm1183, %v1190, %v1192
        %v1194 = vsel %vm1182, %v1172, %v1175
        %v1195 = vsel %vm1185, %v1181, 1326507024
        %v1196 = vsel %vm1184, %v1178, %v1195
        %v1197 = vsel %vm1183, %v1194, %v1196
        %v1198 = vshll.u32 %v1158, 8
        %v1199 = vmul.u32.u64.compose %v1198, %v1197
        %v1200 = vextract.low.u32 %v1199
        %v1201 = vextract.high.u32 %v1199
        %v1202 = vmul.u32.u64.compose %v1198, %v1193
        %v1203 = vextract.low.u32 %v1202
        %v1204 = vextract.high.u32 %v1202
        %v1205 = vmul.u32 %v1198, %v1189
        %v1206 = vadd.s32 %v1201, %v1203
        %vm1207 = vc.u32 %v1201, %v1203
        %v1208 = vadd.s32 %v1204, 1
        %v1209 = vsel %vm1207, %v1208, %v1204
        %v1210 = vadd.s32 %v1205, %v1209
        %v1211 = vadd.s32 %v1210, 536870912
        %v1212 = vshrl.u32 %v1211, 30
        %v1213 = vshll.u32 %v1212, 30
        %v1214 = vsub.s32 %v1210, %v1213
        %vm1215 = vcmp.lt.s32.totalorder %v1214, 0
        %v1216 = vsub.s32 0, %v1214
        %v1217 = vsel %vm1215, %v1216, %v1214
        %v1218 = vclz %v1217
        %v1219 = vsub.s32 %v1218, 2
        %vm1220 = vcmp.gt.s32.totalorder 0, %v1219
        %v1221 = vsel %vm1220, 0, %v1219
        %v1222 = vsub.s32 32, %v1221
        %v1223 = vshll.u32 %v1214, %v1221
        %v1224 = vshrl.u32 %v1206, %v1222
        %v1225 = vor.u32 %v1223, %v1224
        %v1226 = vsub.s32 4294967266, %v1221
        %v1227 = vadd.s32 %v1226, 127
        %v1228 = vshll.u32 %v1227, 23
        %v1229 = vor.u32 4788187, %v1228
        %v1230 = vand.u32 2147483647, %v1229
        %v1232 = vcvt.s32.f32 %v1225
        %v1233 = vmul.f32 %v1232, %v1230
        %v1234 = vxor.u32 %v1233, 2147483648
        %v1235 = vsel %vm1152, %v1234, %v1233
        %v1236 = vsub.s32 4, %v1212
        %v1237 = vsel %vm1152, %v1236, %v1212
        %v1238 = vsel %vm1151, %v837, %v1235
        %v1239 = vsel %vm1151, 0, %v1237
        %v1240 = vcosq.f32.pop %v1238
        %v1241 = vsinq.f32.pop %v1238
        %vm1242 = vweird.f32 %v837
        %v1243 = vadd.s32 %v1239, 3
        %v1244 = vand.u32 %v1243, 3
        %vm1245 = vcmp.lt.s32.totalorder %v1244, 2
        %vm1246 = vcmp.eq.s32.totalorder %v1244, 0
        %v1247 = vxor.u32 %v1241, 2147483648
        %v1248 = vsel %vm1246, %v1240, %v1247
        %vm1249 = vcmp.eq.s32.totalorder %v1244, 2
        %v1250 = vxor.u32 %v1240, 2147483648
        %v1251 = vsel %vm1249, %v1250, %v1241
        %v1252 = vsel %vm1245, %v1248, %v1251
        %v1253 = vsel %vm1242, nan, %v1252
        %v1254 = vmul.f32 %v820, %v941
        %v1255 = vmul.f32 %v820, %v1045
        %v1256 = vmul.f32 %v820, %v1149
        %v1257 = vmul.f32 %v820, %v1253
        %v1258 = vadd.f32 %v1254, %v820
        %v1259 = vadd.f32 %v1255, %v820
        %v1260 = vadd.f32 %v1256, %v820
        %v1261 = vadd.f32 %v1257, %v820
        %v1262 = vmax.f32 %v812, 0.0
        %v1263 = vmax.f32 %v813, 0.0
        %v1264 = vmax.f32 %v814, 0.0
        %v1265 = vmax.f32 %v815, 0.0
        %vm1266 = vcmp.ge.f32.partialorder %v812, %v820
        %vm1267 = vcmp.ge.f32.partialorder %v813, %v820
        %vm1268 = vcmp.ge.f32.partialorder %v814, %v820
        %vm1269 = vcmp.ge.f32.partialorder %v815, %v820
        %v1270 = vsel %vm1266, %v1258, %v1262
        %v1271 = vsel %vm1267, %v1259, %v1263
        %v1272 = vsel %vm1268, %v1260, %v1264
        %v1273 = vsel %vm1269, %v1261, %v1265
        %v1274 = vstv %s818
        %vm1275 = vcmp.ge.f32.partialorder %v812, %v1274
        %vm1276 = vcmp.ge.f32.partialorder %v813, %v1274
        %vm1277 = vcmp.ge.f32.partialorder %v814, %v1274
        %vm1278 = vcmp.ge.f32.partialorder %v815, %v1274
        %v1279 = vstv %s819
        %v1280 = vsel %vm1275, %v1279, %v1270
        %v1281 = vsel %vm1276, %v1279, %v1271
        %v1282 = vsel %vm1277, %v1279, %v1272
        %v1283 = vsel %vm1278, %v1279, %v1273
        %v1284 = vpack.c.bf16 %v709, %v708
        %v1285 = vpack.c.bf16 %v711, %v710
        %v1286 = vpack.c.bf16 %v713, %v712
        %v1287 = vpack.c.bf16 %v715, %v714
        %v1288 = vpack.c.bf16 %v717, %v716
        %v1289 = vpack.c.bf16 %v719, %v718
        %v1290 = vpack.c.bf16 %v721, %v720
        %v1291 = vpack.c.bf16 %v723, %v722
        %v1293 = vsel %vm738, %v1284, 0
        %v1296 = vsel %vm738, %v1285, 0
        %v1299 = vsel %vm738, %v1286, 0
        %v1302 = vsel %vm738, %v1287, 0
        %v1305 = vsel %vm738, %v1288, 0
        %v1308 = vsel %vm738, %v1289, 0
        %v1311 = vsel %vm738, %v1290, 0
        %v1314 = vsel %vm738, %v1291, 0
        %1316 = vmatprep.subr.bf16.mxu0 0
        %1317 = vmatpush1.bf16.msra.mxu0 %v736
        %1318 = vmatprep.subr.bf16.mxu0 0
        %1319 = vmatpush1.bf16.msra.mxu0 0
        %1320 = vmatprep.subr.bf16.mxu0 0
        %1321 = vmatpush1.bf16.msra.mxu0 0
        %1322 = vmatprep.subr.bf16.mxu0 0
        %1323 = vmatpush1.bf16.msra.mxu0 0
        %1324 = vmatprep.subr.bf16.mxu0 0
        %1325 = vmatpush1.bf16.msra.mxu0 0
        %1326 = vmatprep.subr.bf16.mxu0 0
        %1327 = vmatpush1.bf16.msra.mxu0 0
        %1328 = vmatprep.subr.bf16.mxu0 0
        %1329 = vmatpush1.bf16.msra.mxu0 0
        %1330 = vmatprep.subr.bf16.mxu0 0
        %1331 = vmatpush1.bf16.msra.mxu0 0
        %1332 = vmatprep.subr.bf16.mxu0 0
        %1333 = vmatpush1.bf16.msra.mxu0 0
        %1334 = vmatprep.subr.bf16.mxu0 0
        %1335 = vmatpush1.bf16.msra.mxu0 0
        %1336 = vmatprep.subr.bf16.mxu0 0
        %1337 = vmatpush1.bf16.msra.mxu0 0
        %1338 = vmatprep.subr.bf16.mxu0 0
        %1339 = vmatpush1.bf16.msra.mxu0 0
        %1340 = vmatprep.subr.bf16.mxu0 0
        %1341 = vmatpush1.bf16.msra.mxu0 0
        %1342 = vmatprep.subr.bf16.mxu0 0
        %1343 = vmatpush1.bf16.msra.mxu0 0
        %1344 = vmatprep.subr.bf16.mxu0 0
        %1345 = vmatpush1.bf16.msra.mxu0 0
        %1346 = vmatprep.subr.bf16.mxu0 0
        %1347 = vmatpush1.bf16.msra.mxu0 0
        %1348 = vmatprep.mubr.bf16.mxu0 0
        %1349 = vmatmul.mubr.bf16.gmra.mrb[0].mxu0 %v1293
        %v1350 = vpop.f32.mrb[0].mxu0
        %v1351 = vadd.f32 0.0, %v1350
        %v1352 = vpop.f32.mrb[0].mxu0
        %v1353 = vpop.f32.mrb[0].mxu0
        %v1354 = vadd.f32 0.0, %v1353
        %v1355 = vpop.f32.mrb[0].mxu0
        %1356 = vmatprep.mubr.bf16.mxu0 0
        %1357 = vmatmul.mubr.bf16.gmra.mrb[0].mxu0 %v1296
        %v1358 = vpop.f32.mrb[0].mxu0
        %v1359 = vadd.f32 0.0, %v1358
        %v1360 = vpop.f32.mrb[0].mxu0
        %v1361 = vpop.f32.mrb[0].mxu0
        %v1362 = vadd.f32 0.0, %v1361
        %v1363 = vpop.f32.mrb[0].mxu0
        %1364 = vmatprep.mubr.bf16.mxu0 0
        %1365 = vmatmul.mubr.bf16.gmra.mrb[0].mxu0 %v1299
        %v1366 = vpop.f32.mrb[0].mxu0
        %v1367 = vadd.f32 0.0, %v1366
        %v1368 = vpop.f32.mrb[0].mxu0
        %v1369 = vpop.f32.mrb[0].mxu0
        %v1370 = vadd.f32 0.0, %v1369
        %v1371 = vpop.f32.mrb[0].mxu0
        %1372 = vmatprep.mubr.bf16.mxu0 0
        %1373 = vmatmul.mubr.bf16.gmra.mrb[0].mxu0 %v1302
        %v1374 = vpop.f32.mrb[0].mxu0
        %v1375 = vadd.f32 0.0, %v1374
        %v1376 = vpop.f32.mrb[0].mxu0
        %v1377 = vpop.f32.mrb[0].mxu0
        %v1378 = vadd.f32 0.0, %v1377
        %v1379 = vpop.f32.mrb[0].mxu0
        %1380 = vmatprep.mubr.bf16.mxu0 0
        %1381 = vmatmul.mubr.bf16.gmra.mrb[0].mxu0 %v1305
        %v1382 = vpop.f32.mrb[0].mxu0
        %v1383 = vadd.f32 0.0, %v1382
        %v1384 = vpop.f32.mrb[0].mxu0
        %v1385 = vpop.f32.mrb[0].mxu0
        %v1386 = vadd.f32 0.0, %v1385
        %v1387 = vpop.f32.mrb[0].mxu0
        %1388 = vmatprep.mubr.bf16.mxu0 0
        %1389 = vmatmul.mubr.bf16.gmra.mrb[0].mxu0 %v1308
        %v1390 = vpop.f32.mrb[0].mxu0
        %v1391 = vadd.f32 0.0, %v1390
        %v1392 = vpop.f32.mrb[0].mxu0
        %v1393 = vpop.f32.mrb[0].mxu0
        %v1394 = vadd.f32 0.0, %v1393
        %v1395 = vpop.f32.mrb[0].mxu0
        %1396 = vmatprep.mubr.bf16.mxu0 0
        %1397 = vmatmul.mubr.bf16.gmra.mrb[0].mxu0 %v1311
        %v1398 = vpop.f32.mrb[0].mxu0
        %v1399 = vadd.f32 0.0, %v1398
        %v1400 = vpop.f32.mrb[0].mxu0
        %v1401 = vpop.f32.mrb[0].mxu0
        %v1402 = vadd.f32 0.0, %v1401
        %v1403 = vpop.f32.mrb[0].mxu0
        %1404 = vmatprep.mubr.bf16.mxu0 0
        %1405 = vmatmul.mubr.bf16.gmra.mrb[0].mxu0 %v1314
        %v1406 = vpop.f32.mrb[0].mxu0
        %v1407 = vadd.f32 0.0, %v1406
        %v1408 = vpop.f32.mrb[0].mxu0
        %v1409 = vpop.f32.mrb[0].mxu0
        %v1410 = vadd.f32 0.0, %v1409
        %v1411 = vpop.f32.mrb[0].mxu0
        %1412 = vdwg.mxu0
        %v1413 = vmul.f32 %v1351, %v799
        %v1414 = vmul.f32 %v1354, %v799
        %v1415 = vmul.f32 %v1359, %v799
        %v1416 = vmul.f32 %v1362, %v799
        %v1417 = vmul.f32 %v1367, %v799
        %v1418 = vmul.f32 %v1370, %v799
        %v1419 = vmul.f32 %v1375, %v799
        %v1420 = vmul.f32 %v1378, %v799
        %v1421 = vmul.f32 %v1383, %v799
        %v1422 = vmul.f32 %v1386, %v799
        %v1423 = vmul.f32 %v1391, %v799
        %v1424 = vmul.f32 %v1394, %v799
        %v1425 = vmul.f32 %v1399, %v799
        %v1426 = vmul.f32 %v1402, %v799
        %v1427 = vmul.f32 %v1407, %v799
        %v1428 = vmul.f32 %v1410, %v799
        %v1429 = vadd.f32 %v1413, %v810
        %v1430 = vadd.f32 %v1414, %v810
        %v1431 = vadd.f32 %v1415, %v810
        %v1432 = vadd.f32 %v1416, %v810
        %v1433 = vadd.f32 %v1417, %v810
        %v1434 = vadd.f32 %v1418, %v810
        %v1435 = vadd.f32 %v1419, %v810
        %v1436 = vadd.f32 %v1420, %v810
        %v1437 = vadd.f32 %v1421, %v810
        %v1438 = vadd.f32 %v1422, %v810
        %v1439 = vadd.f32 %v1423, %v810
        %v1440 = vadd.f32 %v1424, %v810
        %v1441 = vadd.f32 %v1425, %v810
        %v1442 = vadd.f32 %v1426, %v810
        %v1443 = vadd.f32 %v1427, %v810
        %v1444 = vadd.f32 %v1428, %v810
        %v1445 = vmax.f32 %v1429, %v820
        %v1446 = vmax.f32 %v1430, %v820
        %v1447 = vmax.f32 %v1431, %v820
        %v1448 = vmax.f32 %v1432, %v820
        %v1449 = vmax.f32 %v1433, %v820
        %v1450 = vmax.f32 %v1434, %v820
        %v1451 = vmax.f32 %v1435, %v820
        %v1452 = vmax.f32 %v1436, %v820
        %v1453 = vmax.f32 %v1437, %v820
        %v1454 = vmax.f32 %v1438, %v820
        %v1455 = vmax.f32 %v1439, %v820
        %v1456 = vmax.f32 %v1440, %v820
        %v1457 = vmax.f32 %v1441, %v820
        %v1458 = vmax.f32 %v1442, %v820
        %v1459 = vmax.f32 %v1443, %v820
        %v1460 = vmax.f32 %v1444, %v820
        %v1461 = vlog2.pop %v1445
        %v1462 = vmul.f32 %v1461, 0.6931472
        %v1463 = vlog2.pop %v1446
        %v1464 = vmul.f32 %v1463, 0.6931472
        %v1465 = vlog2.pop %v1447
        %v1466 = vmul.f32 %v1465, 0.6931472
        %v1467 = vlog2.pop %v1448
        %v1468 = vmul.f32 %v1467, 0.6931472
        %v1469 = vlog2.pop %v1449
        %v1470 = vmul.f32 %v1469, 0.6931472
        %v1471 = vlog2.pop %v1450
        %v1472 = vmul.f32 %v1471, 0.6931472
        %v1473 = vlog2.pop %v1451
        %v1474 = vmul.f32 %v1473, 0.6931472
        %v1475 = vlog2.pop %v1452
        %v1476 = vmul.f32 %v1475, 0.6931472
        %v1477 = vlog2.pop %v1453
        %v1478 = vmul.f32 %v1477, 0.6931472
        %v1479 = vlog2.pop %v1454
        %v1480 = vmul.f32 %v1479, 0.6931472
        %v1481 = vlog2.pop %v1455
        %v1482 = vmul.f32 %v1481, 0.6931472
        %v1483 = vlog2.pop %v1456
        %v1484 = vmul.f32 %v1483, 0.6931472
        %v1485 = vlog2.pop %v1457
        %v1486 = vmul.f32 %v1485, 0.6931472
        %v1487 = vlog2.pop %v1458
        %v1488 = vmul.f32 %v1487, 0.6931472
        %v1489 = vlog2.pop %v1459
        %v1490 = vmul.f32 %v1489, 0.6931472
        %v1491 = vlog2.pop %v1460
        %v1492 = vmul.f32 %v1491, 0.6931472
        %v1493 = vsub.f32 %v1462, %v833
        %v1494 = vsub.f32 %v1464, %v833
        %v1495 = vsub.f32 %v1466, %v833
        %v1496 = vsub.f32 %v1468, %v833
        %v1497 = vsub.f32 %v1470, %v833
        %v1498 = vsub.f32 %v1472, %v833
        %v1499 = vsub.f32 %v1474, %v833
        %v1500 = vsub.f32 %v1476, %v833
        %v1501 = vsub.f32 %v1478, %v833
        %v1502 = vsub.f32 %v1480, %v833
        %v1503 = vsub.f32 %v1482, %v833
        %v1504 = vsub.f32 %v1484, %v833
        %v1505 = vsub.f32 %v1486, %v833
        %v1506 = vsub.f32 %v1488, %v833
        %v1507 = vsub.f32 %v1490, %v833
        %v1508 = vsub.f32 %v1492, %v833
        %v1509 = vand.u32 2147483647, %v1493
        %vm1510 = vcmp.le.f32.partialorder %v1509, 0.7853982
        %vm1511 = vcmp.lt.s32.totalorder %v1493, 0
        %v1512 = vand.u32 %v1493, 2139095040
        %v1513 = vshrl.u32 %v1512, 23
        %v1514 = vsub.s32 %v1513, 127
        %v1515 = vand.u32 2147483647, %v1493
        %v1516 = vand.u32 %v1515, 8388607
        %v1517 = vor.u32 %v1516, 8388608
        %v1518 = vsub.s32 0, %v1517
        %v1519 = vadd.s32 %v1514, 1
        %vm1520 = vcmp.gt.s32.totalorder %v1519, 0
        %v1521 = vsel %vm1520, %v1519, 0
        %v1522 = vshrl.u32 %v1521, 5
        %v1523 = vand.u32 %v1521, 31
        %v1524 = vsub.s32 32, %v1523
        %v1525 = vshrl.u32 683565275, %v1524
        %v1526 = vshll.u32 683565275, %v1523
        %v1527 = vshrl.u32 2475754826, %v1524
        %v1528 = vor.u32 %v1526, %v1527
        %v1529 = vshll.u32 2475754826, %v1523
        %v1530 = vshrl.u32 2131351028, %v1524
        %v1531 = vor.u32 %v1529, %v1530
        %v1532 = vshll.u32 2131351028, %v1523
        %v1533 = vshrl.u32 2102212464, %v1524
        %v1534 = vor.u32 %v1532, %v1533
        %v1535 = vshll.u32 2102212464, %v1523
        %v1536 = vshrl.u32 920167782, %v1524
        %v1537 = vor.u32 %v1535, %v1536
        %v1538 = vshll.u32 920167782, %v1523
        %v1539 = vshrl.u32 1326507024, %v1524
        %v1540 = vor.u32 %v1538, %v1539
        %vm1541 = vcmp.lt.s32.totalorder %v1522, 1
        %vm1542 = vcmp.lt.s32.totalorder %v1522, 2
        %vm1543 = vcmp.lt.s32.totalorder %v1522, 3
        %vm1544 = vcmp.lt.s32.totalorder %v1522, 4
        %v1545 = vsel %vm1541, %v1525, %v1528
        %v1546 = vsel %vm1544, %v1534, 2102212464
        %v1547 = vsel %vm1543, %v1531, %v1546
        %v1548 = vsel %vm1542, %v1545, %v1547
        %v1549 = vsel %vm1541, %v1528, %v1531
        %v1550 = vsel %vm1544, %v1537, 920167782
        %v1551 = vsel %vm1543, %v1534, %v1550
        %v1552 = vsel %vm1542, %v1549, %v1551
        %v1553 = vsel %vm1541, %v1531, %v1534
        %v1554 = vsel %vm1544, %v1540, 1326507024
        %v1555 = vsel %vm1543, %v1537, %v1554
        %v1556 = vsel %vm1542, %v1553, %v1555
        %v1557 = vshll.u32 %v1517, 8
        %v1558 = vmul.u32.u64.compose %v1557, %v1556
        %v1559 = vextract.low.u32 %v1558
        %v1560 = vextract.high.u32 %v1558
        %v1561 = vmul.u32.u64.compose %v1557, %v1552
        %v1562 = vextract.low.u32 %v1561
        %v1563 = vextract.high.u32 %v1561
        %v1564 = vmul.u32 %v1557, %v1548
        %v1565 = vadd.s32 %v1560, %v1562
        %vm1566 = vc.u32 %v1560, %v1562
        %v1567 = vadd.s32 %v1563, 1
        %v1568 = vsel %vm1566, %v1567, %v1563
        %v1569 = vadd.s32 %v1564, %v1568
        %v1570 = vadd.s32 %v1569, 536870912
        %v1571 = vshrl.u32 %v1570, 30
        %v1572 = vshll.u32 %v1571, 30
        %v1573 = vsub.s32 %v1569, %v1572
        %vm1574 = vcmp.lt.s32.totalorder %v1573, 0
        %v1575 = vsub.s32 0, %v1573
        %v1576 = vsel %vm1574, %v1575, %v1573
        %v1577 = vclz %v1576
        %v1578 = vsub.s32 %v1577, 2
        %vm1579 = vcmp.gt.s32.totalorder 0, %v1578
        %v1580 = vsel %vm1579, 0, %v1578
        %v1581 = vsub.s32 32, %v1580
        %v1582 = vshll.u32 %v1573, %v1580
        %v1583 = vshrl.u32 %v1565, %v1581
        %v1584 = vor.u32 %v1582, %v1583
        %v1585 = vsub.s32 4294967266, %v1580
        %v1586 = vadd.s32 %v1585, 127
        %v1587 = vshll.u32 %v1586, 23
        %v1588 = vor.u32 4788187, %v1587
        %v1589 = vand.u32 2147483647, %v1588
        %v1591 = vcvt.s32.f32 %v1584
        %v1592 = vmul.f32 %v1591, %v1589
        %v1593 = vxor.u32 %v1592, 2147483648
        %v1594 = vsel %vm1511, %v1593, %v1592
        %v1595 = vsub.s32 4, %v1571
        %v1596 = vsel %vm1511, %v1595, %v1571
        %v1597 = vsel %vm1510, %v1493, %v1594
        %v1598 = vsel %vm1510, 0, %v1596
        %v1599 = vcosq.f32.pop %v1597
        %v1600 = vsinq.f32.pop %v1597
        %vm1601 = vweird.f32 %v1493
        %v1602 = vadd.s32 %v1598, 3
        %v1603 = vand.u32 %v1602, 3
        %vm1604 = vcmp.lt.s32.totalorder %v1603, 2
        %vm1605 = vcmp.eq.s32.totalorder %v1603, 0
        %v1606 = vxor.u32 %v1600, 2147483648
        %v1607 = vsel %vm1605, %v1599, %v1606
        %vm1608 = vcmp.eq.s32.totalorder %v1603, 2
        %v1609 = vxor.u32 %v1599, 2147483648
        %v1610 = vsel %vm1608, %v1609, %v1600
        %v1611 = vsel %vm1604, %v1607, %v1610
        %v1612 = vsel %vm1601, nan, %v1611
        %v1613 = vand.u32 2147483647, %v1494
        %vm1614 = vcmp.le.f32.partialorder %v1613, 0.7853982
        %vm1615 = vcmp.lt.s32.totalorder %v1494, 0
        %v1616 = vand.u32 %v1494, 2139095040
        %v1617 = vshrl.u32 %v1616, 23
        %v1618 = vsub.s32 %v1617, 127
        %v1619 = vand.u32 2147483647, %v1494
        %v1620 = vand.u32 %v1619, 8388607
        %v1621 = vor.u32 %v1620, 8388608
        %v1622 = vsub.s32 0, %v1621
        %v1623 = vadd.s32 %v1618, 1
        %vm1624 = vcmp.gt.s32.totalorder %v1623, 0
        %v1625 = vsel %vm1624, %v1623, 0
        %v1626 = vshrl.u32 %v1625, 5
        %v1627 = vand.u32 %v1625, 31
        %v1628 = vsub.s32 32, %v1627
        %v1629 = vshrl.u32 683565275, %v1628
        %v1630 = vshll.u32 683565275, %v1627
        %v1631 = vshrl.u32 2475754826, %v1628
        %v1632 = vor.u32 %v1630, %v1631
        %v1633 = vshll.u32 2475754826, %v1627
        %v1634 = vshrl.u32 2131351028, %v1628
        %v1635 = vor.u32 %v1633, %v1634
        %v1636 = vshll.u32 2131351028, %v1627
        %v1637 = vshrl.u32 2102212464, %v1628
        %v1638 = vor.u32 %v1636, %v1637
        %v1639 = vshll.u32 2102212464, %v1627
        %v1640 = vshrl.u32 920167782, %v1628
        %v1641 = vor.u32 %v1639, %v1640
        %v1642 = vshll.u32 920167782, %v1627
        %v1643 = vshrl.u32 1326507024, %v1628
        %v1644 = vor.u32 %v1642, %v1643
        %vm1645 = vcmp.lt.s32.totalorder %v1626, 1
        %vm1646 = vcmp.lt.s32.totalorder %v1626, 2
        %vm1647 = vcmp.lt.s32.totalorder %v1626, 3
        %vm1648 = vcmp.lt.s32.totalorder %v1626, 4
        %v1649 = vsel %vm1645, %v1629, %v1632
        %v1650 = vsel %vm1648, %v1638, 2102212464
        %v1651 = vsel %vm1647, %v1635, %v1650
        %v1652 = vsel %vm1646, %v1649, %v1651
        %v1653 = vsel %vm1645, %v1632, %v1635
        %v1654 = vsel %vm1648, %v1641, 920167782
        %v1655 = vsel %vm1647, %v1638, %v1654
        %v1656 = vsel %vm1646, %v1653, %v1655
        %v1657 = vsel %vm1645, %v1635, %v1638
        %v1658 = vsel %vm1648, %v1644, 1326507024
        %v1659 = vsel %vm1647, %v1641, %v1658
        %v1660 = vsel %vm1646, %v1657, %v1659
        %v1661 = vshll.u32 %v1621, 8
        %v1662 = vmul.u32.u64.compose %v1661, %v1660
        %v1663 = vextract.low.u32 %v1662
        %v1664 = vextract.high.u32 %v1662
        %v1665 = vmul.u32.u64.compose %v1661, %v1656
        %v1666 = vextract.low.u32 %v1665
        %v1667 = vextract.high.u32 %v1665
        %v1668 = vmul.u32 %v1661, %v1652
        %v1669 = vadd.s32 %v1664, %v1666
        %vm1670 = vc.u32 %v1664, %v1666
        %v1671 = vadd.s32 %v1667, 1
        %v1672 = vsel %vm1670, %v1671, %v1667
        %v1673 = vadd.s32 %v1668, %v1672
        %v1674 = vadd.s32 %v1673, 536870912
        %v1675 = vshrl.u32 %v1674, 30
        %v1676 = vshll.u32 %v1675, 30
        %v1677 = vsub.s32 %v1673, %v1676
        %vm1678 = vcmp.lt.s32.totalorder %v1677, 0
        %v1679 = vsub.s32 0, %v1677
        %v1680 = vsel %vm1678, %v1679, %v1677
        %v1681 = vclz %v1680
        %v1682 = vsub.s32 %v1681, 2
        %vm1683 = vcmp.gt.s32.totalorder 0, %v1682
        %v1684 = vsel %vm1683, 0, %v1682
        %v1685 = vsub.s32 32, %v1684
        %v1686 = vshll.u32 %v1677, %v1684
        %v1687 = vshrl.u32 %v1669, %v1685
        %v1688 = vor.u32 %v1686, %v1687
        %v1689 = vsub.s32 4294967266, %v1684
        %v1690 = vadd.s32 %v1689, 127
        %v1691 = vshll.u32 %v1690, 23
        %v1692 = vor.u32 4788187, %v1691
        %v1693 = vand.u32 2147483647, %v1692
        %v1695 = vcvt.s32.f32 %v1688
        %v1696 = vmul.f32 %v1695, %v1693
        %v1697 = vxor.u32 %v1696, 2147483648
        %v1698 = vsel %vm1615, %v1697, %v1696
        %v1699 = vsub.s32 4, %v1675
        %v1700 = vsel %vm1615, %v1699, %v1675
        %v1701 = vsel %vm1614, %v1494, %v1698
        %v1702 = vsel %vm1614, 0, %v1700
        %v1703 = vcosq.f32.pop %v1701
        %v1704 = vsinq.f32.pop %v1701
        %vm1705 = vweird.f32 %v1494
        %v1706 = vadd.s32 %v1702, 3
        %v1707 = vand.u32 %v1706, 3
        %vm1708 = vcmp.lt.s32.totalorder %v1707, 2
        %vm1709 = vcmp.eq.s32.totalorder %v1707, 0
        %v1710 = vxor.u32 %v1704, 2147483648
        %v1711 = vsel %vm1709, %v1703, %v1710
        %vm1712 = vcmp.eq.s32.totalorder %v1707, 2
        %v1713 = vxor.u32 %v1703, 2147483648
        %v1714 = vsel %vm1712, %v1713, %v1704
        %v1715 = vsel %vm1708, %v1711, %v1714
        %v1716 = vsel %vm1705, nan, %v1715
        %v1717 = vand.u32 2147483647, %v1495
        %vm1718 = vcmp.le.f32.partialorder %v1717, 0.7853982
        %vm1719 = vcmp.lt.s32.totalorder %v1495, 0
        %v1720 = vand.u32 %v1495, 2139095040
        %v1721 = vshrl.u32 %v1720, 23
        %v1722 = vsub.s32 %v1721, 127
        %v1723 = vand.u32 2147483647, %v1495
        %v1724 = vand.u32 %v1723, 8388607
        %v1725 = vor.u32 %v1724, 8388608
        %v1726 = vsub.s32 0, %v1725
        %v1727 = vadd.s32 %v1722, 1
        %vm1728 = vcmp.gt.s32.totalorder %v1727, 0
        %v1729 = vsel %vm1728, %v1727, 0
        %v1730 = vshrl.u32 %v1729, 5
        %v1731 = vand.u32 %v1729, 31
        %v1732 = vsub.s32 32, %v1731
        %v1733 = vshrl.u32 683565275, %v1732
        %v1734 = vshll.u32 683565275, %v1731
        %v1735 = vshrl.u32 2475754826, %v1732
        %v1736 = vor.u32 %v1734, %v1735
        %v1737 = vshll.u32 2475754826, %v1731
        %v1738 = vshrl.u32 2131351028, %v1732
        %v1739 = vor.u32 %v1737, %v1738
        %v1740 = vshll.u32 2131351028, %v1731
        %v1741 = vshrl.u32 2102212464, %v1732
        %v1742 = vor.u32 %v1740, %v1741
        %v1743 = vshll.u32 2102212464, %v1731
        %v1744 = vshrl.u32 920167782, %v1732
        %v1745 = vor.u32 %v1743, %v1744
        %v1746 = vshll.u32 920167782, %v1731
        %v1747 = vshrl.u32 1326507024, %v1732
        %v1748 = vor.u32 %v1746, %v1747
        %vm1749 = vcmp.lt.s32.totalorder %v1730, 1
        %vm1750 = vcmp.lt.s32.totalorder %v1730, 2
        %vm1751 = vcmp.lt.s32.totalorder %v1730, 3
        %vm1752 = vcmp.lt.s32.totalorder %v1730, 4
        %v1753 = vsel %vm1749, %v1733, %v1736
        %v1754 = vsel %vm1752, %v1742, 2102212464
        %v1755 = vsel %vm1751, %v1739, %v1754
        %v1756 = vsel %vm1750, %v1753, %v1755
        %v1757 = vsel %vm1749, %v1736, %v1739
        %v1758 = vsel %vm1752, %v1745, 920167782
        %v1759 = vsel %vm1751, %v1742, %v1758
        %v1760 = vsel %vm1750, %v1757, %v1759
        %v1761 = vsel %vm1749, %v1739, %v1742
        %v1762 = vsel %vm1752, %v1748, 1326507024
        %v1763 = vsel %vm1751, %v1745, %v1762
        %v1764 = vsel %vm1750, %v1761, %v1763
        %v1765 = vshll.u32 %v1725, 8
        %v1766 = vmul.u32.u64.compose %v1765, %v1764
        %v1767 = vextract.low.u32 %v1766
        %v1768 = vextract.high.u32 %v1766
        %v1769 = vmul.u32.u64.compose %v1765, %v1760
        %v1770 = vextract.low.u32 %v1769
        %v1771 = vextract.high.u32 %v1769
        %v1772 = vmul.u32 %v1765, %v1756
        %v1773 = vadd.s32 %v1768, %v1770
        %vm1774 = vc.u32 %v1768, %v1770
        %v1775 = vadd.s32 %v1771, 1
        %v1776 = vsel %vm1774, %v1775, %v1771
        %v1777 = vadd.s32 %v1772, %v1776
        %v1778 = vadd.s32 %v1777, 536870912
        %v1779 = vshrl.u32 %v1778, 30
        %v1780 = vshll.u32 %v1779, 30
        %v1781 = vsub.s32 %v1777, %v1780
        %vm1782 = vcmp.lt.s32.totalorder %v1781, 0
        %v1783 = vsub.s32 0, %v1781
        %v1784 = vsel %vm1782, %v1783, %v1781
        %v1785 = vclz %v1784
        %v1786 = vsub.s32 %v1785, 2
        %vm1787 = vcmp.gt.s32.totalorder 0, %v1786
        %v1788 = vsel %vm1787, 0, %v1786
        %v1789 = vsub.s32 32, %v1788
        %v1790 = vshll.u32 %v1781, %v1788
        %v1791 = vshrl.u32 %v1773, %v1789
        %v1792 = vor.u32 %v1790, %v1791
        %v1793 = vsub.s32 4294967266, %v1788
        %v1794 = vadd.s32 %v1793, 127
        %v1795 = vshll.u32 %v1794, 23
        %v1796 = vor.u32 4788187, %v1795
        %v1797 = vand.u32 2147483647, %v1796
        %v1799 = vcvt.s32.f32 %v1792
        %v1800 = vmul.f32 %v1799, %v1797
        %v1801 = vxor.u32 %v1800, 2147483648
        %v1802 = vsel %vm1719, %v1801, %v1800
        %v1803 = vsub.s32 4, %v1779
        %v1804 = vsel %vm1719, %v1803, %v1779
        %v1805 = vsel %vm1718, %v1495, %v1802
        %v1806 = vsel %vm1718, 0, %v1804
        %v1807 = vcosq.f32.pop %v1805
        %v1808 = vsinq.f32.pop %v1805
        %vm1809 = vweird.f32 %v1495
        %v1810 = vadd.s32 %v1806, 3
        %v1811 = vand.u32 %v1810, 3
        %vm1812 = vcmp.lt.s32.totalorder %v1811, 2
        %vm1813 = vcmp.eq.s32.totalorder %v1811, 0
        %v1814 = vxor.u32 %v1808, 2147483648
        %v1815 = vsel %vm1813, %v1807, %v1814
        %vm1816 = vcmp.eq.s32.totalorder %v1811, 2
        %v1817 = vxor.u32 %v1807, 2147483648
        %v1818 = vsel %vm1816, %v1817, %v1808
        %v1819 = vsel %vm1812, %v1815, %v1818
        %v1820 = vsel %vm1809, nan, %v1819
        %v1821 = vand.u32 2147483647, %v1496
        %vm1822 = vcmp.le.f32.partialorder %v1821, 0.7853982
        %vm1823 = vcmp.lt.s32.totalorder %v1496, 0
        %v1824 = vand.u32 %v1496, 2139095040
        %v1825 = vshrl.u32 %v1824, 23
        %v1826 = vsub.s32 %v1825, 127
        %v1827 = vand.u32 2147483647, %v1496
        %v1828 = vand.u32 %v1827, 8388607
        %v1829 = vor.u32 %v1828, 8388608
        %v1830 = vsub.s32 0, %v1829
        %v1831 = vadd.s32 %v1826, 1
        %vm1832 = vcmp.gt.s32.totalorder %v1831, 0
        %v1833 = vsel %vm1832, %v1831, 0
        %v1834 = vshrl.u32 %v1833, 5
        %v1835 = vand.u32 %v1833, 31
        %v1836 = vsub.s32 32, %v1835
        %v1837 = vshrl.u32 683565275, %v1836
        %v1838 = vshll.u32 683565275, %v1835
        %v1839 = vshrl.u32 2475754826, %v1836
        %v1840 = vor.u32 %v1838, %v1839
        %v1841 = vshll.u32 2475754826, %v1835
        %v1842 = vshrl.u32 2131351028, %v1836
        %v1843 = vor.u32 %v1841, %v1842
        %v1844 = vshll.u32 2131351028, %v1835
        %v1845 = vshrl.u32 2102212464, %v1836
        %v1846 = vor.u32 %v1844, %v1845
        %v1847 = vshll.u32 2102212464, %v1835
        %v1848 = vshrl.u32 920167782, %v1836
        %v1849 = vor.u32 %v1847, %v1848
        %v1850 = vshll.u32 920167782, %v1835
        %v1851 = vshrl.u32 1326507024, %v1836
        %v1852 = vor.u32 %v1850, %v1851
        %vm1853 = vcmp.lt.s32.totalorder %v1834, 1
        %vm1854 = vcmp.lt.s32.totalorder %v1834, 2
        %vm1855 = vcmp.lt.s32.totalorder %v1834, 3
        %vm1856 = vcmp.lt.s32.totalorder %v1834, 4
        %v1857 = vsel %vm1853, %v1837, %v1840
        %v1858 = vsel %vm1856, %v1846, 2102212464
        %v1859 = vsel %vm1855, %v1843, %v1858
        %v1860 = vsel %vm1854, %v1857, %v1859
        %v1861 = vsel %vm1853, %v1840, %v1843
        %v1862 = vsel %vm1856, %v1849, 920167782
        %v1863 = vsel %vm1855, %v1846, %v1862
        %v1864 = vsel %vm1854, %v1861, %v1863
        %v1865 = vsel %vm1853, %v1843, %v1846
        %v1866 = vsel %vm1856, %v1852, 1326507024
        %v1867 = vsel %vm1855, %v1849, %v1866
        %v1868 = vsel %vm1854, %v1865, %v1867
        %v1869 = vshll.u32 %v1829, 8
        %v1870 = vmul.u32.u64.compose %v1869, %v1868
        %v1871 = vextract.low.u32 %v1870
        %v1872 = vextract.high.u32 %v1870
        %v1873 = vmul.u32.u64.compose %v1869, %v1864
        %v1874 = vextract.low.u32 %v1873
        %v1875 = vextract.high.u32 %v1873
        %v1876 = vmul.u32 %v1869, %v1860
        %v1877 = vadd.s32 %v1872, %v1874
        %vm1878 = vc.u32 %v1872, %v1874
        %v1879 = vadd.s32 %v1875, 1
        %v1880 = vsel %vm1878, %v1879, %v1875
        %v1881 = vadd.s32 %v1876, %v1880
        %v1882 = vadd.s32 %v1881, 536870912
        %v1883 = vshrl.u32 %v1882, 30
        %v1884 = vshll.u32 %v1883, 30
        %v1885 = vsub.s32 %v1881, %v1884
        %vm1886 = vcmp.lt.s32.totalorder %v1885, 0
        %v1887 = vsub.s32 0, %v1885
        %v1888 = vsel %vm1886, %v1887, %v1885
        %v1889 = vclz %v1888
        %v1890 = vsub.s32 %v1889, 2
        %vm1891 = vcmp.gt.s32.totalorder 0, %v1890
        %v1892 = vsel %vm1891, 0, %v1890
        %v1893 = vsub.s32 32, %v1892
        %v1894 = vshll.u32 %v1885, %v1892
        %v1895 = vshrl.u32 %v1877, %v1893
        %v1896 = vor.u32 %v1894, %v1895
        %v1897 = vsub.s32 4294967266, %v1892
        %v1898 = vadd.s32 %v1897, 127
        %v1899 = vshll.u32 %v1898, 23
        %v1900 = vor.u32 4788187, %v1899
        %v1901 = vand.u32 2147483647, %v1900
        %v1903 = vcvt.s32.f32 %v1896
        %v1904 = vmul.f32 %v1903, %v1901
        %v1905 = vxor.u32 %v1904, 2147483648
        %v1906 = vsel %vm1823, %v1905, %v1904
        %v1907 = vsub.s32 4, %v1883
        %v1908 = vsel %vm1823, %v1907, %v1883
        %v1909 = vsel %vm1822, %v1496, %v1906
        %v1910 = vsel %vm1822, 0, %v1908
        %v1911 = vcosq.f32.pop %v1909
        %v1912 = vsinq.f32.pop %v1909
        %vm1913 = vweird.f32 %v1496
        %v1914 = vadd.s32 %v1910, 3
        %v1915 = vand.u32 %v1914, 3
        %vm1916 = vcmp.lt.s32.totalorder %v1915, 2
        %vm1917 = vcmp.eq.s32.totalorder %v1915, 0
        %v1918 = vxor.u32 %v1912, 2147483648
        %v1919 = vsel %vm1917, %v1911, %v1918
        %vm1920 = vcmp.eq.s32.totalorder %v1915, 2
        %v1921 = vxor.u32 %v1911, 2147483648
        %v1922 = vsel %vm1920, %v1921, %v1912
        %v1923 = vsel %vm1916, %v1919, %v1922
        %v1924 = vsel %vm1913, nan, %v1923
        %v1925 = vand.u32 2147483647, %v1497
        %vm1926 = vcmp.le.f32.partialorder %v1925, 0.7853982
        %vm1927 = vcmp.lt.s32.totalorder %v1497, 0
        %v1928 = vand.u32 %v1497, 2139095040
        %v1929 = vshrl.u32 %v1928, 23
        %v1930 = vsub.s32 %v1929, 127
        %v1931 = vand.u32 2147483647, %v1497
        %v1932 = vand.u32 %v1931, 8388607
        %v1933 = vor.u32 %v1932, 8388608
        %v1934 = vsub.s32 0, %v1933
        %v1935 = vadd.s32 %v1930, 1
        %vm1936 = vcmp.gt.s32.totalorder %v1935, 0
        %v1937 = vsel %vm1936, %v1935, 0
        %v1938 = vshrl.u32 %v1937, 5
        %v1939 = vand.u32 %v1937, 31
        %v1940 = vsub.s32 32, %v1939
        %v1941 = vshrl.u32 683565275, %v1940
        %v1942 = vshll.u32 683565275, %v1939
        %v1943 = vshrl.u32 2475754826, %v1940
        %v1944 = vor.u32 %v1942, %v1943
        %v1945 = vshll.u32 2475754826, %v1939
        %v1946 = vshrl.u32 2131351028, %v1940
        %v1947 = vor.u32 %v1945, %v1946
        %v1948 = vshll.u32 2131351028, %v1939
        %v1949 = vshrl.u32 2102212464, %v1940
        %v1950 = vor.u32 %v1948, %v1949
        %v1951 = vshll.u32 2102212464, %v1939
        %v1952 = vshrl.u32 920167782, %v1940
        %v1953 = vor.u32 %v1951, %v1952
        %v1954 = vshll.u32 920167782, %v1939
        %v1955 = vshrl.u32 1326507024, %v1940
        %v1956 = vor.u32 %v1954, %v1955
        %vm1957 = vcmp.lt.s32.totalorder %v1938, 1
        %vm1958 = vcmp.lt.s32.totalorder %v1938, 2
        %vm1959 = vcmp.lt.s32.totalorder %v1938, 3
        %vm1960 = vcmp.lt.s32.totalorder %v1938, 4
        %v1961 = vsel %vm1957, %v1941, %v1944
        %v1962 = vsel %vm1960, %v1950, 2102212464
        %v1963 = vsel %vm1959, %v1947, %v1962
        %v1964 = vsel %vm1958, %v1961, %v1963
        %v1965 = vsel %vm1957, %v1944, %v1947
        %v1966 = vsel %vm1960, %v1953, 920167782
        %v1967 = vsel %vm1959, %v1950, %v1966
        %v1968 = vsel %vm1958, %v1965, %v1967
        %v1969 = vsel %vm1957, %v1947, %v1950
        %v1970 = vsel %vm1960, %v1956, 1326507024
        %v1971 = vsel %vm1959, %v1953, %v1970
        %v1972 = vsel %vm1958, %v1969, %v1971
        %v1973 = vshll.u32 %v1933, 8
        %v1974 = vmul.u32.u64.compose %v1973, %v1972
        %v1975 = vextract.low.u32 %v1974
        %v1976 = vextract.high.u32 %v1974
        %v1977 = vmul.u32.u64.compose %v1973, %v1968
        %v1978 = vextract.low.u32 %v1977
        %v1979 = vextract.high.u32 %v1977
        %v1980 = vmul.u32 %v1973, %v1964
        %v1981 = vadd.s32 %v1976, %v1978
        %vm1982 = vc.u32 %v1976, %v1978
        %v1983 = vadd.s32 %v1979, 1
        %v1984 = vsel %vm1982, %v1983, %v1979
        %v1985 = vadd.s32 %v1980, %v1984
        %v1986 = vadd.s32 %v1985, 536870912
        %v1987 = vshrl.u32 %v1986, 30
        %v1988 = vshll.u32 %v1987, 30
        %v1989 = vsub.s32 %v1985, %v1988
        %vm1990 = vcmp.lt.s32.totalorder %v1989, 0
        %v1991 = vsub.s32 0, %v1989
        %v1992 = vsel %vm1990, %v1991, %v1989
        %v1993 = vclz %v1992
        %v1994 = vsub.s32 %v1993, 2
        %vm1995 = vcmp.gt.s32.totalorder 0, %v1994
        %v1996 = vsel %vm1995, 0, %v1994
        %v1997 = vsub.s32 32, %v1996
        %v1998 = vshll.u32 %v1989, %v1996
        %v1999 = vshrl.u32 %v1981, %v1997
        %v2000 = vor.u32 %v1998, %v1999
        %v2001 = vsub.s32 4294967266, %v1996
        %v2002 = vadd.s32 %v2001, 127
        %v2003 = vshll.u32 %v2002, 23
        %v2004 = vor.u32 4788187, %v2003
        %v2005 = vand.u32 2147483647, %v2004
        %v2007 = vcvt.s32.f32 %v2000
        %v2008 = vmul.f32 %v2007, %v2005
        %v2009 = vxor.u32 %v2008, 2147483648
        %v2010 = vsel %vm1927, %v2009, %v2008
        %v2011 = vsub.s32 4, %v1987
        %v2012 = vsel %vm1927, %v2011, %v1987
        %v2013 = vsel %vm1926, %v1497, %v2010
        %v2014 = vsel %vm1926, 0, %v2012
        %v2015 = vcosq.f32.pop %v2013
        %v2016 = vsinq.f32.pop %v2013
        %vm2017 = vweird.f32 %v1497
        %v2018 = vadd.s32 %v2014, 3
        %v2019 = vand.u32 %v2018, 3
        %vm2020 = vcmp.lt.s32.totalorder %v2019, 2
        %vm2021 = vcmp.eq.s32.totalorder %v2019, 0
        %v2022 = vxor.u32 %v2016, 2147483648
        %v2023 = vsel %vm2021, %v2015, %v2022
        %vm2024 = vcmp.eq.s32.totalorder %v2019, 2
        %v2025 = vxor.u32 %v2015, 2147483648
        %v2026 = vsel %vm2024, %v2025, %v2016
        %v2027 = vsel %vm2020, %v2023, %v2026
        %v2028 = vsel %vm2017, nan, %v2027
        %v2029 = vand.u32 2147483647, %v1498
        %vm2030 = vcmp.le.f32.partialorder %v2029, 0.7853982
        %vm2031 = vcmp.lt.s32.totalorder %v1498, 0
        %v2032 = vand.u32 %v1498, 2139095040
        %v2033 = vshrl.u32 %v2032, 23
        %v2034 = vsub.s32 %v2033, 127
        %v2035 = vand.u32 2147483647, %v1498
        %v2036 = vand.u32 %v2035, 8388607
        %v2037 = vor.u32 %v2036, 8388608
        %v2038 = vsub.s32 0, %v2037
        %v2039 = vadd.s32 %v2034, 1
        %vm2040 = vcmp.gt.s32.totalorder %v2039, 0
        %v2041 = vsel %vm2040, %v2039, 0
        %v2042 = vshrl.u32 %v2041, 5
        %v2043 = vand.u32 %v2041, 31
        %v2044 = vsub.s32 32, %v2043
        %v2045 = vshrl.u32 683565275, %v2044
        %v2046 = vshll.u32 683565275, %v2043
        %v2047 = vshrl.u32 2475754826, %v2044
        %v2048 = vor.u32 %v2046, %v2047
        %v2049 = vshll.u32 2475754826, %v2043
        %v2050 = vshrl.u32 2131351028, %v2044
        %v2051 = vor.u32 %v2049, %v2050
        %v2052 = vshll.u32 2131351028, %v2043
        %v2053 = vshrl.u32 2102212464, %v2044
        %v2054 = vor.u32 %v2052, %v2053
        %v2055 = vshll.u32 2102212464, %v2043
        %v2056 = vshrl.u32 920167782, %v2044
        %v2057 = vor.u32 %v2055, %v2056
        %v2058 = vshll.u32 920167782, %v2043
        %v2059 = vshrl.u32 1326507024, %v2044
        %v2060 = vor.u32 %v2058, %v2059
        %vm2061 = vcmp.lt.s32.totalorder %v2042, 1
        %vm2062 = vcmp.lt.s32.totalorder %v2042, 2
        %vm2063 = vcmp.lt.s32.totalorder %v2042, 3
        %vm2064 = vcmp.lt.s32.totalorder %v2042, 4
        %v2065 = vsel %vm2061, %v2045, %v2048
        %v2066 = vsel %vm2064, %v2054, 2102212464
        %v2067 = vsel %vm2063, %v2051, %v2066
        %v2068 = vsel %vm2062, %v2065, %v2067
        %v2069 = vsel %vm2061, %v2048, %v2051
        %v2070 = vsel %vm2064, %v2057, 920167782
        %v2071 = vsel %vm2063, %v2054, %v2070
        %v2072 = vsel %vm2062, %v2069, %v2071
        %v2073 = vsel %vm2061, %v2051, %v2054
        %v2074 = vsel %vm2064, %v2060, 1326507024
        %v2075 = vsel %vm2063, %v2057, %v2074
        %v2076 = vsel %vm2062, %v2073, %v2075
        %v2077 = vshll.u32 %v2037, 8
        %v2078 = vmul.u32.u64.compose %v2077, %v2076
        %v2079 = vextract.low.u32 %v2078
        %v2080 = vextract.high.u32 %v2078
        %v2081 = vmul.u32.u64.compose %v2077, %v2072
        %v2082 = vextract.low.u32 %v2081
        %v2083 = vextract.high.u32 %v2081
        %v2084 = vmul.u32 %v2077, %v2068
        %v2085 = vadd.s32 %v2080, %v2082
        %vm2086 = vc.u32 %v2080, %v2082
        %v2087 = vadd.s32 %v2083, 1
        %v2088 = vsel %vm2086, %v2087, %v2083
        %v2089 = vadd.s32 %v2084, %v2088
        %v2090 = vadd.s32 %v2089, 536870912
        %v2091 = vshrl.u32 %v2090, 30
        %v2092 = vshll.u32 %v2091, 30
        %v2093 = vsub.s32 %v2089, %v2092
        %vm2094 = vcmp.lt.s32.totalorder %v2093, 0
        %v2095 = vsub.s32 0, %v2093
        %v2096 = vsel %vm2094, %v2095, %v2093
        %v2097 = vclz %v2096
        %v2098 = vsub.s32 %v2097, 2
        %vm2099 = vcmp.gt.s32.totalorder 0, %v2098
        %v2100 = vsel %vm2099, 0, %v2098
        %v2101 = vsub.s32 32, %v2100
        %v2102 = vshll.u32 %v2093, %v2100
        %v2103 = vshrl.u32 %v2085, %v2101
        %v2104 = vor.u32 %v2102, %v2103
        %v2105 = vsub.s32 4294967266, %v2100
        %v2106 = vadd.s32 %v2105, 127
        %v2107 = vshll.u32 %v2106, 23
        %v2108 = vor.u32 4788187, %v2107
        %v2109 = vand.u32 2147483647, %v2108
        %v2111 = vcvt.s32.f32 %v2104
        %v2112 = vmul.f32 %v2111, %v2109
        %v2113 = vxor.u32 %v2112, 2147483648
        %v2114 = vsel %vm2031, %v2113, %v2112
        %v2115 = vsub.s32 4, %v2091
        %v2116 = vsel %vm2031, %v2115, %v2091
        %v2117 = vsel %vm2030, %v1498, %v2114
        %v2118 = vsel %vm2030, 0, %v2116
        %v2119 = vcosq.f32.pop %v2117
        %v2120 = vsinq.f32.pop %v2117
        %vm2121 = vweird.f32 %v1498
        %v2122 = vadd.s32 %v2118, 3
        %v2123 = vand.u32 %v2122, 3
        %vm2124 = vcmp.lt.s32.totalorder %v2123, 2
        %vm2125 = vcmp.eq.s32.totalorder %v2123, 0
        %v2126 = vxor.u32 %v2120, 2147483648
        %v2127 = vsel %vm2125, %v2119, %v2126
        %vm2128 = vcmp.eq.s32.totalorder %v2123, 2
        %v2129 = vxor.u32 %v2119, 2147483648
        %v2130 = vsel %vm2128, %v2129, %v2120
        %v2131 = vsel %vm2124, %v2127, %v2130
        %v2132 = vsel %vm2121, nan, %v2131
        %v2133 = vand.u32 2147483647, %v1499
        %vm2134 = vcmp.le.f32.partialorder %v2133, 0.7853982
        %vm2135 = vcmp.lt.s32.totalorder %v1499, 0
        %v2136 = vand.u32 %v1499, 2139095040
        %v2137 = vshrl.u32 %v2136, 23
        %v2138 = vsub.s32 %v2137, 127
        %v2139 = vand.u32 2147483647, %v1499
        %v2140 = vand.u32 %v2139, 8388607
        %v2141 = vor.u32 %v2140, 8388608
        %v2142 = vsub.s32 0, %v2141
        %v2143 = vadd.s32 %v2138, 1
        %vm2144 = vcmp.gt.s32.totalorder %v2143, 0
        %v2145 = vsel %vm2144, %v2143, 0
        %v2146 = vshrl.u32 %v2145, 5
        %v2147 = vand.u32 %v2145, 31
        %v2148 = vsub.s32 32, %v2147
        %v2149 = vshrl.u32 683565275, %v2148
        %v2150 = vshll.u32 683565275, %v2147
        %v2151 = vshrl.u32 2475754826, %v2148
        %v2152 = vor.u32 %v2150, %v2151
        %v2153 = vshll.u32 2475754826, %v2147
        %v2154 = vshrl.u32 2131351028, %v2148
        %v2155 = vor.u32 %v2153, %v2154
        %v2156 = vshll.u32 2131351028, %v2147
        %v2157 = vshrl.u32 2102212464, %v2148
        %v2158 = vor.u32 %v2156, %v2157
        %v2159 = vshll.u32 2102212464, %v2147
        %v2160 = vshrl.u32 920167782, %v2148
        %v2161 = vor.u32 %v2159, %v2160
        %v2162 = vshll.u32 920167782, %v2147
        %v2163 = vshrl.u32 1326507024, %v2148
        %v2164 = vor.u32 %v2162, %v2163
        %vm2165 = vcmp.lt.s32.totalorder %v2146, 1
        %vm2166 = vcmp.lt.s32.totalorder %v2146, 2
        %vm2167 = vcmp.lt.s32.totalorder %v2146, 3
        %vm2168 = vcmp.lt.s32.totalorder %v2146, 4
        %v2169 = vsel %vm2165, %v2149, %v2152
        %v2170 = vsel %vm2168, %v2158, 2102212464
        %v2171 = vsel %vm2167, %v2155, %v2170
        %v2172 = vsel %vm2166, %v2169, %v2171
        %v2173 = vsel %vm2165, %v2152, %v2155
        %v2174 = vsel %vm2168, %v2161, 920167782
        %v2175 = vsel %vm2167, %v2158, %v2174
        %v2176 = vsel %vm2166, %v2173, %v2175
        %v2177 = vsel %vm2165, %v2155, %v2158
        %v2178 = vsel %vm2168, %v2164, 1326507024
        %v2179 = vsel %vm2167, %v2161, %v2178
        %v2180 = vsel %vm2166, %v2177, %v2179
        %v2181 = vshll.u32 %v2141, 8
        %v2182 = vmul.u32.u64.compose %v2181, %v2180
        %v2183 = vextract.low.u32 %v2182
        %v2184 = vextract.high.u32 %v2182
        %v2185 = vmul.u32.u64.compose %v2181, %v2176
        %v2186 = vextract.low.u32 %v2185
        %v2187 = vextract.high.u32 %v2185
        %v2188 = vmul.u32 %v2181, %v2172
        %v2189 = vadd.s32 %v2184, %v2186
        %vm2190 = vc.u32 %v2184, %v2186
        %v2191 = vadd.s32 %v2187, 1
        %v2192 = vsel %vm2190, %v2191, %v2187
        %v2193 = vadd.s32 %v2188, %v2192
        %v2194 = vadd.s32 %v2193, 536870912
        %v2195 = vshrl.u32 %v2194, 30
        %v2196 = vshll.u32 %v2195, 30
        %v2197 = vsub.s32 %v2193, %v2196
        %vm2198 = vcmp.lt.s32.totalorder %v2197, 0
        %v2199 = vsub.s32 0, %v2197
        %v2200 = vsel %vm2198, %v2199, %v2197
        %v2201 = vclz %v2200
        %v2202 = vsub.s32 %v2201, 2
        %vm2203 = vcmp.gt.s32.totalorder 0, %v2202
        %v2204 = vsel %vm2203, 0, %v2202
        %v2205 = vsub.s32 32, %v2204
        %v2206 = vshll.u32 %v2197, %v2204
        %v2207 = vshrl.u32 %v2189, %v2205
        %v2208 = vor.u32 %v2206, %v2207
        %v2209 = vsub.s32 4294967266, %v2204
        %v2210 = vadd.s32 %v2209, 127
        %v2211 = vshll.u32 %v2210, 23
        %v2212 = vor.u32 4788187, %v2211
        %v2213 = vand.u32 2147483647, %v2212
        %v2215 = vcvt.s32.f32 %v2208
        %v2216 = vmul.f32 %v2215, %v2213
        %v2217 = vxor.u32 %v2216, 2147483648
        %v2218 = vsel %vm2135, %v2217, %v2216
        %v2219 = vsub.s32 4, %v2195
        %v2220 = vsel %vm2135, %v2219, %v2195
        %v2221 = vsel %vm2134, %v1499, %v2218
        %v2222 = vsel %vm2134, 0, %v2220
        %v2223 = vcosq.f32.pop %v2221
        %v2224 = vsinq.f32.pop %v2221
        %vm2225 = vweird.f32 %v1499
        %v2226 = vadd.s32 %v2222, 3
        %v2227 = vand.u32 %v2226, 3
        %vm2228 = vcmp.lt.s32.totalorder %v2227, 2
        %vm2229 = vcmp.eq.s32.totalorder %v2227, 0
        %v2230 = vxor.u32 %v2224, 2147483648
        %v2231 = vsel %vm2229, %v2223, %v2230
        %vm2232 = vcmp.eq.s32.totalorder %v2227, 2
        %v2233 = vxor.u32 %v2223, 2147483648
        %v2234 = vsel %vm2232, %v2233, %v2224
        %v2235 = vsel %vm2228, %v2231, %v2234
        %v2236 = vsel %vm2225, nan, %v2235
        %v2237 = vand.u32 2147483647, %v1500
        %vm2238 = vcmp.le.f32.partialorder %v2237, 0.7853982
        %vm2239 = vcmp.lt.s32.totalorder %v1500, 0
        %v2240 = vand.u32 %v1500, 2139095040
        %v2241 = vshrl.u32 %v2240, 23
        %v2242 = vsub.s32 %v2241, 127
        %v2243 = vand.u32 2147483647, %v1500
        %v2244 = vand.u32 %v2243, 8388607
        %v2245 = vor.u32 %v2244, 8388608
        %v2246 = vsub.s32 0, %v2245
        %v2247 = vadd.s32 %v2242, 1
        %vm2248 = vcmp.gt.s32.totalorder %v2247, 0
        %v2249 = vsel %vm2248, %v2247, 0
        %v2250 = vshrl.u32 %v2249, 5
        %v2251 = vand.u32 %v2249, 31
        %v2252 = vsub.s32 32, %v2251
        %v2253 = vshrl.u32 683565275, %v2252
        %v2254 = vshll.u32 683565275, %v2251
        %v2255 = vshrl.u32 2475754826, %v2252
        %v2256 = vor.u32 %v2254, %v2255
        %v2257 = vshll.u32 2475754826, %v2251
        %v2258 = vshrl.u32 2131351028, %v2252
        %v2259 = vor.u32 %v2257, %v2258
        %v2260 = vshll.u32 2131351028, %v2251
        %v2261 = vshrl.u32 2102212464, %v2252
        %v2262 = vor.u32 %v2260, %v2261
        %v2263 = vshll.u32 2102212464, %v2251
        %v2264 = vshrl.u32 920167782, %v2252
        %v2265 = vor.u32 %v2263, %v2264
        %v2266 = vshll.u32 920167782, %v2251
        %v2267 = vshrl.u32 1326507024, %v2252
        %v2268 = vor.u32 %v2266, %v2267
        %vm2269 = vcmp.lt.s32.totalorder %v2250, 1
        %vm2270 = vcmp.lt.s32.totalorder %v2250, 2
        %vm2271 = vcmp.lt.s32.totalorder %v2250, 3
        %vm2272 = vcmp.lt.s32.totalorder %v2250, 4
        %v2273 = vsel %vm2269, %v2253, %v2256
        %v2274 = vsel %vm2272, %v2262, 2102212464
        %v2275 = vsel %vm2271, %v2259, %v2274
        %v2276 = vsel %vm2270, %v2273, %v2275
        %v2277 = vsel %vm2269, %v2256, %v2259
        %v2278 = vsel %vm2272, %v2265, 920167782
        %v2279 = vsel %vm2271, %v2262, %v2278
        %v2280 = vsel %vm2270, %v2277, %v2279
        %v2281 = vsel %vm2269, %v2259, %v2262
        %v2282 = vsel %vm2272, %v2268, 1326507024
        %v2283 = vsel %vm2271, %v2265, %v2282
        %v2284 = vsel %vm2270, %v2281, %v2283
        %v2285 = vshll.u32 %v2245, 8
        %v2286 = vmul.u32.u64.compose %v2285, %v2284
        %v2287 = vextract.low.u32 %v2286
        %v2288 = vextract.high.u32 %v2286
        %v2289 = vmul.u32.u64.compose %v2285, %v2280
        %v2290 = vextract.low.u32 %v2289
        %v2291 = vextract.high.u32 %v2289
        %v2292 = vmul.u32 %v2285, %v2276
        %v2293 = vadd.s32 %v2288, %v2290
        %vm2294 = vc.u32 %v2288, %v2290
        %v2295 = vadd.s32 %v2291, 1
        %v2296 = vsel %vm2294, %v2295, %v2291
        %v2297 = vadd.s32 %v2292, %v2296
        %v2298 = vadd.s32 %v2297, 536870912
        %v2299 = vshrl.u32 %v2298, 30
        %v2300 = vshll.u32 %v2299, 30
        %v2301 = vsub.s32 %v2297, %v2300
        %vm2302 = vcmp.lt.s32.totalorder %v2301, 0
        %v2303 = vsub.s32 0, %v2301
        %v2304 = vsel %vm2302, %v2303, %v2301
        %v2305 = vclz %v2304
        %v2306 = vsub.s32 %v2305, 2
        %vm2307 = vcmp.gt.s32.totalorder 0, %v2306
        %v2308 = vsel %vm2307, 0, %v2306
        %v2309 = vsub.s32 32, %v2308
        %v2310 = vshll.u32 %v2301, %v2308
        %v2311 = vshrl.u32 %v2293, %v2309
        %v2312 = vor.u32 %v2310, %v2311
        %v2313 = vsub.s32 4294967266, %v2308
        %v2314 = vadd.s32 %v2313, 127
        %v2315 = vshll.u32 %v2314, 23
        %v2316 = vor.u32 4788187, %v2315
        %v2317 = vand.u32 2147483647, %v2316
        %v2319 = vcvt.s32.f32 %v2312
        %v2320 = vmul.f32 %v2319, %v2317
        %v2321 = vxor.u32 %v2320, 2147483648
        %v2322 = vsel %vm2239, %v2321, %v2320
        %v2323 = vsub.s32 4, %v2299
        %v2324 = vsel %vm2239, %v2323, %v2299
        %v2325 = vsel %vm2238, %v1500, %v2322
        %v2326 = vsel %vm2238, 0, %v2324
        %v2327 = vcosq.f32.pop %v2325
        %v2328 = vsinq.f32.pop %v2325
        %vm2329 = vweird.f32 %v1500
        %v2330 = vadd.s32 %v2326, 3
        %v2331 = vand.u32 %v2330, 3
        %vm2332 = vcmp.lt.s32.totalorder %v2331, 2
        %vm2333 = vcmp.eq.s32.totalorder %v2331, 0
        %v2334 = vxor.u32 %v2328, 2147483648
        %v2335 = vsel %vm2333, %v2327, %v2334
        %vm2336 = vcmp.eq.s32.totalorder %v2331, 2
        %v2337 = vxor.u32 %v2327, 2147483648
        %v2338 = vsel %vm2336, %v2337, %v2328
        %v2339 = vsel %vm2332, %v2335, %v2338
        %v2340 = vsel %vm2329, nan, %v2339
        %v2341 = vand.u32 2147483647, %v1501
        %vm2342 = vcmp.le.f32.partialorder %v2341, 0.7853982
        %vm2343 = vcmp.lt.s32.totalorder %v1501, 0
        %v2344 = vand.u32 %v1501, 2139095040
        %v2345 = vshrl.u32 %v2344, 23
        %v2346 = vsub.s32 %v2345, 127
        %v2347 = vand.u32 2147483647, %v1501
        %v2348 = vand.u32 %v2347, 8388607
        %v2349 = vor.u32 %v2348, 8388608
        %v2350 = vsub.s32 0, %v2349
        %v2351 = vadd.s32 %v2346, 1
        %vm2352 = vcmp.gt.s32.totalorder %v2351, 0
        %v2353 = vsel %vm2352, %v2351, 0
        %v2354 = vshrl.u32 %v2353, 5
        %v2355 = vand.u32 %v2353, 31
        %v2356 = vsub.s32 32, %v2355
        %v2357 = vshrl.u32 683565275, %v2356
        %v2358 = vshll.u32 683565275, %v2355
        %v2359 = vshrl.u32 2475754826, %v2356
        %v2360 = vor.u32 %v2358, %v2359
        %v2361 = vshll.u32 2475754826, %v2355
        %v2362 = vshrl.u32 2131351028, %v2356
        %v2363 = vor.u32 %v2361, %v2362
        %v2364 = vshll.u32 2131351028, %v2355
        %v2365 = vshrl.u32 2102212464, %v2356
        %v2366 = vor.u32 %v2364, %v2365
        %v2367 = vshll.u32 2102212464, %v2355
        %v2368 = vshrl.u32 920167782, %v2356
        %v2369 = vor.u32 %v2367, %v2368
        %v2370 = vshll.u32 920167782, %v2355
        %v2371 = vshrl.u32 1326507024, %v2356
        %v2372 = vor.u32 %v2370, %v2371
        %vm2373 = vcmp.lt.s32.totalorder %v2354, 1
        %vm2374 = vcmp.lt.s32.totalorder %v2354, 2
        %vm2375 = vcmp.lt.s32.totalorder %v2354, 3
        %vm2376 = vcmp.lt.s32.totalorder %v2354, 4
        %v2377 = vsel %vm2373, %v2357, %v2360
        %v2378 = vsel %vm2376, %v2366, 2102212464
        %v2379 = vsel %vm2375, %v2363, %v2378
        %v2380 = vsel %vm2374, %v2377, %v2379
        %v2381 = vsel %vm2373, %v2360, %v2363
        %v2382 = vsel %vm2376, %v2369, 920167782
        %v2383 = vsel %vm2375, %v2366, %v2382
        %v2384 = vsel %vm2374, %v2381, %v2383
        %v2385 = vsel %vm2373, %v2363, %v2366
        %v2386 = vsel %vm2376, %v2372, 1326507024
        %v2387 = vsel %vm2375, %v2369, %v2386
        %v2388 = vsel %vm2374, %v2385, %v2387
        %v2389 = vshll.u32 %v2349, 8
        %v2390 = vmul.u32.u64.compose %v2389, %v2388
        %v2391 = vextract.low.u32 %v2390
        %v2392 = vextract.high.u32 %v2390
        %v2393 = vmul.u32.u64.compose %v2389, %v2384
        %v2394 = vextract.low.u32 %v2393
        %v2395 = vextract.high.u32 %v2393
        %v2396 = vmul.u32 %v2389, %v2380
        %v2397 = vadd.s32 %v2392, %v2394
        %vm2398 = vc.u32 %v2392, %v2394
        %v2399 = vadd.s32 %v2395, 1
        %v2400 = vsel %vm2398, %v2399, %v2395
        %v2401 = vadd.s32 %v2396, %v2400
        %v2402 = vadd.s32 %v2401, 536870912
        %v2403 = vshrl.u32 %v2402, 30
        %v2404 = vshll.u32 %v2403, 30
        %v2405 = vsub.s32 %v2401, %v2404
        %vm2406 = vcmp.lt.s32.totalorder %v2405, 0
        %v2407 = vsub.s32 0, %v2405
        %v2408 = vsel %vm2406, %v2407, %v2405
        %v2409 = vclz %v2408
        %v2410 = vsub.s32 %v2409, 2
        %vm2411 = vcmp.gt.s32.totalorder 0, %v2410
        %v2412 = vsel %vm2411, 0, %v2410
        %v2413 = vsub.s32 32, %v2412
        %v2414 = vshll.u32 %v2405, %v2412
        %v2415 = vshrl.u32 %v2397, %v2413
        %v2416 = vor.u32 %v2414, %v2415
        %v2417 = vsub.s32 4294967266, %v2412
        %v2418 = vadd.s32 %v2417, 127
        %v2419 = vshll.u32 %v2418, 23
        %v2420 = vor.u32 4788187, %v2419
        %v2421 = vand.u32 2147483647, %v2420
        %v2423 = vcvt.s32.f32 %v2416
        %v2424 = vmul.f32 %v2423, %v2421
        %v2425 = vxor.u32 %v2424, 2147483648
        %v2426 = vsel %vm2343, %v2425, %v2424
        %v2427 = vsub.s32 4, %v2403
        %v2428 = vsel %vm2343, %v2427, %v2403
        %v2429 = vsel %vm2342, %v1501, %v2426
        %v2430 = vsel %vm2342, 0, %v2428
        %v2431 = vcosq.f32.pop %v2429
        %v2432 = vsinq.f32.pop %v2429
        %vm2433 = vweird.f32 %v1501
        %v2434 = vadd.s32 %v2430, 3
        %v2435 = vand.u32 %v2434, 3
        %vm2436 = vcmp.lt.s32.totalorder %v2435, 2
        %vm2437 = vcmp.eq.s32.totalorder %v2435, 0
        %v2438 = vxor.u32 %v2432, 2147483648
        %v2439 = vsel %vm2437, %v2431, %v2438
        %vm2440 = vcmp.eq.s32.totalorder %v2435, 2
        %v2441 = vxor.u32 %v2431, 2147483648
        %v2442 = vsel %vm2440, %v2441, %v2432
        %v2443 = vsel %vm2436, %v2439, %v2442
        %v2444 = vsel %vm2433, nan, %v2443
        %v2445 = vand.u32 2147483647, %v1502
        %vm2446 = vcmp.le.f32.partialorder %v2445, 0.7853982
        %vm2447 = vcmp.lt.s32.totalorder %v1502, 0
        %v2448 = vand.u32 %v1502, 2139095040
        %v2449 = vshrl.u32 %v2448, 23
        %v2450 = vsub.s32 %v2449, 127
        %v2451 = vand.u32 2147483647, %v1502
        %v2452 = vand.u32 %v2451, 8388607
        %v2453 = vor.u32 %v2452, 8388608
        %v2454 = vsub.s32 0, %v2453
        %v2455 = vadd.s32 %v2450, 1
        %vm2456 = vcmp.gt.s32.totalorder %v2455, 0
        %v2457 = vsel %vm2456, %v2455, 0
        %v2458 = vshrl.u32 %v2457, 5
        %v2459 = vand.u32 %v2457, 31
        %v2460 = vsub.s32 32, %v2459
        %v2461 = vshrl.u32 683565275, %v2460
        %v2462 = vshll.u32 683565275, %v2459
        %v2463 = vshrl.u32 2475754826, %v2460
        %v2464 = vor.u32 %v2462, %v2463
        %v2465 = vshll.u32 2475754826, %v2459
        %v2466 = vshrl.u32 2131351028, %v2460
        %v2467 = vor.u32 %v2465, %v2466
        %v2468 = vshll.u32 2131351028, %v2459
        %v2469 = vshrl.u32 2102212464, %v2460
        %v2470 = vor.u32 %v2468, %v2469
        %v2471 = vshll.u32 2102212464, %v2459
        %v2472 = vshrl.u32 920167782, %v2460
        %v2473 = vor.u32 %v2471, %v2472
        %v2474 = vshll.u32 920167782, %v2459
        %v2475 = vshrl.u32 1326507024, %v2460
        %v2476 = vor.u32 %v2474, %v2475
        %vm2477 = vcmp.lt.s32.totalorder %v2458, 1
        %vm2478 = vcmp.lt.s32.totalorder %v2458, 2
        %vm2479 = vcmp.lt.s32.totalorder %v2458, 3
        %vm2480 = vcmp.lt.s32.totalorder %v2458, 4
        %v2481 = vsel %vm2477, %v2461, %v2464
        %v2482 = vsel %vm2480, %v2470, 2102212464
        %v2483 = vsel %vm2479, %v2467, %v2482
        %v2484 = vsel %vm2478, %v2481, %v2483
        %v2485 = vsel %vm2477, %v2464, %v2467
        %v2486 = vsel %vm2480, %v2473, 920167782
        %v2487 = vsel %vm2479, %v2470, %v2486
        %v2488 = vsel %vm2478, %v2485, %v2487
        %v2489 = vsel %vm2477, %v2467, %v2470
        %v2490 = vsel %vm2480, %v2476, 1326507024
        %v2491 = vsel %vm2479, %v2473, %v2490
        %v2492 = vsel %vm2478, %v2489, %v2491
        %v2493 = vshll.u32 %v2453, 8
        %v2494 = vmul.u32.u64.compose %v2493, %v2492
        %v2495 = vextract.low.u32 %v2494
        %v2496 = vextract.high.u32 %v2494
        %v2497 = vmul.u32.u64.compose %v2493, %v2488
        %v2498 = vextract.low.u32 %v2497
        %v2499 = vextract.high.u32 %v2497
        %v2500 = vmul.u32 %v2493, %v2484
        %v2501 = vadd.s32 %v2496, %v2498
        %vm2502 = vc.u32 %v2496, %v2498
        %v2503 = vadd.s32 %v2499, 1
        %v2504 = vsel %vm2502, %v2503, %v2499
        %v2505 = vadd.s32 %v2500, %v2504
        %v2506 = vadd.s32 %v2505, 536870912
        %v2507 = vshrl.u32 %v2506, 30
        %v2508 = vshll.u32 %v2507, 30
        %v2509 = vsub.s32 %v2505, %v2508
        %vm2510 = vcmp.lt.s32.totalorder %v2509, 0
        %v2511 = vsub.s32 0, %v2509
        %v2512 = vsel %vm2510, %v2511, %v2509
        %v2513 = vclz %v2512
        %v2514 = vsub.s32 %v2513, 2
        %vm2515 = vcmp.gt.s32.totalorder 0, %v2514
        %v2516 = vsel %vm2515, 0, %v2514
        %v2517 = vsub.s32 32, %v2516
        %v2518 = vshll.u32 %v2509, %v2516
        %v2519 = vshrl.u32 %v2501, %v2517
        %v2520 = vor.u32 %v2518, %v2519
        %v2521 = vsub.s32 4294967266, %v2516
        %v2522 = vadd.s32 %v2521, 127
        %v2523 = vshll.u32 %v2522, 23
        %v2524 = vor.u32 4788187, %v2523
        %v2525 = vand.u32 2147483647, %v2524
        %v2527 = vcvt.s32.f32 %v2520
        %v2528 = vmul.f32 %v2527, %v2525
        %v2529 = vxor.u32 %v2528, 2147483648
        %v2530 = vsel %vm2447, %v2529, %v2528
        %v2531 = vsub.s32 4, %v2507
        %v2532 = vsel %vm2447, %v2531, %v2507
        %v2533 = vsel %vm2446, %v1502, %v2530
        %v2534 = vsel %vm2446, 0, %v2532
        %v2535 = vcosq.f32.pop %v2533
        %v2536 = vsinq.f32.pop %v2533
        %vm2537 = vweird.f32 %v1502
        %v2538 = vadd.s32 %v2534, 3
        %v2539 = vand.u32 %v2538, 3
        %vm2540 = vcmp.lt.s32.totalorder %v2539, 2
        %vm2541 = vcmp.eq.s32.totalorder %v2539, 0
        %v2542 = vxor.u32 %v2536, 2147483648
        %v2543 = vsel %vm2541, %v2535, %v2542
        %vm2544 = vcmp.eq.s32.totalorder %v2539, 2
        %v2545 = vxor.u32 %v2535, 2147483648
        %v2546 = vsel %vm2544, %v2545, %v2536
        %v2547 = vsel %vm2540, %v2543, %v2546
        %v2548 = vsel %vm2537, nan, %v2547
        %v2549 = vand.u32 2147483647, %v1503
        %vm2550 = vcmp.le.f32.partialorder %v2549, 0.7853982
        %vm2551 = vcmp.lt.s32.totalorder %v1503, 0
        %v2552 = vand.u32 %v1503, 2139095040
        %v2553 = vshrl.u32 %v2552, 23
        %v2554 = vsub.s32 %v2553, 127
        %v2555 = vand.u32 2147483647, %v1503
        %v2556 = vand.u32 %v2555, 8388607
        %v2557 = vor.u32 %v2556, 8388608
        %v2558 = vsub.s32 0, %v2557
        %v2559 = vadd.s32 %v2554, 1
        %vm2560 = vcmp.gt.s32.totalorder %v2559, 0
        %v2561 = vsel %vm2560, %v2559, 0
        %v2562 = vshrl.u32 %v2561, 5
        %v2563 = vand.u32 %v2561, 31
        %v2564 = vsub.s32 32, %v2563
        %v2565 = vshrl.u32 683565275, %v2564
        %v2566 = vshll.u32 683565275, %v2563
        %v2567 = vshrl.u32 2475754826, %v2564
        %v2568 = vor.u32 %v2566, %v2567
        %v2569 = vshll.u32 2475754826, %v2563
        %v2570 = vshrl.u32 2131351028, %v2564
        %v2571 = vor.u32 %v2569, %v2570
        %v2572 = vshll.u32 2131351028, %v2563
        %v2573 = vshrl.u32 2102212464, %v2564
        %v2574 = vor.u32 %v2572, %v2573
        %v2575 = vshll.u32 2102212464, %v2563
        %v2576 = vshrl.u32 920167782, %v2564
        %v2577 = vor.u32 %v2575, %v2576
        %v2578 = vshll.u32 920167782, %v2563
        %v2579 = vshrl.u32 1326507024, %v2564
        %v2580 = vor.u32 %v2578, %v2579
        %vm2581 = vcmp.lt.s32.totalorder %v2562, 1
        %vm2582 = vcmp.lt.s32.totalorder %v2562, 2
        %vm2583 = vcmp.lt.s32.totalorder %v2562, 3
        %vm2584 = vcmp.lt.s32.totalorder %v2562, 4
        %v2585 = vsel %vm2581, %v2565, %v2568
        %v2586 = vsel %vm2584, %v2574, 2102212464
        %v2587 = vsel %vm2583, %v2571, %v2586
        %v2588 = vsel %vm2582, %v2585, %v2587
        %v2589 = vsel %vm2581, %v2568, %v2571
        %v2590 = vsel %vm2584, %v2577, 920167782
        %v2591 = vsel %vm2583, %v2574, %v2590
        %v2592 = vsel %vm2582, %v2589, %v2591
        %v2593 = vsel %vm2581, %v2571, %v2574
        %v2594 = vsel %vm2584, %v2580, 1326507024
        %v2595 = vsel %vm2583, %v2577, %v2594
        %v2596 = vsel %vm2582, %v2593, %v2595
        %v2597 = vshll.u32 %v2557, 8
        %v2598 = vmul.u32.u64.compose %v2597, %v2596
        %v2599 = vextract.low.u32 %v2598
        %v2600 = vextract.high.u32 %v2598
        %v2601 = vmul.u32.u64.compose %v2597, %v2592
        %v2602 = vextract.low.u32 %v2601
        %v2603 = vextract.high.u32 %v2601
        %v2604 = vmul.u32 %v2597, %v2588
        %v2605 = vadd.s32 %v2600, %v2602
        %vm2606 = vc.u32 %v2600, %v2602
        %v2607 = vadd.s32 %v2603, 1
        %v2608 = vsel %vm2606, %v2607, %v2603
        %v2609 = vadd.s32 %v2604, %v2608
        %v2610 = vadd.s32 %v2609, 536870912
        %v2611 = vshrl.u32 %v2610, 30
        %v2612 = vshll.u32 %v2611, 30
        %v2613 = vsub.s32 %v2609, %v2612
        %vm2614 = vcmp.lt.s32.totalorder %v2613, 0
        %v2615 = vsub.s32 0, %v2613
        %v2616 = vsel %vm2614, %v2615, %v2613
        %v2617 = vclz %v2616
        %v2618 = vsub.s32 %v2617, 2
        %vm2619 = vcmp.gt.s32.totalorder 0, %v2618
        %v2620 = vsel %vm2619, 0, %v2618
        %v2621 = vsub.s32 32, %v2620
        %v2622 = vshll.u32 %v2613, %v2620
        %v2623 = vshrl.u32 %v2605, %v2621
        %v2624 = vor.u32 %v2622, %v2623
        %v2625 = vsub.s32 4294967266, %v2620
        %v2626 = vadd.s32 %v2625, 127
        %v2627 = vshll.u32 %v2626, 23
        %v2628 = vor.u32 4788187, %v2627
        %v2629 = vand.u32 2147483647, %v2628
        %v2631 = vcvt.s32.f32 %v2624
        %v2632 = vmul.f32 %v2631, %v2629
        %v2633 = vxor.u32 %v2632, 2147483648
        %v2634 = vsel %vm2551, %v2633, %v2632
        %v2635 = vsub.s32 4, %v2611
        %v2636 = vsel %vm2551, %v2635, %v2611
        %v2637 = vsel %vm2550, %v1503, %v2634
        %v2638 = vsel %vm2550, 0, %v2636
        %v2639 = vcosq.f32.pop %v2637
        %v2640 = vsinq.f32.pop %v2637
        %vm2641 = vweird.f32 %v1503
        %v2642 = vadd.s32 %v2638, 3
        %v2643 = vand.u32 %v2642, 3
        %vm2644 = vcmp.lt.s32.totalorder %v2643, 2
        %vm2645 = vcmp.eq.s32.totalorder %v2643, 0
        %v2646 = vxor.u32 %v2640, 2147483648
        %v2647 = vsel %vm2645, %v2639, %v2646
        %vm2648 = vcmp.eq.s32.totalorder %v2643, 2
        %v2649 = vxor.u32 %v2639, 2147483648
        %v2650 = vsel %vm2648, %v2649, %v2640
        %v2651 = vsel %vm2644, %v2647, %v2650
        %v2652 = vsel %vm2641, nan, %v2651
        %v2653 = vand.u32 2147483647, %v1504
        %vm2654 = vcmp.le.f32.partialorder %v2653, 0.7853982
        %vm2655 = vcmp.lt.s32.totalorder %v1504, 0
        %v2656 = vand.u32 %v1504, 2139095040
        %v2657 = vshrl.u32 %v2656, 23
        %v2658 = vsub.s32 %v2657, 127
        %v2659 = vand.u32 2147483647, %v1504
        %v2660 = vand.u32 %v2659, 8388607
        %v2661 = vor.u32 %v2660, 8388608
        %v2662 = vsub.s32 0, %v2661
        %v2663 = vadd.s32 %v2658, 1
        %vm2664 = vcmp.gt.s32.totalorder %v2663, 0
        %v2665 = vsel %vm2664, %v2663, 0
        %v2666 = vshrl.u32 %v2665, 5
        %v2667 = vand.u32 %v2665, 31
        %v2668 = vsub.s32 32, %v2667
        %v2669 = vshrl.u32 683565275, %v2668
        %v2670 = vshll.u32 683565275, %v2667
        %v2671 = vshrl.u32 2475754826, %v2668
        %v2672 = vor.u32 %v2670, %v2671
        %v2673 = vshll.u32 2475754826, %v2667
        %v2674 = vshrl.u32 2131351028, %v2668
        %v2675 = vor.u32 %v2673, %v2674
        %v2676 = vshll.u32 2131351028, %v2667
        %v2677 = vshrl.u32 2102212464, %v2668
        %v2678 = vor.u32 %v2676, %v2677
        %v2679 = vshll.u32 2102212464, %v2667
        %v2680 = vshrl.u32 920167782, %v2668
        %v2681 = vor.u32 %v2679, %v2680
        %v2682 = vshll.u32 920167782, %v2667
        %v2683 = vshrl.u32 1326507024, %v2668
        %v2684 = vor.u32 %v2682, %v2683
        %vm2685 = vcmp.lt.s32.totalorder %v2666, 1
        %vm2686 = vcmp.lt.s32.totalorder %v2666, 2
        %vm2687 = vcmp.lt.s32.totalorder %v2666, 3
        %vm2688 = vcmp.lt.s32.totalorder %v2666, 4
        %v2689 = vsel %vm2685, %v2669, %v2672
        %v2690 = vsel %vm2688, %v2678, 2102212464
        %v2691 = vsel %vm2687, %v2675, %v2690
        %v2692 = vsel %vm2686, %v2689, %v2691
        %v2693 = vsel %vm2685, %v2672, %v2675
        %v2694 = vsel %vm2688, %v2681, 920167782
        %v2695 = vsel %vm2687, %v2678, %v2694
        %v2696 = vsel %vm2686, %v2693, %v2695
        %v2697 = vsel %vm2685, %v2675, %v2678
        %v2698 = vsel %vm2688, %v2684, 1326507024
        %v2699 = vsel %vm2687, %v2681, %v2698
        %v2700 = vsel %vm2686, %v2697, %v2699
        %v2701 = vshll.u32 %v2661, 8
        %v2702 = vmul.u32.u64.compose %v2701, %v2700
        %v2703 = vextract.low.u32 %v2702
        %v2704 = vextract.high.u32 %v2702
        %v2705 = vmul.u32.u64.compose %v2701, %v2696
        %v2706 = vextract.low.u32 %v2705
        %v2707 = vextract.high.u32 %v2705
        %v2708 = vmul.u32 %v2701, %v2692
        %v2709 = vadd.s32 %v2704, %v2706
        %vm2710 = vc.u32 %v2704, %v2706
        %v2711 = vadd.s32 %v2707, 1
        %v2712 = vsel %vm2710, %v2711, %v2707
        %v2713 = vadd.s32 %v2708, %v2712
        %v2714 = vadd.s32 %v2713, 536870912
        %v2715 = vshrl.u32 %v2714, 30
        %v2716 = vshll.u32 %v2715, 30
        %v2717 = vsub.s32 %v2713, %v2716
        %vm2718 = vcmp.lt.s32.totalorder %v2717, 0
        %v2719 = vsub.s32 0, %v2717
        %v2720 = vsel %vm2718, %v2719, %v2717
        %v2721 = vclz %v2720
        %v2722 = vsub.s32 %v2721, 2
        %vm2723 = vcmp.gt.s32.totalorder 0, %v2722
        %v2724 = vsel %vm2723, 0, %v2722
        %v2725 = vsub.s32 32, %v2724
        %v2726 = vshll.u32 %v2717, %v2724
        %v2727 = vshrl.u32 %v2709, %v2725
        %v2728 = vor.u32 %v2726, %v2727
        %v2729 = vsub.s32 4294967266, %v2724
        %v2730 = vadd.s32 %v2729, 127
        %v2731 = vshll.u32 %v2730, 23
        %v2732 = vor.u32 4788187, %v2731
        %v2733 = vand.u32 2147483647, %v2732
        %v2735 = vcvt.s32.f32 %v2728
        %v2736 = vmul.f32 %v2735, %v2733
        %v2737 = vxor.u32 %v2736, 2147483648
        %v2738 = vsel %vm2655, %v2737, %v2736
        %v2739 = vsub.s32 4, %v2715
        %v2740 = vsel %vm2655, %v2739, %v2715
        %v2741 = vsel %vm2654, %v1504, %v2738
        %v2742 = vsel %vm2654, 0, %v2740
        %v2743 = vcosq.f32.pop %v2741
        %v2744 = vsinq.f32.pop %v2741
        %vm2745 = vweird.f32 %v1504
        %v2746 = vadd.s32 %v2742, 3
        %v2747 = vand.u32 %v2746, 3
        %vm2748 = vcmp.lt.s32.totalorder %v2747, 2
        %vm2749 = vcmp.eq.s32.totalorder %v2747, 0
        %v2750 = vxor.u32 %v2744, 2147483648
        %v2751 = vsel %vm2749, %v2743, %v2750
        %vm2752 = vcmp.eq.s32.totalorder %v2747, 2
        %v2753 = vxor.u32 %v2743, 2147483648
        %v2754 = vsel %vm2752, %v2753, %v2744
        %v2755 = vsel %vm2748, %v2751, %v2754
        %v2756 = vsel %vm2745, nan, %v2755
        %v2757 = vand.u32 2147483647, %v1505
        %vm2758 = vcmp.le.f32.partialorder %v2757, 0.7853982
        %vm2759 = vcmp.lt.s32.totalorder %v1505, 0
        %v2760 = vand.u32 %v1505, 2139095040
        %v2761 = vshrl.u32 %v2760, 23
        %v2762 = vsub.s32 %v2761, 127
        %v2763 = vand.u32 2147483647, %v1505
        %v2764 = vand.u32 %v2763, 8388607
        %v2765 = vor.u32 %v2764, 8388608
        %v2766 = vsub.s32 0, %v2765
        %v2767 = vadd.s32 %v2762, 1
        %vm2768 = vcmp.gt.s32.totalorder %v2767, 0
        %v2769 = vsel %vm2768, %v2767, 0
        %v2770 = vshrl.u32 %v2769, 5
        %v2771 = vand.u32 %v2769, 31
        %v2772 = vsub.s32 32, %v2771
        %v2773 = vshrl.u32 683565275, %v2772
        %v2774 = vshll.u32 683565275, %v2771
        %v2775 = vshrl.u32 2475754826, %v2772
        %v2776 = vor.u32 %v2774, %v2775
        %v2777 = vshll.u32 2475754826, %v2771
        %v2778 = vshrl.u32 2131351028, %v2772
        %v2779 = vor.u32 %v2777, %v2778
        %v2780 = vshll.u32 2131351028, %v2771
        %v2781 = vshrl.u32 2102212464, %v2772
        %v2782 = vor.u32 %v2780, %v2781
        %v2783 = vshll.u32 2102212464, %v2771
        %v2784 = vshrl.u32 920167782, %v2772
        %v2785 = vor.u32 %v2783, %v2784
        %v2786 = vshll.u32 920167782, %v2771
        %v2787 = vshrl.u32 1326507024, %v2772
        %v2788 = vor.u32 %v2786, %v2787
        %vm2789 = vcmp.lt.s32.totalorder %v2770, 1
        %vm2790 = vcmp.lt.s32.totalorder %v2770, 2
        %vm2791 = vcmp.lt.s32.totalorder %v2770, 3
        %vm2792 = vcmp.lt.s32.totalorder %v2770, 4
        %v2793 = vsel %vm2789, %v2773, %v2776
        %v2794 = vsel %vm2792, %v2782, 2102212464
        %v2795 = vsel %vm2791, %v2779, %v2794
        %v2796 = vsel %vm2790, %v2793, %v2795
        %v2797 = vsel %vm2789, %v2776, %v2779
        %v2798 = vsel %vm2792, %v2785, 920167782
        %v2799 = vsel %vm2791, %v2782, %v2798
        %v2800 = vsel %vm2790, %v2797, %v2799
        %v2801 = vsel %vm2789, %v2779, %v2782
        %v2802 = vsel %vm2792, %v2788, 1326507024
        %v2803 = vsel %vm2791, %v2785, %v2802
        %v2804 = vsel %vm2790, %v2801, %v2803
        %v2805 = vshll.u32 %v2765, 8
        %v2806 = vmul.u32.u64.compose %v2805, %v2804
        %v2807 = vextract.low.u32 %v2806
        %v2808 = vextract.high.u32 %v2806
        %v2809 = vmul.u32.u64.compose %v2805, %v2800
        %v2810 = vextract.low.u32 %v2809
        %v2811 = vextract.high.u32 %v2809
        %v2812 = vmul.u32 %v2805, %v2796
        %v2813 = vadd.s32 %v2808, %v2810
        %vm2814 = vc.u32 %v2808, %v2810
        %v2815 = vadd.s32 %v2811, 1
        %v2816 = vsel %vm2814, %v2815, %v2811
        %v2817 = vadd.s32 %v2812, %v2816
        %v2818 = vadd.s32 %v2817, 536870912
        %v2819 = vshrl.u32 %v2818, 30
        %v2820 = vshll.u32 %v2819, 30
        %v2821 = vsub.s32 %v2817, %v2820
        %vm2822 = vcmp.lt.s32.totalorder %v2821, 0
        %v2823 = vsub.s32 0, %v2821
        %v2824 = vsel %vm2822, %v2823, %v2821
        %v2825 = vclz %v2824
        %v2826 = vsub.s32 %v2825, 2
        %vm2827 = vcmp.gt.s32.totalorder 0, %v2826
        %v2828 = vsel %vm2827, 0, %v2826
        %v2829 = vsub.s32 32, %v2828
        %v2830 = vshll.u32 %v2821, %v2828
        %v2831 = vshrl.u32 %v2813, %v2829
        %v2832 = vor.u32 %v2830, %v2831
        %v2833 = vsub.s32 4294967266, %v2828
        %v2834 = vadd.s32 %v2833, 127
        %v2835 = vshll.u32 %v2834, 23
        %v2836 = vor.u32 4788187, %v2835
        %v2837 = vand.u32 2147483647, %v2836
        %v2839 = vcvt.s32.f32 %v2832
        %v2840 = vmul.f32 %v2839, %v2837
        %v2841 = vxor.u32 %v2840, 2147483648
        %v2842 = vsel %vm2759, %v2841, %v2840
        %v2843 = vsub.s32 4, %v2819
        %v2844 = vsel %vm2759, %v2843, %v2819
        %v2845 = vsel %vm2758, %v1505, %v2842
        %v2846 = vsel %vm2758, 0, %v2844
        %v2847 = vcosq.f32.pop %v2845
        %v2848 = vsinq.f32.pop %v2845
        %vm2849 = vweird.f32 %v1505
        %v2850 = vadd.s32 %v2846, 3
        %v2851 = vand.u32 %v2850, 3
        %vm2852 = vcmp.lt.s32.totalorder %v2851, 2
        %vm2853 = vcmp.eq.s32.totalorder %v2851, 0
        %v2854 = vxor.u32 %v2848, 2147483648
        %v2855 = vsel %vm2853, %v2847, %v2854
        %vm2856 = vcmp.eq.s32.totalorder %v2851, 2
        %v2857 = vxor.u32 %v2847, 2147483648
        %v2858 = vsel %vm2856, %v2857, %v2848
        %v2859 = vsel %vm2852, %v2855, %v2858
        %v2860 = vsel %vm2849, nan, %v2859
        %v2861 = vand.u32 2147483647, %v1506
        %vm2862 = vcmp.le.f32.partialorder %v2861, 0.7853982
        %vm2863 = vcmp.lt.s32.totalorder %v1506, 0
        %v2864 = vand.u32 %v1506, 2139095040
        %v2865 = vshrl.u32 %v2864, 23
        %v2866 = vsub.s32 %v2865, 127
        %v2867 = vand.u32 2147483647, %v1506
        %v2868 = vand.u32 %v2867, 8388607
        %v2869 = vor.u32 %v2868, 8388608
        %v2870 = vsub.s32 0, %v2869
        %v2871 = vadd.s32 %v2866, 1
        %vm2872 = vcmp.gt.s32.totalorder %v2871, 0
        %v2873 = vsel %vm2872, %v2871, 0
        %v2874 = vshrl.u32 %v2873, 5
        %v2875 = vand.u32 %v2873, 31
        %v2876 = vsub.s32 32, %v2875
        %v2877 = vshrl.u32 683565275, %v2876
        %v2878 = vshll.u32 683565275, %v2875
        %v2879 = vshrl.u32 2475754826, %v2876
        %v2880 = vor.u32 %v2878, %v2879
        %v2881 = vshll.u32 2475754826, %v2875
        %v2882 = vshrl.u32 2131351028, %v2876
        %v2883 = vor.u32 %v2881, %v2882
        %v2884 = vshll.u32 2131351028, %v2875
        %v2885 = vshrl.u32 2102212464, %v2876
        %v2886 = vor.u32 %v2884, %v2885
        %v2887 = vshll.u32 2102212464, %v2875
        %v2888 = vshrl.u32 920167782, %v2876
        %v2889 = vor.u32 %v2887, %v2888
        %v2890 = vshll.u32 920167782, %v2875
        %v2891 = vshrl.u32 1326507024, %v2876
        %v2892 = vor.u32 %v2890, %v2891
        %vm2893 = vcmp.lt.s32.totalorder %v2874, 1
        %vm2894 = vcmp.lt.s32.totalorder %v2874, 2
        %vm2895 = vcmp.lt.s32.totalorder %v2874, 3
        %vm2896 = vcmp.lt.s32.totalorder %v2874, 4
        %v2897 = vsel %vm2893, %v2877, %v2880
        %v2898 = vsel %vm2896, %v2886, 2102212464
        %v2899 = vsel %vm2895, %v2883, %v2898
        %v2900 = vsel %vm2894, %v2897, %v2899
        %v2901 = vsel %vm2893, %v2880, %v2883
        %v2902 = vsel %vm2896, %v2889, 920167782
        %v2903 = vsel %vm2895, %v2886, %v2902
        %v2904 = vsel %vm2894, %v2901, %v2903
        %v2905 = vsel %vm2893, %v2883, %v2886
        %v2906 = vsel %vm2896, %v2892, 1326507024
        %v2907 = vsel %vm2895, %v2889, %v2906
        %v2908 = vsel %vm2894, %v2905, %v2907
        %v2909 = vshll.u32 %v2869, 8
        %v2910 = vmul.u32.u64.compose %v2909, %v2908
        %v2911 = vextract.low.u32 %v2910
        %v2912 = vextract.high.u32 %v2910
        %v2913 = vmul.u32.u64.compose %v2909, %v2904
        %v2914 = vextract.low.u32 %v2913
        %v2915 = vextract.high.u32 %v2913
        %v2916 = vmul.u32 %v2909, %v2900
        %v2917 = vadd.s32 %v2912, %v2914
        %vm2918 = vc.u32 %v2912, %v2914
        %v2919 = vadd.s32 %v2915, 1
        %v2920 = vsel %vm2918, %v2919, %v2915
        %v2921 = vadd.s32 %v2916, %v2920
        %v2922 = vadd.s32 %v2921, 536870912
        %v2923 = vshrl.u32 %v2922, 30
        %v2924 = vshll.u32 %v2923, 30
        %v2925 = vsub.s32 %v2921, %v2924
        %vm2926 = vcmp.lt.s32.totalorder %v2925, 0
        %v2927 = vsub.s32 0, %v2925
        %v2928 = vsel %vm2926, %v2927, %v2925
        %v2929 = vclz %v2928
        %v2930 = vsub.s32 %v2929, 2
        %vm2931 = vcmp.gt.s32.totalorder 0, %v2930
        %v2932 = vsel %vm2931, 0, %v2930
        %v2933 = vsub.s32 32, %v2932
        %v2934 = vshll.u32 %v2925, %v2932
        %v2935 = vshrl.u32 %v2917, %v2933
        %v2936 = vor.u32 %v2934, %v2935
        %v2937 = vsub.s32 4294967266, %v2932
        %v2938 = vadd.s32 %v2937, 127
        %v2939 = vshll.u32 %v2938, 23
        %v2940 = vor.u32 4788187, %v2939
        %v2941 = vand.u32 2147483647, %v2940
        %v2943 = vcvt.s32.f32 %v2936
        %v2944 = vmul.f32 %v2943, %v2941
        %v2945 = vxor.u32 %v2944, 2147483648
        %v2946 = vsel %vm2863, %v2945, %v2944
        %v2947 = vsub.s32 4, %v2923
        %v2948 = vsel %vm2863, %v2947, %v2923
        %v2949 = vsel %vm2862, %v1506, %v2946
        %v2950 = vsel %vm2862, 0, %v2948
        %v2951 = vcosq.f32.pop %v2949
        %v2952 = vsinq.f32.pop %v2949
        %vm2953 = vweird.f32 %v1506
        %v2954 = vadd.s32 %v2950, 3
        %v2955 = vand.u32 %v2954, 3
        %vm2956 = vcmp.lt.s32.totalorder %v2955, 2
        %vm2957 = vcmp.eq.s32.totalorder %v2955, 0
        %v2958 = vxor.u32 %v2952, 2147483648
        %v2959 = vsel %vm2957, %v2951, %v2958
        %vm2960 = vcmp.eq.s32.totalorder %v2955, 2
        %v2961 = vxor.u32 %v2951, 2147483648
        %v2962 = vsel %vm2960, %v2961, %v2952
        %v2963 = vsel %vm2956, %v2959, %v2962
        %v2964 = vsel %vm2953, nan, %v2963
        %v2965 = vand.u32 2147483647, %v1507
        %vm2966 = vcmp.le.f32.partialorder %v2965, 0.7853982
        %vm2967 = vcmp.lt.s32.totalorder %v1507, 0
        %v2968 = vand.u32 %v1507, 2139095040
        %v2969 = vshrl.u32 %v2968, 23
        %v2970 = vsub.s32 %v2969, 127
        %v2971 = vand.u32 2147483647, %v1507
        %v2972 = vand.u32 %v2971, 8388607
        %v2973 = vor.u32 %v2972, 8388608
        %v2974 = vsub.s32 0, %v2973
        %v2975 = vadd.s32 %v2970, 1
        %vm2976 = vcmp.gt.s32.totalorder %v2975, 0
        %v2977 = vsel %vm2976, %v2975, 0
        %v2978 = vshrl.u32 %v2977, 5
        %v2979 = vand.u32 %v2977, 31
        %v2980 = vsub.s32 32, %v2979
        %v2981 = vshrl.u32 683565275, %v2980
        %v2982 = vshll.u32 683565275, %v2979
        %v2983 = vshrl.u32 2475754826, %v2980
        %v2984 = vor.u32 %v2982, %v2983
        %v2985 = vshll.u32 2475754826, %v2979
        %v2986 = vshrl.u32 2131351028, %v2980
        %v2987 = vor.u32 %v2985, %v2986
        %v2988 = vshll.u32 2131351028, %v2979
        %v2989 = vshrl.u32 2102212464, %v2980
        %v2990 = vor.u32 %v2988, %v2989
        %v2991 = vshll.u32 2102212464, %v2979
        %v2992 = vshrl.u32 920167782, %v2980
        %v2993 = vor.u32 %v2991, %v2992
        %v2994 = vshll.u32 920167782, %v2979
        %v2995 = vshrl.u32 1326507024, %v2980
        %v2996 = vor.u32 %v2994, %v2995
        %vm2997 = vcmp.lt.s32.totalorder %v2978, 1
        %vm2998 = vcmp.lt.s32.totalorder %v2978, 2
        %vm2999 = vcmp.lt.s32.totalorder %v2978, 3
        %vm3000 = vcmp.lt.s32.totalorder %v2978, 4
        %v3001 = vsel %vm2997, %v2981, %v2984
        %v3002 = vsel %vm3000, %v2990, 2102212464
        %v3003 = vsel %vm2999, %v2987, %v3002
        %v3004 = vsel %vm2998, %v3001, %v3003
        %v3005 = vsel %vm2997, %v2984, %v2987
        %v3006 = vsel %vm3000, %v2993, 920167782
        %v3007 = vsel %vm2999, %v2990, %v3006
        %v3008 = vsel %vm2998, %v3005, %v3007
        %v3009 = vsel %vm2997, %v2987, %v2990
        %v3010 = vsel %vm3000, %v2996, 1326507024
        %v3011 = vsel %vm2999, %v2993, %v3010
        %v3012 = vsel %vm2998, %v3009, %v3011
        %v3013 = vshll.u32 %v2973, 8
        %v3014 = vmul.u32.u64.compose %v3013, %v3012
        %v3015 = vextract.low.u32 %v3014
        %v3016 = vextract.high.u32 %v3014
        %v3017 = vmul.u32.u64.compose %v3013, %v3008
        %v3018 = vextract.low.u32 %v3017
        %v3019 = vextract.high.u32 %v3017
        %v3020 = vmul.u32 %v3013, %v3004
        %v3021 = vadd.s32 %v3016, %v3018
        %vm3022 = vc.u32 %v3016, %v3018
        %v3023 = vadd.s32 %v3019, 1
        %v3024 = vsel %vm3022, %v3023, %v3019
        %v3025 = vadd.s32 %v3020, %v3024
        %v3026 = vadd.s32 %v3025, 536870912
        %v3027 = vshrl.u32 %v3026, 30
        %v3028 = vshll.u32 %v3027, 30
        %v3029 = vsub.s32 %v3025, %v3028
        %vm3030 = vcmp.lt.s32.totalorder %v3029, 0
        %v3031 = vsub.s32 0, %v3029
        %v3032 = vsel %vm3030, %v3031, %v3029
        %v3033 = vclz %v3032
        %v3034 = vsub.s32 %v3033, 2
        %vm3035 = vcmp.gt.s32.totalorder 0, %v3034
        %v3036 = vsel %vm3035, 0, %v3034
        %v3037 = vsub.s32 32, %v3036
        %v3038 = vshll.u32 %v3029, %v3036
        %v3039 = vshrl.u32 %v3021, %v3037
        %v3040 = vor.u32 %v3038, %v3039
        %v3041 = vsub.s32 4294967266, %v3036
        %v3042 = vadd.s32 %v3041, 127
        %v3043 = vshll.u32 %v3042, 23
        %v3044 = vor.u32 4788187, %v3043
        %v3045 = vand.u32 2147483647, %v3044
        %v3047 = vcvt.s32.f32 %v3040
        %v3048 = vmul.f32 %v3047, %v3045
        %v3049 = vxor.u32 %v3048, 2147483648
        %v3050 = vsel %vm2967, %v3049, %v3048
        %v3051 = vsub.s32 4, %v3027
        %v3052 = vsel %vm2967, %v3051, %v3027
        %v3053 = vsel %vm2966, %v1507, %v3050
        %v3054 = vsel %vm2966, 0, %v3052
        %v3055 = vcosq.f32.pop %v3053
        %v3056 = vsinq.f32.pop %v3053
        %vm3057 = vweird.f32 %v1507
        %v3058 = vadd.s32 %v3054, 3
        %v3059 = vand.u32 %v3058, 3
        %vm3060 = vcmp.lt.s32.totalorder %v3059, 2
        %vm3061 = vcmp.eq.s32.totalorder %v3059, 0
        %v3062 = vxor.u32 %v3056, 2147483648
        %v3063 = vsel %vm3061, %v3055, %v3062
        %vm3064 = vcmp.eq.s32.totalorder %v3059, 2
        %v3065 = vxor.u32 %v3055, 2147483648
        %v3066 = vsel %vm3064, %v3065, %v3056
        %v3067 = vsel %vm3060, %v3063, %v3066
        %v3068 = vsel %vm3057, nan, %v3067
        %v3069 = vand.u32 2147483647, %v1508
        %vm3070 = vcmp.le.f32.partialorder %v3069, 0.7853982
        %vm3071 = vcmp.lt.s32.totalorder %v1508, 0
        %v3072 = vand.u32 %v1508, 2139095040
        %v3073 = vshrl.u32 %v3072, 23
        %v3074 = vsub.s32 %v3073, 127
        %v3075 = vand.u32 2147483647, %v1508
        %v3076 = vand.u32 %v3075, 8388607
        %v3077 = vor.u32 %v3076, 8388608
        %v3078 = vsub.s32 0, %v3077
        %v3079 = vadd.s32 %v3074, 1
        %vm3080 = vcmp.gt.s32.totalorder %v3079, 0
        %v3081 = vsel %vm3080, %v3079, 0
        %v3082 = vshrl.u32 %v3081, 5
        %v3083 = vand.u32 %v3081, 31
        %v3084 = vsub.s32 32, %v3083
        %v3085 = vshrl.u32 683565275, %v3084
        %v3086 = vshll.u32 683565275, %v3083
        %v3087 = vshrl.u32 2475754826, %v3084
        %v3088 = vor.u32 %v3086, %v3087
        %v3089 = vshll.u32 2475754826, %v3083
        %v3090 = vshrl.u32 2131351028, %v3084
        %v3091 = vor.u32 %v3089, %v3090
        %v3092 = vshll.u32 2131351028, %v3083
        %v3093 = vshrl.u32 2102212464, %v3084
        %v3094 = vor.u32 %v3092, %v3093
        %v3095 = vshll.u32 2102212464, %v3083
        %v3096 = vshrl.u32 920167782, %v3084
        %v3097 = vor.u32 %v3095, %v3096
        %v3098 = vshll.u32 920167782, %v3083
        %v3099 = vshrl.u32 1326507024, %v3084
        %v3100 = vor.u32 %v3098, %v3099
        %vm3101 = vcmp.lt.s32.totalorder %v3082, 1
        %vm3102 = vcmp.lt.s32.totalorder %v3082, 2
        %vm3103 = vcmp.lt.s32.totalorder %v3082, 3
        %vm3104 = vcmp.lt.s32.totalorder %v3082, 4
        %v3105 = vsel %vm3101, %v3085, %v3088
        %v3106 = vsel %vm3104, %v3094, 2102212464
        %v3107 = vsel %vm3103, %v3091, %v3106
        %v3108 = vsel %vm3102, %v3105, %v3107
        %v3109 = vsel %vm3101, %v3088, %v3091
        %v3110 = vsel %vm3104, %v3097, 920167782
        %v3111 = vsel %vm3103, %v3094, %v3110
        %v3112 = vsel %vm3102, %v3109, %v3111
        %v3113 = vsel %vm3101, %v3091, %v3094
        %v3114 = vsel %vm3104, %v3100, 1326507024
        %v3115 = vsel %vm3103, %v3097, %v3114
        %v3116 = vsel %vm3102, %v3113, %v3115
        %v3117 = vshll.u32 %v3077, 8
        %v3118 = vmul.u32.u64.compose %v3117, %v3116
        %v3119 = vextract.low.u32 %v3118
        %v3120 = vextract.high.u32 %v3118
        %v3121 = vmul.u32.u64.compose %v3117, %v3112
        %v3122 = vextract.low.u32 %v3121
        %v3123 = vextract.high.u32 %v3121
        %v3124 = vmul.u32 %v3117, %v3108
        %v3125 = vadd.s32 %v3120, %v3122
        %vm3126 = vc.u32 %v3120, %v3122
        %v3127 = vadd.s32 %v3123, 1
        %v3128 = vsel %vm3126, %v3127, %v3123
        %v3129 = vadd.s32 %v3124, %v3128
        %v3130 = vadd.s32 %v3129, 536870912
        %v3131 = vshrl.u32 %v3130, 30
        %v3132 = vshll.u32 %v3131, 30
        %v3133 = vsub.s32 %v3129, %v3132
        %vm3134 = vcmp.lt.s32.totalorder %v3133, 0
        %v3135 = vsub.s32 0, %v3133
        %v3136 = vsel %vm3134, %v3135, %v3133
        %v3137 = vclz %v3136
        %v3138 = vsub.s32 %v3137, 2
        %vm3139 = vcmp.gt.s32.totalorder 0, %v3138
        %v3140 = vsel %vm3139, 0, %v3138
        %v3141 = vsub.s32 32, %v3140
        %v3142 = vshll.u32 %v3133, %v3140
        %v3143 = vshrl.u32 %v3125, %v3141
        %v3144 = vor.u32 %v3142, %v3143
        %v3145 = vsub.s32 4294967266, %v3140
        %v3146 = vadd.s32 %v3145, 127
        %v3147 = vshll.u32 %v3146, 23
        %v3148 = vor.u32 4788187, %v3147
        %v3149 = vand.u32 2147483647, %v3148
        %v3151 = vcvt.s32.f32 %v3144
        %v3152 = vmul.f32 %v3151, %v3149
        %v3153 = vxor.u32 %v3152, 2147483648
        %v3154 = vsel %vm3071, %v3153, %v3152
        %v3155 = vsub.s32 4, %v3131
        %v3156 = vsel %vm3071, %v3155, %v3131
        %v3157 = vsel %vm3070, %v1508, %v3154
        %v3158 = vsel %vm3070, 0, %v3156
        %v3159 = vcosq.f32.pop %v3157
        %v3160 = vsinq.f32.pop %v3157
        %vm3161 = vweird.f32 %v1508
        %v3162 = vadd.s32 %v3158, 3
        %v3163 = vand.u32 %v3162, 3
        %vm3164 = vcmp.lt.s32.totalorder %v3163, 2
        %vm3165 = vcmp.eq.s32.totalorder %v3163, 0
        %v3166 = vxor.u32 %v3160, 2147483648
        %v3167 = vsel %vm3165, %v3159, %v3166
        %vm3168 = vcmp.eq.s32.totalorder %v3163, 2
        %v3169 = vxor.u32 %v3159, 2147483648
        %v3170 = vsel %vm3168, %v3169, %v3160
        %v3171 = vsel %vm3164, %v3167, %v3170
        %v3172 = vsel %vm3161, nan, %v3171
        %v3173 = vmul.f32 %v820, %v1612
        %v3174 = vmul.f32 %v820, %v1716
        %v3175 = vmul.f32 %v820, %v1820
        %v3176 = vmul.f32 %v820, %v1924
        %v3177 = vmul.f32 %v820, %v2028
        %v3178 = vmul.f32 %v820, %v2132
        %v3179 = vmul.f32 %v820, %v2236
        %v3180 = vmul.f32 %v820, %v2340
        %v3181 = vmul.f32 %v820, %v2444
        %v3182 = vmul.f32 %v820, %v2548
        %v3183 = vmul.f32 %v820, %v2652
        %v3184 = vmul.f32 %v820, %v2756
        %v3185 = vmul.f32 %v820, %v2860
        %v3186 = vmul.f32 %v820, %v2964
        %v3187 = vmul.f32 %v820, %v3068
        %v3188 = vmul.f32 %v820, %v3172
        %v3189 = vadd.f32 %v3173, %v820
        %v3190 = vadd.f32 %v3174, %v820
        %v3191 = vadd.f32 %v3175, %v820
        %v3192 = vadd.f32 %v3176, %v820
        %v3193 = vadd.f32 %v3177, %v820
        %v3194 = vadd.f32 %v3178, %v820
        %v3195 = vadd.f32 %v3179, %v820
        %v3196 = vadd.f32 %v3180, %v820
        %v3197 = vadd.f32 %v3181, %v820
        %v3198 = vadd.f32 %v3182, %v820
        %v3199 = vadd.f32 %v3183, %v820
        %v3200 = vadd.f32 %v3184, %v820
        %v3201 = vadd.f32 %v3185, %v820
        %v3202 = vadd.f32 %v3186, %v820
        %v3203 = vadd.f32 %v3187, %v820
        %v3204 = vadd.f32 %v3188, %v820
        %v3205 = vmax.f32 %v1429, 0.0
        %v3206 = vmax.f32 %v1430, 0.0
        %v3207 = vmax.f32 %v1431, 0.0
        %v3208 = vmax.f32 %v1432, 0.0
        %v3209 = vmax.f32 %v1433, 0.0
        %v3210 = vmax.f32 %v1434, 0.0
        %v3211 = vmax.f32 %v1435, 0.0
        %v3212 = vmax.f32 %v1436, 0.0
        %v3213 = vmax.f32 %v1437, 0.0
        %v3214 = vmax.f32 %v1438, 0.0
        %v3215 = vmax.f32 %v1439, 0.0
        %v3216 = vmax.f32 %v1440, 0.0
        %v3217 = vmax.f32 %v1441, 0.0
        %v3218 = vmax.f32 %v1442, 0.0
        %v3219 = vmax.f32 %v1443, 0.0
        %v3220 = vmax.f32 %v1444, 0.0
        %vm3221 = vcmp.ge.f32.partialorder %v1429, %v820
        %vm3222 = vcmp.ge.f32.partialorder %v1430, %v820
        %vm3223 = vcmp.ge.f32.partialorder %v1431, %v820
        %vm3224 = vcmp.ge.f32.partialorder %v1432, %v820
        %vm3225 = vcmp.ge.f32.partialorder %v1433, %v820
        %vm3226 = vcmp.ge.f32.partialorder %v1434, %v820
        %vm3227 = vcmp.ge.f32.partialorder %v1435, %v820
        %vm3228 = vcmp.ge.f32.partialorder %v1436, %v820
        %vm3229 = vcmp.ge.f32.partialorder %v1437, %v820
        %vm3230 = vcmp.ge.f32.partialorder %v1438, %v820
        %vm3231 = vcmp.ge.f32.partialorder %v1439, %v820
        %vm3232 = vcmp.ge.f32.partialorder %v1440, %v820
        %vm3233 = vcmp.ge.f32.partialorder %v1441, %v820
        %vm3234 = vcmp.ge.f32.partialorder %v1442, %v820
        %vm3235 = vcmp.ge.f32.partialorder %v1443, %v820
        %vm3236 = vcmp.ge.f32.partialorder %v1444, %v820
        %v3237 = vsel %vm3221, %v3189, %v3205
        %v3238 = vsel %vm3222, %v3190, %v3206
        %v3239 = vsel %vm3223, %v3191, %v3207
        %v3240 = vsel %vm3224, %v3192, %v3208
        %v3241 = vsel %vm3225, %v3193, %v3209
        %v3242 = vsel %vm3226, %v3194, %v3210
        %v3243 = vsel %vm3227, %v3195, %v3211
        %v3244 = vsel %vm3228, %v3196, %v3212
        %v3245 = vsel %vm3229, %v3197, %v3213
        %v3246 = vsel %vm3230, %v3198, %v3214
        %v3247 = vsel %vm3231, %v3199, %v3215
        %v3248 = vsel %vm3232, %v3200, %v3216
        %v3249 = vsel %vm3233, %v3201, %v3217
        %v3250 = vsel %vm3234, %v3202, %v3218
        %v3251 = vsel %vm3235, %v3203, %v3219
        %v3252 = vsel %vm3236, %v3204, %v3220
        %vm3253 = vcmp.ge.f32.partialorder %v1429, %v1274
        %vm3254 = vcmp.ge.f32.partialorder %v1430, %v1274
        %vm3255 = vcmp.ge.f32.partialorder %v1431, %v1274
        %vm3256 = vcmp.ge.f32.partialorder %v1432, %v1274
        %vm3257 = vcmp.ge.f32.partialorder %v1433, %v1274
        %vm3258 = vcmp.ge.f32.partialorder %v1434, %v1274
        %vm3259 = vcmp.ge.f32.partialorder %v1435, %v1274
        %vm3260 = vcmp.ge.f32.partialorder %v1436, %v1274
        %vm3261 = vcmp.ge.f32.partialorder %v1437, %v1274
        %vm3262 = vcmp.ge.f32.partialorder %v1438, %v1274
        %vm3263 = vcmp.ge.f32.partialorder %v1439, %v1274
        %vm3264 = vcmp.ge.f32.partialorder %v1440, %v1274
        %vm3265 = vcmp.ge.f32.partialorder %v1441, %v1274
        %vm3266 = vcmp.ge.f32.partialorder %v1442, %v1274
        %vm3267 = vcmp.ge.f32.partialorder %v1443, %v1274
        %vm3268 = vcmp.ge.f32.partialorder %v1444, %v1274
        %v3269 = vsel %vm3253, %v1279, %v3237
        %v3270 = vsel %vm3254, %v1279, %v3238
        %v3271 = vsel %vm3255, %v1279, %v3239
        %v3272 = vsel %vm3256, %v1279, %v3240
        %v3273 = vsel %vm3257, %v1279, %v3241
        %v3274 = vsel %vm3258, %v1279, %v3242
        %v3275 = vsel %vm3259, %v1279, %v3243
        %v3276 = vsel %vm3260, %v1279, %v3244
        %v3277 = vsel %vm3261, %v1279, %v3245
        %v3278 = vsel %vm3262, %v1279, %v3246
        %v3279 = vsel %vm3263, %v1279, %v3247
        %v3280 = vsel %vm3264, %v1279, %v3248
        %v3281 = vsel %vm3265, %v1279, %v3249
        %v3282 = vsel %vm3266, %v1279, %v3250
        %v3283 = vsel %vm3267, %v1279, %v3251
        %v3284 = vsel %vm3268, %v1279, %v3252
        %vm3285 = vcmask 31744
        %3286 = vst.msk [vmem:[#allocation2] sm:$0xff] %vm3285, %v1280
        %3287 = vst.msk [vmem:[#allocation2 + $0x8] sm:$0xff] %vm3285, %v1281
        %3288 = vst.msk [vmem:[#allocation2 + $0x10] sm:$0xff] %vm3285, %v3269
        %3289 = vst.msk [vmem:[#allocation2 + $0x18] sm:$0xff] %vm3285, %v3270
        %3290 = vst.msk [vmem:[#allocation2 + $0x20] sm:$0xff] %vm3285, %v3271
        %3291 = vst.msk [vmem:[#allocation2 + $0x28] sm:$0xff] %vm3285, %v3272
        %3292 = vst.msk [vmem:[#allocation2 + $0x30] sm:$0xff] %vm3285, %v3273
        %3293 = vst.msk [vmem:[#allocation2 + $0x38] sm:$0xff] %vm3285, %v3274
        %3294 = vst.msk [vmem:[#allocation2 + $0x40] sm:$0xff] %vm3285, %v3275
        %3295 = vst.msk [vmem:[#allocation2 + $0x48] sm:$0xff] %vm3285, %v3276
        %3296 = vst.msk [vmem:[#allocation2 + $0x50] sm:$0xff] %vm3285, %v3277
        %3297 = vst.msk [vmem:[#allocation2 + $0x58] sm:$0xff] %vm3285, %v3278
        %3298 = vst.msk [vmem:[#allocation2 + $0x60] sm:$0xff] %vm3285, %v3279
        %3299 = vst.msk [vmem:[#allocation2 + $0x68] sm:$0xff] %vm3285, %v3280
        %3300 = vst.msk [vmem:[#allocation2 + $0x70] sm:$0xff] %vm3285, %v3281
        %3301 = vst.msk [vmem:[#allocation2 + $0x78] sm:$0xff] %vm3285, %v3282
        %3302 = vst.msk [vmem:[#allocation2 + $0x80] sm:$0xff] %vm3285, %v3283
        %3303 = vst.msk [vmem:[#allocation2 + $0x88] sm:$0xff] %vm3285, %v3284
        %3304 = vst.msk [vmem:[#allocation2 + $0x90] sm:$0xff] %vm3285, %v1282
        %3305 = vst.msk [vmem:[#allocation2 + $0x98] sm:$0xff] %vm3285, %v1283
        %p3306 = scmp.eq.s32.totalorder %s45, 0
        // Predicated region
        $region133: #{tpu_custom_call.1} parent=75 // pred_check
          %p3307 = pneg %p3306
        $region134: #{tpu_custom_call.1} parent=75 // pred_check_branch
          %3309 = sbr.rel (%p3307) target = $region136
        $region135: #{tpu_custom_call.1} parent=75 // pred_region
          %3310 = vst.msk [vmem:[#allocation2] sm:$0xff] %vm3285, 0.0
          %3311 = vst.msk [vmem:[#allocation2 + $0x8] sm:$0xff] %vm3285, 0.0
        $region136: #{tpu_custom_call.1} parent=75 // pred_fallthru
          _
        %p3312 = scmp.eq.s32.totalorder %s45, 1
        // Predicated region
        $region137: #{tpu_custom_call.1} parent=75 // pred_check
          %p3313 = pneg %p3312
        $region138: #{tpu_custom_call.1} parent=75 // pred_check_branch
          %3315 = sbr.rel (%p3313) target = $region140
        $region139: #{tpu_custom_call.1} parent=75 // pred_region
          %3316 = vst.msk [vmem:[#allocation2 + $0x90] sm:$0xff] %vm3285, 0.0
          %3317 = vst.msk [vmem:[#allocation2 + $0x98] sm:$0xff] %vm3285, 0.0
        $region140: #{tpu_custom_call.1} parent=75 // pred_fallthru
          _
        %v3318 = vld [vmem:[#allocation2] sm:$0xff]
        %v3319 = vld [vmem:[#allocation2 + $0x8] sm:$0xff]
        %v3320 = vld [vmem:[#allocation2 + $0x10] sm:$0xff]
        %v3321 = vld [vmem:[#allocation2 + $0x18] sm:$0xff]
        %v3322 = vld [vmem:[#allocation2 + $0x20] sm:$0xff]
        %v3323 = vld [vmem:[#allocation2 + $0x28] sm:$0xff]
        %v3324 = vld [vmem:[#allocation2 + $0x30] sm:$0xff]
        %v3325 = vld [vmem:[#allocation2 + $0x38] sm:$0xff]
        %v3326 = vld [vmem:[#allocation2 + $0x40] sm:$0xff]
        %v3327 = vld [vmem:[#allocation2 + $0x48] sm:$0xff]
        %v3328 = vld [vmem:[#allocation2 + $0x50] sm:$0xff]
        %v3329 = vld [vmem:[#allocation2 + $0x58] sm:$0xff]
        %v3330 = vld [vmem:[#allocation2 + $0x60] sm:$0xff]
        %v3331 = vld [vmem:[#allocation2 + $0x68] sm:$0xff]
        %v3332 = vld [vmem:[#allocation2 + $0x70] sm:$0xff]
        %v3333 = vld [vmem:[#allocation2 + $0x78] sm:$0xff]
        %v3334 = vld [vmem:[#allocation2 + $0x80] sm:$0xff]
        %v3335 = vld [vmem:[#allocation2 + $0x88] sm:$0xff]
        %v3336 = vld [vmem:[#allocation2 + $0x90] sm:$0xff]
        %v3337 = vld [vmem:[#allocation2 + $0x98] sm:$0xff]
        %v3338 = vrot.slane %v3318, 7
        %v3339 = vrot.slane %v3319, 7
        %v3340 = vrot.slane %v3320, 7
        %v3341 = vrot.slane %v3321, 7
        %v3342 = vrot.slane %v3322, 7
        %v3343 = vrot.slane %v3323, 7
        %v3344 = vrot.slane %v3324, 7
        %v3345 = vrot.slane %v3325, 7
        %v3346 = vrot.slane %v3326, 7
        %v3347 = vrot.slane %v3327, 7
        %v3348 = vrot.slane %v3328, 7
        %v3349 = vrot.slane %v3329, 7
        %v3350 = vrot.slane %v3330, 7
        %v3351 = vrot.slane %v3331, 7
        %v3352 = vrot.slane %v3332, 7
        %v3353 = vrot.slane %v3333, 7
        %v3354 = vrot.slane %v3334, 7
        %v3355 = vrot.slane %v3335, 7
        %v3356 = vrot.slane %v3336, 7
        %v3357 = vrot.slane %v3337, 7
        %v3358 = vlaneseq
        %v3359 = vshrl.u32 %v3358, 7
        %vm3360 = vcmp.lt.s32.totalorder %v3359, 1
        %v3361 = vsel %vm3360, %v3356, %v3357
        %v3362 = vsel %vm3360, %v3355, %v3356
        %v3363 = vsel %vm3360, %v3354, %v3355
        %v3364 = vsel %vm3360, %v3353, %v3354
        %v3365 = vsel %vm3360, %v3352, %v3353
        %v3366 = vsel %vm3360, %v3351, %v3352
        %v3367 = vsel %vm3360, %v3350, %v3351
        %v3368 = vsel %vm3360, %v3349, %v3350
        %v3369 = vsel %vm3360, %v3348, %v3349
        %v3370 = vsel %vm3360, %v3347, %v3348
        %v3371 = vsel %vm3360, %v3346, %v3347
        %v3372 = vsel %vm3360, %v3345, %v3346
        %v3373 = vsel %vm3360, %v3344, %v3345
        %v3374 = vsel %vm3360, %v3343, %v3344
        %v3375 = vsel %vm3360, %v3342, %v3343
        %v3376 = vsel %vm3360, %v3341, %v3342
        %v3377 = vsel %vm3360, %v3340, %v3341
        %v3378 = vsel %vm3360, %v3339, %v3340
        %v3379 = vsel %vm3360, %v3338, %v3339
        %v3380 = vsel %vm3360, %v3357, %v3338
        %v3381 = vld [vmem:[#allocation10] sm:$0xff]
        %v3382 = vld [vmem:[#allocation10 + $0x8] sm:$0xff]
        %v3383 = vld [vmem:[#allocation10 + $0x10] sm:$0xff]
        %v3384 = vld [vmem:[#allocation10 + $0x18] sm:$0xff]
        %v3385 = vld [vmem:[#allocation10 + $0x20] sm:$0xff]
        %v3386 = vld [vmem:[#allocation10 + $0x28] sm:$0xff]
        %v3387 = vld [vmem:[#allocation10 + $0x30] sm:$0xff]
        %v3388 = vld [vmem:[#allocation10 + $0x38] sm:$0xff]
        %v3389 = vld [vmem:[#allocation10 + $0x40] sm:$0xff]
        %v3390 = vld [vmem:[#allocation10 + $0x48] sm:$0xff]
        %v3391 = vld [vmem:[#allocation10 + $0x50] sm:$0xff]
        %v3392 = vld [vmem:[#allocation10 + $0x58] sm:$0xff]
        %v3393 = vld [vmem:[#allocation10 + $0x60] sm:$0xff]
        %v3394 = vld [vmem:[#allocation10 + $0x68] sm:$0xff]
        %v3395 = vld [vmem:[#allocation10 + $0x70] sm:$0xff]
        %v3396 = vld [vmem:[#allocation10 + $0x78] sm:$0xff]
        %v3397 = vld [vmem:[#allocation10 + $0x80] sm:$0xff]
        %v3398 = vld [vmem:[#allocation10 + $0x88] sm:$0xff]
        %v3399 = vld [vmem:[#allocation10 + $0x90] sm:$0xff]
        %v3400 = vld [vmem:[#allocation10 + $0x98] sm:$0xff]
        %3402 = vset.pattern.permute.xlu0 0
        %3403 = vperm.xlu0 %3402, %v3381
        %v3404 = vpop.permute.xlu0 %3403
        %3407 = vset.pattern.permute.xlu0 0
        %3408 = vperm.xlu0 %3407, %v3382
        %v3409 = vpop.permute.xlu0 %3408
        %3412 = vset.pattern.permute.xlu0 0
        %3413 = vperm.xlu0 %3412, %v3383
        %v3414 = vpop.permute.xlu0 %3413
        %3417 = vset.pattern.permute.xlu0 0
        %3418 = vperm.xlu0 %3417, %v3384
        %v3419 = vpop.permute.xlu0 %3418
        %3422 = vset.pattern.permute.xlu0 0
        %3423 = vperm.xlu0 %3422, %v3385
        %v3424 = vpop.permute.xlu0 %3423
        %3427 = vset.pattern.permute.xlu0 0
        %3428 = vperm.xlu0 %3427, %v3386
        %v3429 = vpop.permute.xlu0 %3428
        %3432 = vset.pattern.permute.xlu0 0
        %3433 = vperm.xlu0 %3432, %v3387
        %v3434 = vpop.permute.xlu0 %3433
        %3437 = vset.pattern.permute.xlu0 0
        %3438 = vperm.xlu0 %3437, %v3388
        %v3439 = vpop.permute.xlu0 %3438
        %3442 = vset.pattern.permute.xlu0 0
        %3443 = vperm.xlu0 %3442, %v3389
        %v3444 = vpop.permute.xlu0 %3443
        %3447 = vset.pattern.permute.xlu0 0
        %3448 = vperm.xlu0 %3447, %v3390
        %v3449 = vpop.permute.xlu0 %3448
        %3452 = vset.pattern.permute.xlu0 0
        %3453 = vperm.xlu0 %3452, %v3391
        %v3454 = vpop.permute.xlu0 %3453
        %3457 = vset.pattern.permute.xlu0 0
        %3458 = vperm.xlu0 %3457, %v3392
        %v3459 = vpop.permute.xlu0 %3458
        %3462 = vset.pattern.permute.xlu0 0
        %3463 = vperm.xlu0 %3462, %v3393
        %v3464 = vpop.permute.xlu0 %3463
        %3467 = vset.pattern.permute.xlu0 0
        %3468 = vperm.xlu0 %3467, %v3394
        %v3469 = vpop.permute.xlu0 %3468
        %3472 = vset.pattern.permute.xlu0 0
        %3473 = vperm.xlu0 %3472, %v3395
        %v3474 = vpop.permute.xlu0 %3473
        %3477 = vset.pattern.permute.xlu0 0
        %3478 = vperm.xlu0 %3477, %v3396
        %v3479 = vpop.permute.xlu0 %3478
        %3482 = vset.pattern.permute.xlu0 0
        %3483 = vperm.xlu0 %3482, %v3397
        %v3484 = vpop.permute.xlu0 %3483
        %3487 = vset.pattern.permute.xlu0 0
        %3488 = vperm.xlu0 %3487, %v3398
        %v3489 = vpop.permute.xlu0 %3488
        %3492 = vset.pattern.permute.xlu0 0
        %3493 = vperm.xlu0 %3492, %v3399
        %v3494 = vpop.permute.xlu0 %3493
        %3497 = vset.pattern.permute.xlu0 0
        %3498 = vperm.xlu0 %3497, %v3400
        %v3499 = vpop.permute.xlu0 %3498
        %v3501 = vmul.f32 %v3380, %v3404
        %v3502 = vmul.f32 %v3379, %v3409
        %v3503 = vmul.f32 %v3378, %v3414
        %v3504 = vmul.f32 %v3377, %v3419
        %v3505 = vmul.f32 %v3376, %v3424
        %v3506 = vmul.f32 %v3375, %v3429
        %v3507 = vmul.f32 %v3374, %v3434
        %v3508 = vmul.f32 %v3373, %v3439
        %v3509 = vmul.f32 %v3372, %v3444
        %v3510 = vmul.f32 %v3371, %v3449
        %v3511 = vmul.f32 %v3370, %v3454
        %v3512 = vmul.f32 %v3369, %v3459
        %v3513 = vmul.f32 %v3368, %v3464
        %v3514 = vmul.f32 %v3367, %v3469
        %v3515 = vmul.f32 %v3366, %v3474
        %v3516 = vmul.f32 %v3365, %v3479
        %v3517 = vmul.f32 %v3364, %v3484
        %v3518 = vmul.f32 %v3363, %v3489
        %v3519 = vmul.f32 %v3362, %v3494
        %v3520 = vmul.f32 %v3361, %v3499
        %v3521 = vrot.slane %v3318, 1
        %v3522 = vrot.slane %v3319, 1
        %v3523 = vrot.slane %v3320, 1
        %v3524 = vrot.slane %v3321, 1
        %v3525 = vrot.slane %v3322, 1
        %v3526 = vrot.slane %v3323, 1
        %v3527 = vrot.slane %v3324, 1
        %v3528 = vrot.slane %v3325, 1
        %v3529 = vrot.slane %v3326, 1
        %v3530 = vrot.slane %v3327, 1
        %v3531 = vrot.slane %v3328, 1
        %v3532 = vrot.slane %v3329, 1
        %v3533 = vrot.slane %v3330, 1
        %v3534 = vrot.slane %v3331, 1
        %v3535 = vrot.slane %v3332, 1
        %v3536 = vrot.slane %v3333, 1
        %v3537 = vrot.slane %v3334, 1
        %v3538 = vrot.slane %v3335, 1
        %v3539 = vrot.slane %v3336, 1
        %v3540 = vrot.slane %v3337, 1
        %vm3541 = vcmp.lt.s32.totalorder %v3359, 7
        %v3542 = vsel %vm3541, %v3539, %v3540
        %v3543 = vsel %vm3541, %v3538, %v3539
        %v3544 = vsel %vm3541, %v3537, %v3538
        %v3545 = vsel %vm3541, %v3536, %v3537
        %v3546 = vsel %vm3541, %v3535, %v3536
        %v3547 = vsel %vm3541, %v3534, %v3535
        %v3548 = vsel %vm3541, %v3533, %v3534
        %v3549 = vsel %vm3541, %v3532, %v3533
        %v3550 = vsel %vm3541, %v3531, %v3532
        %v3551 = vsel %vm3541, %v3530, %v3531
        %v3552 = vsel %vm3541, %v3529, %v3530
        %v3553 = vsel %vm3541, %v3528, %v3529
        %v3554 = vsel %vm3541, %v3527, %v3528
        %v3555 = vsel %vm3541, %v3526, %v3527
        %v3556 = vsel %vm3541, %v3525, %v3526
        %v3557 = vsel %vm3541, %v3524, %v3525
        %v3558 = vsel %vm3541, %v3523, %v3524
        %v3559 = vsel %vm3541, %v3522, %v3523
        %v3560 = vsel %vm3541, %v3521, %v3522
        %v3561 = vsel %vm3541, %v3540, %v3521
        %v3562 = vld [vmem:[#allocation11] sm:$0xff]
        %v3563 = vld [vmem:[#allocation11 + $0x8] sm:$0xff]
        %v3564 = vld [vmem:[#allocation11 + $0x10] sm:$0xff]
        %v3565 = vld [vmem:[#allocation11 + $0x18] sm:$0xff]
        %v3566 = vld [vmem:[#allocation11 + $0x20] sm:$0xff]
        %v3567 = vld [vmem:[#allocation11 + $0x28] sm:$0xff]
        %v3568 = vld [vmem:[#allocation11 + $0x30] sm:$0xff]
        %v3569 = vld [vmem:[#allocation11 + $0x38] sm:$0xff]
        %v3570 = vld [vmem:[#allocation11 + $0x40] sm:$0xff]
        %v3571 = vld [vmem:[#allocation11 + $0x48] sm:$0xff]
        %v3572 = vld [vmem:[#allocation11 + $0x50] sm:$0xff]
        %v3573 = vld [vmem:[#allocation11 + $0x58] sm:$0xff]
        %v3574 = vld [vmem:[#allocation11 + $0x60] sm:$0xff]
        %v3575 = vld [vmem:[#allocation11 + $0x68] sm:$0xff]
        %v3576 = vld [vmem:[#allocation11 + $0x70] sm:$0xff]
        %v3577 = vld [vmem:[#allocation11 + $0x78] sm:$0xff]
        %v3578 = vld [vmem:[#allocation11 + $0x80] sm:$0xff]
        %v3579 = vld [vmem:[#allocation11 + $0x88] sm:$0xff]
        %v3580 = vld [vmem:[#allocation11 + $0x90] sm:$0xff]
        %v3581 = vld [vmem:[#allocation11 + $0x98] sm:$0xff]
        %3583 = vset.pattern.permute.xlu0 0
        %3584 = vperm.xlu0 %3583, %v3562
        %v3585 = vpop.permute.xlu0 %3584
        %3588 = vset.pattern.permute.xlu0 0
        %3589 = vperm.xlu0 %3588, %v3563
        %v3590 = vpop.permute.xlu0 %3589
        %3593 = vset.pattern.permute.xlu0 0
        %3594 = vperm.xlu0 %3593, %v3564
        %v3595 = vpop.permute.xlu0 %3594
        %3598 = vset.pattern.permute.xlu0 0
        %3599 = vperm.xlu0 %3598, %v3565
        %v3600 = vpop.permute.xlu0 %3599
        %3603 = vset.pattern.permute.xlu0 0
        %3604 = vperm.xlu0 %3603, %v3566
        %v3605 = vpop.permute.xlu0 %3604
        %3608 = vset.pattern.permute.xlu0 0
        %3609 = vperm.xlu0 %3608, %v3567
        %v3610 = vpop.permute.xlu0 %3609
        %3613 = vset.pattern.permute.xlu0 0
        %3614 = vperm.xlu0 %3613, %v3568
        %v3615 = vpop.permute.xlu0 %3614
        %3618 = vset.pattern.permute.xlu0 0
        %3619 = vperm.xlu0 %3618, %v3569
        %v3620 = vpop.permute.xlu0 %3619
        %3623 = vset.pattern.permute.xlu0 0
        %3624 = vperm.xlu0 %3623, %v3570
        %v3625 = vpop.permute.xlu0 %3624
        %3628 = vset.pattern.permute.xlu0 0
        %3629 = vperm.xlu0 %3628, %v3571
        %v3630 = vpop.permute.xlu0 %3629
        %3633 = vset.pattern.permute.xlu0 0
        %3634 = vperm.xlu0 %3633, %v3572
        %v3635 = vpop.permute.xlu0 %3634
        %3638 = vset.pattern.permute.xlu0 0
        %3639 = vperm.xlu0 %3638, %v3573
        %v3640 = vpop.permute.xlu0 %3639
        %3643 = vset.pattern.permute.xlu0 0
        %3644 = vperm.xlu0 %3643, %v3574
        %v3645 = vpop.permute.xlu0 %3644
        %3648 = vset.pattern.permute.xlu0 0
        %3649 = vperm.xlu0 %3648, %v3575
        %v3650 = vpop.permute.xlu0 %3649
        %3653 = vset.pattern.permute.xlu0 0
        %3654 = vperm.xlu0 %3653, %v3576
        %v3655 = vpop.permute.xlu0 %3654
        %3658 = vset.pattern.permute.xlu0 0
        %3659 = vperm.xlu0 %3658, %v3577
        %v3660 = vpop.permute.xlu0 %3659
        %3663 = vset.pattern.permute.xlu0 0
        %3664 = vperm.xlu0 %3663, %v3578
        %v3665 = vpop.permute.xlu0 %3664
        %3668 = vset.pattern.permute.xlu0 0
        %3669 = vperm.xlu0 %3668, %v3579
        %v3670 = vpop.permute.xlu0 %3669
        %3673 = vset.pattern.permute.xlu0 0
        %3674 = vperm.xlu0 %3673, %v3580
        %v3675 = vpop.permute.xlu0 %3674
        %3678 = vset.pattern.permute.xlu0 0
        %3679 = vperm.xlu0 %3678, %v3581
        %v3680 = vpop.permute.xlu0 %3679
        %v3682 = vmul.f32 %v3560, %v3585
        %v3683 = vmul.f32 %v3559, %v3590
        %v3684 = vmul.f32 %v3558, %v3595
        %v3685 = vmul.f32 %v3557, %v3600
        %v3686 = vmul.f32 %v3556, %v3605
        %v3687 = vmul.f32 %v3555, %v3610
        %v3688 = vmul.f32 %v3554, %v3615
        %v3689 = vmul.f32 %v3553, %v3620
        %v3690 = vmul.f32 %v3552, %v3625
        %v3691 = vmul.f32 %v3551, %v3630
        %v3692 = vmul.f32 %v3550, %v3635
        %v3693 = vmul.f32 %v3549, %v3640
        %v3694 = vmul.f32 %v3548, %v3645
        %v3695 = vmul.f32 %v3547, %v3650
        %v3696 = vmul.f32 %v3546, %v3655
        %v3697 = vmul.f32 %v3545, %v3660
        %v3698 = vmul.f32 %v3544, %v3665
        %v3699 = vmul.f32 %v3543, %v3670
        %v3700 = vmul.f32 %v3542, %v3675
        %v3701 = vmul.f32 %v3561, %v3680
        %v3702 = vpack.c.bf16 %v3502, %v3501
        %v3703 = vpack.c.bf16 %v3504, %v3503
        %v3704 = vpack.c.bf16 %v3506, %v3505
        %v3705 = vpack.c.bf16 %v3508, %v3507
        %v3706 = vpack.c.bf16 %v3510, %v3509
        %v3707 = vpack.c.bf16 %v3512, %v3511
        %v3708 = vpack.c.bf16 %v3514, %v3513
        %v3709 = vpack.c.bf16 %v3516, %v3515
        %v3710 = vld [vmem:[#allocation14] sm:$0x3]
        %v3711 = vpack.c.bf16 %v3319, %v3318
        %v3712 = vpack.c.bf16 %v3321, %v3320
        %v3713 = vpack.c.bf16 %v3323, %v3322
        %v3714 = vpack.c.bf16 %v3325, %v3324
        %v3715 = vpack.c.bf16 %v3327, %v3326
        %v3716 = vpack.c.bf16 %v3329, %v3328
        %v3717 = vpack.c.bf16 %v3331, %v3330
        %v3718 = vpack.c.bf16 %v3333, %v3332
        %s3719 = scalar_lea.vmem [#allocation14], 2
        %v3720 = vld [vmem:[%s3719] sm:$0x3]
        %v3722 = vsel %vm3285, %v3711, 0
        %v3725 = vsel %vm3285, %v3712, 0
        %v3728 = vsel %vm3285, %v3713, 0
        %v3731 = vsel %vm3285, %v3714, 0
        %v3734 = vsel %vm3285, %v3715, 0
        %v3737 = vsel %vm3285, %v3716, 0
        %v3740 = vsel %vm3285, %v3717, 0
        %v3743 = vsel %vm3285, %v3718, 0
        %vm3745 = vcmask 1041408
        %v3747 = vsel %vm3745, %v3720, 0
        %3749 = vmatprep.subr.bf16.mxu0 0
        %3750 = vmatpush1.bf16.msra.mxu0 %v3747
        %3751 = vmatprep.subr.bf16.mxu0 0
        %3752 = vmatpush1.bf16.msra.mxu0 0
        %3753 = vmatprep.subr.bf16.mxu0 0
        %3754 = vmatpush1.bf16.msra.mxu0 0
        %3755 = vmatprep.subr.bf16.mxu0 0
        %3756 = vmatpush1.bf16.msra.mxu0 0
        %3757 = vmatprep.subr.bf16.mxu0 0
        %3758 = vmatpush1.bf16.msra.mxu0 0
        %3759 = vmatprep.subr.bf16.mxu0 0
        %3760 = vmatpush1.bf16.msra.mxu0 0
        %3761 = vmatprep.subr.bf16.mxu0 0
        %3762 = vmatpush1.bf16.msra.mxu0 0
        %3763 = vmatprep.subr.bf16.mxu0 0
        %3764 = vmatpush1.bf16.msra.mxu0 0
        %3765 = vmatprep.subr.bf16.mxu0 0
        %3766 = vmatpush1.bf16.msra.mxu0 0
        %3767 = vmatprep.subr.bf16.mxu0 0
        %3768 = vmatpush1.bf16.msra.mxu0 0
        %3769 = vmatprep.subr.bf16.mxu0 0
        %3770 = vmatpush1.bf16.msra.mxu0 0
        %3771 = vmatprep.subr.bf16.mxu0 0
        %3772 = vmatpush1.bf16.msra.mxu0 0
        %3773 = vmatprep.subr.bf16.mxu0 0
        %3774 = vmatpush1.bf16.msra.mxu0 0
        %3775 = vmatprep.subr.bf16.mxu0 0
        %3776 = vmatpush1.bf16.msra.mxu0 0
        %3777 = vmatprep.subr.bf16.mxu0 0
        %3778 = vmatpush1.bf16.msra.mxu0 0
        %3779 = vmatprep.subr.bf16.mxu0 0
        %3780 = vmatpush1.bf16.msra.mxu0 0
        %3781 = vmatprep.mubr.bf16.mxu0 0
        %3782 = vmatmul.mubr.bf16.gmra.mrb[0].mxu0 %v3722
        %v3783 = vpop.f32.mrb[0].mxu0
        %v3784 = vadd.f32 0.0, %v3783
        %v3785 = vpop.f32.mrb[0].mxu0
        %v3786 = vpop.f32.mrb[0].mxu0
        %v3787 = vadd.f32 0.0, %v3786
        %v3788 = vpop.f32.mrb[0].mxu0
        %3789 = vmatprep.mubr.bf16.mxu0 0
        %3790 = vmatmul.mubr.bf16.gmra.mrb[0].mxu0 %v3725
        %v3791 = vpop.f32.mrb[0].mxu0
        %v3792 = vadd.f32 0.0, %v3791
        %v3793 = vpop.f32.mrb[0].mxu0
        %v3794 = vpop.f32.mrb[0].mxu0
        %v3795 = vadd.f32 0.0, %v3794
        %v3796 = vpop.f32.mrb[0].mxu0
        %3797 = vmatprep.mubr.bf16.mxu0 0
        %3798 = vmatmul.mubr.bf16.gmra.mrb[0].mxu0 %v3728
        %v3799 = vpop.f32.mrb[0].mxu0
        %v3800 = vadd.f32 0.0, %v3799
        %v3801 = vpop.f32.mrb[0].mxu0
        %v3802 = vpop.f32.mrb[0].mxu0
        %v3803 = vadd.f32 0.0, %v3802
        %v3804 = vpop.f32.mrb[0].mxu0
        %3805 = vmatprep.mubr.bf16.mxu0 0
        %3806 = vmatmul.mubr.bf16.gmra.mrb[0].mxu0 %v3731
        %v3807 = vpop.f32.mrb[0].mxu0
        %v3808 = vadd.f32 0.0, %v3807
        %v3809 = vpop.f32.mrb[0].mxu0
        %v3810 = vpop.f32.mrb[0].mxu0
        %v3811 = vadd.f32 0.0, %v3810
        %v3812 = vpop.f32.mrb[0].mxu0
        %3813 = vmatprep.mubr.bf16.mxu0 0
        %3814 = vmatmul.mubr.bf16.gmra.mrb[0].mxu0 %v3734
        %v3815 = vpop.f32.mrb[0].mxu0
        %v3816 = vadd.f32 0.0, %v3815
        %v3817 = vpop.f32.mrb[0].mxu0
        %v3818 = vpop.f32.mrb[0].mxu0
        %v3819 = vadd.f32 0.0, %v3818
        %v3820 = vpop.f32.mrb[0].mxu0
        %3821 = vmatprep.mubr.bf16.mxu0 0
        %3822 = vmatmul.mubr.bf16.gmra.mrb[0].mxu0 %v3737
        %v3823 = vpop.f32.mrb[0].mxu0
        %v3824 = vadd.f32 0.0, %v3823
        %v3825 = vpop.f32.mrb[0].mxu0
        %v3826 = vpop.f32.mrb[0].mxu0
        %v3827 = vadd.f32 0.0, %v3826
        %v3828 = vpop.f32.mrb[0].mxu0
        %3829 = vmatprep.mubr.bf16.mxu0 0
        %3830 = vmatmul.mubr.bf16.gmra.mrb[0].mxu0 %v3740
        %v3831 = vpop.f32.mrb[0].mxu0
        %v3832 = vadd.f32 0.0, %v3831
        %v3833 = vpop.f32.mrb[0].mxu0
        %v3834 = vpop.f32.mrb[0].mxu0
        %v3835 = vadd.f32 0.0, %v3834
        %v3836 = vpop.f32.mrb[0].mxu0
        %3837 = vmatprep.mubr.bf16.mxu0 0
        %3838 = vmatmul.mubr.bf16.gmra.mrb[0].mxu0 %v3743
        %v3839 = vpop.f32.mrb[0].mxu0
        %v3840 = vadd.f32 0.0, %v3839
        %v3841 = vpop.f32.mrb[0].mxu0
        %v3842 = vpop.f32.mrb[0].mxu0
        %v3843 = vadd.f32 0.0, %v3842
        %v3844 = vpop.f32.mrb[0].mxu0
        %3845 = vdwg.mxu0
        %v3847 = vsel %vm3285, %v3702, 0
        %v3850 = vsel %vm3285, %v3703, 0
        %v3853 = vsel %vm3285, %v3704, 0
        %v3856 = vsel %vm3285, %v3705, 0
        %v3859 = vsel %vm3285, %v3706, 0
        %v3862 = vsel %vm3285, %v3707, 0
        %v3865 = vsel %vm3285, %v3708, 0
        %v3868 = vsel %vm3285, %v3709, 0
        %v3871 = vsel %vm3745, %v3710, 0
        %3873 = vmatprep.subr.bf16.mxu0 0
        %3874 = vmatpush1.bf16.msra.mxu0 %v3871
        %3875 = vmatprep.subr.bf16.mxu0 0
        %3876 = vmatpush1.bf16.msra.mxu0 0
        %3877 = vmatprep.subr.bf16.mxu0 0
        %3878 = vmatpush1.bf16.msra.mxu0 0
        %3879 = vmatprep.subr.bf16.mxu0 0
        %3880 = vmatpush1.bf16.msra.mxu0 0
        %3881 = vmatprep.subr.bf16.mxu0 0
        %3882 = vmatpush1.bf16.msra.mxu0 0
        %3883 = vmatprep.subr.bf16.mxu0 0
        %3884 = vmatpush1.bf16.msra.mxu0 0
        %3885 = vmatprep.subr.bf16.mxu0 0
        %3886 = vmatpush1.bf16.msra.mxu0 0
        %3887 = vmatprep.subr.bf16.mxu0 0
        %3888 = vmatpush1.bf16.msra.mxu0 0
        %3889 = vmatprep.subr.bf16.mxu0 0
        %3890 = vmatpush1.bf16.msra.mxu0 0
        %3891 = vmatprep.subr.bf16.mxu0 0
        %3892 = vmatpush1.bf16.msra.mxu0 0
        %3893 = vmatprep.subr.bf16.mxu0 0
        %3894 = vmatpush1.bf16.msra.mxu0 0
        %3895 = vmatprep.subr.bf16.mxu0 0
        %3896 = vmatpush1.bf16.msra.mxu0 0
        %3897 = vmatprep.subr.bf16.mxu0 0
        %3898 = vmatpush1.bf16.msra.mxu0 0
        %3899 = vmatprep.subr.bf16.mxu0 0
        %3900 = vmatpush1.bf16.msra.mxu0 0
        %3901 = vmatprep.subr.bf16.mxu0 0
        %3902 = vmatpush1.bf16.msra.mxu0 0
        %3903 = vmatprep.subr.bf16.mxu0 0
        %3904 = vmatpush1.bf16.msra.mxu0 0
        %3905 = vmatprep.mubr.bf16.mxu0 0
        %3906 = vmatmul.mubr.bf16.gmra.mrb[0].mxu0 %v3847
        %v3907 = vpop.f32.mrb[0].mxu0
        %v3908 = vadd.f32 %v3784, %v3907
        %v3909 = vpop.f32.mrb[0].mxu0
        %v3910 = vpop.f32.mrb[0].mxu0
        %v3911 = vadd.f32 %v3787, %v3910
        %v3912 = vpop.f32.mrb[0].mxu0
        %3913 = vmatprep.mubr.bf16.mxu0 0
        %3914 = vmatmul.mubr.bf16.gmra.mrb[0].mxu0 %v3850
        %v3915 = vpop.f32.mrb[0].mxu0
        %v3916 = vadd.f32 %v3792, %v3915
        %v3917 = vpop.f32.mrb[0].mxu0
        %v3918 = vpop.f32.mrb[0].mxu0
        %v3919 = vadd.f32 %v3795, %v3918
        %v3920 = vpop.f32.mrb[0].mxu0
        %3921 = vmatprep.mubr.bf16.mxu0 0
        %3922 = vmatmul.mubr.bf16.gmra.mrb[0].mxu0 %v3853
        %v3923 = vpop.f32.mrb[0].mxu0
        %v3924 = vadd.f32 %v3800, %v3923
        %v3925 = vpop.f32.mrb[0].mxu0
        %v3926 = vpop.f32.mrb[0].mxu0
        %v3927 = vadd.f32 %v3803, %v3926
        %v3928 = vpop.f32.mrb[0].mxu0
        %3929 = vmatprep.mubr.bf16.mxu0 0
        %3930 = vmatmul.mubr.bf16.gmra.mrb[0].mxu0 %v3856
        %v3931 = vpop.f32.mrb[0].mxu0
        %v3932 = vadd.f32 %v3808, %v3931
        %v3933 = vpop.f32.mrb[0].mxu0
        %v3934 = vpop.f32.mrb[0].mxu0
        %v3935 = vadd.f32 %v3811, %v3934
        %v3936 = vpop.f32.mrb[0].mxu0
        %3937 = vmatprep.mubr.bf16.mxu0 0
        %3938 = vmatmul.mubr.bf16.gmra.mrb[0].mxu0 %v3859
        %v3939 = vpop.f32.mrb[0].mxu0
        %v3940 = vadd.f32 %v3816, %v3939
        %v3941 = vpop.f32.mrb[0].mxu0
        %v3942 = vpop.f32.mrb[0].mxu0
        %v3943 = vadd.f32 %v3819, %v3942
        %v3944 = vpop.f32.mrb[0].mxu0
        %3945 = vmatprep.mubr.bf16.mxu0 0
        %3946 = vmatmul.mubr.bf16.gmra.mrb[0].mxu0 %v3862
        %v3947 = vpop.f32.mrb[0].mxu0
        %v3948 = vadd.f32 %v3824, %v3947
        %v3949 = vpop.f32.mrb[0].mxu0
        %v3950 = vpop.f32.mrb[0].mxu0
        %v3951 = vadd.f32 %v3827, %v3950
        %v3952 = vpop.f32.mrb[0].mxu0
        %3953 = vmatprep.mubr.bf16.mxu0 0
        %3954 = vmatmul.mubr.bf16.gmra.mrb[0].mxu0 %v3865
        %v3955 = vpop.f32.mrb[0].mxu0
        %v3956 = vadd.f32 %v3832, %v3955
        %v3957 = vpop.f32.mrb[0].mxu0
        %v3958 = vpop.f32.mrb[0].mxu0
        %v3959 = vadd.f32 %v3835, %v3958
        %v3960 = vpop.f32.mrb[0].mxu0
        %3961 = vmatprep.mubr.bf16.mxu0 0
        %3962 = vmatmul.mubr.bf16.gmra.mrb[0].mxu0 %v3868
        %v3963 = vpop.f32.mrb[0].mxu0
        %v3964 = vadd.f32 %v3840, %v3963
        %v3965 = vpop.f32.mrb[0].mxu0
        %v3966 = vpop.f32.mrb[0].mxu0
        %v3967 = vadd.f32 %v3843, %v3966
        %v3968 = vpop.f32.mrb[0].mxu0
        %3969 = vdwg.mxu0
        %v3970 = vpack.c.bf16 %v3683, %v3682
        %v3971 = vpack.c.bf16 %v3685, %v3684
        %v3972 = vpack.c.bf16 %v3687, %v3686
        %v3973 = vpack.c.bf16 %v3689, %v3688
        %v3974 = vpack.c.bf16 %v3691, %v3690
        %v3975 = vpack.c.bf16 %v3693, %v3692
        %v3976 = vpack.c.bf16 %v3695, %v3694
        %v3977 = vpack.c.bf16 %v3697, %v3696
        %s3978 = scalar_lea.vmem [#allocation14], 4
        %v3979 = vld [vmem:[%s3978] sm:$0x3]
        %v3981 = vsel %vm3285, %v3970, 0
        %v3984 = vsel %vm3285, %v3971, 0
        %v3987 = vsel %vm3285, %v3972, 0
        %v3990 = vsel %vm3285, %v3973, 0
        %v3993 = vsel %vm3285, %v3974, 0
        %v3996 = vsel %vm3285, %v3975, 0
        %v3999 = vsel %vm3285, %v3976, 0
        %v4002 = vsel %vm3285, %v3977, 0
        %v4005 = vsel %vm3745, %v3979, 0
        %4007 = vmatprep.subr.bf16.mxu0 0
        %4008 = vmatpush1.bf16.msra.mxu0 %v4005
        %4009 = vmatprep.subr.bf16.mxu0 0
        %4010 = vmatpush1.bf16.msra.mxu0 0
        %4011 = vmatprep.subr.bf16.mxu0 0
        %4012 = vmatpush1.bf16.msra.mxu0 0
        %4013 = vmatprep.subr.bf16.mxu0 0
        %4014 = vmatpush1.bf16.msra.mxu0 0
        %4015 = vmatprep.subr.bf16.mxu0 0
        %4016 = vmatpush1.bf16.msra.mxu0 0
        %4017 = vmatprep.subr.bf16.mxu0 0
        %4018 = vmatpush1.bf16.msra.mxu0 0
        %4019 = vmatprep.subr.bf16.mxu0 0
        %4020 = vmatpush1.bf16.msra.mxu0 0
        %4021 = vmatprep.subr.bf16.mxu0 0
        %4022 = vmatpush1.bf16.msra.mxu0 0
        %4023 = vmatprep.subr.bf16.mxu0 0
        %4024 = vmatpush1.bf16.msra.mxu0 0
        %4025 = vmatprep.subr.bf16.mxu0 0
        %4026 = vmatpush1.bf16.msra.mxu0 0
        %4027 = vmatprep.subr.bf16.mxu0 0
        %4028 = vmatpush1.bf16.msra.mxu0 0
        %4029 = vmatprep.subr.bf16.mxu0 0
        %4030 = vmatpush1.bf16.msra.mxu0 0
        %4031 = vmatprep.subr.bf16.mxu0 0
        %4032 = vmatpush1.bf16.msra.mxu0 0
        %4033 = vmatprep.subr.bf16.mxu0 0
        %4034 = vmatpush1.bf16.msra.mxu0 0
        %4035 = vmatprep.subr.bf16.mxu0 0
        %4036 = vmatpush1.bf16.msra.mxu0 0
        %4037 = vmatprep.subr.bf16.mxu0 0
        %4038 = vmatpush1.bf16.msra.mxu0 0
        %4039 = vmatprep.mubr.bf16.mxu0 0
        %4040 = vmatmul.mubr.bf16.gmra.mrb[0].mxu0 %v3981
        %v4041 = vpop.f32.mrb[0].mxu0
        %v4042 = vadd.f32 0.0, %v4041
        %v4043 = vpop.f32.mrb[0].mxu0
        %v4044 = vpop.f32.mrb[0].mxu0
        %v4045 = vadd.f32 0.0, %v4044
        %v4046 = vpop.f32.mrb[0].mxu0
        %4047 = vmatprep.mubr.bf16.mxu0 0
        %4048 = vmatmul.mubr.bf16.gmra.mrb[0].mxu0 %v3984
        %v4049 = vpop.f32.mrb[0].mxu0
        %v4050 = vadd.f32 0.0, %v4049
        %v4051 = vpop.f32.mrb[0].mxu0
        %v4052 = vpop.f32.mrb[0].mxu0
        %v4053 = vadd.f32 0.0, %v4052
        %v4054 = vpop.f32.mrb[0].mxu0
        %4055 = vmatprep.mubr.bf16.mxu0 0
        %4056 = vmatmul.mubr.bf16.gmra.mrb[0].mxu0 %v3987
        %v4057 = vpop.f32.mrb[0].mxu0
        %v4058 = vadd.f32 0.0, %v4057
        %v4059 = vpop.f32.mrb[0].mxu0
        %v4060 = vpop.f32.mrb[0].mxu0
        %v4061 = vadd.f32 0.0, %v4060
        %v4062 = vpop.f32.mrb[0].mxu0
        %4063 = vmatprep.mubr.bf16.mxu0 0
        %4064 = vmatmul.mubr.bf16.gmra.mrb[0].mxu0 %v3990
        %v4065 = vpop.f32.mrb[0].mxu0
        %v4066 = vadd.f32 0.0, %v4065
        %v4067 = vpop.f32.mrb[0].mxu0
        %v4068 = vpop.f32.mrb[0].mxu0
        %v4069 = vadd.f32 0.0, %v4068
        %v4070 = vpop.f32.mrb[0].mxu0
        %4071 = vmatprep.mubr.bf16.mxu0 0
        %4072 = vmatmul.mubr.bf16.gmra.mrb[0].mxu0 %v3993
        %v4073 = vpop.f32.mrb[0].mxu0
        %v4074 = vadd.f32 0.0, %v4073
        %v4075 = vpop.f32.mrb[0].mxu0
        %v4076 = vpop.f32.mrb[0].mxu0
        %v4077 = vadd.f32 0.0, %v4076
        %v4078 = vpop.f32.mrb[0].mxu0
        %4079 = vmatprep.mubr.bf16.mxu0 0
        %4080 = vmatmul.mubr.bf16.gmra.mrb[0].mxu0 %v3996
        %v4081 = vpop.f32.mrb[0].mxu0
        %v4082 = vadd.f32 0.0, %v4081
        %v4083 = vpop.f32.mrb[0].mxu0
        %v4084 = vpop.f32.mrb[0].mxu0
        %v4085 = vadd.f32 0.0, %v4084
        %v4086 = vpop.f32.mrb[0].mxu0
        %4087 = vmatprep.mubr.bf16.mxu0 0
        %4088 = vmatmul.mubr.bf16.gmra.mrb[0].mxu0 %v3999
        %v4089 = vpop.f32.mrb[0].mxu0
        %v4090 = vadd.f32 0.0, %v4089
        %v4091 = vpop.f32.mrb[0].mxu0
        %v4092 = vpop.f32.mrb[0].mxu0
        %v4093 = vadd.f32 0.0, %v4092
        %v4094 = vpop.f32.mrb[0].mxu0
        %4095 = vmatprep.mubr.bf16.mxu0 0
        %4096 = vmatmul.mubr.bf16.gmra.mrb[0].mxu0 %v4002
        %v4097 = vpop.f32.mrb[0].mxu0
        %v4098 = vadd.f32 0.0, %v4097
        %v4099 = vpop.f32.mrb[0].mxu0
        %v4100 = vpop.f32.mrb[0].mxu0
        %v4101 = vadd.f32 0.0, %v4100
        %v4102 = vpop.f32.mrb[0].mxu0
        %4103 = vdwg.mxu0
        %v4104 = vadd.f32 %v3908, %v4042
        %v4105 = vadd.f32 %v3911, %v4045
        %v4106 = vadd.f32 %v3916, %v4050
        %v4107 = vadd.f32 %v3919, %v4053
        %v4108 = vadd.f32 %v3924, %v4058
        %v4109 = vadd.f32 %v3927, %v4061
        %v4110 = vadd.f32 %v3932, %v4066
        %v4111 = vadd.f32 %v3935, %v4069
        %v4112 = vadd.f32 %v3940, %v4074
        %v4113 = vadd.f32 %v3943, %v4077
        %v4114 = vadd.f32 %v3948, %v4082
        %v4115 = vadd.f32 %v3951, %v4085
        %v4116 = vadd.f32 %v3956, %v4090
        %v4117 = vadd.f32 %v3959, %v4093
        %v4118 = vadd.f32 %v3964, %v4098
        %v4119 = vadd.f32 %v3967, %v4101
        %v4120 = vpack.c.bf16 %v3518, %v3517
        %s4121 = scalar_lea.vmem [#allocation14], 6
        %v4122 = vld [vmem:[%s4121] sm:$0x3]
        %v4124 = vsel %vm3285, %v4120, 0
        %v4127 = vsel %vm3745, %v4122, 0
        %4129 = vmatprep.subr.bf16.mxu0 0
        %4130 = vmatpush1.bf16.msra.mxu0 %v4127
        %4131 = vmatprep.subr.bf16.mxu0 0
        %4132 = vmatpush1.bf16.msra.mxu0 0
        %4133 = vmatprep.subr.bf16.mxu0 0
        %4134 = vmatpush1.bf16.msra.mxu0 0
        %4135 = vmatprep.subr.bf16.mxu0 0
        %4136 = vmatpush1.bf16.msra.mxu0 0
        %4137 = vmatprep.subr.bf16.mxu0 0
        %4138 = vmatpush1.bf16.msra.mxu0 0
        %4139 = vmatprep.subr.bf16.mxu0 0
        %4140 = vmatpush1.bf16.msra.mxu0 0
        %4141 = vmatprep.subr.bf16.mxu0 0
        %4142 = vmatpush1.bf16.msra.mxu0 0
        %4143 = vmatprep.subr.bf16.mxu0 0
        %4144 = vmatpush1.bf16.msra.mxu0 0
        %4145 = vmatprep.subr.bf16.mxu0 0
        %4146 = vmatpush1.bf16.msra.mxu0 0
        %4147 = vmatprep.subr.bf16.mxu0 0
        %4148 = vmatpush1.bf16.msra.mxu0 0
        %4149 = vmatprep.subr.bf16.mxu0 0
        %4150 = vmatpush1.bf16.msra.mxu0 0
        %4151 = vmatprep.subr.bf16.mxu0 0
        %4152 = vmatpush1.bf16.msra.mxu0 0
        %4153 = vmatprep.subr.bf16.mxu0 0
        %4154 = vmatpush1.bf16.msra.mxu0 0
        %4155 = vmatprep.subr.bf16.mxu0 0
        %4156 = vmatpush1.bf16.msra.mxu0 0
        %4157 = vmatprep.subr.bf16.mxu0 0
        %4158 = vmatpush1.bf16.msra.mxu0 0
        %4159 = vmatprep.subr.bf16.mxu0 0
        %4160 = vmatpush1.bf16.msra.mxu0 0
        %4161 = vmatprep.mubr.bf16.mxu0 0
        %4162 = vmatmul.mubr.bf16.gmra.mrb[0].mxu0 %v3850
        %v4163 = vpop.f32.mrb[0].mxu0
        %v4164 = vadd.f32 0.0, %v4163
        %v4165 = vpop.f32.mrb[0].mxu0
        %v4166 = vpop.f32.mrb[0].mxu0
        %v4167 = vadd.f32 0.0, %v4166
        %v4168 = vpop.f32.mrb[0].mxu0
        %4169 = vmatprep.mubr.bf16.mxu0 0
        %4170 = vmatmul.mubr.bf16.gmra.mrb[0].mxu0 %v3853
        %v4171 = vpop.f32.mrb[0].mxu0
        %v4172 = vadd.f32 0.0, %v4171
        %v4173 = vpop.f32.mrb[0].mxu0
        %v4174 = vpop.f32.mrb[0].mxu0
        %v4175 = vadd.f32 0.0, %v4174
        %v4176 = vpop.f32.mrb[0].mxu0
        %4177 = vmatprep.mubr.bf16.mxu0 0
        %4178 = vmatmul.mubr.bf16.gmra.mrb[0].mxu0 %v3856
        %v4179 = vpop.f32.mrb[0].mxu0
        %v4180 = vadd.f32 0.0, %v4179
        %v4181 = vpop.f32.mrb[0].mxu0
        %v4182 = vpop.f32.mrb[0].mxu0
        %v4183 = vadd.f32 0.0, %v4182
        %v4184 = vpop.f32.mrb[0].mxu0
        %4185 = vmatprep.mubr.bf16.mxu0 0
        %4186 = vmatmul.mubr.bf16.gmra.mrb[0].mxu0 %v3859
        %v4187 = vpop.f32.mrb[0].mxu0
        %v4188 = vadd.f32 0.0, %v4187
        %v4189 = vpop.f32.mrb[0].mxu0
        %v4190 = vpop.f32.mrb[0].mxu0
        %v4191 = vadd.f32 0.0, %v4190
        %v4192 = vpop.f32.mrb[0].mxu0
        %4193 = vmatprep.mubr.bf16.mxu0 0
        %4194 = vmatmul.mubr.bf16.gmra.mrb[0].mxu0 %v3862
        %v4195 = vpop.f32.mrb[0].mxu0
        %v4196 = vadd.f32 0.0, %v4195
        %v4197 = vpop.f32.mrb[0].mxu0
        %v4198 = vpop.f32.mrb[0].mxu0
        %v4199 = vadd.f32 0.0, %v4198
        %v4200 = vpop.f32.mrb[0].mxu0
        %4201 = vmatprep.mubr.bf16.mxu0 0
        %4202 = vmatmul.mubr.bf16.gmra.mrb[0].mxu0 %v3865
        %v4203 = vpop.f32.mrb[0].mxu0
        %v4204 = vadd.f32 0.0, %v4203
        %v4205 = vpop.f32.mrb[0].mxu0
        %v4206 = vpop.f32.mrb[0].mxu0
        %v4207 = vadd.f32 0.0, %v4206
        %v4208 = vpop.f32.mrb[0].mxu0
        %4209 = vmatprep.mubr.bf16.mxu0 0
        %4210 = vmatmul.mubr.bf16.gmra.mrb[0].mxu0 %v3868
        %v4211 = vpop.f32.mrb[0].mxu0
        %v4212 = vadd.f32 0.0, %v4211
        %v4213 = vpop.f32.mrb[0].mxu0
        %v4214 = vpop.f32.mrb[0].mxu0
        %v4215 = vadd.f32 0.0, %v4214
        %v4216 = vpop.f32.mrb[0].mxu0
        %4217 = vmatprep.mubr.bf16.mxu0 0
        %4218 = vmatmul.mubr.bf16.gmra.mrb[0].mxu0 %v4124
        %v4219 = vpop.f32.mrb[0].mxu0
        %v4220 = vadd.f32 0.0, %v4219
        %v4221 = vpop.f32.mrb[0].mxu0
        %v4222 = vpop.f32.mrb[0].mxu0
        %v4223 = vadd.f32 0.0, %v4222
        %v4224 = vpop.f32.mrb[0].mxu0
        %4225 = vdwg.mxu0
        %v4226 = vadd.f32 %v4104, %v4164
        %v4227 = vadd.f32 %v4105, %v4167
        %v4228 = vadd.f32 %v4106, %v4172
        %v4229 = vadd.f32 %v4107, %v4175
        %v4230 = vadd.f32 %v4108, %v4180
        %v4231 = vadd.f32 %v4109, %v4183
        %v4232 = vadd.f32 %v4110, %v4188
        %v4233 = vadd.f32 %v4111, %v4191
        %v4234 = vadd.f32 %v4112, %v4196
        %v4235 = vadd.f32 %v4113, %v4199
        %v4236 = vadd.f32 %v4114, %v4204
        %v4237 = vadd.f32 %v4115, %v4207
        %v4238 = vadd.f32 %v4116, %v4212
        %v4239 = vadd.f32 %v4117, %v4215
        %v4240 = vadd.f32 %v4118, %v4220
        %v4241 = vadd.f32 %v4119, %v4223
        %v4242 = vpack.c.bf16 %v3335, %v3334
        %s4243 = scalar_lea.vmem [#allocation14], 8
        %v4244 = vld [vmem:[%s4243] sm:$0x3]
        %v4246 = vsel %vm3285, %v4242, 0
        %v4249 = vsel %vm3745, %v4244, 0
        %4251 = vmatprep.subr.bf16.mxu0 0
        %4252 = vmatpush1.bf16.msra.mxu0 %v4249
        %4253 = vmatprep.subr.bf16.mxu0 0
        %4254 = vmatpush1.bf16.msra.mxu0 0
        %4255 = vmatprep.subr.bf16.mxu0 0
        %4256 = vmatpush1.bf16.msra.mxu0 0
        %4257 = vmatprep.subr.bf16.mxu0 0
        %4258 = vmatpush1.bf16.msra.mxu0 0
        %4259 = vmatprep.subr.bf16.mxu0 0
        %4260 = vmatpush1.bf16.msra.mxu0 0
        %4261 = vmatprep.subr.bf16.mxu0 0
        %4262 = vmatpush1.bf16.msra.mxu0 0
        %4263 = vmatprep.subr.bf16.mxu0 0
        %4264 = vmatpush1.bf16.msra.mxu0 0
        %4265 = vmatprep.subr.bf16.mxu0 0
        %4266 = vmatpush1.bf16.msra.mxu0 0
        %4267 = vmatprep.subr.bf16.mxu0 0
        %4268 = vmatpush1.bf16.msra.mxu0 0
        %4269 = vmatprep.subr.bf16.mxu0 0
        %4270 = vmatpush1.bf16.msra.mxu0 0
        %4271 = vmatprep.subr.bf16.mxu0 0
        %4272 = vmatpush1.bf16.msra.mxu0 0
        %4273 = vmatprep.subr.bf16.mxu0 0
        %4274 = vmatpush1.bf16.msra.mxu0 0
        %4275 = vmatprep.subr.bf16.mxu0 0
        %4276 = vmatpush1.bf16.msra.mxu0 0
        %4277 = vmatprep.subr.bf16.mxu0 0
        %4278 = vmatpush1.bf16.msra.mxu0 0
        %4279 = vmatprep.subr.bf16.mxu0 0
        %4280 = vmatpush1.bf16.msra.mxu0 0
        %4281 = vmatprep.subr.bf16.mxu0 0
        %4282 = vmatpush1.bf16.msra.mxu0 0
        %4283 = vmatprep.mubr.bf16.mxu0 0
        %4284 = vmatmul.mubr.bf16.gmra.mrb[0].mxu0 %v3725
        %v4285 = vpop.f32.mrb[0].mxu0
        %v4286 = vadd.f32 0.0, %v4285
        %v4287 = vpop.f32.mrb[0].mxu0
        %v4288 = vpop.f32.mrb[0].mxu0
        %v4289 = vadd.f32 0.0, %v4288
        %v4290 = vpop.f32.mrb[0].mxu0
        %4291 = vmatprep.mubr.bf16.mxu0 0
        %4292 = vmatmul.mubr.bf16.gmra.mrb[0].mxu0 %v3728
        %v4293 = vpop.f32.mrb[0].mxu0
        %v4294 = vadd.f32 0.0, %v4293
        %v4295 = vpop.f32.mrb[0].mxu0
        %v4296 = vpop.f32.mrb[0].mxu0
        %v4297 = vadd.f32 0.0, %v4296
        %v4298 = vpop.f32.mrb[0].mxu0
        %4299 = vmatprep.mubr.bf16.mxu0 0
        %4300 = vmatmul.mubr.bf16.gmra.mrb[0].mxu0 %v3731
        %v4301 = vpop.f32.mrb[0].mxu0
        %v4302 = vadd.f32 0.0, %v4301
        %v4303 = vpop.f32.mrb[0].mxu0
        %v4304 = vpop.f32.mrb[0].mxu0
        %v4305 = vadd.f32 0.0, %v4304
        %v4306 = vpop.f32.mrb[0].mxu0
        %4307 = vmatprep.mubr.bf16.mxu0 0
        %4308 = vmatmul.mubr.bf16.gmra.mrb[0].mxu0 %v3734
        %v4309 = vpop.f32.mrb[0].mxu0
        %v4310 = vadd.f32 0.0, %v4309
        %v4311 = vpop.f32.mrb[0].mxu0
        %v4312 = vpop.f32.mrb[0].mxu0
        %v4313 = vadd.f32 0.0, %v4312
        %v4314 = vpop.f32.mrb[0].mxu0
        %4315 = vmatprep.mubr.bf16.mxu0 0
        %4316 = vmatmul.mubr.bf16.gmra.mrb[0].mxu0 %v3737
        %v4317 = vpop.f32.mrb[0].mxu0
        %v4318 = vadd.f32 0.0, %v4317
        %v4319 = vpop.f32.mrb[0].mxu0
        %v4320 = vpop.f32.mrb[0].mxu0
        %v4321 = vadd.f32 0.0, %v4320
        %v4322 = vpop.f32.mrb[0].mxu0
        %4323 = vmatprep.mubr.bf16.mxu0 0
        %4324 = vmatmul.mubr.bf16.gmra.mrb[0].mxu0 %v3740
        %v4325 = vpop.f32.mrb[0].mxu0
        %v4326 = vadd.f32 0.0, %v4325
        %v4327 = vpop.f32.mrb[0].mxu0
        %v4328 = vpop.f32.mrb[0].mxu0
        %v4329 = vadd.f32 0.0, %v4328
        %v4330 = vpop.f32.mrb[0].mxu0
        %4331 = vmatprep.mubr.bf16.mxu0 0
        %4332 = vmatmul.mubr.bf16.gmra.mrb[0].mxu0 %v3743
        %v4333 = vpop.f32.mrb[0].mxu0
        %v4334 = vadd.f32 0.0, %v4333
        %v4335 = vpop.f32.mrb[0].mxu0
        %v4336 = vpop.f32.mrb[0].mxu0
        %v4337 = vadd.f32 0.0, %v4336
        %v4338 = vpop.f32.mrb[0].mxu0
        %4339 = vmatprep.mubr.bf16.mxu0 0
        %4340 = vmatmul.mubr.bf16.gmra.mrb[0].mxu0 %v4246
        %v4341 = vpop.f32.mrb[0].mxu0
        %v4342 = vadd.f32 0.0, %v4341
        %v4343 = vpop.f32.mrb[0].mxu0
        %v4344 = vpop.f32.mrb[0].mxu0
        %v4345 = vadd.f32 0.0, %v4344
        %v4346 = vpop.f32.mrb[0].mxu0
        %4347 = vdwg.mxu0
        %v4348 = vadd.f32 %v4226, %v4286
        %v4349 = vadd.f32 %v4227, %v4289
        %v4350 = vadd.f32 %v4228, %v4294
        %v4351 = vadd.f32 %v4229, %v4297
        %v4352 = vadd.f32 %v4230, %v4302
        %v4353 = vadd.f32 %v4231, %v4305
        %v4354 = vadd.f32 %v4232, %v4310
        %v4355 = vadd.f32 %v4233, %v4313
        %v4356 = vadd.f32 %v4234, %v4318
        %v4357 = vadd.f32 %v4235, %v4321
        %v4358 = vadd.f32 %v4236, %v4326
        %v4359 = vadd.f32 %v4237, %v4329
        %v4360 = vadd.f32 %v4238, %v4334
        %v4361 = vadd.f32 %v4239, %v4337
        %v4362 = vadd.f32 %v4240, %v4342
        %v4363 = vadd.f32 %v4241, %v4345
        %v4364 = vpack.c.bf16 %v3699, %v3698
        %s4365 = scalar_lea.vmem [#allocation14], 10
        %v4366 = vld [vmem:[%s4365] sm:$0x3]
        %v4368 = vsel %vm3285, %v4364, 0
        %v4371 = vsel %vm3745, %v4366, 0
        %4373 = vmatprep.subr.bf16.mxu0 0
        %4374 = vmatpush1.bf16.msra.mxu0 %v4371
        %4375 = vmatprep.subr.bf16.mxu0 0
        %4376 = vmatpush1.bf16.msra.mxu0 0
        %4377 = vmatprep.subr.bf16.mxu0 0
        %4378 = vmatpush1.bf16.msra.mxu0 0
        %4379 = vmatprep.subr.bf16.mxu0 0
        %4380 = vmatpush1.bf16.msra.mxu0 0
        %4381 = vmatprep.subr.bf16.mxu0 0
        %4382 = vmatpush1.bf16.msra.mxu0 0
        %4383 = vmatprep.subr.bf16.mxu0 0
        %4384 = vmatpush1.bf16.msra.mxu0 0
        %4385 = vmatprep.subr.bf16.mxu0 0
        %4386 = vmatpush1.bf16.msra.mxu0 0
        %4387 = vmatprep.subr.bf16.mxu0 0
        %4388 = vmatpush1.bf16.msra.mxu0 0
        %4389 = vmatprep.subr.bf16.mxu0 0
        %4390 = vmatpush1.bf16.msra.mxu0 0
        %4391 = vmatprep.subr.bf16.mxu0 0
        %4392 = vmatpush1.bf16.msra.mxu0 0
        %4393 = vmatprep.subr.bf16.mxu0 0
        %4394 = vmatpush1.bf16.msra.mxu0 0
        %4395 = vmatprep.subr.bf16.mxu0 0
        %4396 = vmatpush1.bf16.msra.mxu0 0
        %4397 = vmatprep.subr.bf16.mxu0 0
        %4398 = vmatpush1.bf16.msra.mxu0 0
        %4399 = vmatprep.subr.bf16.mxu0 0
        %4400 = vmatpush1.bf16.msra.mxu0 0
        %4401 = vmatprep.subr.bf16.mxu0 0
        %4402 = vmatpush1.bf16.msra.mxu0 0
        %4403 = vmatprep.subr.bf16.mxu0 0
        %4404 = vmatpush1.bf16.msra.mxu0 0
        %4405 = vmatprep.mubr.bf16.mxu0 0
        %4406 = vmatmul.mubr.bf16.gmra.mrb[0].mxu0 %v3984
        %v4407 = vpop.f32.mrb[0].mxu0
        %v4408 = vadd.f32 0.0, %v4407
        %v4409 = vpop.f32.mrb[0].mxu0
        %v4410 = vpop.f32.mrb[0].mxu0
        %v4411 = vadd.f32 0.0, %v4410
        %v4412 = vpop.f32.mrb[0].mxu0
        %4413 = vmatprep.mubr.bf16.mxu0 0
        %4414 = vmatmul.mubr.bf16.gmra.mrb[0].mxu0 %v3987
        %v4415 = vpop.f32.mrb[0].mxu0
        %v4416 = vadd.f32 0.0, %v4415
        %v4417 = vpop.f32.mrb[0].mxu0
        %v4418 = vpop.f32.mrb[0].mxu0
        %v4419 = vadd.f32 0.0, %v4418
        %v4420 = vpop.f32.mrb[0].mxu0
        %4421 = vmatprep.mubr.bf16.mxu0 0
        %4422 = vmatmul.mubr.bf16.gmra.mrb[0].mxu0 %v3990
        %v4423 = vpop.f32.mrb[0].mxu0
        %v4424 = vadd.f32 0.0, %v4423
        %v4425 = vpop.f32.mrb[0].mxu0
        %v4426 = vpop.f32.mrb[0].mxu0
        %v4427 = vadd.f32 0.0, %v4426
        %v4428 = vpop.f32.mrb[0].mxu0
        %4429 = vmatprep.mubr.bf16.mxu0 0
        %4430 = vmatmul.mubr.bf16.gmra.mrb[0].mxu0 %v3993
        %v4431 = vpop.f32.mrb[0].mxu0
        %v4432 = vadd.f32 0.0, %v4431
        %v4433 = vpop.f32.mrb[0].mxu0
        %v4434 = vpop.f32.mrb[0].mxu0
        %v4435 = vadd.f32 0.0, %v4434
        %v4436 = vpop.f32.mrb[0].mxu0
        %4437 = vmatprep.mubr.bf16.mxu0 0
        %4438 = vmatmul.mubr.bf16.gmra.mrb[0].mxu0 %v3996
        %v4439 = vpop.f32.mrb[0].mxu0
        %v4440 = vadd.f32 0.0, %v4439
        %v4441 = vpop.f32.mrb[0].mxu0
        %v4442 = vpop.f32.mrb[0].mxu0
        %v4443 = vadd.f32 0.0, %v4442
        %v4444 = vpop.f32.mrb[0].mxu0
        %4445 = vmatprep.mubr.bf16.mxu0 0
        %4446 = vmatmul.mubr.bf16.gmra.mrb[0].mxu0 %v3999
        %v4447 = vpop.f32.mrb[0].mxu0
        %v4448 = vadd.f32 0.0, %v4447
        %v4449 = vpop.f32.mrb[0].mxu0
        %v4450 = vpop.f32.mrb[0].mxu0
        %v4451 = vadd.f32 0.0, %v4450
        %v4452 = vpop.f32.mrb[0].mxu0
        %4453 = vmatprep.mubr.bf16.mxu0 0
        %4454 = vmatmul.mubr.bf16.gmra.mrb[0].mxu0 %v4002
        %v4455 = vpop.f32.mrb[0].mxu0
        %v4456 = vadd.f32 0.0, %v4455
        %v4457 = vpop.f32.mrb[0].mxu0
        %v4458 = vpop.f32.mrb[0].mxu0
        %v4459 = vadd.f32 0.0, %v4458
        %v4460 = vpop.f32.mrb[0].mxu0
        %4461 = vmatprep.mubr.bf16.mxu0 0
        %4462 = vmatmul.mubr.bf16.gmra.mrb[0].mxu0 %v4368
        %v4463 = vpop.f32.mrb[0].mxu0
        %v4464 = vadd.f32 0.0, %v4463
        %v4465 = vpop.f32.mrb[0].mxu0
        %v4466 = vpop.f32.mrb[0].mxu0
        %v4467 = vadd.f32 0.0, %v4466
        %v4468 = vpop.f32.mrb[0].mxu0
        %4469 = vdwg.mxu0
        %v4470 = vadd.f32 %v4348, %v4408
        %v4471 = vadd.f32 %v4349, %v4411
        %v4472 = vadd.f32 %v4350, %v4416
        %v4473 = vadd.f32 %v4351, %v4419
        %v4474 = vadd.f32 %v4352, %v4424
        %v4475 = vadd.f32 %v4353, %v4427
        %v4476 = vadd.f32 %v4354, %v4432
        %v4477 = vadd.f32 %v4355, %v4435
        %v4478 = vadd.f32 %v4356, %v4440
        %v4479 = vadd.f32 %v4357, %v4443
        %v4480 = vadd.f32 %v4358, %v4448
        %v4481 = vadd.f32 %v4359, %v4451
        %v4482 = vadd.f32 %v4360, %v4456
        %v4483 = vadd.f32 %v4361, %v4459
        %v4484 = vadd.f32 %v4362, %v4464
        %v4485 = vadd.f32 %v4363, %v4467
        %v4486 = vpack.c.bf16 %v3520, %v3519
        %s4487 = scalar_lea.vmem [#allocation14], 12
        %v4488 = vld [vmem:[%s4487] sm:$0x3]
        %v4490 = vsel %vm3285, %v4486, 0
        %v4493 = vsel %vm3745, %v4488, 0
        %4495 = vmatprep.subr.bf16.mxu0 0
        %4496 = vmatpush1.bf16.msra.mxu0 %v4493
        %4497 = vmatprep.subr.bf16.mxu0 0
        %4498 = vmatpush1.bf16.msra.mxu0 0
        %4499 = vmatprep.subr.bf16.mxu0 0
        %4500 = vmatpush1.bf16.msra.mxu0 0
        %4501 = vmatprep.subr.bf16.mxu0 0
        %4502 = vmatpush1.bf16.msra.mxu0 0
        %4503 = vmatprep.subr.bf16.mxu0 0
        %4504 = vmatpush1.bf16.msra.mxu0 0
        %4505 = vmatprep.subr.bf16.mxu0 0
        %4506 = vmatpush1.bf16.msra.mxu0 0
        %4507 = vmatprep.subr.bf16.mxu0 0
        %4508 = vmatpush1.bf16.msra.mxu0 0
        %4509 = vmatprep.subr.bf16.mxu0 0
        %4510 = vmatpush1.bf16.msra.mxu0 0
        %4511 = vmatprep.subr.bf16.mxu0 0
        %4512 = vmatpush1.bf16.msra.mxu0 0
        %4513 = vmatprep.subr.bf16.mxu0 0
        %4514 = vmatpush1.bf16.msra.mxu0 0
        %4515 = vmatprep.subr.bf16.mxu0 0
        %4516 = vmatpush1.bf16.msra.mxu0 0
        %4517 = vmatprep.subr.bf16.mxu0 0
        %4518 = vmatpush1.bf16.msra.mxu0 0
        %4519 = vmatprep.subr.bf16.mxu0 0
        %4520 = vmatpush1.bf16.msra.mxu0 0
        %4521 = vmatprep.subr.bf16.mxu0 0
        %4522 = vmatpush1.bf16.msra.mxu0 0
        %4523 = vmatprep.subr.bf16.mxu0 0
        %4524 = vmatpush1.bf16.msra.mxu0 0
        %4525 = vmatprep.subr.bf16.mxu0 0
        %4526 = vmatpush1.bf16.msra.mxu0 0
        %4527 = vmatprep.mubr.bf16.mxu0 0
        %4528 = vmatmul.mubr.bf16.gmra.mrb[0].mxu0 %v3853
        %v4529 = vpop.f32.mrb[0].mxu0
        %v4530 = vadd.f32 0.0, %v4529
        %v4531 = vpop.f32.mrb[0].mxu0
        %v4532 = vpop.f32.mrb[0].mxu0
        %v4533 = vadd.f32 0.0, %v4532
        %v4534 = vpop.f32.mrb[0].mxu0
        %4535 = vmatprep.mubr.bf16.mxu0 0
        %4536 = vmatmul.mubr.bf16.gmra.mrb[0].mxu0 %v3856
        %v4537 = vpop.f32.mrb[0].mxu0
        %v4538 = vadd.f32 0.0, %v4537
        %v4539 = vpop.f32.mrb[0].mxu0
        %v4540 = vpop.f32.mrb[0].mxu0
        %v4541 = vadd.f32 0.0, %v4540
        %v4542 = vpop.f32.mrb[0].mxu0
        %4543 = vmatprep.mubr.bf16.mxu0 0
        %4544 = vmatmul.mubr.bf16.gmra.mrb[0].mxu0 %v3859
        %v4545 = vpop.f32.mrb[0].mxu0
        %v4546 = vadd.f32 0.0, %v4545
        %v4547 = vpop.f32.mrb[0].mxu0
        %v4548 = vpop.f32.mrb[0].mxu0
        %v4549 = vadd.f32 0.0, %v4548
        %v4550 = vpop.f32.mrb[0].mxu0
        %4551 = vmatprep.mubr.bf16.mxu0 0
        %4552 = vmatmul.mubr.bf16.gmra.mrb[0].mxu0 %v3862
        %v4553 = vpop.f32.mrb[0].mxu0
        %v4554 = vadd.f32 0.0, %v4553
        %v4555 = vpop.f32.mrb[0].mxu0
        %v4556 = vpop.f32.mrb[0].mxu0
        %v4557 = vadd.f32 0.0, %v4556
        %v4558 = vpop.f32.mrb[0].mxu0
        %4559 = vmatprep.mubr.bf16.mxu0 0
        %4560 = vmatmul.mubr.bf16.gmra.mrb[0].mxu0 %v3865
        %v4561 = vpop.f32.mrb[0].mxu0
        %v4562 = vadd.f32 0.0, %v4561
        %v4563 = vpop.f32.mrb[0].mxu0
        %v4564 = vpop.f32.mrb[0].mxu0
        %v4565 = vadd.f32 0.0, %v4564
        %v4566 = vpop.f32.mrb[0].mxu0
        %4567 = vmatprep.mubr.bf16.mxu0 0
        %4568 = vmatmul.mubr.bf16.gmra.mrb[0].mxu0 %v3868
        %v4569 = vpop.f32.mrb[0].mxu0
        %v4570 = vadd.f32 0.0, %v4569
        %v4571 = vpop.f32.mrb[0].mxu0
        %v4572 = vpop.f32.mrb[0].mxu0
        %v4573 = vadd.f32 0.0, %v4572
        %v4574 = vpop.f32.mrb[0].mxu0
        %4575 = vmatprep.mubr.bf16.mxu0 0
        %4576 = vmatmul.mubr.bf16.gmra.mrb[0].mxu0 %v4124
        %v4577 = vpop.f32.mrb[0].mxu0
        %v4578 = vadd.f32 0.0, %v4577
        %v4579 = vpop.f32.mrb[0].mxu0
        %v4580 = vpop.f32.mrb[0].mxu0
        %v4581 = vadd.f32 0.0, %v4580
        %v4582 = vpop.f32.mrb[0].mxu0
        %4583 = vmatprep.mubr.bf16.mxu0 0
        %4584 = vmatmul.mubr.bf16.gmra.mrb[0].mxu0 %v4490
        %v4585 = vpop.f32.mrb[0].mxu0
        %v4586 = vadd.f32 0.0, %v4585
        %v4587 = vpop.f32.mrb[0].mxu0
        %v4588 = vpop.f32.mrb[0].mxu0
        %v4589 = vadd.f32 0.0, %v4588
        %v4590 = vpop.f32.mrb[0].mxu0
        %4591 = vdwg.mxu0
        %v4592 = vadd.f32 %v4470, %v4530
        %v4593 = vadd.f32 %v4471, %v4533
        %v4594 = vadd.f32 %v4472, %v4538
        %v4595 = vadd.f32 %v4473, %v4541
        %v4596 = vadd.f32 %v4474, %v4546
        %v4597 = vadd.f32 %v4475, %v4549
        %v4598 = vadd.f32 %v4476, %v4554
        %v4599 = vadd.f32 %v4477, %v4557
        %v4600 = vadd.f32 %v4478, %v4562
        %v4601 = vadd.f32 %v4479, %v4565
        %v4602 = vadd.f32 %v4480, %v4570
        %v4603 = vadd.f32 %v4481, %v4573
        %v4604 = vadd.f32 %v4482, %v4578
        %v4605 = vadd.f32 %v4483, %v4581
        %v4606 = vadd.f32 %v4484, %v4586
        %v4607 = vadd.f32 %v4485, %v4589
        %v4608 = vpack.c.bf16 %v3337, %v3336
        %s4609 = scalar_lea.vmem [#allocation14], 14
        %v4610 = vld [vmem:[%s4609] sm:$0x3]
        %v4612 = vsel %vm3285, %v4608, 0
        %v4615 = vsel %vm3745, %v4610, 0
        %4617 = vmatprep.subr.bf16.mxu0 0
        %4618 = vmatpush1.bf16.msra.mxu0 %v4615
        %4619 = vmatprep.subr.bf16.mxu0 0
        %4620 = vmatpush1.bf16.msra.mxu0 0
        %4621 = vmatprep.subr.bf16.mxu0 0
        %4622 = vmatpush1.bf16.msra.mxu0 0
        %4623 = vmatprep.subr.bf16.mxu0 0
        %4624 = vmatpush1.bf16.msra.mxu0 0
        %4625 = vmatprep.subr.bf16.mxu0 0
        %4626 = vmatpush1.bf16.msra.mxu0 0
        %4627 = vmatprep.subr.bf16.mxu0 0
        %4628 = vmatpush1.bf16.msra.mxu0 0
        %4629 = vmatprep.subr.bf16.mxu0 0
        %4630 = vmatpush1.bf16.msra.mxu0 0
        %4631 = vmatprep.subr.bf16.mxu0 0
        %4632 = vmatpush1.bf16.msra.mxu0 0
        %4633 = vmatprep.subr.bf16.mxu0 0
        %4634 = vmatpush1.bf16.msra.mxu0 0
        %4635 = vmatprep.subr.bf16.mxu0 0
        %4636 = vmatpush1.bf16.msra.mxu0 0
        %4637 = vmatprep.subr.bf16.mxu0 0
        %4638 = vmatpush1.bf16.msra.mxu0 0
        %4639 = vmatprep.subr.bf16.mxu0 0
        %4640 = vmatpush1.bf16.msra.mxu0 0
        %4641 = vmatprep.subr.bf16.mxu0 0
        %4642 = vmatpush1.bf16.msra.mxu0 0
        %4643 = vmatprep.subr.bf16.mxu0 0
        %4644 = vmatpush1.bf16.msra.mxu0 0
        %4645 = vmatprep.subr.bf16.mxu0 0
        %4646 = vmatpush1.bf16.msra.mxu0 0
        %4647 = vmatprep.subr.bf16.mxu0 0
        %4648 = vmatpush1.bf16.msra.mxu0 0
        %4649 = vmatprep.mubr.bf16.mxu0 0
        %4650 = vmatmul.mubr.bf16.gmra.mrb[0].mxu0 %v3728
        %v4651 = vpop.f32.mrb[0].mxu0
        %v4652 = vadd.f32 0.0, %v4651
        %v4653 = vpop.f32.mrb[0].mxu0
        %v4654 = vpop.f32.mrb[0].mxu0
        %v4655 = vadd.f32 0.0, %v4654
        %v4656 = vpop.f32.mrb[0].mxu0
        %4657 = vmatprep.mubr.bf16.mxu0 0
        %4658 = vmatmul.mubr.bf16.gmra.mrb[0].mxu0 %v3731
        %v4659 = vpop.f32.mrb[0].mxu0
        %v4660 = vadd.f32 0.0, %v4659
        %v4661 = vpop.f32.mrb[0].mxu0
        %v4662 = vpop.f32.mrb[0].mxu0
        %v4663 = vadd.f32 0.0, %v4662
        %v4664 = vpop.f32.mrb[0].mxu0
        %4665 = vmatprep.mubr.bf16.mxu0 0
        %4666 = vmatmul.mubr.bf16.gmra.mrb[0].mxu0 %v3734
        %v4667 = vpop.f32.mrb[0].mxu0
        %v4668 = vadd.f32 0.0, %v4667
        %v4669 = vpop.f32.mrb[0].mxu0
        %v4670 = vpop.f32.mrb[0].mxu0
        %v4671 = vadd.f32 0.0, %v4670
        %v4672 = vpop.f32.mrb[0].mxu0
        %4673 = vmatprep.mubr.bf16.mxu0 0
        %4674 = vmatmul.mubr.bf16.gmra.mrb[0].mxu0 %v3737
        %v4675 = vpop.f32.mrb[0].mxu0
        %v4676 = vadd.f32 0.0, %v4675
        %v4677 = vpop.f32.mrb[0].mxu0
        %v4678 = vpop.f32.mrb[0].mxu0
        %v4679 = vadd.f32 0.0, %v4678
        %v4680 = vpop.f32.mrb[0].mxu0
        %4681 = vmatprep.mubr.bf16.mxu0 0
        %4682 = vmatmul.mubr.bf16.gmra.mrb[0].mxu0 %v3740
        %v4683 = vpop.f32.mrb[0].mxu0
        %v4684 = vadd.f32 0.0, %v4683
        %v4685 = vpop.f32.mrb[0].mxu0
        %v4686 = vpop.f32.mrb[0].mxu0
        %v4687 = vadd.f32 0.0, %v4686
        %v4688 = vpop.f32.mrb[0].mxu0
        %4689 = vmatprep.mubr.bf16.mxu0 0
        %4690 = vmatmul.mubr.bf16.gmra.mrb[0].mxu0 %v3743
        %v4691 = vpop.f32.mrb[0].mxu0
        %v4692 = vadd.f32 0.0, %v4691
        %v4693 = vpop.f32.mrb[0].mxu0
        %v4694 = vpop.f32.mrb[0].mxu0
        %v4695 = vadd.f32 0.0, %v4694
        %v4696 = vpop.f32.mrb[0].mxu0
        %4697 = vmatprep.mubr.bf16.mxu0 0
        %4698 = vmatmul.mubr.bf16.gmra.mrb[0].mxu0 %v4246
        %v4699 = vpop.f32.mrb[0].mxu0
        %v4700 = vadd.f32 0.0, %v4699
        %v4701 = vpop.f32.mrb[0].mxu0
        %v4702 = vpop.f32.mrb[0].mxu0
        %v4703 = vadd.f32 0.0, %v4702
        %v4704 = vpop.f32.mrb[0].mxu0
        %4705 = vmatprep.mubr.bf16.mxu0 0
        %4706 = vmatmul.mubr.bf16.gmra.mrb[0].mxu0 %v4612
        %v4707 = vpop.f32.mrb[0].mxu0
        %v4708 = vadd.f32 0.0, %v4707
        %v4709 = vpop.f32.mrb[0].mxu0
        %v4710 = vpop.f32.mrb[0].mxu0
        %v4711 = vadd.f32 0.0, %v4710
        %v4712 = vpop.f32.mrb[0].mxu0
        %4713 = vdwg.mxu0
        %v4714 = vadd.f32 %v4592, %v4652
        %v4715 = vadd.f32 %v4593, %v4655
        %v4716 = vadd.f32 %v4594, %v4660
        %v4717 = vadd.f32 %v4595, %v4663
        %v4718 = vadd.f32 %v4596, %v4668
        %v4719 = vadd.f32 %v4597, %v4671
        %v4720 = vadd.f32 %v4598, %v4676
        %v4721 = vadd.f32 %v4599, %v4679
        %v4722 = vadd.f32 %v4600, %v4684
        %v4723 = vadd.f32 %v4601, %v4687
        %v4724 = vadd.f32 %v4602, %v4692
        %v4725 = vadd.f32 %v4603, %v4695
        %v4726 = vadd.f32 %v4604, %v4700
        %v4727 = vadd.f32 %v4605, %v4703
        %v4728 = vadd.f32 %v4606, %v4708
        %v4729 = vadd.f32 %v4607, %v4711
        %v4730 = vpack.c.bf16 %v3701, %v3700
        %s4731 = scalar_lea.vmem [#allocation14], 16
        %v4732 = vld [vmem:[%s4731] sm:$0x3]
        %v4734 = vsel %vm3285, %v4730, 0
        %v4737 = vsel %vm3745, %v4732, 0
        %4739 = vmatprep.subr.bf16.mxu0 0
        %4740 = vmatpush1.bf16.msra.mxu0 %v4737
        %4741 = vmatprep.subr.bf16.mxu0 0
        %4742 = vmatpush1.bf16.msra.mxu0 0
        %4743 = vmatprep.subr.bf16.mxu0 0
        %4744 = vmatpush1.bf16.msra.mxu0 0
        %4745 = vmatprep.subr.bf16.mxu0 0
        %4746 = vmatpush1.bf16.msra.mxu0 0
        %4747 = vmatprep.subr.bf16.mxu0 0
        %4748 = vmatpush1.bf16.msra.mxu0 0
        %4749 = vmatprep.subr.bf16.mxu0 0
        %4750 = vmatpush1.bf16.msra.mxu0 0
        %4751 = vmatprep.subr.bf16.mxu0 0
        %4752 = vmatpush1.bf16.msra.mxu0 0
        %4753 = vmatprep.subr.bf16.mxu0 0
        %4754 = vmatpush1.bf16.msra.mxu0 0
        %4755 = vmatprep.subr.bf16.mxu0 0
        %4756 = vmatpush1.bf16.msra.mxu0 0
        %4757 = vmatprep.subr.bf16.mxu0 0
        %4758 = vmatpush1.bf16.msra.mxu0 0
        %4759 = vmatprep.subr.bf16.mxu0 0
        %4760 = vmatpush1.bf16.msra.mxu0 0
        %4761 = vmatprep.subr.bf16.mxu0 0
        %4762 = vmatpush1.bf16.msra.mxu0 0
        %4763 = vmatprep.subr.bf16.mxu0 0
        %4764 = vmatpush1.bf16.msra.mxu0 0
        %4765 = vmatprep.subr.bf16.mxu0 0
        %4766 = vmatpush1.bf16.msra.mxu0 0
        %4767 = vmatprep.subr.bf16.mxu0 0
        %4768 = vmatpush1.bf16.msra.mxu0 0
        %4769 = vmatprep.subr.bf16.mxu0 0
        %4770 = vmatpush1.bf16.msra.mxu0 0
        %4771 = vmatprep.mubr.bf16.mxu0 0
        %4772 = vmatmul.mubr.bf16.gmra.mrb[0].mxu0 %v3987
        %v4773 = vpop.f32.mrb[0].mxu0
        %v4774 = vadd.f32 0.0, %v4773
        %v4775 = vpop.f32.mrb[0].mxu0
        %v4776 = vpop.f32.mrb[0].mxu0
        %v4777 = vadd.f32 0.0, %v4776
        %v4778 = vpop.f32.mrb[0].mxu0
        %4779 = vmatprep.mubr.bf16.mxu0 0
        %4780 = vmatmul.mubr.bf16.gmra.mrb[0].mxu0 %v3990
        %v4781 = vpop.f32.mrb[0].mxu0
        %v4782 = vadd.f32 0.0, %v4781
        %v4783 = vpop.f32.mrb[0].mxu0
        %v4784 = vpop.f32.mrb[0].mxu0
        %v4785 = vadd.f32 0.0, %v4784
        %v4786 = vpop.f32.mrb[0].mxu0
        %4787 = vmatprep.mubr.bf16.mxu0 0
        %4788 = vmatmul.mubr.bf16.gmra.mrb[0].mxu0 %v3993
        %v4789 = vpop.f32.mrb[0].mxu0
        %v4790 = vadd.f32 0.0, %v4789
        %v4791 = vpop.f32.mrb[0].mxu0
        %v4792 = vpop.f32.mrb[0].mxu0
        %v4793 = vadd.f32 0.0, %v4792
        %v4794 = vpop.f32.mrb[0].mxu0
        %4795 = vmatprep.mubr.bf16.mxu0 0
        %4796 = vmatmul.mubr.bf16.gmra.mrb[0].mxu0 %v3996
        %v4797 = vpop.f32.mrb[0].mxu0
        %v4798 = vadd.f32 0.0, %v4797
        %v4799 = vpop.f32.mrb[0].mxu0
        %v4800 = vpop.f32.mrb[0].mxu0
        %v4801 = vadd.f32 0.0, %v4800
        %v4802 = vpop.f32.mrb[0].mxu0
        %4803 = vmatprep.mubr.bf16.mxu0 0
        %4804 = vmatmul.mubr.bf16.gmra.mrb[0].mxu0 %v3999
        %v4805 = vpop.f32.mrb[0].mxu0
        %v4806 = vadd.f32 0.0, %v4805
        %v4807 = vpop.f32.mrb[0].mxu0
        %v4808 = vpop.f32.mrb[0].mxu0
        %v4809 = vadd.f32 0.0, %v4808
        %v4810 = vpop.f32.mrb[0].mxu0
        %4811 = vmatprep.mubr.bf16.mxu0 0
        %4812 = vmatmul.mubr.bf16.gmra.mrb[0].mxu0 %v4002
        %v4813 = vpop.f32.mrb[0].mxu0
        %v4814 = vadd.f32 0.0, %v4813
        %v4815 = vpop.f32.mrb[0].mxu0
        %v4816 = vpop.f32.mrb[0].mxu0
        %v4817 = vadd.f32 0.0, %v4816
        %v4818 = vpop.f32.mrb[0].mxu0
        %4819 = vmatprep.mubr.bf16.mxu0 0
        %4820 = vmatmul.mubr.bf16.gmra.mrb[0].mxu0 %v4368
        %v4821 = vpop.f32.mrb[0].mxu0
        %v4822 = vadd.f32 0.0, %v4821
        %v4823 = vpop.f32.mrb[0].mxu0
        %v4824 = vpop.f32.mrb[0].mxu0
        %v4825 = vadd.f32 0.0, %v4824
        %v4826 = vpop.f32.mrb[0].mxu0
        %4827 = vmatprep.mubr.bf16.mxu0 0
        %4828 = vmatmul.mubr.bf16.gmra.mrb[0].mxu0 %v4734
        %v4829 = vpop.f32.mrb[0].mxu0
        %v4830 = vadd.f32 0.0, %v4829
        %v4831 = vpop.f32.mrb[0].mxu0
        %v4832 = vpop.f32.mrb[0].mxu0
        %v4833 = vadd.f32 0.0, %v4832
        %v4834 = vpop.f32.mrb[0].mxu0
        %4835 = vdwg.mxu0
        %v4836 = vadd.f32 %v4714, %v4774
        %v4837 = vadd.f32 %v4715, %v4777
        %v4838 = vadd.f32 %v4716, %v4782
        %v4839 = vadd.f32 %v4717, %v4785
        %v4840 = vadd.f32 %v4718, %v4790
        %v4841 = vadd.f32 %v4719, %v4793
        %v4842 = vadd.f32 %v4720, %v4798
        %v4843 = vadd.f32 %v4721, %v4801
        %v4844 = vadd.f32 %v4722, %v4806
        %v4845 = vadd.f32 %v4723, %v4809
        %v4846 = vadd.f32 %v4724, %v4814
        %v4847 = vadd.f32 %v4725, %v4817
        %v4848 = vadd.f32 %v4726, %v4822
        %v4849 = vadd.f32 %v4727, %v4825
        %v4850 = vadd.f32 %v4728, %v4830
        %v4851 = vadd.f32 %v4729, %v4833
        %v4852 = vld [vmem:[#allocation20] sm:$0x1]
        %v4854 = vlaneseq
        %v4855 = vshrl.u32 %v4854, 7
        %v4856 = vsub.s32 0, %v4855
        %v4857 = vrot.slane %v4852, %v4856
        %v4859 = vmul.f32 %v4836, %v4857
        %v4860 = vmul.f32 %v4837, %v4857
        %v4861 = vmul.f32 %v4838, %v4857
        %v4862 = vmul.f32 %v4839, %v4857
        %v4863 = vmul.f32 %v4840, %v4857
        %v4864 = vmul.f32 %v4841, %v4857
        %v4865 = vmul.f32 %v4842, %v4857
        %v4866 = vmul.f32 %v4843, %v4857
        %v4867 = vmul.f32 %v4844, %v4857
        %v4868 = vmul.f32 %v4845, %v4857
        %v4869 = vmul.f32 %v4846, %v4857
        %v4870 = vmul.f32 %v4847, %v4857
        %v4871 = vmul.f32 %v4848, %v4857
        %v4872 = vmul.f32 %v4849, %v4857
        %v4873 = vmul.f32 %v4850, %v4857
        %v4874 = vmul.f32 %v4851, %v4857
        %v4875 = vld [vmem:[#allocation22] sm:$0x1]
        %v4877 = vlaneseq
        %v4878 = vshrl.u32 %v4877, 7
        %v4879 = vsub.s32 0, %v4878
        %v4880 = vrot.slane %v4875, %v4879
        %v4882 = vadd.f32 %v4859, %v4880
        %v4883 = vadd.f32 %v4860, %v4880
        %v4884 = vadd.f32 %v4861, %v4880
        %v4885 = vadd.f32 %v4862, %v4880
        %v4886 = vadd.f32 %v4863, %v4880
        %v4887 = vadd.f32 %v4864, %v4880
        %v4888 = vadd.f32 %v4865, %v4880
        %v4889 = vadd.f32 %v4866, %v4880
        %v4890 = vadd.f32 %v4867, %v4880
        %v4891 = vadd.f32 %v4868, %v4880
        %v4892 = vadd.f32 %v4869, %v4880
        %v4893 = vadd.f32 %v4870, %v4880
        %v4894 = vadd.f32 %v4871, %v4880
        %v4895 = vadd.f32 %v4872, %v4880
        %v4896 = vadd.f32 %v4873, %v4880
        %v4897 = vadd.f32 %v4874, %v4880
        %s4898 = sld [smem:[#allocation3 + $0x4]]
        %s4899 = sld [smem:[#allocation3 + $0x5]]
        %s4900 = sld [smem:[#allocation3 + $0x6]]
        %s4901 = sld [smem:[#allocation3 + $0x7]]
        %v4902 = vstv %s4898
        %v4903 = vmax.f32 %v4882, %v4902
        %v4904 = vmax.f32 %v4883, %v4902
        %v4905 = vmax.f32 %v4884, %v4902
        %v4906 = vmax.f32 %v4885, %v4902
        %v4907 = vmax.f32 %v4886, %v4902
        %v4908 = vmax.f32 %v4887, %v4902
        %v4909 = vmax.f32 %v4888, %v4902
        %v4910 = vmax.f32 %v4889, %v4902
        %v4911 = vmax.f32 %v4890, %v4902
        %v4912 = vmax.f32 %v4891, %v4902
        %v4913 = vmax.f32 %v4892, %v4902
        %v4914 = vmax.f32 %v4893, %v4902
        %v4915 = vmax.f32 %v4894, %v4902
        %v4916 = vmax.f32 %v4895, %v4902
        %v4917 = vmax.f32 %v4896, %v4902
        %v4918 = vmax.f32 %v4897, %v4902
        %v4919 = vlog2.pop %v4903
        %v4920 = vmul.f32 %v4919, 0.6931472
        %v4921 = vlog2.pop %v4904
        %v4922 = vmul.f32 %v4921, 0.6931472
        %v4923 = vlog2.pop %v4905
        %v4924 = vmul.f32 %v4923, 0.6931472
        %v4925 = vlog2.pop %v4906
        %v4926 = vmul.f32 %v4925, 0.6931472
        %v4927 = vlog2.pop %v4907
        %v4928 = vmul.f32 %v4927, 0.6931472
        %v4929 = vlog2.pop %v4908
        %v4930 = vmul.f32 %v4929, 0.6931472
        %v4931 = vlog2.pop %v4909
        %v4932 = vmul.f32 %v4931, 0.6931472
        %v4933 = vlog2.pop %v4910
        %v4934 = vmul.f32 %v4933, 0.6931472
        %v4935 = vlog2.pop %v4911
        %v4936 = vmul.f32 %v4935, 0.6931472
        %v4937 = vlog2.pop %v4912
        %v4938 = vmul.f32 %v4937, 0.6931472
        %v4939 = vlog2.pop %v4913
        %v4940 = vmul.f32 %v4939, 0.6931472
        %v4941 = vlog2.pop %v4914
        %v4942 = vmul.f32 %v4941, 0.6931472
        %v4943 = vlog2.pop %v4915
        %v4944 = vmul.f32 %v4943, 0.6931472
        %v4945 = vlog2.pop %v4916
        %v4946 = vmul.f32 %v4945, 0.6931472
        %v4947 = vlog2.pop %v4917
        %v4948 = vmul.f32 %v4947, 0.6931472
        %v4949 = vlog2.pop %v4918
        %v4950 = vmul.f32 %v4949, 0.6931472
        %v4951 = vstv %s4899
        %v4952 = vsub.f32 %v4920, %v4951
        %v4953 = vsub.f32 %v4922, %v4951
        %v4954 = vsub.f32 %v4924, %v4951
        %v4955 = vsub.f32 %v4926, %v4951
        %v4956 = vsub.f32 %v4928, %v4951
        %v4957 = vsub.f32 %v4930, %v4951
        %v4958 = vsub.f32 %v4932, %v4951
        %v4959 = vsub.f32 %v4934, %v4951
        %v4960 = vsub.f32 %v4936, %v4951
        %v4961 = vsub.f32 %v4938, %v4951
        %v4962 = vsub.f32 %v4940, %v4951
        %v4963 = vsub.f32 %v4942, %v4951
        %v4964 = vsub.f32 %v4944, %v4951
        %v4965 = vsub.f32 %v4946, %v4951
        %v4966 = vsub.f32 %v4948, %v4951
        %v4967 = vsub.f32 %v4950, %v4951
        %v4968 = vand.u32 2147483647, %v4952
        %vm4969 = vcmp.le.f32.partialorder %v4968, 0.7853982
        %vm4970 = vcmp.lt.s32.totalorder %v4952, 0
        %v4971 = vand.u32 %v4952, 2139095040
        %v4972 = vshrl.u32 %v4971, 23
        %v4973 = vsub.s32 %v4972, 127
        %v4974 = vand.u32 2147483647, %v4952
        %v4975 = vand.u32 %v4974, 8388607
        %v4976 = vor.u32 %v4975, 8388608
        %v4977 = vsub.s32 0, %v4976
        %v4978 = vadd.s32 %v4973, 1
        %vm4979 = vcmp.gt.s32.totalorder %v4978, 0
        %v4980 = vsel %vm4979, %v4978, 0
        %v4981 = vshrl.u32 %v4980, 5
        %v4982 = vand.u32 %v4980, 31
        %v4983 = vsub.s32 32, %v4982
        %v4984 = vshrl.u32 683565275, %v4983
        %v4985 = vshll.u32 683565275, %v4982
        %v4986 = vshrl.u32 2475754826, %v4983
        %v4987 = vor.u32 %v4985, %v4986
        %v4988 = vshll.u32 2475754826, %v4982
        %v4989 = vshrl.u32 2131351028, %v4983
        %v4990 = vor.u32 %v4988, %v4989
        %v4991 = vshll.u32 2131351028, %v4982
        %v4992 = vshrl.u32 2102212464, %v4983
        %v4993 = vor.u32 %v4991, %v4992
        %v4994 = vshll.u32 2102212464, %v4982
        %v4995 = vshrl.u32 920167782, %v4983
        %v4996 = vor.u32 %v4994, %v4995
        %v4997 = vshll.u32 920167782, %v4982
        %v4998 = vshrl.u32 1326507024, %v4983
        %v4999 = vor.u32 %v4997, %v4998
        %vm5000 = vcmp.lt.s32.totalorder %v4981, 1
        %vm5001 = vcmp.lt.s32.totalorder %v4981, 2
        %vm5002 = vcmp.lt.s32.totalorder %v4981, 3
        %vm5003 = vcmp.lt.s32.totalorder %v4981, 4
        %v5004 = vsel %vm5000, %v4984, %v4987
        %v5005 = vsel %vm5003, %v4993, 2102212464
        %v5006 = vsel %vm5002, %v4990, %v5005
        %v5007 = vsel %vm5001, %v5004, %v5006
        %v5008 = vsel %vm5000, %v4987, %v4990
        %v5009 = vsel %vm5003, %v4996, 920167782
        %v5010 = vsel %vm5002, %v4993, %v5009
        %v5011 = vsel %vm5001, %v5008, %v5010
        %v5012 = vsel %vm5000, %v4990, %v4993
        %v5013 = vsel %vm5003, %v4999, 1326507024
        %v5014 = vsel %vm5002, %v4996, %v5013
        %v5015 = vsel %vm5001, %v5012, %v5014
        %v5016 = vshll.u32 %v4976, 8
        %v5017 = vmul.u32.u64.compose %v5016, %v5015
        %v5018 = vextract.low.u32 %v5017
        %v5019 = vextract.high.u32 %v5017
        %v5020 = vmul.u32.u64.compose %v5016, %v5011
        %v5021 = vextract.low.u32 %v5020
        %v5022 = vextract.high.u32 %v5020
        %v5023 = vmul.u32 %v5016, %v5007
        %v5024 = vadd.s32 %v5019, %v5021
        %vm5025 = vc.u32 %v5019, %v5021
        %v5026 = vadd.s32 %v5022, 1
        %v5027 = vsel %vm5025, %v5026, %v5022
        %v5028 = vadd.s32 %v5023, %v5027
        %v5029 = vadd.s32 %v5028, 536870912
        %v5030 = vshrl.u32 %v5029, 30
        %v5031 = vshll.u32 %v5030, 30
        %v5032 = vsub.s32 %v5028, %v5031
        %vm5033 = vcmp.lt.s32.totalorder %v5032, 0
        %v5034 = vsub.s32 0, %v5032
        %v5035 = vsel %vm5033, %v5034, %v5032
        %v5036 = vclz %v5035
        %v5037 = vsub.s32 %v5036, 2
        %vm5038 = vcmp.gt.s32.totalorder 0, %v5037
        %v5039 = vsel %vm5038, 0, %v5037
        %v5040 = vsub.s32 32, %v5039
        %v5041 = vshll.u32 %v5032, %v5039
        %v5042 = vshrl.u32 %v5024, %v5040
        %v5043 = vor.u32 %v5041, %v5042
        %v5044 = vsub.s32 4294967266, %v5039
        %v5045 = vadd.s32 %v5044, 127
        %v5046 = vshll.u32 %v5045, 23
        %v5047 = vor.u32 4788187, %v5046
        %v5048 = vand.u32 2147483647, %v5047
        %v5050 = vcvt.s32.f32 %v5043
        %v5051 = vmul.f32 %v5050, %v5048
        %v5052 = vxor.u32 %v5051, 2147483648
        %v5053 = vsel %vm4970, %v5052, %v5051
        %v5054 = vsub.s32 4, %v5030
        %v5055 = vsel %vm4970, %v5054, %v5030
        %v5056 = vsel %vm4969, %v4952, %v5053
        %v5057 = vsel %vm4969, 0, %v5055
        %v5058 = vcosq.f32.pop %v5056
        %v5059 = vsinq.f32.pop %v5056
        %vm5060 = vweird.f32 %v4952
        %v5061 = vadd.s32 %v5057, 3
        %v5062 = vand.u32 %v5061, 3
        %vm5063 = vcmp.lt.s32.totalorder %v5062, 2
        %vm5064 = vcmp.eq.s32.totalorder %v5062, 0
        %v5065 = vxor.u32 %v5059, 2147483648
        %v5066 = vsel %vm5064, %v5058, %v5065
        %vm5067 = vcmp.eq.s32.totalorder %v5062, 2
        %v5068 = vxor.u32 %v5058, 2147483648
        %v5069 = vsel %vm5067, %v5068, %v5059
        %v5070 = vsel %vm5063, %v5066, %v5069
        %v5071 = vsel %vm5060, nan, %v5070
        %v5072 = vand.u32 2147483647, %v4953
        %vm5073 = vcmp.le.f32.partialorder %v5072, 0.7853982
        %vm5074 = vcmp.lt.s32.totalorder %v4953, 0
        %v5075 = vand.u32 %v4953, 2139095040
        %v5076 = vshrl.u32 %v5075, 23
        %v5077 = vsub.s32 %v5076, 127
        %v5078 = vand.u32 2147483647, %v4953
        %v5079 = vand.u32 %v5078, 8388607
        %v5080 = vor.u32 %v5079, 8388608
        %v5081 = vsub.s32 0, %v5080
        %v5082 = vadd.s32 %v5077, 1
        %vm5083 = vcmp.gt.s32.totalorder %v5082, 0
        %v5084 = vsel %vm5083, %v5082, 0
        %v5085 = vshrl.u32 %v5084, 5
        %v5086 = vand.u32 %v5084, 31
        %v5087 = vsub.s32 32, %v5086
        %v5088 = vshrl.u32 683565275, %v5087
        %v5089 = vshll.u32 683565275, %v5086
        %v5090 = vshrl.u32 2475754826, %v5087
        %v5091 = vor.u32 %v5089, %v5090
        %v5092 = vshll.u32 2475754826, %v5086
        %v5093 = vshrl.u32 2131351028, %v5087
        %v5094 = vor.u32 %v5092, %v5093
        %v5095 = vshll.u32 2131351028, %v5086
        %v5096 = vshrl.u32 2102212464, %v5087
        %v5097 = vor.u32 %v5095, %v5096
        %v5098 = vshll.u32 2102212464, %v5086
        %v5099 = vshrl.u32 920167782, %v5087
        %v5100 = vor.u32 %v5098, %v5099
        %v5101 = vshll.u32 920167782, %v5086
        %v5102 = vshrl.u32 1326507024, %v5087
        %v5103 = vor.u32 %v5101, %v5102
        %vm5104 = vcmp.lt.s32.totalorder %v5085, 1
        %vm5105 = vcmp.lt.s32.totalorder %v5085, 2
        %vm5106 = vcmp.lt.s32.totalorder %v5085, 3
        %vm5107 = vcmp.lt.s32.totalorder %v5085, 4
        %v5108 = vsel %vm5104, %v5088, %v5091
        %v5109 = vsel %vm5107, %v5097, 2102212464
        %v5110 = vsel %vm5106, %v5094, %v5109
        %v5111 = vsel %vm5105, %v5108, %v5110
        %v5112 = vsel %vm5104, %v5091, %v5094
        %v5113 = vsel %vm5107, %v5100, 920167782
        %v5114 = vsel %vm5106, %v5097, %v5113
        %v5115 = vsel %vm5105, %v5112, %v5114
        %v5116 = vsel %vm5104, %v5094, %v5097
        %v5117 = vsel %vm5107, %v5103, 1326507024
        %v5118 = vsel %vm5106, %v5100, %v5117
        %v5119 = vsel %vm5105, %v5116, %v5118
        %v5120 = vshll.u32 %v5080, 8
        %v5121 = vmul.u32.u64.compose %v5120, %v5119
        %v5122 = vextract.low.u32 %v5121
        %v5123 = vextract.high.u32 %v5121
        %v5124 = vmul.u32.u64.compose %v5120, %v5115
        %v5125 = vextract.low.u32 %v5124
        %v5126 = vextract.high.u32 %v5124
        %v5127 = vmul.u32 %v5120, %v5111
        %v5128 = vadd.s32 %v5123, %v5125
        %vm5129 = vc.u32 %v5123, %v5125
        %v5130 = vadd.s32 %v5126, 1
        %v5131 = vsel %vm5129, %v5130, %v5126
        %v5132 = vadd.s32 %v5127, %v5131
        %v5133 = vadd.s32 %v5132, 536870912
        %v5134 = vshrl.u32 %v5133, 30
        %v5135 = vshll.u32 %v5134, 30
        %v5136 = vsub.s32 %v5132, %v5135
        %vm5137 = vcmp.lt.s32.totalorder %v5136, 0
        %v5138 = vsub.s32 0, %v5136
        %v5139 = vsel %vm5137, %v5138, %v5136
        %v5140 = vclz %v5139
        %v5141 = vsub.s32 %v5140, 2
        %vm5142 = vcmp.gt.s32.totalorder 0, %v5141
        %v5143 = vsel %vm5142, 0, %v5141
        %v5144 = vsub.s32 32, %v5143
        %v5145 = vshll.u32 %v5136, %v5143
        %v5146 = vshrl.u32 %v5128, %v5144
        %v5147 = vor.u32 %v5145, %v5146
        %v5148 = vsub.s32 4294967266, %v5143
        %v5149 = vadd.s32 %v5148, 127
        %v5150 = vshll.u32 %v5149, 23
        %v5151 = vor.u32 4788187, %v5150
        %v5152 = vand.u32 2147483647, %v5151
        %v5154 = vcvt.s32.f32 %v5147
        %v5155 = vmul.f32 %v5154, %v5152
        %v5156 = vxor.u32 %v5155, 2147483648
        %v5157 = vsel %vm5074, %v5156, %v5155
        %v5158 = vsub.s32 4, %v5134
        %v5159 = vsel %vm5074, %v5158, %v5134
        %v5160 = vsel %vm5073, %v4953, %v5157
        %v5161 = vsel %vm5073, 0, %v5159
        %v5162 = vcosq.f32.pop %v5160
        %v5163 = vsinq.f32.pop %v5160
        %vm5164 = vweird.f32 %v4953
        %v5165 = vadd.s32 %v5161, 3
        %v5166 = vand.u32 %v5165, 3
        %vm5167 = vcmp.lt.s32.totalorder %v5166, 2
        %vm5168 = vcmp.eq.s32.totalorder %v5166, 0
        %v5169 = vxor.u32 %v5163, 2147483648
        %v5170 = vsel %vm5168, %v5162, %v5169
        %vm5171 = vcmp.eq.s32.totalorder %v5166, 2
        %v5172 = vxor.u32 %v5162, 2147483648
        %v5173 = vsel %vm5171, %v5172, %v5163
        %v5174 = vsel %vm5167, %v5170, %v5173
        %v5175 = vsel %vm5164, nan, %v5174
        %v5176 = vand.u32 2147483647, %v4954
        %vm5177 = vcmp.le.f32.partialorder %v5176, 0.7853982
        %vm5178 = vcmp.lt.s32.totalorder %v4954, 0
        %v5179 = vand.u32 %v4954, 2139095040
        %v5180 = vshrl.u32 %v5179, 23
        %v5181 = vsub.s32 %v5180, 127
        %v5182 = vand.u32 2147483647, %v4954
        %v5183 = vand.u32 %v5182, 8388607
        %v5184 = vor.u32 %v5183, 8388608
        %v5185 = vsub.s32 0, %v5184
        %v5186 = vadd.s32 %v5181, 1
        %vm5187 = vcmp.gt.s32.totalorder %v5186, 0
        %v5188 = vsel %vm5187, %v5186, 0
        %v5189 = vshrl.u32 %v5188, 5
        %v5190 = vand.u32 %v5188, 31
        %v5191 = vsub.s32 32, %v5190
        %v5192 = vshrl.u32 683565275, %v5191
        %v5193 = vshll.u32 683565275, %v5190
        %v5194 = vshrl.u32 2475754826, %v5191
        %v5195 = vor.u32 %v5193, %v5194
        %v5196 = vshll.u32 2475754826, %v5190
        %v5197 = vshrl.u32 2131351028, %v5191
        %v5198 = vor.u32 %v5196, %v5197
        %v5199 = vshll.u32 2131351028, %v5190
        %v5200 = vshrl.u32 2102212464, %v5191
        %v5201 = vor.u32 %v5199, %v5200
        %v5202 = vshll.u32 2102212464, %v5190
        %v5203 = vshrl.u32 920167782, %v5191
        %v5204 = vor.u32 %v5202, %v5203
        %v5205 = vshll.u32 920167782, %v5190
        %v5206 = vshrl.u32 1326507024, %v5191
        %v5207 = vor.u32 %v5205, %v5206
        %vm5208 = vcmp.lt.s32.totalorder %v5189, 1
        %vm5209 = vcmp.lt.s32.totalorder %v5189, 2
        %vm5210 = vcmp.lt.s32.totalorder %v5189, 3
        %vm5211 = vcmp.lt.s32.totalorder %v5189, 4
        %v5212 = vsel %vm5208, %v5192, %v5195
        %v5213 = vsel %vm5211, %v5201, 2102212464
        %v5214 = vsel %vm5210, %v5198, %v5213
        %v5215 = vsel %vm5209, %v5212, %v5214
        %v5216 = vsel %vm5208, %v5195, %v5198
        %v5217 = vsel %vm5211, %v5204, 920167782
        %v5218 = vsel %vm5210, %v5201, %v5217
        %v5219 = vsel %vm5209, %v5216, %v5218
        %v5220 = vsel %vm5208, %v5198, %v5201
        %v5221 = vsel %vm5211, %v5207, 1326507024
        %v5222 = vsel %vm5210, %v5204, %v5221
        %v5223 = vsel %vm5209, %v5220, %v5222
        %v5224 = vshll.u32 %v5184, 8
        %v5225 = vmul.u32.u64.compose %v5224, %v5223
        %v5226 = vextract.low.u32 %v5225
        %v5227 = vextract.high.u32 %v5225
        %v5228 = vmul.u32.u64.compose %v5224, %v5219
        %v5229 = vextract.low.u32 %v5228
        %v5230 = vextract.high.u32 %v5228
        %v5231 = vmul.u32 %v5224, %v5215
        %v5232 = vadd.s32 %v5227, %v5229
        %vm5233 = vc.u32 %v5227, %v5229
        %v5234 = vadd.s32 %v5230, 1
        %v5235 = vsel %vm5233, %v5234, %v5230
        %v5236 = vadd.s32 %v5231, %v5235
        %v5237 = vadd.s32 %v5236, 536870912
        %v5238 = vshrl.u32 %v5237, 30
        %v5239 = vshll.u32 %v5238, 30
        %v5240 = vsub.s32 %v5236, %v5239
        %vm5241 = vcmp.lt.s32.totalorder %v5240, 0
        %v5242 = vsub.s32 0, %v5240
        %v5243 = vsel %vm5241, %v5242, %v5240
        %v5244 = vclz %v5243
        %v5245 = vsub.s32 %v5244, 2
        %vm5246 = vcmp.gt.s32.totalorder 0, %v5245
        %v5247 = vsel %vm5246, 0, %v5245
        %v5248 = vsub.s32 32, %v5247
        %v5249 = vshll.u32 %v5240, %v5247
        %v5250 = vshrl.u32 %v5232, %v5248
        %v5251 = vor.u32 %v5249, %v5250
        %v5252 = vsub.s32 4294967266, %v5247
        %v5253 = vadd.s32 %v5252, 127
        %v5254 = vshll.u32 %v5253, 23
        %v5255 = vor.u32 4788187, %v5254
        %v5256 = vand.u32 2147483647, %v5255
        %v5258 = vcvt.s32.f32 %v5251
        %v5259 = vmul.f32 %v5258, %v5256
        %v5260 = vxor.u32 %v5259, 2147483648
        %v5261 = vsel %vm5178, %v5260, %v5259
        %v5262 = vsub.s32 4, %v5238
        %v5263 = vsel %vm5178, %v5262, %v5238
        %v5264 = vsel %vm5177, %v4954, %v5261
        %v5265 = vsel %vm5177, 0, %v5263
        %v5266 = vcosq.f32.pop %v5264
        %v5267 = vsinq.f32.pop %v5264
        %vm5268 = vweird.f32 %v4954
        %v5269 = vadd.s32 %v5265, 3
        %v5270 = vand.u32 %v5269, 3
        %vm5271 = vcmp.lt.s32.totalorder %v5270, 2
        %vm5272 = vcmp.eq.s32.totalorder %v5270, 0
        %v5273 = vxor.u32 %v5267, 2147483648
        %v5274 = vsel %vm5272, %v5266, %v5273
        %vm5275 = vcmp.eq.s32.totalorder %v5270, 2
        %v5276 = vxor.u32 %v5266, 2147483648
        %v5277 = vsel %vm5275, %v5276, %v5267
        %v5278 = vsel %vm5271, %v5274, %v5277
        %v5279 = vsel %vm5268, nan, %v5278
        %v5280 = vand.u32 2147483647, %v4955
        %vm5281 = vcmp.le.f32.partialorder %v5280, 0.7853982
        %vm5282 = vcmp.lt.s32.totalorder %v4955, 0
        %v5283 = vand.u32 %v4955, 2139095040
        %v5284 = vshrl.u32 %v5283, 23
        %v5285 = vsub.s32 %v5284, 127
        %v5286 = vand.u32 2147483647, %v4955
        %v5287 = vand.u32 %v5286, 8388607
        %v5288 = vor.u32 %v5287, 8388608
        %v5289 = vsub.s32 0, %v5288
        %v5290 = vadd.s32 %v5285, 1
        %vm5291 = vcmp.gt.s32.totalorder %v5290, 0
        %v5292 = vsel %vm5291, %v5290, 0
        %v5293 = vshrl.u32 %v5292, 5
        %v5294 = vand.u32 %v5292, 31
        %v5295 = vsub.s32 32, %v5294
        %v5296 = vshrl.u32 683565275, %v5295
        %v5297 = vshll.u32 683565275, %v5294
        %v5298 = vshrl.u32 2475754826, %v5295
        %v5299 = vor.u32 %v5297, %v5298
        %v5300 = vshll.u32 2475754826, %v5294
        %v5301 = vshrl.u32 2131351028, %v5295
        %v5302 = vor.u32 %v5300, %v5301
        %v5303 = vshll.u32 2131351028, %v5294
        %v5304 = vshrl.u32 2102212464, %v5295
        %v5305 = vor.u32 %v5303, %v5304
        %v5306 = vshll.u32 2102212464, %v5294
        %v5307 = vshrl.u32 920167782, %v5295
        %v5308 = vor.u32 %v5306, %v5307
        %v5309 = vshll.u32 920167782, %v5294
        %v5310 = vshrl.u32 1326507024, %v5295
        %v5311 = vor.u32 %v5309, %v5310
        %vm5312 = vcmp.lt.s32.totalorder %v5293, 1
        %vm5313 = vcmp.lt.s32.totalorder %v5293, 2
        %vm5314 = vcmp.lt.s32.totalorder %v5293, 3
        %vm5315 = vcmp.lt.s32.totalorder %v5293, 4
        %v5316 = vsel %vm5312, %v5296, %v5299
        %v5317 = vsel %vm5315, %v5305, 2102212464
        %v5318 = vsel %vm5314, %v5302, %v5317
        %v5319 = vsel %vm5313, %v5316, %v5318
        %v5320 = vsel %vm5312, %v5299, %v5302
        %v5321 = vsel %vm5315, %v5308, 920167782
        %v5322 = vsel %vm5314, %v5305, %v5321
        %v5323 = vsel %vm5313, %v5320, %v5322
        %v5324 = vsel %vm5312, %v5302, %v5305
        %v5325 = vsel %vm5315, %v5311, 1326507024
        %v5326 = vsel %vm5314, %v5308, %v5325
        %v5327 = vsel %vm5313, %v5324, %v5326
        %v5328 = vshll.u32 %v5288, 8
        %v5329 = vmul.u32.u64.compose %v5328, %v5327
        %v5330 = vextract.low.u32 %v5329
        %v5331 = vextract.high.u32 %v5329
        %v5332 = vmul.u32.u64.compose %v5328, %v5323
        %v5333 = vextract.low.u32 %v5332
        %v5334 = vextract.high.u32 %v5332
        %v5335 = vmul.u32 %v5328, %v5319
        %v5336 = vadd.s32 %v5331, %v5333
        %vm5337 = vc.u32 %v5331, %v5333
        %v5338 = vadd.s32 %v5334, 1
        %v5339 = vsel %vm5337, %v5338, %v5334
        %v5340 = vadd.s32 %v5335, %v5339
        %v5341 = vadd.s32 %v5340, 536870912
        %v5342 = vshrl.u32 %v5341, 30
        %v5343 = vshll.u32 %v5342, 30
        %v5344 = vsub.s32 %v5340, %v5343
        %vm5345 = vcmp.lt.s32.totalorder %v5344, 0
        %v5346 = vsub.s32 0, %v5344
        %v5347 = vsel %vm5345, %v5346, %v5344
        %v5348 = vclz %v5347
        %v5349 = vsub.s32 %v5348, 2
        %vm5350 = vcmp.gt.s32.totalorder 0, %v5349
        %v5351 = vsel %vm5350, 0, %v5349
        %v5352 = vsub.s32 32, %v5351
        %v5353 = vshll.u32 %v5344, %v5351
        %v5354 = vshrl.u32 %v5336, %v5352
        %v5355 = vor.u32 %v5353, %v5354
        %v5356 = vsub.s32 4294967266, %v5351
        %v5357 = vadd.s32 %v5356, 127
        %v5358 = vshll.u32 %v5357, 23
        %v5359 = vor.u32 4788187, %v5358
        %v5360 = vand.u32 2147483647, %v5359
        %v5362 = vcvt.s32.f32 %v5355
        %v5363 = vmul.f32 %v5362, %v5360
        %v5364 = vxor.u32 %v5363, 2147483648
        %v5365 = vsel %vm5282, %v5364, %v5363
        %v5366 = vsub.s32 4, %v5342
        %v5367 = vsel %vm5282, %v5366, %v5342
        %v5368 = vsel %vm5281, %v4955, %v5365
        %v5369 = vsel %vm5281, 0, %v5367
        %v5370 = vcosq.f32.pop %v5368
        %v5371 = vsinq.f32.pop %v5368
        %vm5372 = vweird.f32 %v4955
        %v5373 = vadd.s32 %v5369, 3
        %v5374 = vand.u32 %v5373, 3
        %vm5375 = vcmp.lt.s32.totalorder %v5374, 2
        %vm5376 = vcmp.eq.s32.totalorder %v5374, 0
        %v5377 = vxor.u32 %v5371, 2147483648
        %v5378 = vsel %vm5376, %v5370, %v5377
        %vm5379 = vcmp.eq.s32.totalorder %v5374, 2
        %v5380 = vxor.u32 %v5370, 2147483648
        %v5381 = vsel %vm5379, %v5380, %v5371
        %v5382 = vsel %vm5375, %v5378, %v5381
        %v5383 = vsel %vm5372, nan, %v5382
        %v5384 = vand.u32 2147483647, %v4956
        %vm5385 = vcmp.le.f32.partialorder %v5384, 0.7853982
        %vm5386 = vcmp.lt.s32.totalorder %v4956, 0
        %v5387 = vand.u32 %v4956, 2139095040
        %v5388 = vshrl.u32 %v5387, 23
        %v5389 = vsub.s32 %v5388, 127
        %v5390 = vand.u32 2147483647, %v4956
        %v5391 = vand.u32 %v5390, 8388607
        %v5392 = vor.u32 %v5391, 8388608
        %v5393 = vsub.s32 0, %v5392
        %v5394 = vadd.s32 %v5389, 1
        %vm5395 = vcmp.gt.s32.totalorder %v5394, 0
        %v5396 = vsel %vm5395, %v5394, 0
        %v5397 = vshrl.u32 %v5396, 5
        %v5398 = vand.u32 %v5396, 31
        %v5399 = vsub.s32 32, %v5398
        %v5400 = vshrl.u32 683565275, %v5399
        %v5401 = vshll.u32 683565275, %v5398
        %v5402 = vshrl.u32 2475754826, %v5399
        %v5403 = vor.u32 %v5401, %v5402
        %v5404 = vshll.u32 2475754826, %v5398
        %v5405 = vshrl.u32 2131351028, %v5399
        %v5406 = vor.u32 %v5404, %v5405
        %v5407 = vshll.u32 2131351028, %v5398
        %v5408 = vshrl.u32 2102212464, %v5399
        %v5409 = vor.u32 %v5407, %v5408
        %v5410 = vshll.u32 2102212464, %v5398
        %v5411 = vshrl.u32 920167782, %v5399
        %v5412 = vor.u32 %v5410, %v5411
        %v5413 = vshll.u32 920167782, %v5398
        %v5414 = vshrl.u32 1326507024, %v5399
        %v5415 = vor.u32 %v5413, %v5414
        %vm5416 = vcmp.lt.s32.totalorder %v5397, 1
        %vm5417 = vcmp.lt.s32.totalorder %v5397, 2
        %vm5418 = vcmp.lt.s32.totalorder %v5397, 3
        %vm5419 = vcmp.lt.s32.totalorder %v5397, 4
        %v5420 = vsel %vm5416, %v5400, %v5403
        %v5421 = vsel %vm5419, %v5409, 2102212464
        %v5422 = vsel %vm5418, %v5406, %v5421
        %v5423 = vsel %vm5417, %v5420, %v5422
        %v5424 = vsel %vm5416, %v5403, %v5406
        %v5425 = vsel %vm5419, %v5412, 920167782
        %v5426 = vsel %vm5418, %v5409, %v5425
        %v5427 = vsel %vm5417, %v5424, %v5426
        %v5428 = vsel %vm5416, %v5406, %v5409
        %v5429 = vsel %vm5419, %v5415, 1326507024
        %v5430 = vsel %vm5418, %v5412, %v5429
        %v5431 = vsel %vm5417, %v5428, %v5430
        %v5432 = vshll.u32 %v5392, 8
        %v5433 = vmul.u32.u64.compose %v5432, %v5431
        %v5434 = vextract.low.u32 %v5433
        %v5435 = vextract.high.u32 %v5433
        %v5436 = vmul.u32.u64.compose %v5432, %v5427
        %v5437 = vextract.low.u32 %v5436
        %v5438 = vextract.high.u32 %v5436
        %v5439 = vmul.u32 %v5432, %v5423
        %v5440 = vadd.s32 %v5435, %v5437
        %vm5441 = vc.u32 %v5435, %v5437
        %v5442 = vadd.s32 %v5438, 1
        %v5443 = vsel %vm5441, %v5442, %v5438
        %v5444 = vadd.s32 %v5439, %v5443
        %v5445 = vadd.s32 %v5444, 536870912
        %v5446 = vshrl.u32 %v5445, 30
        %v5447 = vshll.u32 %v5446, 30
        %v5448 = vsub.s32 %v5444, %v5447
        %vm5449 = vcmp.lt.s32.totalorder %v5448, 0
        %v5450 = vsub.s32 0, %v5448
        %v5451 = vsel %vm5449, %v5450, %v5448
        %v5452 = vclz %v5451
        %v5453 = vsub.s32 %v5452, 2
        %vm5454 = vcmp.gt.s32.totalorder 0, %v5453
        %v5455 = vsel %vm5454, 0, %v5453
        %v5456 = vsub.s32 32, %v5455
        %v5457 = vshll.u32 %v5448, %v5455
        %v5458 = vshrl.u32 %v5440, %v5456
        %v5459 = vor.u32 %v5457, %v5458
        %v5460 = vsub.s32 4294967266, %v5455
        %v5461 = vadd.s32 %v5460, 127
        %v5462 = vshll.u32 %v5461, 23
        %v5463 = vor.u32 4788187, %v5462
        %v5464 = vand.u32 2147483647, %v5463
        %v5466 = vcvt.s32.f32 %v5459
        %v5467 = vmul.f32 %v5466, %v5464
        %v5468 = vxor.u32 %v5467, 2147483648
        %v5469 = vsel %vm5386, %v5468, %v5467
        %v5470 = vsub.s32 4, %v5446
        %v5471 = vsel %vm5386, %v5470, %v5446
        %v5472 = vsel %vm5385, %v4956, %v5469
        %v5473 = vsel %vm5385, 0, %v5471
        %v5474 = vcosq.f32.pop %v5472
        %v5475 = vsinq.f32.pop %v5472
        %vm5476 = vweird.f32 %v4956
        %v5477 = vadd.s32 %v5473, 3
        %v5478 = vand.u32 %v5477, 3
        %vm5479 = vcmp.lt.s32.totalorder %v5478, 2
        %vm5480 = vcmp.eq.s32.totalorder %v5478, 0
        %v5481 = vxor.u32 %v5475, 2147483648
        %v5482 = vsel %vm5480, %v5474, %v5481
        %vm5483 = vcmp.eq.s32.totalorder %v5478, 2
        %v5484 = vxor.u32 %v5474, 2147483648
        %v5485 = vsel %vm5483, %v5484, %v5475
        %v5486 = vsel %vm5479, %v5482, %v5485
        %v5487 = vsel %vm5476, nan, %v5486
        %v5488 = vand.u32 2147483647, %v4957
        %vm5489 = vcmp.le.f32.partialorder %v5488, 0.7853982
        %vm5490 = vcmp.lt.s32.totalorder %v4957, 0
        %v5491 = vand.u32 %v4957, 2139095040
        %v5492 = vshrl.u32 %v5491, 23
        %v5493 = vsub.s32 %v5492, 127
        %v5494 = vand.u32 2147483647, %v4957
        %v5495 = vand.u32 %v5494, 8388607
        %v5496 = vor.u32 %v5495, 8388608
        %v5497 = vsub.s32 0, %v5496
        %v5498 = vadd.s32 %v5493, 1
        %vm5499 = vcmp.gt.s32.totalorder %v5498, 0
        %v5500 = vsel %vm5499, %v5498, 0
        %v5501 = vshrl.u32 %v5500, 5
        %v5502 = vand.u32 %v5500, 31
        %v5503 = vsub.s32 32, %v5502
        %v5504 = vshrl.u32 683565275, %v5503
        %v5505 = vshll.u32 683565275, %v5502
        %v5506 = vshrl.u32 2475754826, %v5503
        %v5507 = vor.u32 %v5505, %v5506
        %v5508 = vshll.u32 2475754826, %v5502
        %v5509 = vshrl.u32 2131351028, %v5503
        %v5510 = vor.u32 %v5508, %v5509
        %v5511 = vshll.u32 2131351028, %v5502
        %v5512 = vshrl.u32 2102212464, %v5503
        %v5513 = vor.u32 %v5511, %v5512
        %v5514 = vshll.u32 2102212464, %v5502
        %v5515 = vshrl.u32 920167782, %v5503
        %v5516 = vor.u32 %v5514, %v5515
        %v5517 = vshll.u32 920167782, %v5502
        %v5518 = vshrl.u32 1326507024, %v5503
        %v5519 = vor.u32 %v5517, %v5518
        %vm5520 = vcmp.lt.s32.totalorder %v5501, 1
        %vm5521 = vcmp.lt.s32.totalorder %v5501, 2
        %vm5522 = vcmp.lt.s32.totalorder %v5501, 3
        %vm5523 = vcmp.lt.s32.totalorder %v5501, 4
        %v5524 = vsel %vm5520, %v5504, %v5507
        %v5525 = vsel %vm5523, %v5513, 2102212464
        %v5526 = vsel %vm5522, %v5510, %v5525
        %v5527 = vsel %vm5521, %v5524, %v5526
        %v5528 = vsel %vm5520, %v5507, %v5510
        %v5529 = vsel %vm5523, %v5516, 920167782
        %v5530 = vsel %vm5522, %v5513, %v5529
        %v5531 = vsel %vm5521, %v5528, %v5530
        %v5532 = vsel %vm5520, %v5510, %v5513
        %v5533 = vsel %vm5523, %v5519, 1326507024
        %v5534 = vsel %vm5522, %v5516, %v5533
        %v5535 = vsel %vm5521, %v5532, %v5534
        %v5536 = vshll.u32 %v5496, 8
        %v5537 = vmul.u32.u64.compose %v5536, %v5535
        %v5538 = vextract.low.u32 %v5537
        %v5539 = vextract.high.u32 %v5537
        %v5540 = vmul.u32.u64.compose %v5536, %v5531
        %v5541 = vextract.low.u32 %v5540
        %v5542 = vextract.high.u32 %v5540
        %v5543 = vmul.u32 %v5536, %v5527
        %v5544 = vadd.s32 %v5539, %v5541
        %vm5545 = vc.u32 %v5539, %v5541
        %v5546 = vadd.s32 %v5542, 1
        %v5547 = vsel %vm5545, %v5546, %v5542
        %v5548 = vadd.s32 %v5543, %v5547
        %v5549 = vadd.s32 %v5548, 536870912
        %v5550 = vshrl.u32 %v5549, 30
        %v5551 = vshll.u32 %v5550, 30
        %v5552 = vsub.s32 %v5548, %v5551
        %vm5553 = vcmp.lt.s32.totalorder %v5552, 0
        %v5554 = vsub.s32 0, %v5552
        %v5555 = vsel %vm5553, %v5554, %v5552
        %v5556 = vclz %v5555
        %v5557 = vsub.s32 %v5556, 2
        %vm5558 = vcmp.gt.s32.totalorder 0, %v5557
        %v5559 = vsel %vm5558, 0, %v5557
        %v5560 = vsub.s32 32, %v5559
        %v5561 = vshll.u32 %v5552, %v5559
        %v5562 = vshrl.u32 %v5544, %v5560
        %v5563 = vor.u32 %v5561, %v5562
        %v5564 = vsub.s32 4294967266, %v5559
        %v5565 = vadd.s32 %v5564, 127
        %v5566 = vshll.u32 %v5565, 23
        %v5567 = vor.u32 4788187, %v5566
        %v5568 = vand.u32 2147483647, %v5567
        %v5570 = vcvt.s32.f32 %v5563
        %v5571 = vmul.f32 %v5570, %v5568
        %v5572 = vxor.u32 %v5571, 2147483648
        %v5573 = vsel %vm5490, %v5572, %v5571
        %v5574 = vsub.s32 4, %v5550
        %v5575 = vsel %vm5490, %v5574, %v5550
        %v5576 = vsel %vm5489, %v4957, %v5573
        %v5577 = vsel %vm5489, 0, %v5575
        %v5578 = vcosq.f32.pop %v5576
        %v5579 = vsinq.f32.pop %v5576
        %vm5580 = vweird.f32 %v4957
        %v5581 = vadd.s32 %v5577, 3
        %v5582 = vand.u32 %v5581, 3
        %vm5583 = vcmp.lt.s32.totalorder %v5582, 2
        %vm5584 = vcmp.eq.s32.totalorder %v5582, 0
        %v5585 = vxor.u32 %v5579, 2147483648
        %v5586 = vsel %vm5584, %v5578, %v5585
        %vm5587 = vcmp.eq.s32.totalorder %v5582, 2
        %v5588 = vxor.u32 %v5578, 2147483648
        %v5589 = vsel %vm5587, %v5588, %v5579
        %v5590 = vsel %vm5583, %v5586, %v5589
        %v5591 = vsel %vm5580, nan, %v5590
        %v5592 = vand.u32 2147483647, %v4958
        %vm5593 = vcmp.le.f32.partialorder %v5592, 0.7853982
        %vm5594 = vcmp.lt.s32.totalorder %v4958, 0
        %v5595 = vand.u32 %v4958, 2139095040
        %v5596 = vshrl.u32 %v5595, 23
        %v5597 = vsub.s32 %v5596, 127
        %v5598 = vand.u32 2147483647, %v4958
        %v5599 = vand.u32 %v5598, 8388607
        %v5600 = vor.u32 %v5599, 8388608
        %v5601 = vsub.s32 0, %v5600
        %v5602 = vadd.s32 %v5597, 1
        %vm5603 = vcmp.gt.s32.totalorder %v5602, 0
        %v5604 = vsel %vm5603, %v5602, 0
        %v5605 = vshrl.u32 %v5604, 5
        %v5606 = vand.u32 %v5604, 31
        %v5607 = vsub.s32 32, %v5606
        %v5608 = vshrl.u32 683565275, %v5607
        %v5609 = vshll.u32 683565275, %v5606
        %v5610 = vshrl.u32 2475754826, %v5607
        %v5611 = vor.u32 %v5609, %v5610
        %v5612 = vshll.u32 2475754826, %v5606
        %v5613 = vshrl.u32 2131351028, %v5607
        %v5614 = vor.u32 %v5612, %v5613
        %v5615 = vshll.u32 2131351028, %v5606
        %v5616 = vshrl.u32 2102212464, %v5607
        %v5617 = vor.u32 %v5615, %v5616
        %v5618 = vshll.u32 2102212464, %v5606
        %v5619 = vshrl.u32 920167782, %v5607
        %v5620 = vor.u32 %v5618, %v5619
        %v5621 = vshll.u32 920167782, %v5606
        %v5622 = vshrl.u32 1326507024, %v5607
        %v5623 = vor.u32 %v5621, %v5622
        %vm5624 = vcmp.lt.s32.totalorder %v5605, 1
        %vm5625 = vcmp.lt.s32.totalorder %v5605, 2
        %vm5626 = vcmp.lt.s32.totalorder %v5605, 3
        %vm5627 = vcmp.lt.s32.totalorder %v5605, 4
        %v5628 = vsel %vm5624, %v5608, %v5611
        %v5629 = vsel %vm5627, %v5617, 2102212464
        %v5630 = vsel %vm5626, %v5614, %v5629
        %v5631 = vsel %vm5625, %v5628, %v5630
        %v5632 = vsel %vm5624, %v5611, %v5614
        %v5633 = vsel %vm5627, %v5620, 920167782
        %v5634 = vsel %vm5626, %v5617, %v5633
        %v5635 = vsel %vm5625, %v5632, %v5634
        %v5636 = vsel %vm5624, %v5614, %v5617
        %v5637 = vsel %vm5627, %v5623, 1326507024
        %v5638 = vsel %vm5626, %v5620, %v5637
        %v5639 = vsel %vm5625, %v5636, %v5638
        %v5640 = vshll.u32 %v5600, 8
        %v5641 = vmul.u32.u64.compose %v5640, %v5639
        %v5642 = vextract.low.u32 %v5641
        %v5643 = vextract.high.u32 %v5641
        %v5644 = vmul.u32.u64.compose %v5640, %v5635
        %v5645 = vextract.low.u32 %v5644
        %v5646 = vextract.high.u32 %v5644
        %v5647 = vmul.u32 %v5640, %v5631
        %v5648 = vadd.s32 %v5643, %v5645
        %vm5649 = vc.u32 %v5643, %v5645
        %v5650 = vadd.s32 %v5646, 1
        %v5651 = vsel %vm5649, %v5650, %v5646
        %v5652 = vadd.s32 %v5647, %v5651
        %v5653 = vadd.s32 %v5652, 536870912
        %v5654 = vshrl.u32 %v5653, 30
        %v5655 = vshll.u32 %v5654, 30
        %v5656 = vsub.s32 %v5652, %v5655
        %vm5657 = vcmp.lt.s32.totalorder %v5656, 0
        %v5658 = vsub.s32 0, %v5656
        %v5659 = vsel %vm5657, %v5658, %v5656
        %v5660 = vclz %v5659
        %v5661 = vsub.s32 %v5660, 2
        %vm5662 = vcmp.gt.s32.totalorder 0, %v5661
        %v5663 = vsel %vm5662, 0, %v5661
        %v5664 = vsub.s32 32, %v5663
        %v5665 = vshll.u32 %v5656, %v5663
        %v5666 = vshrl.u32 %v5648, %v5664
        %v5667 = vor.u32 %v5665, %v5666
        %v5668 = vsub.s32 4294967266, %v5663
        %v5669 = vadd.s32 %v5668, 127
        %v5670 = vshll.u32 %v5669, 23
        %v5671 = vor.u32 4788187, %v5670
        %v5672 = vand.u32 2147483647, %v5671
        %v5674 = vcvt.s32.f32 %v5667
        %v5675 = vmul.f32 %v5674, %v5672
        %v5676 = vxor.u32 %v5675, 2147483648
        %v5677 = vsel %vm5594, %v5676, %v5675
        %v5678 = vsub.s32 4, %v5654
        %v5679 = vsel %vm5594, %v5678, %v5654
        %v5680 = vsel %vm5593, %v4958, %v5677
        %v5681 = vsel %vm5593, 0, %v5679
        %v5682 = vcosq.f32.pop %v5680
        %v5683 = vsinq.f32.pop %v5680
        %vm5684 = vweird.f32 %v4958
        %v5685 = vadd.s32 %v5681, 3
        %v5686 = vand.u32 %v5685, 3
        %vm5687 = vcmp.lt.s32.totalorder %v5686, 2
        %vm5688 = vcmp.eq.s32.totalorder %v5686, 0
        %v5689 = vxor.u32 %v5683, 2147483648
        %v5690 = vsel %vm5688, %v5682, %v5689
        %vm5691 = vcmp.eq.s32.totalorder %v5686, 2
        %v5692 = vxor.u32 %v5682, 2147483648
        %v5693 = vsel %vm5691, %v5692, %v5683
        %v5694 = vsel %vm5687, %v5690, %v5693
        %v5695 = vsel %vm5684, nan, %v5694
        %v5696 = vand.u32 2147483647, %v4959
        %vm5697 = vcmp.le.f32.partialorder %v5696, 0.7853982
        %vm5698 = vcmp.lt.s32.totalorder %v4959, 0
        %v5699 = vand.u32 %v4959, 2139095040
        %v5700 = vshrl.u32 %v5699, 23
        %v5701 = vsub.s32 %v5700, 127
        %v5702 = vand.u32 2147483647, %v4959
        %v5703 = vand.u32 %v5702, 8388607
        %v5704 = vor.u32 %v5703, 8388608
        %v5705 = vsub.s32 0, %v5704
        %v5706 = vadd.s32 %v5701, 1
        %vm5707 = vcmp.gt.s32.totalorder %v5706, 0
        %v5708 = vsel %vm5707, %v5706, 0
        %v5709 = vshrl.u32 %v5708, 5
        %v5710 = vand.u32 %v5708, 31
        %v5711 = vsub.s32 32, %v5710
        %v5712 = vshrl.u32 683565275, %v5711
        %v5713 = vshll.u32 683565275, %v5710
        %v5714 = vshrl.u32 2475754826, %v5711
        %v5715 = vor.u32 %v5713, %v5714
        %v5716 = vshll.u32 2475754826, %v5710
        %v5717 = vshrl.u32 2131351028, %v5711
        %v5718 = vor.u32 %v5716, %v5717
        %v5719 = vshll.u32 2131351028, %v5710
        %v5720 = vshrl.u32 2102212464, %v5711
        %v5721 = vor.u32 %v5719, %v5720
        %v5722 = vshll.u32 2102212464, %v5710
        %v5723 = vshrl.u32 920167782, %v5711
        %v5724 = vor.u32 %v5722, %v5723
        %v5725 = vshll.u32 920167782, %v5710
        %v5726 = vshrl.u32 1326507024, %v5711
        %v5727 = vor.u32 %v5725, %v5726
        %vm5728 = vcmp.lt.s32.totalorder %v5709, 1
        %vm5729 = vcmp.lt.s32.totalorder %v5709, 2
        %vm5730 = vcmp.lt.s32.totalorder %v5709, 3
        %vm5731 = vcmp.lt.s32.totalorder %v5709, 4
        %v5732 = vsel %vm5728, %v5712, %v5715
        %v5733 = vsel %vm5731, %v5721, 2102212464
        %v5734 = vsel %vm5730, %v5718, %v5733
        %v5735 = vsel %vm5729, %v5732, %v5734
        %v5736 = vsel %vm5728, %v5715, %v5718
        %v5737 = vsel %vm5731, %v5724, 920167782
        %v5738 = vsel %vm5730, %v5721, %v5737
        %v5739 = vsel %vm5729, %v5736, %v5738
        %v5740 = vsel %vm5728, %v5718, %v5721
        %v5741 = vsel %vm5731, %v5727, 1326507024
        %v5742 = vsel %vm5730, %v5724, %v5741
        %v5743 = vsel %vm5729, %v5740, %v5742
        %v5744 = vshll.u32 %v5704, 8
        %v5745 = vmul.u32.u64.compose %v5744, %v5743
        %v5746 = vextract.low.u32 %v5745
        %v5747 = vextract.high.u32 %v5745
        %v5748 = vmul.u32.u64.compose %v5744, %v5739
        %v5749 = vextract.low.u32 %v5748
        %v5750 = vextract.high.u32 %v5748
        %v5751 = vmul.u32 %v5744, %v5735
        %v5752 = vadd.s32 %v5747, %v5749
        %vm5753 = vc.u32 %v5747, %v5749
        %v5754 = vadd.s32 %v5750, 1
        %v5755 = vsel %vm5753, %v5754, %v5750
        %v5756 = vadd.s32 %v5751, %v5755
        %v5757 = vadd.s32 %v5756, 536870912
        %v5758 = vshrl.u32 %v5757, 30
        %v5759 = vshll.u32 %v5758, 30
        %v5760 = vsub.s32 %v5756, %v5759
        %vm5761 = vcmp.lt.s32.totalorder %v5760, 0
        %v5762 = vsub.s32 0, %v5760
        %v5763 = vsel %vm5761, %v5762, %v5760
        %v5764 = vclz %v5763
        %v5765 = vsub.s32 %v5764, 2
        %vm5766 = vcmp.gt.s32.totalorder 0, %v5765
        %v5767 = vsel %vm5766, 0, %v5765
        %v5768 = vsub.s32 32, %v5767
        %v5769 = vshll.u32 %v5760, %v5767
        %v5770 = vshrl.u32 %v5752, %v5768
        %v5771 = vor.u32 %v5769, %v5770
        %v5772 = vsub.s32 4294967266, %v5767
        %v5773 = vadd.s32 %v5772, 127
        %v5774 = vshll.u32 %v5773, 23
        %v5775 = vor.u32 4788187, %v5774
        %v5776 = vand.u32 2147483647, %v5775
        %v5778 = vcvt.s32.f32 %v5771
        %v5779 = vmul.f32 %v5778, %v5776
        %v5780 = vxor.u32 %v5779, 2147483648
        %v5781 = vsel %vm5698, %v5780, %v5779
        %v5782 = vsub.s32 4, %v5758
        %v5783 = vsel %vm5698, %v5782, %v5758
        %v5784 = vsel %vm5697, %v4959, %v5781
        %v5785 = vsel %vm5697, 0, %v5783
        %v5786 = vcosq.f32.pop %v5784
        %v5787 = vsinq.f32.pop %v5784
        %vm5788 = vweird.f32 %v4959
        %v5789 = vadd.s32 %v5785, 3
        %v5790 = vand.u32 %v5789, 3
        %vm5791 = vcmp.lt.s32.totalorder %v5790, 2
        %vm5792 = vcmp.eq.s32.totalorder %v5790, 0
        %v5793 = vxor.u32 %v5787, 2147483648
        %v5794 = vsel %vm5792, %v5786, %v5793
        %vm5795 = vcmp.eq.s32.totalorder %v5790, 2
        %v5796 = vxor.u32 %v5786, 2147483648
        %v5797 = vsel %vm5795, %v5796, %v5787
        %v5798 = vsel %vm5791, %v5794, %v5797
        %v5799 = vsel %vm5788, nan, %v5798
        %v5800 = vand.u32 2147483647, %v4960
        %vm5801 = vcmp.le.f32.partialorder %v5800, 0.7853982
        %vm5802 = vcmp.lt.s32.totalorder %v4960, 0
        %v5803 = vand.u32 %v4960, 2139095040
        %v5804 = vshrl.u32 %v5803, 23
        %v5805 = vsub.s32 %v5804, 127
        %v5806 = vand.u32 2147483647, %v4960
        %v5807 = vand.u32 %v5806, 8388607
        %v5808 = vor.u32 %v5807, 8388608
        %v5809 = vsub.s32 0, %v5808
        %v5810 = vadd.s32 %v5805, 1
        %vm5811 = vcmp.gt.s32.totalorder %v5810, 0
        %v5812 = vsel %vm5811, %v5810, 0
        %v5813 = vshrl.u32 %v5812, 5
        %v5814 = vand.u32 %v5812, 31
        %v5815 = vsub.s32 32, %v5814
        %v5816 = vshrl.u32 683565275, %v5815
        %v5817 = vshll.u32 683565275, %v5814
        %v5818 = vshrl.u32 2475754826, %v5815
        %v5819 = vor.u32 %v5817, %v5818
        %v5820 = vshll.u32 2475754826, %v5814
        %v5821 = vshrl.u32 2131351028, %v5815
        %v5822 = vor.u32 %v5820, %v5821
        %v5823 = vshll.u32 2131351028, %v5814
        %v5824 = vshrl.u32 2102212464, %v5815
        %v5825 = vor.u32 %v5823, %v5824
        %v5826 = vshll.u32 2102212464, %v5814
        %v5827 = vshrl.u32 920167782, %v5815
        %v5828 = vor.u32 %v5826, %v5827
        %v5829 = vshll.u32 920167782, %v5814
        %v5830 = vshrl.u32 1326507024, %v5815
        %v5831 = vor.u32 %v5829, %v5830
        %vm5832 = vcmp.lt.s32.totalorder %v5813, 1
        %vm5833 = vcmp.lt.s32.totalorder %v5813, 2
        %vm5834 = vcmp.lt.s32.totalorder %v5813, 3
        %vm5835 = vcmp.lt.s32.totalorder %v5813, 4
        %v5836 = vsel %vm5832, %v5816, %v5819
        %v5837 = vsel %vm5835, %v5825, 2102212464
        %v5838 = vsel %vm5834, %v5822, %v5837
        %v5839 = vsel %vm5833, %v5836, %v5838
        %v5840 = vsel %vm5832, %v5819, %v5822
        %v5841 = vsel %vm5835, %v5828, 920167782
        %v5842 = vsel %vm5834, %v5825, %v5841
        %v5843 = vsel %vm5833, %v5840, %v5842
        %v5844 = vsel %vm5832, %v5822, %v5825
        %v5845 = vsel %vm5835, %v5831, 1326507024
        %v5846 = vsel %vm5834, %v5828, %v5845
        %v5847 = vsel %vm5833, %v5844, %v5846
        %v5848 = vshll.u32 %v5808, 8
        %v5849 = vmul.u32.u64.compose %v5848, %v5847
        %v5850 = vextract.low.u32 %v5849
        %v5851 = vextract.high.u32 %v5849
        %v5852 = vmul.u32.u64.compose %v5848, %v5843
        %v5853 = vextract.low.u32 %v5852
        %v5854 = vextract.high.u32 %v5852
        %v5855 = vmul.u32 %v5848, %v5839
        %v5856 = vadd.s32 %v5851, %v5853
        %vm5857 = vc.u32 %v5851, %v5853
        %v5858 = vadd.s32 %v5854, 1
        %v5859 = vsel %vm5857, %v5858, %v5854
        %v5860 = vadd.s32 %v5855, %v5859
        %v5861 = vadd.s32 %v5860, 536870912
        %v5862 = vshrl.u32 %v5861, 30
        %v5863 = vshll.u32 %v5862, 30
        %v5864 = vsub.s32 %v5860, %v5863
        %vm5865 = vcmp.lt.s32.totalorder %v5864, 0
        %v5866 = vsub.s32 0, %v5864
        %v5867 = vsel %vm5865, %v5866, %v5864
        %v5868 = vclz %v5867
        %v5869 = vsub.s32 %v5868, 2
        %vm5870 = vcmp.gt.s32.totalorder 0, %v5869
        %v5871 = vsel %vm5870, 0, %v5869
        %v5872 = vsub.s32 32, %v5871
        %v5873 = vshll.u32 %v5864, %v5871
        %v5874 = vshrl.u32 %v5856, %v5872
        %v5875 = vor.u32 %v5873, %v5874
        %v5876 = vsub.s32 4294967266, %v5871
        %v5877 = vadd.s32 %v5876, 127
        %v5878 = vshll.u32 %v5877, 23
        %v5879 = vor.u32 4788187, %v5878
        %v5880 = vand.u32 2147483647, %v5879
        %v5882 = vcvt.s32.f32 %v5875
        %v5883 = vmul.f32 %v5882, %v5880
        %v5884 = vxor.u32 %v5883, 2147483648
        %v5885 = vsel %vm5802, %v5884, %v5883
        %v5886 = vsub.s32 4, %v5862
        %v5887 = vsel %vm5802, %v5886, %v5862
        %v5888 = vsel %vm5801, %v4960, %v5885
        %v5889 = vsel %vm5801, 0, %v5887
        %v5890 = vcosq.f32.pop %v5888
        %v5891 = vsinq.f32.pop %v5888
        %vm5892 = vweird.f32 %v4960
        %v5893 = vadd.s32 %v5889, 3
        %v5894 = vand.u32 %v5893, 3
        %vm5895 = vcmp.lt.s32.totalorder %v5894, 2
        %vm5896 = vcmp.eq.s32.totalorder %v5894, 0
        %v5897 = vxor.u32 %v5891, 2147483648
        %v5898 = vsel %vm5896, %v5890, %v5897
        %vm5899 = vcmp.eq.s32.totalorder %v5894, 2
        %v5900 = vxor.u32 %v5890, 2147483648
        %v5901 = vsel %vm5899, %v5900, %v5891
        %v5902 = vsel %vm5895, %v5898, %v5901
        %v5903 = vsel %vm5892, nan, %v5902
        %v5904 = vand.u32 2147483647, %v4961
        %vm5905 = vcmp.le.f32.partialorder %v5904, 0.7853982
        %vm5906 = vcmp.lt.s32.totalorder %v4961, 0
        %v5907 = vand.u32 %v4961, 2139095040
        %v5908 = vshrl.u32 %v5907, 23
        %v5909 = vsub.s32 %v5908, 127
        %v5910 = vand.u32 2147483647, %v4961
        %v5911 = vand.u32 %v5910, 8388607
        %v5912 = vor.u32 %v5911, 8388608
        %v5913 = vsub.s32 0, %v5912
        %v5914 = vadd.s32 %v5909, 1
        %vm5915 = vcmp.gt.s32.totalorder %v5914, 0
        %v5916 = vsel %vm5915, %v5914, 0
        %v5917 = vshrl.u32 %v5916, 5
        %v5918 = vand.u32 %v5916, 31
        %v5919 = vsub.s32 32, %v5918
        %v5920 = vshrl.u32 683565275, %v5919
        %v5921 = vshll.u32 683565275, %v5918
        %v5922 = vshrl.u32 2475754826, %v5919
        %v5923 = vor.u32 %v5921, %v5922
        %v5924 = vshll.u32 2475754826, %v5918
        %v5925 = vshrl.u32 2131351028, %v5919
        %v5926 = vor.u32 %v5924, %v5925
        %v5927 = vshll.u32 2131351028, %v5918
        %v5928 = vshrl.u32 2102212464, %v5919
        %v5929 = vor.u32 %v5927, %v5928
        %v5930 = vshll.u32 2102212464, %v5918
        %v5931 = vshrl.u32 920167782, %v5919
        %v5932 = vor.u32 %v5930, %v5931
        %v5933 = vshll.u32 920167782, %v5918
        %v5934 = vshrl.u32 1326507024, %v5919
        %v5935 = vor.u32 %v5933, %v5934
        %vm5936 = vcmp.lt.s32.totalorder %v5917, 1
        %vm5937 = vcmp.lt.s32.totalorder %v5917, 2
        %vm5938 = vcmp.lt.s32.totalorder %v5917, 3
        %vm5939 = vcmp.lt.s32.totalorder %v5917, 4
        %v5940 = vsel %vm5936, %v5920, %v5923
        %v5941 = vsel %vm5939, %v5929, 2102212464
        %v5942 = vsel %vm5938, %v5926, %v5941
        %v5943 = vsel %vm5937, %v5940, %v5942
        %v5944 = vsel %vm5936, %v5923, %v5926
        %v5945 = vsel %vm5939, %v5932, 920167782
        %v5946 = vsel %vm5938, %v5929, %v5945
        %v5947 = vsel %vm5937, %v5944, %v5946
        %v5948 = vsel %vm5936, %v5926, %v5929
        %v5949 = vsel %vm5939, %v5935, 1326507024
        %v5950 = vsel %vm5938, %v5932, %v5949
        %v5951 = vsel %vm5937, %v5948, %v5950
        %v5952 = vshll.u32 %v5912, 8
        %v5953 = vmul.u32.u64.compose %v5952, %v5951
        %v5954 = vextract.low.u32 %v5953
        %v5955 = vextract.high.u32 %v5953
        %v5956 = vmul.u32.u64.compose %v5952, %v5947
        %v5957 = vextract.low.u32 %v5956
        %v5958 = vextract.high.u32 %v5956
        %v5959 = vmul.u32 %v5952, %v5943
        %v5960 = vadd.s32 %v5955, %v5957
        %vm5961 = vc.u32 %v5955, %v5957
        %v5962 = vadd.s32 %v5958, 1
        %v5963 = vsel %vm5961, %v5962, %v5958
        %v5964 = vadd.s32 %v5959, %v5963
        %v5965 = vadd.s32 %v5964, 536870912
        %v5966 = vshrl.u32 %v5965, 30
        %v5967 = vshll.u32 %v5966, 30
        %v5968 = vsub.s32 %v5964, %v5967
        %vm5969 = vcmp.lt.s32.totalorder %v5968, 0
        %v5970 = vsub.s32 0, %v5968
        %v5971 = vsel %vm5969, %v5970, %v5968
        %v5972 = vclz %v5971
        %v5973 = vsub.s32 %v5972, 2
        %vm5974 = vcmp.gt.s32.totalorder 0, %v5973
        %v5975 = vsel %vm5974, 0, %v5973
        %v5976 = vsub.s32 32, %v5975
        %v5977 = vshll.u32 %v5968, %v5975
        %v5978 = vshrl.u32 %v5960, %v5976
        %v5979 = vor.u32 %v5977, %v5978
        %v5980 = vsub.s32 4294967266, %v5975
        %v5981 = vadd.s32 %v5980, 127
        %v5982 = vshll.u32 %v5981, 23
        %v5983 = vor.u32 4788187, %v5982
        %v5984 = vand.u32 2147483647, %v5983
        %v5986 = vcvt.s32.f32 %v5979
        %v5987 = vmul.f32 %v5986, %v5984
        %v5988 = vxor.u32 %v5987, 2147483648
        %v5989 = vsel %vm5906, %v5988, %v5987
        %v5990 = vsub.s32 4, %v5966
        %v5991 = vsel %vm5906, %v5990, %v5966
        %v5992 = vsel %vm5905, %v4961, %v5989
        %v5993 = vsel %vm5905, 0, %v5991
        %v5994 = vcosq.f32.pop %v5992
        %v5995 = vsinq.f32.pop %v5992
        %vm5996 = vweird.f32 %v4961
        %v5997 = vadd.s32 %v5993, 3
        %v5998 = vand.u32 %v5997, 3
        %vm5999 = vcmp.lt.s32.totalorder %v5998, 2
        %vm6000 = vcmp.eq.s32.totalorder %v5998, 0
        %v6001 = vxor.u32 %v5995, 2147483648
        %v6002 = vsel %vm6000, %v5994, %v6001
        %vm6003 = vcmp.eq.s32.totalorder %v5998, 2
        %v6004 = vxor.u32 %v5994, 2147483648
        %v6005 = vsel %vm6003, %v6004, %v5995
        %v6006 = vsel %vm5999, %v6002, %v6005
        %v6007 = vsel %vm5996, nan, %v6006
        %v6008 = vand.u32 2147483647, %v4962
        %vm6009 = vcmp.le.f32.partialorder %v6008, 0.7853982
        %vm6010 = vcmp.lt.s32.totalorder %v4962, 0
        %v6011 = vand.u32 %v4962, 2139095040
        %v6012 = vshrl.u32 %v6011, 23
        %v6013 = vsub.s32 %v6012, 127
        %v6014 = vand.u32 2147483647, %v4962
        %v6015 = vand.u32 %v6014, 8388607
        %v6016 = vor.u32 %v6015, 8388608
        %v6017 = vsub.s32 0, %v6016
        %v6018 = vadd.s32 %v6013, 1
        %vm6019 = vcmp.gt.s32.totalorder %v6018, 0
        %v6020 = vsel %vm6019, %v6018, 0
        %v6021 = vshrl.u32 %v6020, 5
        %v6022 = vand.u32 %v6020, 31
        %v6023 = vsub.s32 32, %v6022
        %v6024 = vshrl.u32 683565275, %v6023
        %v6025 = vshll.u32 683565275, %v6022
        %v6026 = vshrl.u32 2475754826, %v6023
        %v6027 = vor.u32 %v6025, %v6026
        %v6028 = vshll.u32 2475754826, %v6022
        %v6029 = vshrl.u32 2131351028, %v6023
        %v6030 = vor.u32 %v6028, %v6029
        %v6031 = vshll.u32 2131351028, %v6022
        %v6032 = vshrl.u32 2102212464, %v6023
        %v6033 = vor.u32 %v6031, %v6032
        %v6034 = vshll.u32 2102212464, %v6022
        %v6035 = vshrl.u32 920167782, %v6023
        %v6036 = vor.u32 %v6034, %v6035
        %v6037 = vshll.u32 920167782, %v6022
        %v6038 = vshrl.u32 1326507024, %v6023
        %v6039 = vor.u32 %v6037, %v6038
        %vm6040 = vcmp.lt.s32.totalorder %v6021, 1
        %vm6041 = vcmp.lt.s32.totalorder %v6021, 2
        %vm6042 = vcmp.lt.s32.totalorder %v6021, 3
        %vm6043 = vcmp.lt.s32.totalorder %v6021, 4
        %v6044 = vsel %vm6040, %v6024, %v6027
        %v6045 = vsel %vm6043, %v6033, 2102212464
        %v6046 = vsel %vm6042, %v6030, %v6045
        %v6047 = vsel %vm6041, %v6044, %v6046
        %v6048 = vsel %vm6040, %v6027, %v6030
        %v6049 = vsel %vm6043, %v6036, 920167782
        %v6050 = vsel %vm6042, %v6033, %v6049
        %v6051 = vsel %vm6041, %v6048, %v6050
        %v6052 = vsel %vm6040, %v6030, %v6033
        %v6053 = vsel %vm6043, %v6039, 1326507024
        %v6054 = vsel %vm6042, %v6036, %v6053
        %v6055 = vsel %vm6041, %v6052, %v6054
        %v6056 = vshll.u32 %v6016, 8
        %v6057 = vmul.u32.u64.compose %v6056, %v6055
        %v6058 = vextract.low.u32 %v6057
        %v6059 = vextract.high.u32 %v6057
        %v6060 = vmul.u32.u64.compose %v6056, %v6051
        %v6061 = vextract.low.u32 %v6060
        %v6062 = vextract.high.u32 %v6060
        %v6063 = vmul.u32 %v6056, %v6047
        %v6064 = vadd.s32 %v6059, %v6061
        %vm6065 = vc.u32 %v6059, %v6061
        %v6066 = vadd.s32 %v6062, 1
        %v6067 = vsel %vm6065, %v6066, %v6062
        %v6068 = vadd.s32 %v6063, %v6067
        %v6069 = vadd.s32 %v6068, 536870912
        %v6070 = vshrl.u32 %v6069, 30
        %v6071 = vshll.u32 %v6070, 30
        %v6072 = vsub.s32 %v6068, %v6071
        %vm6073 = vcmp.lt.s32.totalorder %v6072, 0
        %v6074 = vsub.s32 0, %v6072
        %v6075 = vsel %vm6073, %v6074, %v6072
        %v6076 = vclz %v6075
        %v6077 = vsub.s32 %v6076, 2
        %vm6078 = vcmp.gt.s32.totalorder 0, %v6077
        %v6079 = vsel %vm6078, 0, %v6077
        %v6080 = vsub.s32 32, %v6079
        %v6081 = vshll.u32 %v6072, %v6079
        %v6082 = vshrl.u32 %v6064, %v6080
        %v6083 = vor.u32 %v6081, %v6082
        %v6084 = vsub.s32 4294967266, %v6079
        %v6085 = vadd.s32 %v6084, 127
        %v6086 = vshll.u32 %v6085, 23
        %v6087 = vor.u32 4788187, %v6086
        %v6088 = vand.u32 2147483647, %v6087
        %v6090 = vcvt.s32.f32 %v6083
        %v6091 = vmul.f32 %v6090, %v6088
        %v6092 = vxor.u32 %v6091, 2147483648
        %v6093 = vsel %vm6010, %v6092, %v6091
        %v6094 = vsub.s32 4, %v6070
        %v6095 = vsel %vm6010, %v6094, %v6070
        %v6096 = vsel %vm6009, %v4962, %v6093
        %v6097 = vsel %vm6009, 0, %v6095
        %v6098 = vcosq.f32.pop %v6096
        %v6099 = vsinq.f32.pop %v6096
        %vm6100 = vweird.f32 %v4962
        %v6101 = vadd.s32 %v6097, 3
        %v6102 = vand.u32 %v6101, 3
        %vm6103 = vcmp.lt.s32.totalorder %v6102, 2
        %vm6104 = vcmp.eq.s32.totalorder %v6102, 0
        %v6105 = vxor.u32 %v6099, 2147483648
        %v6106 = vsel %vm6104, %v6098, %v6105
        %vm6107 = vcmp.eq.s32.totalorder %v6102, 2
        %v6108 = vxor.u32 %v6098, 2147483648
        %v6109 = vsel %vm6107, %v6108, %v6099
        %v6110 = vsel %vm6103, %v6106, %v6109
        %v6111 = vsel %vm6100, nan, %v6110
        %v6112 = vand.u32 2147483647, %v4963
        %vm6113 = vcmp.le.f32.partialorder %v6112, 0.7853982
        %vm6114 = vcmp.lt.s32.totalorder %v4963, 0
        %v6115 = vand.u32 %v4963, 2139095040
        %v6116 = vshrl.u32 %v6115, 23
        %v6117 = vsub.s32 %v6116, 127
        %v6118 = vand.u32 2147483647, %v4963
        %v6119 = vand.u32 %v6118, 8388607
        %v6120 = vor.u32 %v6119, 8388608
        %v6121 = vsub.s32 0, %v6120
        %v6122 = vadd.s32 %v6117, 1
        %vm6123 = vcmp.gt.s32.totalorder %v6122, 0
        %v6124 = vsel %vm6123, %v6122, 0
        %v6125 = vshrl.u32 %v6124, 5
        %v6126 = vand.u32 %v6124, 31
        %v6127 = vsub.s32 32, %v6126
        %v6128 = vshrl.u32 683565275, %v6127
        %v6129 = vshll.u32 683565275, %v6126
        %v6130 = vshrl.u32 2475754826, %v6127
        %v6131 = vor.u32 %v6129, %v6130
        %v6132 = vshll.u32 2475754826, %v6126
        %v6133 = vshrl.u32 2131351028, %v6127
        %v6134 = vor.u32 %v6132, %v6133
        %v6135 = vshll.u32 2131351028, %v6126
        %v6136 = vshrl.u32 2102212464, %v6127
        %v6137 = vor.u32 %v6135, %v6136
        %v6138 = vshll.u32 2102212464, %v6126
        %v6139 = vshrl.u32 920167782, %v6127
        %v6140 = vor.u32 %v6138, %v6139
        %v6141 = vshll.u32 920167782, %v6126
        %v6142 = vshrl.u32 1326507024, %v6127
        %v6143 = vor.u32 %v6141, %v6142
        %vm6144 = vcmp.lt.s32.totalorder %v6125, 1
        %vm6145 = vcmp.lt.s32.totalorder %v6125, 2
        %vm6146 = vcmp.lt.s32.totalorder %v6125, 3
        %vm6147 = vcmp.lt.s32.totalorder %v6125, 4
        %v6148 = vsel %vm6144, %v6128, %v6131
        %v6149 = vsel %vm6147, %v6137, 2102212464
        %v6150 = vsel %vm6146, %v6134, %v6149
        %v6151 = vsel %vm6145, %v6148, %v6150
        %v6152 = vsel %vm6144, %v6131, %v6134
        %v6153 = vsel %vm6147, %v6140, 920167782
        %v6154 = vsel %vm6146, %v6137, %v6153
        %v6155 = vsel %vm6145, %v6152, %v6154
        %v6156 = vsel %vm6144, %v6134, %v6137
        %v6157 = vsel %vm6147, %v6143, 1326507024
        %v6158 = vsel %vm6146, %v6140, %v6157
        %v6159 = vsel %vm6145, %v6156, %v6158
        %v6160 = vshll.u32 %v6120, 8
        %v6161 = vmul.u32.u64.compose %v6160, %v6159
        %v6162 = vextract.low.u32 %v6161
        %v6163 = vextract.high.u32 %v6161
        %v6164 = vmul.u32.u64.compose %v6160, %v6155
        %v6165 = vextract.low.u32 %v6164
        %v6166 = vextract.high.u32 %v6164
        %v6167 = vmul.u32 %v6160, %v6151
        %v6168 = vadd.s32 %v6163, %v6165
        %vm6169 = vc.u32 %v6163, %v6165
        %v6170 = vadd.s32 %v6166, 1
        %v6171 = vsel %vm6169, %v6170, %v6166
        %v6172 = vadd.s32 %v6167, %v6171
        %v6173 = vadd.s32 %v6172, 536870912
        %v6174 = vshrl.u32 %v6173, 30
        %v6175 = vshll.u32 %v6174, 30
        %v6176 = vsub.s32 %v6172, %v6175
        %vm6177 = vcmp.lt.s32.totalorder %v6176, 0
        %v6178 = vsub.s32 0, %v6176
        %v6179 = vsel %vm6177, %v6178, %v6176
        %v6180 = vclz %v6179
        %v6181 = vsub.s32 %v6180, 2
        %vm6182 = vcmp.gt.s32.totalorder 0, %v6181
        %v6183 = vsel %vm6182, 0, %v6181
        %v6184 = vsub.s32 32, %v6183
        %v6185 = vshll.u32 %v6176, %v6183
        %v6186 = vshrl.u32 %v6168, %v6184
        %v6187 = vor.u32 %v6185, %v6186
        %v6188 = vsub.s32 4294967266, %v6183
        %v6189 = vadd.s32 %v6188, 127
        %v6190 = vshll.u32 %v6189, 23
        %v6191 = vor.u32 4788187, %v6190
        %v6192 = vand.u32 2147483647, %v6191
        %v6194 = vcvt.s32.f32 %v6187
        %v6195 = vmul.f32 %v6194, %v6192
        %v6196 = vxor.u32 %v6195, 2147483648
        %v6197 = vsel %vm6114, %v6196, %v6195
        %v6198 = vsub.s32 4, %v6174
        %v6199 = vsel %vm6114, %v6198, %v6174
        %v6200 = vsel %vm6113, %v4963, %v6197
        %v6201 = vsel %vm6113, 0, %v6199
        %v6202 = vcosq.f32.pop %v6200
        %v6203 = vsinq.f32.pop %v6200
        %vm6204 = vweird.f32 %v4963
        %v6205 = vadd.s32 %v6201, 3
        %v6206 = vand.u32 %v6205, 3
        %vm6207 = vcmp.lt.s32.totalorder %v6206, 2
        %vm6208 = vcmp.eq.s32.totalorder %v6206, 0
        %v6209 = vxor.u32 %v6203, 2147483648
        %v6210 = vsel %vm6208, %v6202, %v6209
        %vm6211 = vcmp.eq.s32.totalorder %v6206, 2
        %v6212 = vxor.u32 %v6202, 2147483648
        %v6213 = vsel %vm6211, %v6212, %v6203
        %v6214 = vsel %vm6207, %v6210, %v6213
        %v6215 = vsel %vm6204, nan, %v6214
        %v6216 = vand.u32 2147483647, %v4964
        %vm6217 = vcmp.le.f32.partialorder %v6216, 0.7853982
        %vm6218 = vcmp.lt.s32.totalorder %v4964, 0
        %v6219 = vand.u32 %v4964, 2139095040
        %v6220 = vshrl.u32 %v6219, 23
        %v6221 = vsub.s32 %v6220, 127
        %v6222 = vand.u32 2147483647, %v4964
        %v6223 = vand.u32 %v6222, 8388607
        %v6224 = vor.u32 %v6223, 8388608
        %v6225 = vsub.s32 0, %v6224
        %v6226 = vadd.s32 %v6221, 1
        %vm6227 = vcmp.gt.s32.totalorder %v6226, 0
        %v6228 = vsel %vm6227, %v6226, 0
        %v6229 = vshrl.u32 %v6228, 5
        %v6230 = vand.u32 %v6228, 31
        %v6231 = vsub.s32 32, %v6230
        %v6232 = vshrl.u32 683565275, %v6231
        %v6233 = vshll.u32 683565275, %v6230
        %v6234 = vshrl.u32 2475754826, %v6231
        %v6235 = vor.u32 %v6233, %v6234
        %v6236 = vshll.u32 2475754826, %v6230
        %v6237 = vshrl.u32 2131351028, %v6231
        %v6238 = vor.u32 %v6236, %v6237
        %v6239 = vshll.u32 2131351028, %v6230
        %v6240 = vshrl.u32 2102212464, %v6231
        %v6241 = vor.u32 %v6239, %v6240
        %v6242 = vshll.u32 2102212464, %v6230
        %v6243 = vshrl.u32 920167782, %v6231
        %v6244 = vor.u32 %v6242, %v6243
        %v6245 = vshll.u32 920167782, %v6230
        %v6246 = vshrl.u32 1326507024, %v6231
        %v6247 = vor.u32 %v6245, %v6246
        %vm6248 = vcmp.lt.s32.totalorder %v6229, 1
        %vm6249 = vcmp.lt.s32.totalorder %v6229, 2
        %vm6250 = vcmp.lt.s32.totalorder %v6229, 3
        %vm6251 = vcmp.lt.s32.totalorder %v6229, 4
        %v6252 = vsel %vm6248, %v6232, %v6235
        %v6253 = vsel %vm6251, %v6241, 2102212464
        %v6254 = vsel %vm6250, %v6238, %v6253
        %v6255 = vsel %vm6249, %v6252, %v6254
        %v6256 = vsel %vm6248, %v6235, %v6238
        %v6257 = vsel %vm6251, %v6244, 920167782
        %v6258 = vsel %vm6250, %v6241, %v6257
        %v6259 = vsel %vm6249, %v6256, %v6258
        %v6260 = vsel %vm6248, %v6238, %v6241
        %v6261 = vsel %vm6251, %v6247, 1326507024
        %v6262 = vsel %vm6250, %v6244, %v6261
        %v6263 = vsel %vm6249, %v6260, %v6262
        %v6264 = vshll.u32 %v6224, 8
        %v6265 = vmul.u32.u64.compose %v6264, %v6263
        %v6266 = vextract.low.u32 %v6265
        %v6267 = vextract.high.u32 %v6265
        %v6268 = vmul.u32.u64.compose %v6264, %v6259
        %v6269 = vextract.low.u32 %v6268
        %v6270 = vextract.high.u32 %v6268
        %v6271 = vmul.u32 %v6264, %v6255
        %v6272 = vadd.s32 %v6267, %v6269
        %vm6273 = vc.u32 %v6267, %v6269
        %v6274 = vadd.s32 %v6270, 1
        %v6275 = vsel %vm6273, %v6274, %v6270
        %v6276 = vadd.s32 %v6271, %v6275
        %v6277 = vadd.s32 %v6276, 536870912
        %v6278 = vshrl.u32 %v6277, 30
        %v6279 = vshll.u32 %v6278, 30
        %v6280 = vsub.s32 %v6276, %v6279
        %vm6281 = vcmp.lt.s32.totalorder %v6280, 0
        %v6282 = vsub.s32 0, %v6280
        %v6283 = vsel %vm6281, %v6282, %v6280
        %v6284 = vclz %v6283
        %v6285 = vsub.s32 %v6284, 2
        %vm6286 = vcmp.gt.s32.totalorder 0, %v6285
        %v6287 = vsel %vm6286, 0, %v6285
        %v6288 = vsub.s32 32, %v6287
        %v6289 = vshll.u32 %v6280, %v6287
        %v6290 = vshrl.u32 %v6272, %v6288
        %v6291 = vor.u32 %v6289, %v6290
        %v6292 = vsub.s32 4294967266, %v6287
        %v6293 = vadd.s32 %v6292, 127
        %v6294 = vshll.u32 %v6293, 23
        %v6295 = vor.u32 4788187, %v6294
        %v6296 = vand.u32 2147483647, %v6295
        %v6298 = vcvt.s32.f32 %v6291
        %v6299 = vmul.f32 %v6298, %v6296
        %v6300 = vxor.u32 %v6299, 2147483648
        %v6301 = vsel %vm6218, %v6300, %v6299
        %v6302 = vsub.s32 4, %v6278
        %v6303 = vsel %vm6218, %v6302, %v6278
        %v6304 = vsel %vm6217, %v4964, %v6301
        %v6305 = vsel %vm6217, 0, %v6303
        %v6306 = vcosq.f32.pop %v6304
        %v6307 = vsinq.f32.pop %v6304
        %vm6308 = vweird.f32 %v4964
        %v6309 = vadd.s32 %v6305, 3
        %v6310 = vand.u32 %v6309, 3
        %vm6311 = vcmp.lt.s32.totalorder %v6310, 2
        %vm6312 = vcmp.eq.s32.totalorder %v6310, 0
        %v6313 = vxor.u32 %v6307, 2147483648
        %v6314 = vsel %vm6312, %v6306, %v6313
        %vm6315 = vcmp.eq.s32.totalorder %v6310, 2
        %v6316 = vxor.u32 %v6306, 2147483648
        %v6317 = vsel %vm6315, %v6316, %v6307
        %v6318 = vsel %vm6311, %v6314, %v6317
        %v6319 = vsel %vm6308, nan, %v6318
        %v6320 = vand.u32 2147483647, %v4965
        %vm6321 = vcmp.le.f32.partialorder %v6320, 0.7853982
        %vm6322 = vcmp.lt.s32.totalorder %v4965, 0
        %v6323 = vand.u32 %v4965, 2139095040
        %v6324 = vshrl.u32 %v6323, 23
        %v6325 = vsub.s32 %v6324, 127
        %v6326 = vand.u32 2147483647, %v4965
        %v6327 = vand.u32 %v6326, 8388607
        %v6328 = vor.u32 %v6327, 8388608
        %v6329 = vsub.s32 0, %v6328
        %v6330 = vadd.s32 %v6325, 1
        %vm6331 = vcmp.gt.s32.totalorder %v6330, 0
        %v6332 = vsel %vm6331, %v6330, 0
        %v6333 = vshrl.u32 %v6332, 5
        %v6334 = vand.u32 %v6332, 31
        %v6335 = vsub.s32 32, %v6334
        %v6336 = vshrl.u32 683565275, %v6335
        %v6337 = vshll.u32 683565275, %v6334
        %v6338 = vshrl.u32 2475754826, %v6335
        %v6339 = vor.u32 %v6337, %v6338
        %v6340 = vshll.u32 2475754826, %v6334
        %v6341 = vshrl.u32 2131351028, %v6335
        %v6342 = vor.u32 %v6340, %v6341
        %v6343 = vshll.u32 2131351028, %v6334
        %v6344 = vshrl.u32 2102212464, %v6335
        %v6345 = vor.u32 %v6343, %v6344
        %v6346 = vshll.u32 2102212464, %v6334
        %v6347 = vshrl.u32 920167782, %v6335
        %v6348 = vor.u32 %v6346, %v6347
        %v6349 = vshll.u32 920167782, %v6334
        %v6350 = vshrl.u32 1326507024, %v6335
        %v6351 = vor.u32 %v6349, %v6350
        %vm6352 = vcmp.lt.s32.totalorder %v6333, 1
        %vm6353 = vcmp.lt.s32.totalorder %v6333, 2
        %vm6354 = vcmp.lt.s32.totalorder %v6333, 3
        %vm6355 = vcmp.lt.s32.totalorder %v6333, 4
        %v6356 = vsel %vm6352, %v6336, %v6339
        %v6357 = vsel %vm6355, %v6345, 2102212464
        %v6358 = vsel %vm6354, %v6342, %v6357
        %v6359 = vsel %vm6353, %v6356, %v6358
        %v6360 = vsel %vm6352, %v6339, %v6342
        %v6361 = vsel %vm6355, %v6348, 920167782
        %v6362 = vsel %vm6354, %v6345, %v6361
        %v6363 = vsel %vm6353, %v6360, %v6362
        %v6364 = vsel %vm6352, %v6342, %v6345
        %v6365 = vsel %vm6355, %v6351, 1326507024
        %v6366 = vsel %vm6354, %v6348, %v6365
        %v6367 = vsel %vm6353, %v6364, %v6366
        %v6368 = vshll.u32 %v6328, 8
        %v6369 = vmul.u32.u64.compose %v6368, %v6367
        %v6370 = vextract.low.u32 %v6369
        %v6371 = vextract.high.u32 %v6369
        %v6372 = vmul.u32.u64.compose %v6368, %v6363
        %v6373 = vextract.low.u32 %v6372
        %v6374 = vextract.high.u32 %v6372
        %v6375 = vmul.u32 %v6368, %v6359
        %v6376 = vadd.s32 %v6371, %v6373
        %vm6377 = vc.u32 %v6371, %v6373
        %v6378 = vadd.s32 %v6374, 1
        %v6379 = vsel %vm6377, %v6378, %v6374
        %v6380 = vadd.s32 %v6375, %v6379
        %v6381 = vadd.s32 %v6380, 536870912
        %v6382 = vshrl.u32 %v6381, 30
        %v6383 = vshll.u32 %v6382, 30
        %v6384 = vsub.s32 %v6380, %v6383
        %vm6385 = vcmp.lt.s32.totalorder %v6384, 0
        %v6386 = vsub.s32 0, %v6384
        %v6387 = vsel %vm6385, %v6386, %v6384
        %v6388 = vclz %v6387
        %v6389 = vsub.s32 %v6388, 2
        %vm6390 = vcmp.gt.s32.totalorder 0, %v6389
        %v6391 = vsel %vm6390, 0, %v6389
        %v6392 = vsub.s32 32, %v6391
        %v6393 = vshll.u32 %v6384, %v6391
        %v6394 = vshrl.u32 %v6376, %v6392
        %v6395 = vor.u32 %v6393, %v6394
        %v6396 = vsub.s32 4294967266, %v6391
        %v6397 = vadd.s32 %v6396, 127
        %v6398 = vshll.u32 %v6397, 23
        %v6399 = vor.u32 4788187, %v6398
        %v6400 = vand.u32 2147483647, %v6399
        %v6402 = vcvt.s32.f32 %v6395
        %v6403 = vmul.f32 %v6402, %v6400
        %v6404 = vxor.u32 %v6403, 2147483648
        %v6405 = vsel %vm6322, %v6404, %v6403
        %v6406 = vsub.s32 4, %v6382
        %v6407 = vsel %vm6322, %v6406, %v6382
        %v6408 = vsel %vm6321, %v4965, %v6405
        %v6409 = vsel %vm6321, 0, %v6407
        %v6410 = vcosq.f32.pop %v6408
        %v6411 = vsinq.f32.pop %v6408
        %vm6412 = vweird.f32 %v4965
        %v6413 = vadd.s32 %v6409, 3
        %v6414 = vand.u32 %v6413, 3
        %vm6415 = vcmp.lt.s32.totalorder %v6414, 2
        %vm6416 = vcmp.eq.s32.totalorder %v6414, 0
        %v6417 = vxor.u32 %v6411, 2147483648
        %v6418 = vsel %vm6416, %v6410, %v6417
        %vm6419 = vcmp.eq.s32.totalorder %v6414, 2
        %v6420 = vxor.u32 %v6410, 2147483648
        %v6421 = vsel %vm6419, %v6420, %v6411
        %v6422 = vsel %vm6415, %v6418, %v6421
        %v6423 = vsel %vm6412, nan, %v6422
        %v6424 = vand.u32 2147483647, %v4966
        %vm6425 = vcmp.le.f32.partialorder %v6424, 0.7853982
        %vm6426 = vcmp.lt.s32.totalorder %v4966, 0
        %v6427 = vand.u32 %v4966, 2139095040
        %v6428 = vshrl.u32 %v6427, 23
        %v6429 = vsub.s32 %v6428, 127
        %v6430 = vand.u32 2147483647, %v4966
        %v6431 = vand.u32 %v6430, 8388607
        %v6432 = vor.u32 %v6431, 8388608
        %v6433 = vsub.s32 0, %v6432
        %v6434 = vadd.s32 %v6429, 1
        %vm6435 = vcmp.gt.s32.totalorder %v6434, 0
        %v6436 = vsel %vm6435, %v6434, 0
        %v6437 = vshrl.u32 %v6436, 5
        %v6438 = vand.u32 %v6436, 31
        %v6439 = vsub.s32 32, %v6438
        %v6440 = vshrl.u32 683565275, %v6439
        %v6441 = vshll.u32 683565275, %v6438
        %v6442 = vshrl.u32 2475754826, %v6439
        %v6443 = vor.u32 %v6441, %v6442
        %v6444 = vshll.u32 2475754826, %v6438
        %v6445 = vshrl.u32 2131351028, %v6439
        %v6446 = vor.u32 %v6444, %v6445
        %v6447 = vshll.u32 2131351028, %v6438
        %v6448 = vshrl.u32 2102212464, %v6439
        %v6449 = vor.u32 %v6447, %v6448
        %v6450 = vshll.u32 2102212464, %v6438
        %v6451 = vshrl.u32 920167782, %v6439
        %v6452 = vor.u32 %v6450, %v6451
        %v6453 = vshll.u32 920167782, %v6438
        %v6454 = vshrl.u32 1326507024, %v6439
        %v6455 = vor.u32 %v6453, %v6454
        %vm6456 = vcmp.lt.s32.totalorder %v6437, 1
        %vm6457 = vcmp.lt.s32.totalorder %v6437, 2
        %vm6458 = vcmp.lt.s32.totalorder %v6437, 3
        %vm6459 = vcmp.lt.s32.totalorder %v6437, 4
        %v6460 = vsel %vm6456, %v6440, %v6443
        %v6461 = vsel %vm6459, %v6449, 2102212464
        %v6462 = vsel %vm6458, %v6446, %v6461
        %v6463 = vsel %vm6457, %v6460, %v6462
        %v6464 = vsel %vm6456, %v6443, %v6446
        %v6465 = vsel %vm6459, %v6452, 920167782
        %v6466 = vsel %vm6458, %v6449, %v6465
        %v6467 = vsel %vm6457, %v6464, %v6466
        %v6468 = vsel %vm6456, %v6446, %v6449
        %v6469 = vsel %vm6459, %v6455, 1326507024
        %v6470 = vsel %vm6458, %v6452, %v6469
        %v6471 = vsel %vm6457, %v6468, %v6470
        %v6472 = vshll.u32 %v6432, 8
        %v6473 = vmul.u32.u64.compose %v6472, %v6471
        %v6474 = vextract.low.u32 %v6473
        %v6475 = vextract.high.u32 %v6473
        %v6476 = vmul.u32.u64.compose %v6472, %v6467
        %v6477 = vextract.low.u32 %v6476
        %v6478 = vextract.high.u32 %v6476
        %v6479 = vmul.u32 %v6472, %v6463
        %v6480 = vadd.s32 %v6475, %v6477
        %vm6481 = vc.u32 %v6475, %v6477
        %v6482 = vadd.s32 %v6478, 1
        %v6483 = vsel %vm6481, %v6482, %v6478
        %v6484 = vadd.s32 %v6479, %v6483
        %v6485 = vadd.s32 %v6484, 536870912
        %v6486 = vshrl.u32 %v6485, 30
        %v6487 = vshll.u32 %v6486, 30
        %v6488 = vsub.s32 %v6484, %v6487
        %vm6489 = vcmp.lt.s32.totalorder %v6488, 0
        %v6490 = vsub.s32 0, %v6488
        %v6491 = vsel %vm6489, %v6490, %v6488
        %v6492 = vclz %v6491
        %v6493 = vsub.s32 %v6492, 2
        %vm6494 = vcmp.gt.s32.totalorder 0, %v6493
        %v6495 = vsel %vm6494, 0, %v6493
        %v6496 = vsub.s32 32, %v6495
        %v6497 = vshll.u32 %v6488, %v6495
        %v6498 = vshrl.u32 %v6480, %v6496
        %v6499 = vor.u32 %v6497, %v6498
        %v6500 = vsub.s32 4294967266, %v6495
        %v6501 = vadd.s32 %v6500, 127
        %v6502 = vshll.u32 %v6501, 23
        %v6503 = vor.u32 4788187, %v6502
        %v6504 = vand.u32 2147483647, %v6503
        %v6506 = vcvt.s32.f32 %v6499
        %v6507 = vmul.f32 %v6506, %v6504
        %v6508 = vxor.u32 %v6507, 2147483648
        %v6509 = vsel %vm6426, %v6508, %v6507
        %v6510 = vsub.s32 4, %v6486
        %v6511 = vsel %vm6426, %v6510, %v6486
        %v6512 = vsel %vm6425, %v4966, %v6509
        %v6513 = vsel %vm6425, 0, %v6511
        %v6514 = vcosq.f32.pop %v6512
        %v6515 = vsinq.f32.pop %v6512
        %vm6516 = vweird.f32 %v4966
        %v6517 = vadd.s32 %v6513, 3
        %v6518 = vand.u32 %v6517, 3
        %vm6519 = vcmp.lt.s32.totalorder %v6518, 2
        %vm6520 = vcmp.eq.s32.totalorder %v6518, 0
        %v6521 = vxor.u32 %v6515, 2147483648
        %v6522 = vsel %vm6520, %v6514, %v6521
        %vm6523 = vcmp.eq.s32.totalorder %v6518, 2
        %v6524 = vxor.u32 %v6514, 2147483648
        %v6525 = vsel %vm6523, %v6524, %v6515
        %v6526 = vsel %vm6519, %v6522, %v6525
        %v6527 = vsel %vm6516, nan, %v6526
        %v6528 = vand.u32 2147483647, %v4967
        %vm6529 = vcmp.le.f32.partialorder %v6528, 0.7853982
        %vm6530 = vcmp.lt.s32.totalorder %v4967, 0
        %v6531 = vand.u32 %v4967, 2139095040
        %v6532 = vshrl.u32 %v6531, 23
        %v6533 = vsub.s32 %v6532, 127
        %v6534 = vand.u32 2147483647, %v4967
        %v6535 = vand.u32 %v6534, 8388607
        %v6536 = vor.u32 %v6535, 8388608
        %v6537 = vsub.s32 0, %v6536
        %v6538 = vadd.s32 %v6533, 1
        %vm6539 = vcmp.gt.s32.totalorder %v6538, 0
        %v6540 = vsel %vm6539, %v6538, 0
        %v6541 = vshrl.u32 %v6540, 5
        %v6542 = vand.u32 %v6540, 31
        %v6543 = vsub.s32 32, %v6542
        %v6544 = vshrl.u32 683565275, %v6543
        %v6545 = vshll.u32 683565275, %v6542
        %v6546 = vshrl.u32 2475754826, %v6543
        %v6547 = vor.u32 %v6545, %v6546
        %v6548 = vshll.u32 2475754826, %v6542
        %v6549 = vshrl.u32 2131351028, %v6543
        %v6550 = vor.u32 %v6548, %v6549
        %v6551 = vshll.u32 2131351028, %v6542
        %v6552 = vshrl.u32 2102212464, %v6543
        %v6553 = vor.u32 %v6551, %v6552
        %v6554 = vshll.u32 2102212464, %v6542
        %v6555 = vshrl.u32 920167782, %v6543
        %v6556 = vor.u32 %v6554, %v6555
        %v6557 = vshll.u32 920167782, %v6542
        %v6558 = vshrl.u32 1326507024, %v6543
        %v6559 = vor.u32 %v6557, %v6558
        %vm6560 = vcmp.lt.s32.totalorder %v6541, 1
        %vm6561 = vcmp.lt.s32.totalorder %v6541, 2
        %vm6562 = vcmp.lt.s32.totalorder %v6541, 3
        %vm6563 = vcmp.lt.s32.totalorder %v6541, 4
        %v6564 = vsel %vm6560, %v6544, %v6547
        %v6565 = vsel %vm6563, %v6553, 2102212464
        %v6566 = vsel %vm6562, %v6550, %v6565
        %v6567 = vsel %vm6561, %v6564, %v6566
        %v6568 = vsel %vm6560, %v6547, %v6550
        %v6569 = vsel %vm6563, %v6556, 920167782
        %v6570 = vsel %vm6562, %v6553, %v6569
        %v6571 = vsel %vm6561, %v6568, %v6570
        %v6572 = vsel %vm6560, %v6550, %v6553
        %v6573 = vsel %vm6563, %v6559, 1326507024
        %v6574 = vsel %vm6562, %v6556, %v6573
        %v6575 = vsel %vm6561, %v6572, %v6574
        %v6576 = vshll.u32 %v6536, 8
        %v6577 = vmul.u32.u64.compose %v6576, %v6575
        %v6578 = vextract.low.u32 %v6577
        %v6579 = vextract.high.u32 %v6577
        %v6580 = vmul.u32.u64.compose %v6576, %v6571
        %v6581 = vextract.low.u32 %v6580
        %v6582 = vextract.high.u32 %v6580
        %v6583 = vmul.u32 %v6576, %v6567
        %v6584 = vadd.s32 %v6579, %v6581
        %vm6585 = vc.u32 %v6579, %v6581
        %v6586 = vadd.s32 %v6582, 1
        %v6587 = vsel %vm6585, %v6586, %v6582
        %v6588 = vadd.s32 %v6583, %v6587
        %v6589 = vadd.s32 %v6588, 536870912
        %v6590 = vshrl.u32 %v6589, 30
        %v6591 = vshll.u32 %v6590, 30
        %v6592 = vsub.s32 %v6588, %v6591
        %vm6593 = vcmp.lt.s32.totalorder %v6592, 0
        %v6594 = vsub.s32 0, %v6592
        %v6595 = vsel %vm6593, %v6594, %v6592
        %v6596 = vclz %v6595
        %v6597 = vsub.s32 %v6596, 2
        %vm6598 = vcmp.gt.s32.totalorder 0, %v6597
        %v6599 = vsel %vm6598, 0, %v6597
        %v6600 = vsub.s32 32, %v6599
        %v6601 = vshll.u32 %v6592, %v6599
        %v6602 = vshrl.u32 %v6584, %v6600
        %v6603 = vor.u32 %v6601, %v6602
        %v6604 = vsub.s32 4294967266, %v6599
        %v6605 = vadd.s32 %v6604, 127
        %v6606 = vshll.u32 %v6605, 23
        %v6607 = vor.u32 4788187, %v6606
        %v6608 = vand.u32 2147483647, %v6607
        %v6610 = vcvt.s32.f32 %v6603
        %v6611 = vmul.f32 %v6610, %v6608
        %v6612 = vxor.u32 %v6611, 2147483648
        %v6613 = vsel %vm6530, %v6612, %v6611
        %v6614 = vsub.s32 4, %v6590
        %v6615 = vsel %vm6530, %v6614, %v6590
        %v6616 = vsel %vm6529, %v4967, %v6613
        %v6617 = vsel %vm6529, 0, %v6615
        %v6618 = vcosq.f32.pop %v6616
        %v6619 = vsinq.f32.pop %v6616
        %vm6620 = vweird.f32 %v4967
        %v6621 = vadd.s32 %v6617, 3
        %v6622 = vand.u32 %v6621, 3
        %vm6623 = vcmp.lt.s32.totalorder %v6622, 2
        %vm6624 = vcmp.eq.s32.totalorder %v6622, 0
        %v6625 = vxor.u32 %v6619, 2147483648
        %v6626 = vsel %vm6624, %v6618, %v6625
        %vm6627 = vcmp.eq.s32.totalorder %v6622, 2
        %v6628 = vxor.u32 %v6618, 2147483648
        %v6629 = vsel %vm6627, %v6628, %v6619
        %v6630 = vsel %vm6623, %v6626, %v6629
        %v6631 = vsel %vm6620, nan, %v6630
        %v6632 = vmul.f32 %v4902, %v5071
        %v6633 = vmul.f32 %v4902, %v5175
        %v6634 = vmul.f32 %v4902, %v5279
        %v6635 = vmul.f32 %v4902, %v5383
        %v6636 = vmul.f32 %v4902, %v5487
        %v6637 = vmul.f32 %v4902, %v5591
        %v6638 = vmul.f32 %v4902, %v5695
        %v6639 = vmul.f32 %v4902, %v5799
        %v6640 = vmul.f32 %v4902, %v5903
        %v6641 = vmul.f32 %v4902, %v6007
        %v6642 = vmul.f32 %v4902, %v6111
        %v6643 = vmul.f32 %v4902, %v6215
        %v6644 = vmul.f32 %v4902, %v6319
        %v6645 = vmul.f32 %v4902, %v6423
        %v6646 = vmul.f32 %v4902, %v6527
        %v6647 = vmul.f32 %v4902, %v6631
        %v6648 = vadd.f32 %v6632, %v4902
        %v6649 = vadd.f32 %v6633, %v4902
        %v6650 = vadd.f32 %v6634, %v4902
        %v6651 = vadd.f32 %v6635, %v4902
        %v6652 = vadd.f32 %v6636, %v4902
        %v6653 = vadd.f32 %v6637, %v4902
        %v6654 = vadd.f32 %v6638, %v4902
        %v6655 = vadd.f32 %v6639, %v4902
        %v6656 = vadd.f32 %v6640, %v4902
        %v6657 = vadd.f32 %v6641, %v4902
        %v6658 = vadd.f32 %v6642, %v4902
        %v6659 = vadd.f32 %v6643, %v4902
        %v6660 = vadd.f32 %v6644, %v4902
        %v6661 = vadd.f32 %v6645, %v4902
        %v6662 = vadd.f32 %v6646, %v4902
        %v6663 = vadd.f32 %v6647, %v4902
        %v6664 = vmax.f32 %v4882, 0.0
        %v6665 = vmax.f32 %v4883, 0.0
        %v6666 = vmax.f32 %v4884, 0.0
        %v6667 = vmax.f32 %v4885, 0.0
        %v6668 = vmax.f32 %v4886, 0.0
        %v6669 = vmax.f32 %v4887, 0.0
        %v6670 = vmax.f32 %v4888, 0.0
        %v6671 = vmax.f32 %v4889, 0.0
        %v6672 = vmax.f32 %v4890, 0.0
        %v6673 = vmax.f32 %v4891, 0.0
        %v6674 = vmax.f32 %v4892, 0.0
        %v6675 = vmax.f32 %v4893, 0.0
        %v6676 = vmax.f32 %v4894, 0.0
        %v6677 = vmax.f32 %v4895, 0.0
        %v6678 = vmax.f32 %v4896, 0.0
        %v6679 = vmax.f32 %v4897, 0.0
        %vm6680 = vcmp.ge.f32.partialorder %v4882, %v4902
        %vm6681 = vcmp.ge.f32.partialorder %v4883, %v4902
        %vm6682 = vcmp.ge.f32.partialorder %v4884, %v4902
        %vm6683 = vcmp.ge.f32.partialorder %v4885, %v4902
        %vm6684 = vcmp.ge.f32.partialorder %v4886, %v4902
        %vm6685 = vcmp.ge.f32.partialorder %v4887, %v4902
        %vm6686 = vcmp.ge.f32.partialorder %v4888, %v4902
        %vm6687 = vcmp.ge.f32.partialorder %v4889, %v4902
        %vm6688 = vcmp.ge.f32.partialorder %v4890, %v4902
        %vm6689 = vcmp.ge.f32.partialorder %v4891, %v4902
        %vm6690 = vcmp.ge.f32.partialorder %v4892, %v4902
        %vm6691 = vcmp.ge.f32.partialorder %v4893, %v4902
        %vm6692 = vcmp.ge.f32.partialorder %v4894, %v4902
        %vm6693 = vcmp.ge.f32.partialorder %v4895, %v4902
        %vm6694 = vcmp.ge.f32.partialorder %v4896, %v4902
        %vm6695 = vcmp.ge.f32.partialorder %v4897, %v4902
        %v6696 = vsel %vm6680, %v6648, %v6664
        %v6697 = vsel %vm6681, %v6649, %v6665
        %v6698 = vsel %vm6682, %v6650, %v6666
        %v6699 = vsel %vm6683, %v6651, %v6667
        %v6700 = vsel %vm6684, %v6652, %v6668
        %v6701 = vsel %vm6685, %v6653, %v6669
        %v6702 = vsel %vm6686, %v6654, %v6670
        %v6703 = vsel %vm6687, %v6655, %v6671
        %v6704 = vsel %vm6688, %v6656, %v6672
        %v6705 = vsel %vm6689, %v6657, %v6673
        %v6706 = vsel %vm6690, %v6658, %v6674
        %v6707 = vsel %vm6691, %v6659, %v6675
        %v6708 = vsel %vm6692, %v6660, %v6676
        %v6709 = vsel %vm6693, %v6661, %v6677
        %v6710 = vsel %vm6694, %v6662, %v6678
        %v6711 = vsel %vm6695, %v6663, %v6679
        %v6712 = vstv %s4900
        %vm6713 = vcmp.ge.f32.partialorder %v4882, %v6712
        %vm6714 = vcmp.ge.f32.partialorder %v4883, %v6712
        %vm6715 = vcmp.ge.f32.partialorder %v4884, %v6712
        %vm6716 = vcmp.ge.f32.partialorder %v4885, %v6712
        %vm6717 = vcmp.ge.f32.partialorder %v4886, %v6712
        %vm6718 = vcmp.ge.f32.partialorder %v4887, %v6712
        %vm6719 = vcmp.ge.f32.partialorder %v4888, %v6712
        %vm6720 = vcmp.ge.f32.partialorder %v4889, %v6712
        %vm6721 = vcmp.ge.f32.partialorder %v4890, %v6712
        %vm6722 = vcmp.ge.f32.partialorder %v4891, %v6712
        %vm6723 = vcmp.ge.f32.partialorder %v4892, %v6712
        %vm6724 = vcmp.ge.f32.partialorder %v4893, %v6712
        %vm6725 = vcmp.ge.f32.partialorder %v4894, %v6712
        %vm6726 = vcmp.ge.f32.partialorder %v4895, %v6712
        %vm6727 = vcmp.ge.f32.partialorder %v4896, %v6712
        %vm6728 = vcmp.ge.f32.partialorder %v4897, %v6712
        %v6729 = vstv %s4901
        %v6730 = vsel %vm6713, %v6729, %v6696
        %v6731 = vsel %vm6714, %v6729, %v6697
        %v6732 = vsel %vm6715, %v6729, %v6698
        %v6733 = vsel %vm6716, %v6729, %v6699
        %v6734 = vsel %vm6717, %v6729, %v6700
        %v6735 = vsel %vm6718, %v6729, %v6701
        %v6736 = vsel %vm6719, %v6729, %v6702
        %v6737 = vsel %vm6720, %v6729, %v6703
        %v6738 = vsel %vm6721, %v6729, %v6704
        %v6739 = vsel %vm6722, %v6729, %v6705
        %v6740 = vsel %vm6723, %v6729, %v6706
        %v6741 = vsel %vm6724, %v6729, %v6707
        %v6742 = vsel %vm6725, %v6729, %v6708
        %v6743 = vsel %vm6726, %v6729, %v6709
        %v6744 = vsel %vm6727, %v6729, %v6710
        %v6745 = vsel %vm6728, %v6729, %v6711
        %v6746 = vpack.c.bf16 %v6731, %v6730
        %v6747 = vpack.c.bf16 %v6733, %v6732
        %v6748 = vpack.c.bf16 %v6735, %v6734
        %v6749 = vpack.c.bf16 %v6737, %v6736
        %v6750 = vpack.c.bf16 %v6739, %v6738
        %v6751 = vpack.c.bf16 %v6741, %v6740
        %v6752 = vpack.c.bf16 %v6743, %v6742
        %v6753 = vpack.c.bf16 %v6745, %v6744
        %v6754 = vld [vmem:[#allocation16] sm:$0x3]
        %v6756 = vsel %vm3285, %v6746, 0
        %v6759 = vsel %vm3285, %v6747, 0
        %v6762 = vsel %vm3285, %v6748, 0
        %v6765 = vsel %vm3285, %v6749, 0
        %v6768 = vsel %vm3285, %v6750, 0
        %v6771 = vsel %vm3285, %v6751, 0
        %v6774 = vsel %vm3285, %v6752, 0
        %v6777 = vsel %vm3285, %v6753, 0
        %v6780 = vsel %vm3745, %v6754, 0
        %6782 = vmatprep.subr.bf16.mxu0 0
        %6783 = vmatpush1.bf16.msra.mxu0 %v6780
        %6784 = vmatprep.subr.bf16.mxu0 0
        %6785 = vmatpush1.bf16.msra.mxu0 0
        %6786 = vmatprep.subr.bf16.mxu0 0
        %6787 = vmatpush1.bf16.msra.mxu0 0
        %6788 = vmatprep.subr.bf16.mxu0 0
        %6789 = vmatpush1.bf16.msra.mxu0 0
        %6790 = vmatprep.subr.bf16.mxu0 0
        %6791 = vmatpush1.bf16.msra.mxu0 0
        %6792 = vmatprep.subr.bf16.mxu0 0
        %6793 = vmatpush1.bf16.msra.mxu0 0
        %6794 = vmatprep.subr.bf16.mxu0 0
        %6795 = vmatpush1.bf16.msra.mxu0 0
        %6796 = vmatprep.subr.bf16.mxu0 0
        %6797 = vmatpush1.bf16.msra.mxu0 0
        %6798 = vmatprep.subr.bf16.mxu0 0
        %6799 = vmatpush1.bf16.msra.mxu0 0
        %6800 = vmatprep.subr.bf16.mxu0 0
        %6801 = vmatpush1.bf16.msra.mxu0 0
        %6802 = vmatprep.subr.bf16.mxu0 0
        %6803 = vmatpush1.bf16.msra.mxu0 0
        %6804 = vmatprep.subr.bf16.mxu0 0
        %6805 = vmatpush1.bf16.msra.mxu0 0
        %6806 = vmatprep.subr.bf16.mxu0 0
        %6807 = vmatpush1.bf16.msra.mxu0 0
        %6808 = vmatprep.subr.bf16.mxu0 0
        %6809 = vmatpush1.bf16.msra.mxu0 0
        %6810 = vmatprep.subr.bf16.mxu0 0
        %6811 = vmatpush1.bf16.msra.mxu0 0
        %6812 = vmatprep.subr.bf16.mxu0 0
        %6813 = vmatpush1.bf16.msra.mxu0 0
        %6814 = vmatprep.mubr.bf16.mxu0 0
        %6815 = vmatmul.mubr.bf16.gmra.mrb[0].mxu0 %v6756
        %v6816 = vpop.f32.mrb[0].mxu0
        %v6817 = vadd.f32 0.0, %v6816
        %v6818 = vpop.f32.mrb[0].mxu0
        %v6819 = vpop.f32.mrb[0].mxu0
        %v6820 = vadd.f32 0.0, %v6819
        %v6821 = vpop.f32.mrb[0].mxu0
        %6822 = vmatprep.mubr.bf16.mxu0 0
        %6823 = vmatmul.mubr.bf16.gmra.mrb[0].mxu0 %v6759
        %v6824 = vpop.f32.mrb[0].mxu0
        %v6825 = vadd.f32 0.0, %v6824
        %v6826 = vpop.f32.mrb[0].mxu0
        %v6827 = vpop.f32.mrb[0].mxu0
        %v6828 = vadd.f32 0.0, %v6827
        %v6829 = vpop.f32.mrb[0].mxu0
        %6830 = vmatprep.mubr.bf16.mxu0 0
        %6831 = vmatmul.mubr.bf16.gmra.mrb[0].mxu0 %v6762
        %v6832 = vpop.f32.mrb[0].mxu0
        %v6833 = vadd.f32 0.0, %v6832
        %v6834 = vpop.f32.mrb[0].mxu0
        %v6835 = vpop.f32.mrb[0].mxu0
        %v6836 = vadd.f32 0.0, %v6835
        %v6837 = vpop.f32.mrb[0].mxu0
        %6838 = vmatprep.mubr.bf16.mxu0 0
        %6839 = vmatmul.mubr.bf16.gmra.mrb[0].mxu0 %v6765
        %v6840 = vpop.f32.mrb[0].mxu0
        %v6841 = vadd.f32 0.0, %v6840
        %v6842 = vpop.f32.mrb[0].mxu0
        %v6843 = vpop.f32.mrb[0].mxu0
        %v6844 = vadd.f32 0.0, %v6843
        %v6845 = vpop.f32.mrb[0].mxu0
        %6846 = vmatprep.mubr.bf16.mxu0 0
        %6847 = vmatmul.mubr.bf16.gmra.mrb[0].mxu0 %v6768
        %v6848 = vpop.f32.mrb[0].mxu0
        %v6849 = vadd.f32 0.0, %v6848
        %v6850 = vpop.f32.mrb[0].mxu0
        %v6851 = vpop.f32.mrb[0].mxu0
        %v6852 = vadd.f32 0.0, %v6851
        %v6853 = vpop.f32.mrb[0].mxu0
        %6854 = vmatprep.mubr.bf16.mxu0 0
        %6855 = vmatmul.mubr.bf16.gmra.mrb[0].mxu0 %v6771
        %v6856 = vpop.f32.mrb[0].mxu0
        %v6857 = vadd.f32 0.0, %v6856
        %v6858 = vpop.f32.mrb[0].mxu0
        %v6859 = vpop.f32.mrb[0].mxu0
        %v6860 = vadd.f32 0.0, %v6859
        %v6861 = vpop.f32.mrb[0].mxu0
        %6862 = vmatprep.mubr.bf16.mxu0 0
        %6863 = vmatmul.mubr.bf16.gmra.mrb[0].mxu0 %v6774
        %v6864 = vpop.f32.mrb[0].mxu0
        %v6865 = vadd.f32 0.0, %v6864
        %v6866 = vpop.f32.mrb[0].mxu0
        %v6867 = vpop.f32.mrb[0].mxu0
        %v6868 = vadd.f32 0.0, %v6867
        %v6869 = vpop.f32.mrb[0].mxu0
        %6870 = vmatprep.mubr.bf16.mxu0 0
        %6871 = vmatmul.mubr.bf16.gmra.mrb[0].mxu0 %v6777
        %v6872 = vpop.f32.mrb[0].mxu0
        %v6873 = vadd.f32 0.0, %v6872
        %v6874 = vpop.f32.mrb[0].mxu0
        %v6875 = vpop.f32.mrb[0].mxu0
        %v6876 = vadd.f32 0.0, %v6875
        %v6877 = vpop.f32.mrb[0].mxu0
        %6878 = vdwg.mxu0
        %v6879 = vld [vmem:[#allocation23] sm:$0x1]
        %v6881 = vlaneseq
        %v6882 = vshrl.u32 %v6881, 7
        %v6883 = vsub.s32 0, %v6882
        %v6884 = vrot.slane %v6879, %v6883
        %v6886 = vmul.f32 %v6817, %v6884
        %v6887 = vmul.f32 %v6820, %v6884
        %v6888 = vmul.f32 %v6825, %v6884
        %v6889 = vmul.f32 %v6828, %v6884
        %v6890 = vmul.f32 %v6833, %v6884
        %v6891 = vmul.f32 %v6836, %v6884
        %v6892 = vmul.f32 %v6841, %v6884
        %v6893 = vmul.f32 %v6844, %v6884
        %v6894 = vmul.f32 %v6849, %v6884
        %v6895 = vmul.f32 %v6852, %v6884
        %v6896 = vmul.f32 %v6857, %v6884
        %v6897 = vmul.f32 %v6860, %v6884
        %v6898 = vmul.f32 %v6865, %v6884
        %v6899 = vmul.f32 %v6868, %v6884
        %v6900 = vmul.f32 %v6873, %v6884
        %v6901 = vmul.f32 %v6876, %v6884
        %v6902 = vld [vmem:[#allocation25] sm:$0x1]
        %v6904 = vlaneseq
        %v6905 = vshrl.u32 %v6904, 7
        %v6906 = vsub.s32 0, %v6905
        %v6907 = vrot.slane %v6902, %v6906
        %v6909 = vadd.f32 %v6886, %v6907
        %v6910 = vadd.f32 %v6887, %v6907
        %v6911 = vadd.f32 %v6888, %v6907
        %v6912 = vadd.f32 %v6889, %v6907
        %v6913 = vadd.f32 %v6890, %v6907
        %v6914 = vadd.f32 %v6891, %v6907
        %v6915 = vadd.f32 %v6892, %v6907
        %v6916 = vadd.f32 %v6893, %v6907
        %v6917 = vadd.f32 %v6894, %v6907
        %v6918 = vadd.f32 %v6895, %v6907
        %v6919 = vadd.f32 %v6896, %v6907
        %v6920 = vadd.f32 %v6897, %v6907
        %v6921 = vadd.f32 %v6898, %v6907
        %v6922 = vadd.f32 %v6899, %v6907
        %v6923 = vadd.f32 %v6900, %v6907
        %v6924 = vadd.f32 %v6901, %v6907
        %v6925 = vadd.f32 %v6909, %v708
        %v6926 = vadd.f32 %v6910, %v709
        %v6927 = vadd.f32 %v6911, %v710
        %v6928 = vadd.f32 %v6912, %v711
        %v6929 = vadd.f32 %v6913, %v712
        %v6930 = vadd.f32 %v6914, %v713
        %v6931 = vadd.f32 %v6915, %v714
        %v6932 = vadd.f32 %v6916, %v715
        %v6933 = vadd.f32 %v6917, %v716
        %v6934 = vadd.f32 %v6918, %v717
        %v6935 = vadd.f32 %v6919, %v718
        %v6936 = vadd.f32 %v6920, %v719
        %v6937 = vadd.f32 %v6921, %v720
        %v6938 = vadd.f32 %v6922, %v721
        %v6939 = vadd.f32 %v6923, %v722
        %v6940 = vadd.f32 %v6924, %v723
        %s6941 = sld [smem:[#allocation3 + $0x8]]
        %s6942 = sld [smem:[#allocation3 + $0x9]]
        %s6943 = sld [smem:[#allocation3 + $0xa]]
        %s6944 = sld [smem:[#allocation3 + $0xb]]
        %v6945 = vstv %s6941
        %v6946 = vmax.f32 %v6925, %v6945
        %v6947 = vmax.f32 %v6926, %v6945
        %v6948 = vmax.f32 %v6927, %v6945
        %v6949 = vmax.f32 %v6928, %v6945
        %v6950 = vmax.f32 %v6929, %v6945
        %v6951 = vmax.f32 %v6930, %v6945
        %v6952 = vmax.f32 %v6931, %v6945
        %v6953 = vmax.f32 %v6932, %v6945
        %v6954 = vmax.f32 %v6933, %v6945
        %v6955 = vmax.f32 %v6934, %v6945
        %v6956 = vmax.f32 %v6935, %v6945
        %v6957 = vmax.f32 %v6936, %v6945
        %v6958 = vmax.f32 %v6937, %v6945
        %v6959 = vmax.f32 %v6938, %v6945
        %v6960 = vmax.f32 %v6939, %v6945
        %v6961 = vmax.f32 %v6940, %v6945
        %v6962 = vlog2.pop %v6946
        %v6963 = vmul.f32 %v6962, 0.6931472
        %v6964 = vlog2.pop %v6947
        %v6965 = vmul.f32 %v6964, 0.6931472
        %v6966 = vlog2.pop %v6948
        %v6967 = vmul.f32 %v6966, 0.6931472
        %v6968 = vlog2.pop %v6949
        %v6969 = vmul.f32 %v6968, 0.6931472
        %v6970 = vlog2.pop %v6950
        %v6971 = vmul.f32 %v6970, 0.6931472
        %v6972 = vlog2.pop %v6951
        %v6973 = vmul.f32 %v6972, 0.6931472
        %v6974 = vlog2.pop %v6952
        %v6975 = vmul.f32 %v6974, 0.6931472
        %v6976 = vlog2.pop %v6953
        %v6977 = vmul.f32 %v6976, 0.6931472
        %v6978 = vlog2.pop %v6954
        %v6979 = vmul.f32 %v6978, 0.6931472
        %v6980 = vlog2.pop %v6955
        %v6981 = vmul.f32 %v6980, 0.6931472
        %v6982 = vlog2.pop %v6956
        %v6983 = vmul.f32 %v6982, 0.6931472
        %v6984 = vlog2.pop %v6957
        %v6985 = vmul.f32 %v6984, 0.6931472
        %v6986 = vlog2.pop %v6958
        %v6987 = vmul.f32 %v6986, 0.6931472
        %v6988 = vlog2.pop %v6959
        %v6989 = vmul.f32 %v6988, 0.6931472
        %v6990 = vlog2.pop %v6960
        %v6991 = vmul.f32 %v6990, 0.6931472
        %v6992 = vlog2.pop %v6961
        %v6993 = vmul.f32 %v6992, 0.6931472
        %v6994 = vstv %s6942
        %v6995 = vsub.f32 %v6963, %v6994
        %v6996 = vsub.f32 %v6965, %v6994
        %v6997 = vsub.f32 %v6967, %v6994
        %v6998 = vsub.f32 %v6969, %v6994
        %v6999 = vsub.f32 %v6971, %v6994
        %v7000 = vsub.f32 %v6973, %v6994
        %v7001 = vsub.f32 %v6975, %v6994
        %v7002 = vsub.f32 %v6977, %v6994
        %v7003 = vsub.f32 %v6979, %v6994
        %v7004 = vsub.f32 %v6981, %v6994
        %v7005 = vsub.f32 %v6983, %v6994
        %v7006 = vsub.f32 %v6985, %v6994
        %v7007 = vsub.f32 %v6987, %v6994
        %v7008 = vsub.f32 %v6989, %v6994
        %v7009 = vsub.f32 %v6991, %v6994
        %v7010 = vsub.f32 %v6993, %v6994
        %v7011 = vand.u32 2147483647, %v6995
        %vm7012 = vcmp.le.f32.partialorder %v7011, 0.7853982
        %vm7013 = vcmp.lt.s32.totalorder %v6995, 0
        %v7014 = vand.u32 %v6995, 2139095040
        %v7015 = vshrl.u32 %v7014, 23
        %v7016 = vsub.s32 %v7015, 127
        %v7017 = vand.u32 2147483647, %v6995
        %v7018 = vand.u32 %v7017, 8388607
        %v7019 = vor.u32 %v7018, 8388608
        %v7020 = vsub.s32 0, %v7019
        %v7021 = vadd.s32 %v7016, 1
        %vm7022 = vcmp.gt.s32.totalorder %v7021, 0
        %v7023 = vsel %vm7022, %v7021, 0
        %v7024 = vshrl.u32 %v7023, 5
        %v7025 = vand.u32 %v7023, 31
        %v7026 = vsub.s32 32, %v7025
        %v7027 = vshrl.u32 683565275, %v7026
        %v7028 = vshll.u32 683565275, %v7025
        %v7029 = vshrl.u32 2475754826, %v7026
        %v7030 = vor.u32 %v7028, %v7029
        %v7031 = vshll.u32 2475754826, %v7025
        %v7032 = vshrl.u32 2131351028, %v7026
        %v7033 = vor.u32 %v7031, %v7032
        %v7034 = vshll.u32 2131351028, %v7025
        %v7035 = vshrl.u32 2102212464, %v7026
        %v7036 = vor.u32 %v7034, %v7035
        %v7037 = vshll.u32 2102212464, %v7025
        %v7038 = vshrl.u32 920167782, %v7026
        %v7039 = vor.u32 %v7037, %v7038
        %v7040 = vshll.u32 920167782, %v7025
        %v7041 = vshrl.u32 1326507024, %v7026
        %v7042 = vor.u32 %v7040, %v7041
        %vm7043 = vcmp.lt.s32.totalorder %v7024, 1
        %vm7044 = vcmp.lt.s32.totalorder %v7024, 2
        %vm7045 = vcmp.lt.s32.totalorder %v7024, 3
        %vm7046 = vcmp.lt.s32.totalorder %v7024, 4
        %v7047 = vsel %vm7043, %v7027, %v7030
        %v7048 = vsel %vm7046, %v7036, 2102212464
        %v7049 = vsel %vm7045, %v7033, %v7048
        %v7050 = vsel %vm7044, %v7047, %v7049
        %v7051 = vsel %vm7043, %v7030, %v7033
        %v7052 = vsel %vm7046, %v7039, 920167782
        %v7053 = vsel %vm7045, %v7036, %v7052
        %v7054 = vsel %vm7044, %v7051, %v7053
        %v7055 = vsel %vm7043, %v7033, %v7036
        %v7056 = vsel %vm7046, %v7042, 1326507024
        %v7057 = vsel %vm7045, %v7039, %v7056
        %v7058 = vsel %vm7044, %v7055, %v7057
        %v7059 = vshll.u32 %v7019, 8
        %v7060 = vmul.u32.u64.compose %v7059, %v7058
        %v7061 = vextract.low.u32 %v7060
        %v7062 = vextract.high.u32 %v7060
        %v7063 = vmul.u32.u64.compose %v7059, %v7054
        %v7064 = vextract.low.u32 %v7063
        %v7065 = vextract.high.u32 %v7063
        %v7066 = vmul.u32 %v7059, %v7050
        %v7067 = vadd.s32 %v7062, %v7064
        %vm7068 = vc.u32 %v7062, %v7064
        %v7069 = vadd.s32 %v7065, 1
        %v7070 = vsel %vm7068, %v7069, %v7065
        %v7071 = vadd.s32 %v7066, %v7070
        %v7072 = vadd.s32 %v7071, 536870912
        %v7073 = vshrl.u32 %v7072, 30
        %v7074 = vshll.u32 %v7073, 30
        %v7075 = vsub.s32 %v7071, %v7074
        %vm7076 = vcmp.lt.s32.totalorder %v7075, 0
        %v7077 = vsub.s32 0, %v7075
        %v7078 = vsel %vm7076, %v7077, %v7075
        %v7079 = vclz %v7078
        %v7080 = vsub.s32 %v7079, 2
        %vm7081 = vcmp.gt.s32.totalorder 0, %v7080
        %v7082 = vsel %vm7081, 0, %v7080
        %v7083 = vsub.s32 32, %v7082
        %v7084 = vshll.u32 %v7075, %v7082
        %v7085 = vshrl.u32 %v7067, %v7083
        %v7086 = vor.u32 %v7084, %v7085
        %v7087 = vsub.s32 4294967266, %v7082
        %v7088 = vadd.s32 %v7087, 127
        %v7089 = vshll.u32 %v7088, 23
        %v7090 = vor.u32 4788187, %v7089
        %v7091 = vand.u32 2147483647, %v7090
        %v7093 = vcvt.s32.f32 %v7086
        %v7094 = vmul.f32 %v7093, %v7091
        %v7095 = vxor.u32 %v7094, 2147483648
        %v7096 = vsel %vm7013, %v7095, %v7094
        %v7097 = vsub.s32 4, %v7073
        %v7098 = vsel %vm7013, %v7097, %v7073
        %v7099 = vsel %vm7012, %v6995, %v7096
        %v7100 = vsel %vm7012, 0, %v7098
        %v7101 = vcosq.f32.pop %v7099
        %v7102 = vsinq.f32.pop %v7099
        %vm7103 = vweird.f32 %v6995
        %v7104 = vadd.s32 %v7100, 3
        %v7105 = vand.u32 %v7104, 3
        %vm7106 = vcmp.lt.s32.totalorder %v7105, 2
        %vm7107 = vcmp.eq.s32.totalorder %v7105, 0
        %v7108 = vxor.u32 %v7102, 2147483648
        %v7109 = vsel %vm7107, %v7101, %v7108
        %vm7110 = vcmp.eq.s32.totalorder %v7105, 2
        %v7111 = vxor.u32 %v7101, 2147483648
        %v7112 = vsel %vm7110, %v7111, %v7102
        %v7113 = vsel %vm7106, %v7109, %v7112
        %v7114 = vsel %vm7103, nan, %v7113
        %v7115 = vand.u32 2147483647, %v6996
        %vm7116 = vcmp.le.f32.partialorder %v7115, 0.7853982
        %vm7117 = vcmp.lt.s32.totalorder %v6996, 0
        %v7118 = vand.u32 %v6996, 2139095040
        %v7119 = vshrl.u32 %v7118, 23
        %v7120 = vsub.s32 %v7119, 127
        %v7121 = vand.u32 2147483647, %v6996
        %v7122 = vand.u32 %v7121, 8388607
        %v7123 = vor.u32 %v7122, 8388608
        %v7124 = vsub.s32 0, %v7123
        %v7125 = vadd.s32 %v7120, 1
        %vm7126 = vcmp.gt.s32.totalorder %v7125, 0
        %v7127 = vsel %vm7126, %v7125, 0
        %v7128 = vshrl.u32 %v7127, 5
        %v7129 = vand.u32 %v7127, 31
        %v7130 = vsub.s32 32, %v7129
        %v7131 = vshrl.u32 683565275, %v7130
        %v7132 = vshll.u32 683565275, %v7129
        %v7133 = vshrl.u32 2475754826, %v7130
        %v7134 = vor.u32 %v7132, %v7133
        %v7135 = vshll.u32 2475754826, %v7129
        %v7136 = vshrl.u32 2131351028, %v7130
        %v7137 = vor.u32 %v7135, %v7136
        %v7138 = vshll.u32 2131351028, %v7129
        %v7139 = vshrl.u32 2102212464, %v7130
        %v7140 = vor.u32 %v7138, %v7139
        %v7141 = vshll.u32 2102212464, %v7129
        %v7142 = vshrl.u32 920167782, %v7130
        %v7143 = vor.u32 %v7141, %v7142
        %v7144 = vshll.u32 920167782, %v7129
        %v7145 = vshrl.u32 1326507024, %v7130
        %v7146 = vor.u32 %v7144, %v7145
        %vm7147 = vcmp.lt.s32.totalorder %v7128, 1
        %vm7148 = vcmp.lt.s32.totalorder %v7128, 2
        %vm7149 = vcmp.lt.s32.totalorder %v7128, 3
        %vm7150 = vcmp.lt.s32.totalorder %v7128, 4
        %v7151 = vsel %vm7147, %v7131, %v7134
        %v7152 = vsel %vm7150, %v7140, 2102212464
        %v7153 = vsel %vm7149, %v7137, %v7152
        %v7154 = vsel %vm7148, %v7151, %v7153
        %v7155 = vsel %vm7147, %v7134, %v7137
        %v7156 = vsel %vm7150, %v7143, 920167782
        %v7157 = vsel %vm7149, %v7140, %v7156
        %v7158 = vsel %vm7148, %v7155, %v7157
        %v7159 = vsel %vm7147, %v7137, %v7140
        %v7160 = vsel %vm7150, %v7146, 1326507024
        %v7161 = vsel %vm7149, %v7143, %v7160
        %v7162 = vsel %vm7148, %v7159, %v7161
        %v7163 = vshll.u32 %v7123, 8
        %v7164 = vmul.u32.u64.compose %v7163, %v7162
        %v7165 = vextract.low.u32 %v7164
        %v7166 = vextract.high.u32 %v7164
        %v7167 = vmul.u32.u64.compose %v7163, %v7158
        %v7168 = vextract.low.u32 %v7167
        %v7169 = vextract.high.u32 %v7167
        %v7170 = vmul.u32 %v7163, %v7154
        %v7171 = vadd.s32 %v7166, %v7168
        %vm7172 = vc.u32 %v7166, %v7168
        %v7173 = vadd.s32 %v7169, 1
        %v7174 = vsel %vm7172, %v7173, %v7169
        %v7175 = vadd.s32 %v7170, %v7174
        %v7176 = vadd.s32 %v7175, 536870912
        %v7177 = vshrl.u32 %v7176, 30
        %v7178 = vshll.u32 %v7177, 30
        %v7179 = vsub.s32 %v7175, %v7178
        %vm7180 = vcmp.lt.s32.totalorder %v7179, 0
        %v7181 = vsub.s32 0, %v7179
        %v7182 = vsel %vm7180, %v7181, %v7179
        %v7183 = vclz %v7182
        %v7184 = vsub.s32 %v7183, 2
        %vm7185 = vcmp.gt.s32.totalorder 0, %v7184
        %v7186 = vsel %vm7185, 0, %v7184
        %v7187 = vsub.s32 32, %v7186
        %v7188 = vshll.u32 %v7179, %v7186
        %v7189 = vshrl.u32 %v7171, %v7187
        %v7190 = vor.u32 %v7188, %v7189
        %v7191 = vsub.s32 4294967266, %v7186
        %v7192 = vadd.s32 %v7191, 127
        %v7193 = vshll.u32 %v7192, 23
        %v7194 = vor.u32 4788187, %v7193
        %v7195 = vand.u32 2147483647, %v7194
        %v7197 = vcvt.s32.f32 %v7190
        %v7198 = vmul.f32 %v7197, %v7195
        %v7199 = vxor.u32 %v7198, 2147483648
        %v7200 = vsel %vm7117, %v7199, %v7198
        %v7201 = vsub.s32 4, %v7177
        %v7202 = vsel %vm7117, %v7201, %v7177
        %v7203 = vsel %vm7116, %v6996, %v7200
        %v7204 = vsel %vm7116, 0, %v7202
        %v7205 = vcosq.f32.pop %v7203
        %v7206 = vsinq.f32.pop %v7203
        %vm7207 = vweird.f32 %v6996
        %v7208 = vadd.s32 %v7204, 3
        %v7209 = vand.u32 %v7208, 3
        %vm7210 = vcmp.lt.s32.totalorder %v7209, 2
        %vm7211 = vcmp.eq.s32.totalorder %v7209, 0
        %v7212 = vxor.u32 %v7206, 2147483648
        %v7213 = vsel %vm7211, %v7205, %v7212
        %vm7214 = vcmp.eq.s32.totalorder %v7209, 2
        %v7215 = vxor.u32 %v7205, 2147483648
        %v7216 = vsel %vm7214, %v7215, %v7206
        %v7217 = vsel %vm7210, %v7213, %v7216
        %v7218 = vsel %vm7207, nan, %v7217
        %v7219 = vand.u32 2147483647, %v6997
        %vm7220 = vcmp.le.f32.partialorder %v7219, 0.7853982
        %vm7221 = vcmp.lt.s32.totalorder %v6997, 0
        %v7222 = vand.u32 %v6997, 2139095040
        %v7223 = vshrl.u32 %v7222, 23
        %v7224 = vsub.s32 %v7223, 127
        %v7225 = vand.u32 2147483647, %v6997
        %v7226 = vand.u32 %v7225, 8388607
        %v7227 = vor.u32 %v7226, 8388608
        %v7228 = vsub.s32 0, %v7227
        %v7229 = vadd.s32 %v7224, 1
        %vm7230 = vcmp.gt.s32.totalorder %v7229, 0
        %v7231 = vsel %vm7230, %v7229, 0
        %v7232 = vshrl.u32 %v7231, 5
        %v7233 = vand.u32 %v7231, 31
        %v7234 = vsub.s32 32, %v7233
        %v7235 = vshrl.u32 683565275, %v7234
        %v7236 = vshll.u32 683565275, %v7233
        %v7237 = vshrl.u32 2475754826, %v7234
        %v7238 = vor.u32 %v7236, %v7237
        %v7239 = vshll.u32 2475754826, %v7233
        %v7240 = vshrl.u32 2131351028, %v7234
        %v7241 = vor.u32 %v7239, %v7240
        %v7242 = vshll.u32 2131351028, %v7233
        %v7243 = vshrl.u32 2102212464, %v7234
        %v7244 = vor.u32 %v7242, %v7243
        %v7245 = vshll.u32 2102212464, %v7233
        %v7246 = vshrl.u32 920167782, %v7234
        %v7247 = vor.u32 %v7245, %v7246
        %v7248 = vshll.u32 920167782, %v7233
        %v7249 = vshrl.u32 1326507024, %v7234
        %v7250 = vor.u32 %v7248, %v7249
        %vm7251 = vcmp.lt.s32.totalorder %v7232, 1
        %vm7252 = vcmp.lt.s32.totalorder %v7232, 2
        %vm7253 = vcmp.lt.s32.totalorder %v7232, 3
        %vm7254 = vcmp.lt.s32.totalorder %v7232, 4
        %v7255 = vsel %vm7251, %v7235, %v7238
        %v7256 = vsel %vm7254, %v7244, 2102212464
        %v7257 = vsel %vm7253, %v7241, %v7256
        %v7258 = vsel %vm7252, %v7255, %v7257
        %v7259 = vsel %vm7251, %v7238, %v7241
        %v7260 = vsel %vm7254, %v7247, 920167782
        %v7261 = vsel %vm7253, %v7244, %v7260
        %v7262 = vsel %vm7252, %v7259, %v7261
        %v7263 = vsel %vm7251, %v7241, %v7244
        %v7264 = vsel %vm7254, %v7250, 1326507024
        %v7265 = vsel %vm7253, %v7247, %v7264
        %v7266 = vsel %vm7252, %v7263, %v7265
        %v7267 = vshll.u32 %v7227, 8
        %v7268 = vmul.u32.u64.compose %v7267, %v7266
        %v7269 = vextract.low.u32 %v7268
        %v7270 = vextract.high.u32 %v7268
        %v7271 = vmul.u32.u64.compose %v7267, %v7262
        %v7272 = vextract.low.u32 %v7271
        %v7273 = vextract.high.u32 %v7271
        %v7274 = vmul.u32 %v7267, %v7258
        %v7275 = vadd.s32 %v7270, %v7272
        %vm7276 = vc.u32 %v7270, %v7272
        %v7277 = vadd.s32 %v7273, 1
        %v7278 = vsel %vm7276, %v7277, %v7273
        %v7279 = vadd.s32 %v7274, %v7278
        %v7280 = vadd.s32 %v7279, 536870912
        %v7281 = vshrl.u32 %v7280, 30
        %v7282 = vshll.u32 %v7281, 30
        %v7283 = vsub.s32 %v7279, %v7282
        %vm7284 = vcmp.lt.s32.totalorder %v7283, 0
        %v7285 = vsub.s32 0, %v7283
        %v7286 = vsel %vm7284, %v7285, %v7283
        %v7287 = vclz %v7286
        %v7288 = vsub.s32 %v7287, 2
        %vm7289 = vcmp.gt.s32.totalorder 0, %v7288
        %v7290 = vsel %vm7289, 0, %v7288
        %v7291 = vsub.s32 32, %v7290
        %v7292 = vshll.u32 %v7283, %v7290
        %v7293 = vshrl.u32 %v7275, %v7291
        %v7294 = vor.u32 %v7292, %v7293
        %v7295 = vsub.s32 4294967266, %v7290
        %v7296 = vadd.s32 %v7295, 127
        %v7297 = vshll.u32 %v7296, 23
        %v7298 = vor.u32 4788187, %v7297
        %v7299 = vand.u32 2147483647, %v7298
        %v7301 = vcvt.s32.f32 %v7294
        %v7302 = vmul.f32 %v7301, %v7299
        %v7303 = vxor.u32 %v7302, 2147483648
        %v7304 = vsel %vm7221, %v7303, %v7302
        %v7305 = vsub.s32 4, %v7281
        %v7306 = vsel %vm7221, %v7305, %v7281
        %v7307 = vsel %vm7220, %v6997, %v7304
        %v7308 = vsel %vm7220, 0, %v7306
        %v7309 = vcosq.f32.pop %v7307
        %v7310 = vsinq.f32.pop %v7307
        %vm7311 = vweird.f32 %v6997
        %v7312 = vadd.s32 %v7308, 3
        %v7313 = vand.u32 %v7312, 3
        %vm7314 = vcmp.lt.s32.totalorder %v7313, 2
        %vm7315 = vcmp.eq.s32.totalorder %v7313, 0
        %v7316 = vxor.u32 %v7310, 2147483648
        %v7317 = vsel %vm7315, %v7309, %v7316
        %vm7318 = vcmp.eq.s32.totalorder %v7313, 2
        %v7319 = vxor.u32 %v7309, 2147483648
        %v7320 = vsel %vm7318, %v7319, %v7310
        %v7321 = vsel %vm7314, %v7317, %v7320
        %v7322 = vsel %vm7311, nan, %v7321
        %v7323 = vand.u32 2147483647, %v6998
        %vm7324 = vcmp.le.f32.partialorder %v7323, 0.7853982
        %vm7325 = vcmp.lt.s32.totalorder %v6998, 0
        %v7326 = vand.u32 %v6998, 2139095040
        %v7327 = vshrl.u32 %v7326, 23
        %v7328 = vsub.s32 %v7327, 127
        %v7329 = vand.u32 2147483647, %v6998
        %v7330 = vand.u32 %v7329, 8388607
        %v7331 = vor.u32 %v7330, 8388608
        %v7332 = vsub.s32 0, %v7331
        %v7333 = vadd.s32 %v7328, 1
        %vm7334 = vcmp.gt.s32.totalorder %v7333, 0
        %v7335 = vsel %vm7334, %v7333, 0
        %v7336 = vshrl.u32 %v7335, 5
        %v7337 = vand.u32 %v7335, 31
        %v7338 = vsub.s32 32, %v7337
        %v7339 = vshrl.u32 683565275, %v7338
        %v7340 = vshll.u32 683565275, %v7337
        %v7341 = vshrl.u32 2475754826, %v7338
        %v7342 = vor.u32 %v7340, %v7341
        %v7343 = vshll.u32 2475754826, %v7337
        %v7344 = vshrl.u32 2131351028, %v7338
        %v7345 = vor.u32 %v7343, %v7344
        %v7346 = vshll.u32 2131351028, %v7337
        %v7347 = vshrl.u32 2102212464, %v7338
        %v7348 = vor.u32 %v7346, %v7347
        %v7349 = vshll.u32 2102212464, %v7337
        %v7350 = vshrl.u32 920167782, %v7338
        %v7351 = vor.u32 %v7349, %v7350
        %v7352 = vshll.u32 920167782, %v7337
        %v7353 = vshrl.u32 1326507024, %v7338
        %v7354 = vor.u32 %v7352, %v7353
        %vm7355 = vcmp.lt.s32.totalorder %v7336, 1
        %vm7356 = vcmp.lt.s32.totalorder %v7336, 2
        %vm7357 = vcmp.lt.s32.totalorder %v7336, 3
        %vm7358 = vcmp.lt.s32.totalorder %v7336, 4
        %v7359 = vsel %vm7355, %v7339, %v7342
        %v7360 = vsel %vm7358, %v7348, 2102212464
        %v7361 = vsel %vm7357, %v7345, %v7360
        %v7362 = vsel %vm7356, %v7359, %v7361
        %v7363 = vsel %vm7355, %v7342, %v7345
        %v7364 = vsel %vm7358, %v7351, 920167782
        %v7365 = vsel %vm7357, %v7348, %v7364
        %v7366 = vsel %vm7356, %v7363, %v7365
        %v7367 = vsel %vm7355, %v7345, %v7348
        %v7368 = vsel %vm7358, %v7354, 1326507024
        %v7369 = vsel %vm7357, %v7351, %v7368
        %v7370 = vsel %vm7356, %v7367, %v7369
        %v7371 = vshll.u32 %v7331, 8
        %v7372 = vmul.u32.u64.compose %v7371, %v7370
        %v7373 = vextract.low.u32 %v7372
        %v7374 = vextract.high.u32 %v7372
        %v7375 = vmul.u32.u64.compose %v7371, %v7366
        %v7376 = vextract.low.u32 %v7375
        %v7377 = vextract.high.u32 %v7375
        %v7378 = vmul.u32 %v7371, %v7362
        %v7379 = vadd.s32 %v7374, %v7376
        %vm7380 = vc.u32 %v7374, %v7376
        %v7381 = vadd.s32 %v7377, 1
        %v7382 = vsel %vm7380, %v7381, %v7377
        %v7383 = vadd.s32 %v7378, %v7382
        %v7384 = vadd.s32 %v7383, 536870912
        %v7385 = vshrl.u32 %v7384, 30
        %v7386 = vshll.u32 %v7385, 30
        %v7387 = vsub.s32 %v7383, %v7386
        %vm7388 = vcmp.lt.s32.totalorder %v7387, 0
        %v7389 = vsub.s32 0, %v7387
        %v7390 = vsel %vm7388, %v7389, %v7387
        %v7391 = vclz %v7390
        %v7392 = vsub.s32 %v7391, 2
        %vm7393 = vcmp.gt.s32.totalorder 0, %v7392
        %v7394 = vsel %vm7393, 0, %v7392
        %v7395 = vsub.s32 32, %v7394
        %v7396 = vshll.u32 %v7387, %v7394
        %v7397 = vshrl.u32 %v7379, %v7395
        %v7398 = vor.u32 %v7396, %v7397
        %v7399 = vsub.s32 4294967266, %v7394
        %v7400 = vadd.s32 %v7399, 127
        %v7401 = vshll.u32 %v7400, 23
        %v7402 = vor.u32 4788187, %v7401
        %v7403 = vand.u32 2147483647, %v7402
        %v7405 = vcvt.s32.f32 %v7398
        %v7406 = vmul.f32 %v7405, %v7403
        %v7407 = vxor.u32 %v7406, 2147483648
        %v7408 = vsel %vm7325, %v7407, %v7406
        %v7409 = vsub.s32 4, %v7385
        %v7410 = vsel %vm7325, %v7409, %v7385
        %v7411 = vsel %vm7324, %v6998, %v7408
        %v7412 = vsel %vm7324, 0, %v7410
        %v7413 = vcosq.f32.pop %v7411
        %v7414 = vsinq.f32.pop %v7411
        %vm7415 = vweird.f32 %v6998
        %v7416 = vadd.s32 %v7412, 3
        %v7417 = vand.u32 %v7416, 3
        %vm7418 = vcmp.lt.s32.totalorder %v7417, 2
        %vm7419 = vcmp.eq.s32.totalorder %v7417, 0
        %v7420 = vxor.u32 %v7414, 2147483648
        %v7421 = vsel %vm7419, %v7413, %v7420
        %vm7422 = vcmp.eq.s32.totalorder %v7417, 2
        %v7423 = vxor.u32 %v7413, 2147483648
        %v7424 = vsel %vm7422, %v7423, %v7414
        %v7425 = vsel %vm7418, %v7421, %v7424
        %v7426 = vsel %vm7415, nan, %v7425
        %v7427 = vand.u32 2147483647, %v6999
        %vm7428 = vcmp.le.f32.partialorder %v7427, 0.7853982
        %vm7429 = vcmp.lt.s32.totalorder %v6999, 0
        %v7430 = vand.u32 %v6999, 2139095040
        %v7431 = vshrl.u32 %v7430, 23
        %v7432 = vsub.s32 %v7431, 127
        %v7433 = vand.u32 2147483647, %v6999
        %v7434 = vand.u32 %v7433, 8388607
        %v7435 = vor.u32 %v7434, 8388608
        %v7436 = vsub.s32 0, %v7435
        %v7437 = vadd.s32 %v7432, 1
        %vm7438 = vcmp.gt.s32.totalorder %v7437, 0
        %v7439 = vsel %vm7438, %v7437, 0
        %v7440 = vshrl.u32 %v7439, 5
        %v7441 = vand.u32 %v7439, 31
        %v7442 = vsub.s32 32, %v7441
        %v7443 = vshrl.u32 683565275, %v7442
        %v7444 = vshll.u32 683565275, %v7441
        %v7445 = vshrl.u32 2475754826, %v7442
        %v7446 = vor.u32 %v7444, %v7445
        %v7447 = vshll.u32 2475754826, %v7441
        %v7448 = vshrl.u32 2131351028, %v7442
        %v7449 = vor.u32 %v7447, %v7448
        %v7450 = vshll.u32 2131351028, %v7441
        %v7451 = vshrl.u32 2102212464, %v7442
        %v7452 = vor.u32 %v7450, %v7451
        %v7453 = vshll.u32 2102212464, %v7441
        %v7454 = vshrl.u32 920167782, %v7442
        %v7455 = vor.u32 %v7453, %v7454
        %v7456 = vshll.u32 920167782, %v7441
        %v7457 = vshrl.u32 1326507024, %v7442
        %v7458 = vor.u32 %v7456, %v7457
        %vm7459 = vcmp.lt.s32.totalorder %v7440, 1
        %vm7460 = vcmp.lt.s32.totalorder %v7440, 2
        %vm7461 = vcmp.lt.s32.totalorder %v7440, 3
        %vm7462 = vcmp.lt.s32.totalorder %v7440, 4
        %v7463 = vsel %vm7459, %v7443, %v7446
        %v7464 = vsel %vm7462, %v7452, 2102212464
        %v7465 = vsel %vm7461, %v7449, %v7464
        %v7466 = vsel %vm7460, %v7463, %v7465
        %v7467 = vsel %vm7459, %v7446, %v7449
        %v7468 = vsel %vm7462, %v7455, 920167782
        %v7469 = vsel %vm7461, %v7452, %v7468
        %v7470 = vsel %vm7460, %v7467, %v7469
        %v7471 = vsel %vm7459, %v7449, %v7452
        %v7472 = vsel %vm7462, %v7458, 1326507024
        %v7473 = vsel %vm7461, %v7455, %v7472
        %v7474 = vsel %vm7460, %v7471, %v7473
        %v7475 = vshll.u32 %v7435, 8
        %v7476 = vmul.u32.u64.compose %v7475, %v7474
        %v7477 = vextract.low.u32 %v7476
        %v7478 = vextract.high.u32 %v7476
        %v7479 = vmul.u32.u64.compose %v7475, %v7470
        %v7480 = vextract.low.u32 %v7479
        %v7481 = vextract.high.u32 %v7479
        %v7482 = vmul.u32 %v7475, %v7466
        %v7483 = vadd.s32 %v7478, %v7480
        %vm7484 = vc.u32 %v7478, %v7480
        %v7485 = vadd.s32 %v7481, 1
        %v7486 = vsel %vm7484, %v7485, %v7481
        %v7487 = vadd.s32 %v7482, %v7486
        %v7488 = vadd.s32 %v7487, 536870912
        %v7489 = vshrl.u32 %v7488, 30
        %v7490 = vshll.u32 %v7489, 30
        %v7491 = vsub.s32 %v7487, %v7490
        %vm7492 = vcmp.lt.s32.totalorder %v7491, 0
        %v7493 = vsub.s32 0, %v7491
        %v7494 = vsel %vm7492, %v7493, %v7491
        %v7495 = vclz %v7494
        %v7496 = vsub.s32 %v7495, 2
        %vm7497 = vcmp.gt.s32.totalorder 0, %v7496
        %v7498 = vsel %vm7497, 0, %v7496
        %v7499 = vsub.s32 32, %v7498
        %v7500 = vshll.u32 %v7491, %v7498
        %v7501 = vshrl.u32 %v7483, %v7499
        %v7502 = vor.u32 %v7500, %v7501
        %v7503 = vsub.s32 4294967266, %v7498
        %v7504 = vadd.s32 %v7503, 127
        %v7505 = vshll.u32 %v7504, 23
        %v7506 = vor.u32 4788187, %v7505
        %v7507 = vand.u32 2147483647, %v7506
        %v7509 = vcvt.s32.f32 %v7502
        %v7510 = vmul.f32 %v7509, %v7507
        %v7511 = vxor.u32 %v7510, 2147483648
        %v7512 = vsel %vm7429, %v7511, %v7510
        %v7513 = vsub.s32 4, %v7489
        %v7514 = vsel %vm7429, %v7513, %v7489
        %v7515 = vsel %vm7428, %v6999, %v7512
        %v7516 = vsel %vm7428, 0, %v7514
        %v7517 = vcosq.f32.pop %v7515
        %v7518 = vsinq.f32.pop %v7515
        %vm7519 = vweird.f32 %v6999
        %v7520 = vadd.s32 %v7516, 3
        %v7521 = vand.u32 %v7520, 3
        %vm7522 = vcmp.lt.s32.totalorder %v7521, 2
        %vm7523 = vcmp.eq.s32.totalorder %v7521, 0
        %v7524 = vxor.u32 %v7518, 2147483648
        %v7525 = vsel %vm7523, %v7517, %v7524
        %vm7526 = vcmp.eq.s32.totalorder %v7521, 2
        %v7527 = vxor.u32 %v7517, 2147483648
        %v7528 = vsel %vm7526, %v7527, %v7518
        %v7529 = vsel %vm7522, %v7525, %v7528
        %v7530 = vsel %vm7519, nan, %v7529
        %v7531 = vand.u32 2147483647, %v7000
        %vm7532 = vcmp.le.f32.partialorder %v7531, 0.7853982
        %vm7533 = vcmp.lt.s32.totalorder %v7000, 0
        %v7534 = vand.u32 %v7000, 2139095040
        %v7535 = vshrl.u32 %v7534, 23
        %v7536 = vsub.s32 %v7535, 127
        %v7537 = vand.u32 2147483647, %v7000
        %v7538 = vand.u32 %v7537, 8388607
        %v7539 = vor.u32 %v7538, 8388608
        %v7540 = vsub.s32 0, %v7539
        %v7541 = vadd.s32 %v7536, 1
        %vm7542 = vcmp.gt.s32.totalorder %v7541, 0
        %v7543 = vsel %vm7542, %v7541, 0
        %v7544 = vshrl.u32 %v7543, 5
        %v7545 = vand.u32 %v7543, 31
        %v7546 = vsub.s32 32, %v7545
        %v7547 = vshrl.u32 683565275, %v7546
        %v7548 = vshll.u32 683565275, %v7545
        %v7549 = vshrl.u32 2475754826, %v7546
        %v7550 = vor.u32 %v7548, %v7549
        %v7551 = vshll.u32 2475754826, %v7545
        %v7552 = vshrl.u32 2131351028, %v7546
        %v7553 = vor.u32 %v7551, %v7552
        %v7554 = vshll.u32 2131351028, %v7545
        %v7555 = vshrl.u32 2102212464, %v7546
        %v7556 = vor.u32 %v7554, %v7555
        %v7557 = vshll.u32 2102212464, %v7545
        %v7558 = vshrl.u32 920167782, %v7546
        %v7559 = vor.u32 %v7557, %v7558
        %v7560 = vshll.u32 920167782, %v7545
        %v7561 = vshrl.u32 1326507024, %v7546
        %v7562 = vor.u32 %v7560, %v7561
        %vm7563 = vcmp.lt.s32.totalorder %v7544, 1
        %vm7564 = vcmp.lt.s32.totalorder %v7544, 2
        %vm7565 = vcmp.lt.s32.totalorder %v7544, 3
        %vm7566 = vcmp.lt.s32.totalorder %v7544, 4
        %v7567 = vsel %vm7563, %v7547, %v7550
        %v7568 = vsel %vm7566, %v7556, 2102212464
        %v7569 = vsel %vm7565, %v7553, %v7568
        %v7570 = vsel %vm7564, %v7567, %v7569
        %v7571 = vsel %vm7563, %v7550, %v7553
        %v7572 = vsel %vm7566, %v7559, 920167782
        %v7573 = vsel %vm7565, %v7556, %v7572
        %v7574 = vsel %vm7564, %v7571, %v7573
        %v7575 = vsel %vm7563, %v7553, %v7556
        %v7576 = vsel %vm7566, %v7562, 1326507024
        %v7577 = vsel %vm7565, %v7559, %v7576
        %v7578 = vsel %vm7564, %v7575, %v7577
        %v7579 = vshll.u32 %v7539, 8
        %v7580 = vmul.u32.u64.compose %v7579, %v7578
        %v7581 = vextract.low.u32 %v7580
        %v7582 = vextract.high.u32 %v7580
        %v7583 = vmul.u32.u64.compose %v7579, %v7574
        %v7584 = vextract.low.u32 %v7583
        %v7585 = vextract.high.u32 %v7583
        %v7586 = vmul.u32 %v7579, %v7570
        %v7587 = vadd.s32 %v7582, %v7584
        %vm7588 = vc.u32 %v7582, %v7584
        %v7589 = vadd.s32 %v7585, 1
        %v7590 = vsel %vm7588, %v7589, %v7585
        %v7591 = vadd.s32 %v7586, %v7590
        %v7592 = vadd.s32 %v7591, 536870912
        %v7593 = vshrl.u32 %v7592, 30
        %v7594 = vshll.u32 %v7593, 30
        %v7595 = vsub.s32 %v7591, %v7594
        %vm7596 = vcmp.lt.s32.totalorder %v7595, 0
        %v7597 = vsub.s32 0, %v7595
        %v7598 = vsel %vm7596, %v7597, %v7595
        %v7599 = vclz %v7598
        %v7600 = vsub.s32 %v7599, 2
        %vm7601 = vcmp.gt.s32.totalorder 0, %v7600
        %v7602 = vsel %vm7601, 0, %v7600
        %v7603 = vsub.s32 32, %v7602
        %v7604 = vshll.u32 %v7595, %v7602
        %v7605 = vshrl.u32 %v7587, %v7603
        %v7606 = vor.u32 %v7604, %v7605
        %v7607 = vsub.s32 4294967266, %v7602
        %v7608 = vadd.s32 %v7607, 127
        %v7609 = vshll.u32 %v7608, 23
        %v7610 = vor.u32 4788187, %v7609
        %v7611 = vand.u32 2147483647, %v7610
        %v7613 = vcvt.s32.f32 %v7606
        %v7614 = vmul.f32 %v7613, %v7611
        %v7615 = vxor.u32 %v7614, 2147483648
        %v7616 = vsel %vm7533, %v7615, %v7614
        %v7617 = vsub.s32 4, %v7593
        %v7618 = vsel %vm7533, %v7617, %v7593
        %v7619 = vsel %vm7532, %v7000, %v7616
        %v7620 = vsel %vm7532, 0, %v7618
        %v7621 = vcosq.f32.pop %v7619
        %v7622 = vsinq.f32.pop %v7619
        %vm7623 = vweird.f32 %v7000
        %v7624 = vadd.s32 %v7620, 3
        %v7625 = vand.u32 %v7624, 3
        %vm7626 = vcmp.lt.s32.totalorder %v7625, 2
        %vm7627 = vcmp.eq.s32.totalorder %v7625, 0
        %v7628 = vxor.u32 %v7622, 2147483648
        %v7629 = vsel %vm7627, %v7621, %v7628
        %vm7630 = vcmp.eq.s32.totalorder %v7625, 2
        %v7631 = vxor.u32 %v7621, 2147483648
        %v7632 = vsel %vm7630, %v7631, %v7622
        %v7633 = vsel %vm7626, %v7629, %v7632
        %v7634 = vsel %vm7623, nan, %v7633
        %v7635 = vand.u32 2147483647, %v7001
        %vm7636 = vcmp.le.f32.partialorder %v7635, 0.7853982
        %vm7637 = vcmp.lt.s32.totalorder %v7001, 0
        %v7638 = vand.u32 %v7001, 2139095040
        %v7639 = vshrl.u32 %v7638, 23
        %v7640 = vsub.s32 %v7639, 127
        %v7641 = vand.u32 2147483647, %v7001
        %v7642 = vand.u32 %v7641, 8388607
        %v7643 = vor.u32 %v7642, 8388608
        %v7644 = vsub.s32 0, %v7643
        %v7645 = vadd.s32 %v7640, 1
        %vm7646 = vcmp.gt.s32.totalorder %v7645, 0
        %v7647 = vsel %vm7646, %v7645, 0
        %v7648 = vshrl.u32 %v7647, 5
        %v7649 = vand.u32 %v7647, 31
        %v7650 = vsub.s32 32, %v7649
        %v7651 = vshrl.u32 683565275, %v7650
        %v7652 = vshll.u32 683565275, %v7649
        %v7653 = vshrl.u32 2475754826, %v7650
        %v7654 = vor.u32 %v7652, %v7653
        %v7655 = vshll.u32 2475754826, %v7649
        %v7656 = vshrl.u32 2131351028, %v7650
        %v7657 = vor.u32 %v7655, %v7656
        %v7658 = vshll.u32 2131351028, %v7649
        %v7659 = vshrl.u32 2102212464, %v7650
        %v7660 = vor.u32 %v7658, %v7659
        %v7661 = vshll.u32 2102212464, %v7649
        %v7662 = vshrl.u32 920167782, %v7650
        %v7663 = vor.u32 %v7661, %v7662
        %v7664 = vshll.u32 920167782, %v7649
        %v7665 = vshrl.u32 1326507024, %v7650
        %v7666 = vor.u32 %v7664, %v7665
        %vm7667 = vcmp.lt.s32.totalorder %v7648, 1
        %vm7668 = vcmp.lt.s32.totalorder %v7648, 2
        %vm7669 = vcmp.lt.s32.totalorder %v7648, 3
        %vm7670 = vcmp.lt.s32.totalorder %v7648, 4
        %v7671 = vsel %vm7667, %v7651, %v7654
        %v7672 = vsel %vm7670, %v7660, 2102212464
        %v7673 = vsel %vm7669, %v7657, %v7672
        %v7674 = vsel %vm7668, %v7671, %v7673
        %v7675 = vsel %vm7667, %v7654, %v7657
        %v7676 = vsel %vm7670, %v7663, 920167782
        %v7677 = vsel %vm7669, %v7660, %v7676
        %v7678 = vsel %vm7668, %v7675, %v7677
        %v7679 = vsel %vm7667, %v7657, %v7660
        %v7680 = vsel %vm7670, %v7666, 1326507024
        %v7681 = vsel %vm7669, %v7663, %v7680
        %v7682 = vsel %vm7668, %v7679, %v7681
        %v7683 = vshll.u32 %v7643, 8
        %v7684 = vmul.u32.u64.compose %v7683, %v7682
        %v7685 = vextract.low.u32 %v7684
        %v7686 = vextract.high.u32 %v7684
        %v7687 = vmul.u32.u64.compose %v7683, %v7678
        %v7688 = vextract.low.u32 %v7687
        %v7689 = vextract.high.u32 %v7687
        %v7690 = vmul.u32 %v7683, %v7674
        %v7691 = vadd.s32 %v7686, %v7688
        %vm7692 = vc.u32 %v7686, %v7688
        %v7693 = vadd.s32 %v7689, 1
        %v7694 = vsel %vm7692, %v7693, %v7689
        %v7695 = vadd.s32 %v7690, %v7694
        %v7696 = vadd.s32 %v7695, 536870912
        %v7697 = vshrl.u32 %v7696, 30
        %v7698 = vshll.u32 %v7697, 30
        %v7699 = vsub.s32 %v7695, %v7698
        %vm7700 = vcmp.lt.s32.totalorder %v7699, 0
        %v7701 = vsub.s32 0, %v7699
        %v7702 = vsel %vm7700, %v7701, %v7699
        %v7703 = vclz %v7702
        %v7704 = vsub.s32 %v7703, 2
        %vm7705 = vcmp.gt.s32.totalorder 0, %v7704
        %v7706 = vsel %vm7705, 0, %v7704
        %v7707 = vsub.s32 32, %v7706
        %v7708 = vshll.u32 %v7699, %v7706
        %v7709 = vshrl.u32 %v7691, %v7707
        %v7710 = vor.u32 %v7708, %v7709
        %v7711 = vsub.s32 4294967266, %v7706
        %v7712 = vadd.s32 %v7711, 127
        %v7713 = vshll.u32 %v7712, 23
        %v7714 = vor.u32 4788187, %v7713
        %v7715 = vand.u32 2147483647, %v7714
        %v7717 = vcvt.s32.f32 %v7710
        %v7718 = vmul.f32 %v7717, %v7715
        %v7719 = vxor.u32 %v7718, 2147483648
        %v7720 = vsel %vm7637, %v7719, %v7718
        %v7721 = vsub.s32 4, %v7697
        %v7722 = vsel %vm7637, %v7721, %v7697
        %v7723 = vsel %vm7636, %v7001, %v7720
        %v7724 = vsel %vm7636, 0, %v7722
        %v7725 = vcosq.f32.pop %v7723
        %v7726 = vsinq.f32.pop %v7723
        %vm7727 = vweird.f32 %v7001
        %v7728 = vadd.s32 %v7724, 3
        %v7729 = vand.u32 %v7728, 3
        %vm7730 = vcmp.lt.s32.totalorder %v7729, 2
        %vm7731 = vcmp.eq.s32.totalorder %v7729, 0
        %v7732 = vxor.u32 %v7726, 2147483648
        %v7733 = vsel %vm7731, %v7725, %v7732
        %vm7734 = vcmp.eq.s32.totalorder %v7729, 2
        %v7735 = vxor.u32 %v7725, 2147483648
        %v7736 = vsel %vm7734, %v7735, %v7726
        %v7737 = vsel %vm7730, %v7733, %v7736
        %v7738 = vsel %vm7727, nan, %v7737
        %v7739 = vand.u32 2147483647, %v7002
        %vm7740 = vcmp.le.f32.partialorder %v7739, 0.7853982
        %vm7741 = vcmp.lt.s32.totalorder %v7002, 0
        %v7742 = vand.u32 %v7002, 2139095040
        %v7743 = vshrl.u32 %v7742, 23
        %v7744 = vsub.s32 %v7743, 127
        %v7745 = vand.u32 2147483647, %v7002
        %v7746 = vand.u32 %v7745, 8388607
        %v7747 = vor.u32 %v7746, 8388608
        %v7748 = vsub.s32 0, %v7747
        %v7749 = vadd.s32 %v7744, 1
        %vm7750 = vcmp.gt.s32.totalorder %v7749, 0
        %v7751 = vsel %vm7750, %v7749, 0
        %v7752 = vshrl.u32 %v7751, 5
        %v7753 = vand.u32 %v7751, 31
        %v7754 = vsub.s32 32, %v7753
        %v7755 = vshrl.u32 683565275, %v7754
        %v7756 = vshll.u32 683565275, %v7753
        %v7757 = vshrl.u32 2475754826, %v7754
        %v7758 = vor.u32 %v7756, %v7757
        %v7759 = vshll.u32 2475754826, %v7753
        %v7760 = vshrl.u32 2131351028, %v7754
        %v7761 = vor.u32 %v7759, %v7760
        %v7762 = vshll.u32 2131351028, %v7753
        %v7763 = vshrl.u32 2102212464, %v7754
        %v7764 = vor.u32 %v7762, %v7763
        %v7765 = vshll.u32 2102212464, %v7753
        %v7766 = vshrl.u32 920167782, %v7754
        %v7767 = vor.u32 %v7765, %v7766
        %v7768 = vshll.u32 920167782, %v7753
        %v7769 = vshrl.u32 1326507024, %v7754
        %v7770 = vor.u32 %v7768, %v7769
        %vm7771 = vcmp.lt.s32.totalorder %v7752, 1
        %vm7772 = vcmp.lt.s32.totalorder %v7752, 2
        %vm7773 = vcmp.lt.s32.totalorder %v7752, 3
        %vm7774 = vcmp.lt.s32.totalorder %v7752, 4
        %v7775 = vsel %vm7771, %v7755, %v7758
        %v7776 = vsel %vm7774, %v7764, 2102212464
        %v7777 = vsel %vm7773, %v7761, %v7776
        %v7778 = vsel %vm7772, %v7775, %v7777
        %v7779 = vsel %vm7771, %v7758, %v7761
        %v7780 = vsel %vm7774, %v7767, 920167782
        %v7781 = vsel %vm7773, %v7764, %v7780
        %v7782 = vsel %vm7772, %v7779, %v7781
        %v7783 = vsel %vm7771, %v7761, %v7764
        %v7784 = vsel %vm7774, %v7770, 1326507024
        %v7785 = vsel %vm7773, %v7767, %v7784
        %v7786 = vsel %vm7772, %v7783, %v7785
        %v7787 = vshll.u32 %v7747, 8
        %v7788 = vmul.u32.u64.compose %v7787, %v7786
        %v7789 = vextract.low.u32 %v7788
        %v7790 = vextract.high.u32 %v7788
        %v7791 = vmul.u32.u64.compose %v7787, %v7782
        %v7792 = vextract.low.u32 %v7791
        %v7793 = vextract.high.u32 %v7791
        %v7794 = vmul.u32 %v7787, %v7778
        %v7795 = vadd.s32 %v7790, %v7792
        %vm7796 = vc.u32 %v7790, %v7792
        %v7797 = vadd.s32 %v7793, 1
        %v7798 = vsel %vm7796, %v7797, %v7793
        %v7799 = vadd.s32 %v7794, %v7798
        %v7800 = vadd.s32 %v7799, 536870912
        %v7801 = vshrl.u32 %v7800, 30
        %v7802 = vshll.u32 %v7801, 30
        %v7803 = vsub.s32 %v7799, %v7802
        %vm7804 = vcmp.lt.s32.totalorder %v7803, 0
        %v7805 = vsub.s32 0, %v7803
        %v7806 = vsel %vm7804, %v7805, %v7803
        %v7807 = vclz %v7806
        %v7808 = vsub.s32 %v7807, 2
        %vm7809 = vcmp.gt.s32.totalorder 0, %v7808
        %v7810 = vsel %vm7809, 0, %v7808
        %v7811 = vsub.s32 32, %v7810
        %v7812 = vshll.u32 %v7803, %v7810
        %v7813 = vshrl.u32 %v7795, %v7811
        %v7814 = vor.u32 %v7812, %v7813
        %v7815 = vsub.s32 4294967266, %v7810
        %v7816 = vadd.s32 %v7815, 127
        %v7817 = vshll.u32 %v7816, 23
        %v7818 = vor.u32 4788187, %v7817
        %v7819 = vand.u32 2147483647, %v7818
        %v7821 = vcvt.s32.f32 %v7814
        %v7822 = vmul.f32 %v7821, %v7819
        %v7823 = vxor.u32 %v7822, 2147483648
        %v7824 = vsel %vm7741, %v7823, %v7822
        %v7825 = vsub.s32 4, %v7801
        %v7826 = vsel %vm7741, %v7825, %v7801
        %v7827 = vsel %vm7740, %v7002, %v7824
        %v7828 = vsel %vm7740, 0, %v7826
        %v7829 = vcosq.f32.pop %v7827
        %v7830 = vsinq.f32.pop %v7827
        %vm7831 = vweird.f32 %v7002
        %v7832 = vadd.s32 %v7828, 3
        %v7833 = vand.u32 %v7832, 3
        %vm7834 = vcmp.lt.s32.totalorder %v7833, 2
        %vm7835 = vcmp.eq.s32.totalorder %v7833, 0
        %v7836 = vxor.u32 %v7830, 2147483648
        %v7837 = vsel %vm7835, %v7829, %v7836
        %vm7838 = vcmp.eq.s32.totalorder %v7833, 2
        %v7839 = vxor.u32 %v7829, 2147483648
        %v7840 = vsel %vm7838, %v7839, %v7830
        %v7841 = vsel %vm7834, %v7837, %v7840
        %v7842 = vsel %vm7831, nan, %v7841
        %v7843 = vand.u32 2147483647, %v7003
        %vm7844 = vcmp.le.f32.partialorder %v7843, 0.7853982
        %vm7845 = vcmp.lt.s32.totalorder %v7003, 0
        %v7846 = vand.u32 %v7003, 2139095040
        %v7847 = vshrl.u32 %v7846, 23
        %v7848 = vsub.s32 %v7847, 127
        %v7849 = vand.u32 2147483647, %v7003
        %v7850 = vand.u32 %v7849, 8388607
        %v7851 = vor.u32 %v7850, 8388608
        %v7852 = vsub.s32 0, %v7851
        %v7853 = vadd.s32 %v7848, 1
        %vm7854 = vcmp.gt.s32.totalorder %v7853, 0
        %v7855 = vsel %vm7854, %v7853, 0
        %v7856 = vshrl.u32 %v7855, 5
        %v7857 = vand.u32 %v7855, 31
        %v7858 = vsub.s32 32, %v7857
        %v7859 = vshrl.u32 683565275, %v7858
        %v7860 = vshll.u32 683565275, %v7857
        %v7861 = vshrl.u32 2475754826, %v7858
        %v7862 = vor.u32 %v7860, %v7861
        %v7863 = vshll.u32 2475754826, %v7857
        %v7864 = vshrl.u32 2131351028, %v7858
        %v7865 = vor.u32 %v7863, %v7864
        %v7866 = vshll.u32 2131351028, %v7857
        %v7867 = vshrl.u32 2102212464, %v7858
        %v7868 = vor.u32 %v7866, %v7867
        %v7869 = vshll.u32 2102212464, %v7857
        %v7870 = vshrl.u32 920167782, %v7858
        %v7871 = vor.u32 %v7869, %v7870
        %v7872 = vshll.u32 920167782, %v7857
        %v7873 = vshrl.u32 1326507024, %v7858
        %v7874 = vor.u32 %v7872, %v7873
        %vm7875 = vcmp.lt.s32.totalorder %v7856, 1
        %vm7876 = vcmp.lt.s32.totalorder %v7856, 2
        %vm7877 = vcmp.lt.s32.totalorder %v7856, 3
        %vm7878 = vcmp.lt.s32.totalorder %v7856, 4
        %v7879 = vsel %vm7875, %v7859, %v7862
        %v7880 = vsel %vm7878, %v7868, 2102212464
        %v7881 = vsel %vm7877, %v7865, %v7880
        %v7882 = vsel %vm7876, %v7879, %v7881
        %v7883 = vsel %vm7875, %v7862, %v7865
        %v7884 = vsel %vm7878, %v7871, 920167782
        %v7885 = vsel %vm7877, %v7868, %v7884
        %v7886 = vsel %vm7876, %v7883, %v7885
        %v7887 = vsel %vm7875, %v7865, %v7868
        %v7888 = vsel %vm7878, %v7874, 1326507024
        %v7889 = vsel %vm7877, %v7871, %v7888
        %v7890 = vsel %vm7876, %v7887, %v7889
        %v7891 = vshll.u32 %v7851, 8
        %v7892 = vmul.u32.u64.compose %v7891, %v7890
        %v7893 = vextract.low.u32 %v7892
        %v7894 = vextract.high.u32 %v7892
        %v7895 = vmul.u32.u64.compose %v7891, %v7886
        %v7896 = vextract.low.u32 %v7895
        %v7897 = vextract.high.u32 %v7895
        %v7898 = vmul.u32 %v7891, %v7882
        %v7899 = vadd.s32 %v7894, %v7896
        %vm7900 = vc.u32 %v7894, %v7896
        %v7901 = vadd.s32 %v7897, 1
        %v7902 = vsel %vm7900, %v7901, %v7897
        %v7903 = vadd.s32 %v7898, %v7902
        %v7904 = vadd.s32 %v7903, 536870912
        %v7905 = vshrl.u32 %v7904, 30
        %v7906 = vshll.u32 %v7905, 30
        %v7907 = vsub.s32 %v7903, %v7906
        %vm7908 = vcmp.lt.s32.totalorder %v7907, 0
        %v7909 = vsub.s32 0, %v7907
        %v7910 = vsel %vm7908, %v7909, %v7907
        %v7911 = vclz %v7910
        %v7912 = vsub.s32 %v7911, 2
        %vm7913 = vcmp.gt.s32.totalorder 0, %v7912
        %v7914 = vsel %vm7913, 0, %v7912
        %v7915 = vsub.s32 32, %v7914
        %v7916 = vshll.u32 %v7907, %v7914
        %v7917 = vshrl.u32 %v7899, %v7915
        %v7918 = vor.u32 %v7916, %v7917
        %v7919 = vsub.s32 4294967266, %v7914
        %v7920 = vadd.s32 %v7919, 127
        %v7921 = vshll.u32 %v7920, 23
        %v7922 = vor.u32 4788187, %v7921
        %v7923 = vand.u32 2147483647, %v7922
        %v7925 = vcvt.s32.f32 %v7918
        %v7926 = vmul.f32 %v7925, %v7923
        %v7927 = vxor.u32 %v7926, 2147483648
        %v7928 = vsel %vm7845, %v7927, %v7926
        %v7929 = vsub.s32 4, %v7905
        %v7930 = vsel %vm7845, %v7929, %v7905
        %v7931 = vsel %vm7844, %v7003, %v7928
        %v7932 = vsel %vm7844, 0, %v7930
        %v7933 = vcosq.f32.pop %v7931
        %v7934 = vsinq.f32.pop %v7931
        %vm7935 = vweird.f32 %v7003
        %v7936 = vadd.s32 %v7932, 3
        %v7937 = vand.u32 %v7936, 3
        %vm7938 = vcmp.lt.s32.totalorder %v7937, 2
        %vm7939 = vcmp.eq.s32.totalorder %v7937, 0
        %v7940 = vxor.u32 %v7934, 2147483648
        %v7941 = vsel %vm7939, %v7933, %v7940
        %vm7942 = vcmp.eq.s32.totalorder %v7937, 2
        %v7943 = vxor.u32 %v7933, 2147483648
        %v7944 = vsel %vm7942, %v7943, %v7934
        %v7945 = vsel %vm7938, %v7941, %v7944
        %v7946 = vsel %vm7935, nan, %v7945
        %v7947 = vand.u32 2147483647, %v7004
        %vm7948 = vcmp.le.f32.partialorder %v7947, 0.7853982
        %vm7949 = vcmp.lt.s32.totalorder %v7004, 0
        %v7950 = vand.u32 %v7004, 2139095040
        %v7951 = vshrl.u32 %v7950, 23
        %v7952 = vsub.s32 %v7951, 127
        %v7953 = vand.u32 2147483647, %v7004
        %v7954 = vand.u32 %v7953, 8388607
        %v7955 = vor.u32 %v7954, 8388608
        %v7956 = vsub.s32 0, %v7955
        %v7957 = vadd.s32 %v7952, 1
        %vm7958 = vcmp.gt.s32.totalorder %v7957, 0
        %v7959 = vsel %vm7958, %v7957, 0
        %v7960 = vshrl.u32 %v7959, 5
        %v7961 = vand.u32 %v7959, 31
        %v7962 = vsub.s32 32, %v7961
        %v7963 = vshrl.u32 683565275, %v7962
        %v7964 = vshll.u32 683565275, %v7961
        %v7965 = vshrl.u32 2475754826, %v7962
        %v7966 = vor.u32 %v7964, %v7965
        %v7967 = vshll.u32 2475754826, %v7961
        %v7968 = vshrl.u32 2131351028, %v7962
        %v7969 = vor.u32 %v7967, %v7968
        %v7970 = vshll.u32 2131351028, %v7961
        %v7971 = vshrl.u32 2102212464, %v7962
        %v7972 = vor.u32 %v7970, %v7971
        %v7973 = vshll.u32 2102212464, %v7961
        %v7974 = vshrl.u32 920167782, %v7962
        %v7975 = vor.u32 %v7973, %v7974
        %v7976 = vshll.u32 920167782, %v7961
        %v7977 = vshrl.u32 1326507024, %v7962
        %v7978 = vor.u32 %v7976, %v7977
        %vm7979 = vcmp.lt.s32.totalorder %v7960, 1
        %vm7980 = vcmp.lt.s32.totalorder %v7960, 2
        %vm7981 = vcmp.lt.s32.totalorder %v7960, 3
        %vm7982 = vcmp.lt.s32.totalorder %v7960, 4
        %v7983 = vsel %vm7979, %v7963, %v7966
        %v7984 = vsel %vm7982, %v7972, 2102212464
        %v7985 = vsel %vm7981, %v7969, %v7984
        %v7986 = vsel %vm7980, %v7983, %v7985
        %v7987 = vsel %vm7979, %v7966, %v7969
        %v7988 = vsel %vm7982, %v7975, 920167782
        %v7989 = vsel %vm7981, %v7972, %v7988
        %v7990 = vsel %vm7980, %v7987, %v7989
        %v7991 = vsel %vm7979, %v7969, %v7972
        %v7992 = vsel %vm7982, %v7978, 1326507024
        %v7993 = vsel %vm7981, %v7975, %v7992
        %v7994 = vsel %vm7980, %v7991, %v7993
        %v7995 = vshll.u32 %v7955, 8
        %v7996 = vmul.u32.u64.compose %v7995, %v7994
        %v7997 = vextract.low.u32 %v7996
        %v7998 = vextract.high.u32 %v7996
        %v7999 = vmul.u32.u64.compose %v7995, %v7990
        %v8000 = vextract.low.u32 %v7999
        %v8001 = vextract.high.u32 %v7999
        %v8002 = vmul.u32 %v7995, %v7986
        %v8003 = vadd.s32 %v7998, %v8000
        %vm8004 = vc.u32 %v7998, %v8000
        %v8005 = vadd.s32 %v8001, 1
        %v8006 = vsel %vm8004, %v8005, %v8001
        %v8007 = vadd.s32 %v8002, %v8006
        %v8008 = vadd.s32 %v8007, 536870912
        %v8009 = vshrl.u32 %v8008, 30
        %v8010 = vshll.u32 %v8009, 30
        %v8011 = vsub.s32 %v8007, %v8010
        %vm8012 = vcmp.lt.s32.totalorder %v8011, 0
        %v8013 = vsub.s32 0, %v8011
        %v8014 = vsel %vm8012, %v8013, %v8011
        %v8015 = vclz %v8014
        %v8016 = vsub.s32 %v8015, 2
        %vm8017 = vcmp.gt.s32.totalorder 0, %v8016
        %v8018 = vsel %vm8017, 0, %v8016
        %v8019 = vsub.s32 32, %v8018
        %v8020 = vshll.u32 %v8011, %v8018
        %v8021 = vshrl.u32 %v8003, %v8019
        %v8022 = vor.u32 %v8020, %v8021
        %v8023 = vsub.s32 4294967266, %v8018
        %v8024 = vadd.s32 %v8023, 127
        %v8025 = vshll.u32 %v8024, 23
        %v8026 = vor.u32 4788187, %v8025
        %v8027 = vand.u32 2147483647, %v8026
        %v8029 = vcvt.s32.f32 %v8022
        %v8030 = vmul.f32 %v8029, %v8027
        %v8031 = vxor.u32 %v8030, 2147483648
        %v8032 = vsel %vm7949, %v8031, %v8030
        %v8033 = vsub.s32 4, %v8009
        %v8034 = vsel %vm7949, %v8033, %v8009
        %v8035 = vsel %vm7948, %v7004, %v8032
        %v8036 = vsel %vm7948, 0, %v8034
        %v8037 = vcosq.f32.pop %v8035
        %v8038 = vsinq.f32.pop %v8035
        %vm8039 = vweird.f32 %v7004
        %v8040 = vadd.s32 %v8036, 3
        %v8041 = vand.u32 %v8040, 3
        %vm8042 = vcmp.lt.s32.totalorder %v8041, 2
        %vm8043 = vcmp.eq.s32.totalorder %v8041, 0
        %v8044 = vxor.u32 %v8038, 2147483648
        %v8045 = vsel %vm8043, %v8037, %v8044
        %vm8046 = vcmp.eq.s32.totalorder %v8041, 2
        %v8047 = vxor.u32 %v8037, 2147483648
        %v8048 = vsel %vm8046, %v8047, %v8038
        %v8049 = vsel %vm8042, %v8045, %v8048
        %v8050 = vsel %vm8039, nan, %v8049
        %v8051 = vand.u32 2147483647, %v7005
        %vm8052 = vcmp.le.f32.partialorder %v8051, 0.7853982
        %vm8053 = vcmp.lt.s32.totalorder %v7005, 0
        %v8054 = vand.u32 %v7005, 2139095040
        %v8055 = vshrl.u32 %v8054, 23
        %v8056 = vsub.s32 %v8055, 127
        %v8057 = vand.u32 2147483647, %v7005
        %v8058 = vand.u32 %v8057, 8388607
        %v8059 = vor.u32 %v8058, 8388608
        %v8060 = vsub.s32 0, %v8059
        %v8061 = vadd.s32 %v8056, 1
        %vm8062 = vcmp.gt.s32.totalorder %v8061, 0
        %v8063 = vsel %vm8062, %v8061, 0
        %v8064 = vshrl.u32 %v8063, 5
        %v8065 = vand.u32 %v8063, 31
        %v8066 = vsub.s32 32, %v8065
        %v8067 = vshrl.u32 683565275, %v8066
        %v8068 = vshll.u32 683565275, %v8065
        %v8069 = vshrl.u32 2475754826, %v8066
        %v8070 = vor.u32 %v8068, %v8069
        %v8071 = vshll.u32 2475754826, %v8065
        %v8072 = vshrl.u32 2131351028, %v8066
        %v8073 = vor.u32 %v8071, %v8072
        %v8074 = vshll.u32 2131351028, %v8065
        %v8075 = vshrl.u32 2102212464, %v8066
        %v8076 = vor.u32 %v8074, %v8075
        %v8077 = vshll.u32 2102212464, %v8065
        %v8078 = vshrl.u32 920167782, %v8066
        %v8079 = vor.u32 %v8077, %v8078
        %v8080 = vshll.u32 920167782, %v8065
        %v8081 = vshrl.u32 1326507024, %v8066
        %v8082 = vor.u32 %v8080, %v8081
        %vm8083 = vcmp.lt.s32.totalorder %v8064, 1
        %vm8084 = vcmp.lt.s32.totalorder %v8064, 2
        %vm8085 = vcmp.lt.s32.totalorder %v8064, 3
        %vm8086 = vcmp.lt.s32.totalorder %v8064, 4
        %v8087 = vsel %vm8083, %v8067, %v8070
        %v8088 = vsel %vm8086, %v8076, 2102212464
        %v8089 = vsel %vm8085, %v8073, %v8088
        %v8090 = vsel %vm8084, %v8087, %v8089
        %v8091 = vsel %vm8083, %v8070, %v8073
        %v8092 = vsel %vm8086, %v8079, 920167782
        %v8093 = vsel %vm8085, %v8076, %v8092
        %v8094 = vsel %vm8084, %v8091, %v8093
        %v8095 = vsel %vm8083, %v8073, %v8076
        %v8096 = vsel %vm8086, %v8082, 1326507024
        %v8097 = vsel %vm8085, %v8079, %v8096
        %v8098 = vsel %vm8084, %v8095, %v8097
        %v8099 = vshll.u32 %v8059, 8
        %v8100 = vmul.u32.u64.compose %v8099, %v8098
        %v8101 = vextract.low.u32 %v8100
        %v8102 = vextract.high.u32 %v8100
        %v8103 = vmul.u32.u64.compose %v8099, %v8094
        %v8104 = vextract.low.u32 %v8103
        %v8105 = vextract.high.u32 %v8103
        %v8106 = vmul.u32 %v8099, %v8090
        %v8107 = vadd.s32 %v8102, %v8104
        %vm8108 = vc.u32 %v8102, %v8104
        %v8109 = vadd.s32 %v8105, 1
        %v8110 = vsel %vm8108, %v8109, %v8105
        %v8111 = vadd.s32 %v8106, %v8110
        %v8112 = vadd.s32 %v8111, 536870912
        %v8113 = vshrl.u32 %v8112, 30
        %v8114 = vshll.u32 %v8113, 30
        %v8115 = vsub.s32 %v8111, %v8114
        %vm8116 = vcmp.lt.s32.totalorder %v8115, 0
        %v8117 = vsub.s32 0, %v8115
        %v8118 = vsel %vm8116, %v8117, %v8115
        %v8119 = vclz %v8118
        %v8120 = vsub.s32 %v8119, 2
        %vm8121 = vcmp.gt.s32.totalorder 0, %v8120
        %v8122 = vsel %vm8121, 0, %v8120
        %v8123 = vsub.s32 32, %v8122
        %v8124 = vshll.u32 %v8115, %v8122
        %v8125 = vshrl.u32 %v8107, %v8123
        %v8126 = vor.u32 %v8124, %v8125
        %v8127 = vsub.s32 4294967266, %v8122
        %v8128 = vadd.s32 %v8127, 127
        %v8129 = vshll.u32 %v8128, 23
        %v8130 = vor.u32 4788187, %v8129
        %v8131 = vand.u32 2147483647, %v8130
        %v8133 = vcvt.s32.f32 %v8126
        %v8134 = vmul.f32 %v8133, %v8131
        %v8135 = vxor.u32 %v8134, 2147483648
        %v8136 = vsel %vm8053, %v8135, %v8134
        %v8137 = vsub.s32 4, %v8113
        %v8138 = vsel %vm8053, %v8137, %v8113
        %v8139 = vsel %vm8052, %v7005, %v8136
        %v8140 = vsel %vm8052, 0, %v8138
        %v8141 = vcosq.f32.pop %v8139
        %v8142 = vsinq.f32.pop %v8139
        %vm8143 = vweird.f32 %v7005
        %v8144 = vadd.s32 %v8140, 3
        %v8145 = vand.u32 %v8144, 3
        %vm8146 = vcmp.lt.s32.totalorder %v8145, 2
        %vm8147 = vcmp.eq.s32.totalorder %v8145, 0
        %v8148 = vxor.u32 %v8142, 2147483648
        %v8149 = vsel %vm8147, %v8141, %v8148
        %vm8150 = vcmp.eq.s32.totalorder %v8145, 2
        %v8151 = vxor.u32 %v8141, 2147483648
        %v8152 = vsel %vm8150, %v8151, %v8142
        %v8153 = vsel %vm8146, %v8149, %v8152
        %v8154 = vsel %vm8143, nan, %v8153
        %v8155 = vand.u32 2147483647, %v7006
        %vm8156 = vcmp.le.f32.partialorder %v8155, 0.7853982
        %vm8157 = vcmp.lt.s32.totalorder %v7006, 0
        %v8158 = vand.u32 %v7006, 2139095040
        %v8159 = vshrl.u32 %v8158, 23
        %v8160 = vsub.s32 %v8159, 127
        %v8161 = vand.u32 2147483647, %v7006
        %v8162 = vand.u32 %v8161, 8388607
        %v8163 = vor.u32 %v8162, 8388608
        %v8164 = vsub.s32 0, %v8163
        %v8165 = vadd.s32 %v8160, 1
        %vm8166 = vcmp.gt.s32.totalorder %v8165, 0
        %v8167 = vsel %vm8166, %v8165, 0
        %v8168 = vshrl.u32 %v8167, 5
        %v8169 = vand.u32 %v8167, 31
        %v8170 = vsub.s32 32, %v8169
        %v8171 = vshrl.u32 683565275, %v8170
        %v8172 = vshll.u32 683565275, %v8169
        %v8173 = vshrl.u32 2475754826, %v8170
        %v8174 = vor.u32 %v8172, %v8173
        %v8175 = vshll.u32 2475754826, %v8169
        %v8176 = vshrl.u32 2131351028, %v8170
        %v8177 = vor.u32 %v8175, %v8176
        %v8178 = vshll.u32 2131351028, %v8169
        %v8179 = vshrl.u32 2102212464, %v8170
        %v8180 = vor.u32 %v8178, %v8179
        %v8181 = vshll.u32 2102212464, %v8169
        %v8182 = vshrl.u32 920167782, %v8170
        %v8183 = vor.u32 %v8181, %v8182
        %v8184 = vshll.u32 920167782, %v8169
        %v8185 = vshrl.u32 1326507024, %v8170
        %v8186 = vor.u32 %v8184, %v8185
        %vm8187 = vcmp.lt.s32.totalorder %v8168, 1
        %vm8188 = vcmp.lt.s32.totalorder %v8168, 2
        %vm8189 = vcmp.lt.s32.totalorder %v8168, 3
        %vm8190 = vcmp.lt.s32.totalorder %v8168, 4
        %v8191 = vsel %vm8187, %v8171, %v8174
        %v8192 = vsel %vm8190, %v8180, 2102212464
        %v8193 = vsel %vm8189, %v8177, %v8192
        %v8194 = vsel %vm8188, %v8191, %v8193
        %v8195 = vsel %vm8187, %v8174, %v8177
        %v8196 = vsel %vm8190, %v8183, 920167782
        %v8197 = vsel %vm8189, %v8180, %v8196
        %v8198 = vsel %vm8188, %v8195, %v8197
        %v8199 = vsel %vm8187, %v8177, %v8180
        %v8200 = vsel %vm8190, %v8186, 1326507024
        %v8201 = vsel %vm8189, %v8183, %v8200
        %v8202 = vsel %vm8188, %v8199, %v8201
        %v8203 = vshll.u32 %v8163, 8
        %v8204 = vmul.u32.u64.compose %v8203, %v8202
        %v8205 = vextract.low.u32 %v8204
        %v8206 = vextract.high.u32 %v8204
        %v8207 = vmul.u32.u64.compose %v8203, %v8198
        %v8208 = vextract.low.u32 %v8207
        %v8209 = vextract.high.u32 %v8207
        %v8210 = vmul.u32 %v8203, %v8194
        %v8211 = vadd.s32 %v8206, %v8208
        %vm8212 = vc.u32 %v8206, %v8208
        %v8213 = vadd.s32 %v8209, 1
        %v8214 = vsel %vm8212, %v8213, %v8209
        %v8215 = vadd.s32 %v8210, %v8214
        %v8216 = vadd.s32 %v8215, 536870912
        %v8217 = vshrl.u32 %v8216, 30
        %v8218 = vshll.u32 %v8217, 30
        %v8219 = vsub.s32 %v8215, %v8218
        %vm8220 = vcmp.lt.s32.totalorder %v8219, 0
        %v8221 = vsub.s32 0, %v8219
        %v8222 = vsel %vm8220, %v8221, %v8219
        %v8223 = vclz %v8222
        %v8224 = vsub.s32 %v8223, 2
        %vm8225 = vcmp.gt.s32.totalorder 0, %v8224
        %v8226 = vsel %vm8225, 0, %v8224
        %v8227 = vsub.s32 32, %v8226
        %v8228 = vshll.u32 %v8219, %v8226
        %v8229 = vshrl.u32 %v8211, %v8227
        %v8230 = vor.u32 %v8228, %v8229
        %v8231 = vsub.s32 4294967266, %v8226
        %v8232 = vadd.s32 %v8231, 127
        %v8233 = vshll.u32 %v8232, 23
        %v8234 = vor.u32 4788187, %v8233
        %v8235 = vand.u32 2147483647, %v8234
        %v8237 = vcvt.s32.f32 %v8230
        %v8238 = vmul.f32 %v8237, %v8235
        %v8239 = vxor.u32 %v8238, 2147483648
        %v8240 = vsel %vm8157, %v8239, %v8238
        %v8241 = vsub.s32 4, %v8217
        %v8242 = vsel %vm8157, %v8241, %v8217
        %v8243 = vsel %vm8156, %v7006, %v8240
        %v8244 = vsel %vm8156, 0, %v8242
        %v8245 = vcosq.f32.pop %v8243
        %v8246 = vsinq.f32.pop %v8243
        %vm8247 = vweird.f32 %v7006
        %v8248 = vadd.s32 %v8244, 3
        %v8249 = vand.u32 %v8248, 3
        %vm8250 = vcmp.lt.s32.totalorder %v8249, 2
        %vm8251 = vcmp.eq.s32.totalorder %v8249, 0
        %v8252 = vxor.u32 %v8246, 2147483648
        %v8253 = vsel %vm8251, %v8245, %v8252
        %vm8254 = vcmp.eq.s32.totalorder %v8249, 2
        %v8255 = vxor.u32 %v8245, 2147483648
        %v8256 = vsel %vm8254, %v8255, %v8246
        %v8257 = vsel %vm8250, %v8253, %v8256
        %v8258 = vsel %vm8247, nan, %v8257
        %v8259 = vand.u32 2147483647, %v7007
        %vm8260 = vcmp.le.f32.partialorder %v8259, 0.7853982
        %vm8261 = vcmp.lt.s32.totalorder %v7007, 0
        %v8262 = vand.u32 %v7007, 2139095040
        %v8263 = vshrl.u32 %v8262, 23
        %v8264 = vsub.s32 %v8263, 127
        %v8265 = vand.u32 2147483647, %v7007
        %v8266 = vand.u32 %v8265, 8388607
        %v8267 = vor.u32 %v8266, 8388608
        %v8268 = vsub.s32 0, %v8267
        %v8269 = vadd.s32 %v8264, 1
        %vm8270 = vcmp.gt.s32.totalorder %v8269, 0
        %v8271 = vsel %vm8270, %v8269, 0
        %v8272 = vshrl.u32 %v8271, 5
        %v8273 = vand.u32 %v8271, 31
        %v8274 = vsub.s32 32, %v8273
        %v8275 = vshrl.u32 683565275, %v8274
        %v8276 = vshll.u32 683565275, %v8273
        %v8277 = vshrl.u32 2475754826, %v8274
        %v8278 = vor.u32 %v8276, %v8277
        %v8279 = vshll.u32 2475754826, %v8273
        %v8280 = vshrl.u32 2131351028, %v8274
        %v8281 = vor.u32 %v8279, %v8280
        %v8282 = vshll.u32 2131351028, %v8273
        %v8283 = vshrl.u32 2102212464, %v8274
        %v8284 = vor.u32 %v8282, %v8283
        %v8285 = vshll.u32 2102212464, %v8273
        %v8286 = vshrl.u32 920167782, %v8274
        %v8287 = vor.u32 %v8285, %v8286
        %v8288 = vshll.u32 920167782, %v8273
        %v8289 = vshrl.u32 1326507024, %v8274
        %v8290 = vor.u32 %v8288, %v8289
        %vm8291 = vcmp.lt.s32.totalorder %v8272, 1
        %vm8292 = vcmp.lt.s32.totalorder %v8272, 2
        %vm8293 = vcmp.lt.s32.totalorder %v8272, 3
        %vm8294 = vcmp.lt.s32.totalorder %v8272, 4
        %v8295 = vsel %vm8291, %v8275, %v8278
        %v8296 = vsel %vm8294, %v8284, 2102212464
        %v8297 = vsel %vm8293, %v8281, %v8296
        %v8298 = vsel %vm8292, %v8295, %v8297
        %v8299 = vsel %vm8291, %v8278, %v8281
        %v8300 = vsel %vm8294, %v8287, 920167782
        %v8301 = vsel %vm8293, %v8284, %v8300
        %v8302 = vsel %vm8292, %v8299, %v8301
        %v8303 = vsel %vm8291, %v8281, %v8284
        %v8304 = vsel %vm8294, %v8290, 1326507024
        %v8305 = vsel %vm8293, %v8287, %v8304
        %v8306 = vsel %vm8292, %v8303, %v8305
        %v8307 = vshll.u32 %v8267, 8
        %v8308 = vmul.u32.u64.compose %v8307, %v8306
        %v8309 = vextract.low.u32 %v8308
        %v8310 = vextract.high.u32 %v8308
        %v8311 = vmul.u32.u64.compose %v8307, %v8302
        %v8312 = vextract.low.u32 %v8311
        %v8313 = vextract.high.u32 %v8311
        %v8314 = vmul.u32 %v8307, %v8298
        %v8315 = vadd.s32 %v8310, %v8312
        %vm8316 = vc.u32 %v8310, %v8312
        %v8317 = vadd.s32 %v8313, 1
        %v8318 = vsel %vm8316, %v8317, %v8313
        %v8319 = vadd.s32 %v8314, %v8318
        %v8320 = vadd.s32 %v8319, 536870912
        %v8321 = vshrl.u32 %v8320, 30
        %v8322 = vshll.u32 %v8321, 30
        %v8323 = vsub.s32 %v8319, %v8322
        %vm8324 = vcmp.lt.s32.totalorder %v8323, 0
        %v8325 = vsub.s32 0, %v8323
        %v8326 = vsel %vm8324, %v8325, %v8323
        %v8327 = vclz %v8326
        %v8328 = vsub.s32 %v8327, 2
        %vm8329 = vcmp.gt.s32.totalorder 0, %v8328
        %v8330 = vsel %vm8329, 0, %v8328
        %v8331 = vsub.s32 32, %v8330
        %v8332 = vshll.u32 %v8323, %v8330
        %v8333 = vshrl.u32 %v8315, %v8331
        %v8334 = vor.u32 %v8332, %v8333
        %v8335 = vsub.s32 4294967266, %v8330
        %v8336 = vadd.s32 %v8335, 127
        %v8337 = vshll.u32 %v8336, 23
        %v8338 = vor.u32 4788187, %v8337
        %v8339 = vand.u32 2147483647, %v8338
        %v8341 = vcvt.s32.f32 %v8334
        %v8342 = vmul.f32 %v8341, %v8339
        %v8343 = vxor.u32 %v8342, 2147483648
        %v8344 = vsel %vm8261, %v8343, %v8342
        %v8345 = vsub.s32 4, %v8321
        %v8346 = vsel %vm8261, %v8345, %v8321
        %v8347 = vsel %vm8260, %v7007, %v8344
        %v8348 = vsel %vm8260, 0, %v8346
        %v8349 = vcosq.f32.pop %v8347
        %v8350 = vsinq.f32.pop %v8347
        %vm8351 = vweird.f32 %v7007
        %v8352 = vadd.s32 %v8348, 3
        %v8353 = vand.u32 %v8352, 3
        %vm8354 = vcmp.lt.s32.totalorder %v8353, 2
        %vm8355 = vcmp.eq.s32.totalorder %v8353, 0
        %v8356 = vxor.u32 %v8350, 2147483648
        %v8357 = vsel %vm8355, %v8349, %v8356
        %vm8358 = vcmp.eq.s32.totalorder %v8353, 2
        %v8359 = vxor.u32 %v8349, 2147483648
        %v8360 = vsel %vm8358, %v8359, %v8350
        %v8361 = vsel %vm8354, %v8357, %v8360
        %v8362 = vsel %vm8351, nan, %v8361
        %v8363 = vand.u32 2147483647, %v7008
        %vm8364 = vcmp.le.f32.partialorder %v8363, 0.7853982
        %vm8365 = vcmp.lt.s32.totalorder %v7008, 0
        %v8366 = vand.u32 %v7008, 2139095040
        %v8367 = vshrl.u32 %v8366, 23
        %v8368 = vsub.s32 %v8367, 127
        %v8369 = vand.u32 2147483647, %v7008
        %v8370 = vand.u32 %v8369, 8388607
        %v8371 = vor.u32 %v8370, 8388608
        %v8372 = vsub.s32 0, %v8371
        %v8373 = vadd.s32 %v8368, 1
        %vm8374 = vcmp.gt.s32.totalorder %v8373, 0
        %v8375 = vsel %vm8374, %v8373, 0
        %v8376 = vshrl.u32 %v8375, 5
        %v8377 = vand.u32 %v8375, 31
        %v8378 = vsub.s32 32, %v8377
        %v8379 = vshrl.u32 683565275, %v8378
        %v8380 = vshll.u32 683565275, %v8377
        %v8381 = vshrl.u32 2475754826, %v8378
        %v8382 = vor.u32 %v8380, %v8381
        %v8383 = vshll.u32 2475754826, %v8377
        %v8384 = vshrl.u32 2131351028, %v8378
        %v8385 = vor.u32 %v8383, %v8384
        %v8386 = vshll.u32 2131351028, %v8377
        %v8387 = vshrl.u32 2102212464, %v8378
        %v8388 = vor.u32 %v8386, %v8387
        %v8389 = vshll.u32 2102212464, %v8377
        %v8390 = vshrl.u32 920167782, %v8378
        %v8391 = vor.u32 %v8389, %v8390
        %v8392 = vshll.u32 920167782, %v8377
        %v8393 = vshrl.u32 1326507024, %v8378
        %v8394 = vor.u32 %v8392, %v8393
        %vm8395 = vcmp.lt.s32.totalorder %v8376, 1
        %vm8396 = vcmp.lt.s32.totalorder %v8376, 2
        %vm8397 = vcmp.lt.s32.totalorder %v8376, 3
        %vm8398 = vcmp.lt.s32.totalorder %v8376, 4
        %v8399 = vsel %vm8395, %v8379, %v8382
        %v8400 = vsel %vm8398, %v8388, 2102212464
        %v8401 = vsel %vm8397, %v8385, %v8400
        %v8402 = vsel %vm8396, %v8399, %v8401
        %v8403 = vsel %vm8395, %v8382, %v8385
        %v8404 = vsel %vm8398, %v8391, 920167782
        %v8405 = vsel %vm8397, %v8388, %v8404
        %v8406 = vsel %vm8396, %v8403, %v8405
        %v8407 = vsel %vm8395, %v8385, %v8388
        %v8408 = vsel %vm8398, %v8394, 1326507024
        %v8409 = vsel %vm8397, %v8391, %v8408
        %v8410 = vsel %vm8396, %v8407, %v8409
        %v8411 = vshll.u32 %v8371, 8
        %v8412 = vmul.u32.u64.compose %v8411, %v8410
        %v8413 = vextract.low.u32 %v8412
        %v8414 = vextract.high.u32 %v8412
        %v8415 = vmul.u32.u64.compose %v8411, %v8406
        %v8416 = vextract.low.u32 %v8415
        %v8417 = vextract.high.u32 %v8415
        %v8418 = vmul.u32 %v8411, %v8402
        %v8419 = vadd.s32 %v8414, %v8416
        %vm8420 = vc.u32 %v8414, %v8416
        %v8421 = vadd.s32 %v8417, 1
        %v8422 = vsel %vm8420, %v8421, %v8417
        %v8423 = vadd.s32 %v8418, %v8422
        %v8424 = vadd.s32 %v8423, 536870912
        %v8425 = vshrl.u32 %v8424, 30
        %v8426 = vshll.u32 %v8425, 30
        %v8427 = vsub.s32 %v8423, %v8426
        %vm8428 = vcmp.lt.s32.totalorder %v8427, 0
        %v8429 = vsub.s32 0, %v8427
        %v8430 = vsel %vm8428, %v8429, %v8427
        %v8431 = vclz %v8430
        %v8432 = vsub.s32 %v8431, 2
        %vm8433 = vcmp.gt.s32.totalorder 0, %v8432
        %v8434 = vsel %vm8433, 0, %v8432
        %v8435 = vsub.s32 32, %v8434
        %v8436 = vshll.u32 %v8427, %v8434
        %v8437 = vshrl.u32 %v8419, %v8435
        %v8438 = vor.u32 %v8436, %v8437
        %v8439 = vsub.s32 4294967266, %v8434
        %v8440 = vadd.s32 %v8439, 127
        %v8441 = vshll.u32 %v8440, 23
        %v8442 = vor.u32 4788187, %v8441
        %v8443 = vand.u32 2147483647, %v8442
        %v8445 = vcvt.s32.f32 %v8438
        %v8446 = vmul.f32 %v8445, %v8443
        %v8447 = vxor.u32 %v8446, 2147483648
        %v8448 = vsel %vm8365, %v8447, %v8446
        %v8449 = vsub.s32 4, %v8425
        %v8450 = vsel %vm8365, %v8449, %v8425
        %v8451 = vsel %vm8364, %v7008, %v8448
        %v8452 = vsel %vm8364, 0, %v8450
        %v8453 = vcosq.f32.pop %v8451
        %v8454 = vsinq.f32.pop %v8451
        %vm8455 = vweird.f32 %v7008
        %v8456 = vadd.s32 %v8452, 3
        %v8457 = vand.u32 %v8456, 3
        %vm8458 = vcmp.lt.s32.totalorder %v8457, 2
        %vm8459 = vcmp.eq.s32.totalorder %v8457, 0
        %v8460 = vxor.u32 %v8454, 2147483648
        %v8461 = vsel %vm8459, %v8453, %v8460
        %vm8462 = vcmp.eq.s32.totalorder %v8457, 2
        %v8463 = vxor.u32 %v8453, 2147483648
        %v8464 = vsel %vm8462, %v8463, %v8454
        %v8465 = vsel %vm8458, %v8461, %v8464
        %v8466 = vsel %vm8455, nan, %v8465
        %v8467 = vand.u32 2147483647, %v7009
        %vm8468 = vcmp.le.f32.partialorder %v8467, 0.7853982
        %vm8469 = vcmp.lt.s32.totalorder %v7009, 0
        %v8470 = vand.u32 %v7009, 2139095040
        %v8471 = vshrl.u32 %v8470, 23
        %v8472 = vsub.s32 %v8471, 127
        %v8473 = vand.u32 2147483647, %v7009
        %v8474 = vand.u32 %v8473, 8388607
        %v8475 = vor.u32 %v8474, 8388608
        %v8476 = vsub.s32 0, %v8475
        %v8477 = vadd.s32 %v8472, 1
        %vm8478 = vcmp.gt.s32.totalorder %v8477, 0
        %v8479 = vsel %vm8478, %v8477, 0
        %v8480 = vshrl.u32 %v8479, 5
        %v8481 = vand.u32 %v8479, 31
        %v8482 = vsub.s32 32, %v8481
        %v8483 = vshrl.u32 683565275, %v8482
        %v8484 = vshll.u32 683565275, %v8481
        %v8485 = vshrl.u32 2475754826, %v8482
        %v8486 = vor.u32 %v8484, %v8485
        %v8487 = vshll.u32 2475754826, %v8481
        %v8488 = vshrl.u32 2131351028, %v8482
        %v8489 = vor.u32 %v8487, %v8488
        %v8490 = vshll.u32 2131351028, %v8481
        %v8491 = vshrl.u32 2102212464, %v8482
        %v8492 = vor.u32 %v8490, %v8491
        %v8493 = vshll.u32 2102212464, %v8481
        %v8494 = vshrl.u32 920167782, %v8482
        %v8495 = vor.u32 %v8493, %v8494
        %v8496 = vshll.u32 920167782, %v8481
        %v8497 = vshrl.u32 1326507024, %v8482
        %v8498 = vor.u32 %v8496, %v8497
        %vm8499 = vcmp.lt.s32.totalorder %v8480, 1
        %vm8500 = vcmp.lt.s32.totalorder %v8480, 2
        %vm8501 = vcmp.lt.s32.totalorder %v8480, 3
        %vm8502 = vcmp.lt.s32.totalorder %v8480, 4
        %v8503 = vsel %vm8499, %v8483, %v8486
        %v8504 = vsel %vm8502, %v8492, 2102212464
        %v8505 = vsel %vm8501, %v8489, %v8504
        %v8506 = vsel %vm8500, %v8503, %v8505
        %v8507 = vsel %vm8499, %v8486, %v8489
        %v8508 = vsel %vm8502, %v8495, 920167782
        %v8509 = vsel %vm8501, %v8492, %v8508
        %v8510 = vsel %vm8500, %v8507, %v8509
        %v8511 = vsel %vm8499, %v8489, %v8492
        %v8512 = vsel %vm8502, %v8498, 1326507024
        %v8513 = vsel %vm8501, %v8495, %v8512
        %v8514 = vsel %vm8500, %v8511, %v8513
        %v8515 = vshll.u32 %v8475, 8
        %v8516 = vmul.u32.u64.compose %v8515, %v8514
        %v8517 = vextract.low.u32 %v8516
        %v8518 = vextract.high.u32 %v8516
        %v8519 = vmul.u32.u64.compose %v8515, %v8510
        %v8520 = vextract.low.u32 %v8519
        %v8521 = vextract.high.u32 %v8519
        %v8522 = vmul.u32 %v8515, %v8506
        %v8523 = vadd.s32 %v8518, %v8520
        %vm8524 = vc.u32 %v8518, %v8520
        %v8525 = vadd.s32 %v8521, 1
        %v8526 = vsel %vm8524, %v8525, %v8521
        %v8527 = vadd.s32 %v8522, %v8526
        %v8528 = vadd.s32 %v8527, 536870912
        %v8529 = vshrl.u32 %v8528, 30
        %v8530 = vshll.u32 %v8529, 30
        %v8531 = vsub.s32 %v8527, %v8530
        %vm8532 = vcmp.lt.s32.totalorder %v8531, 0
        %v8533 = vsub.s32 0, %v8531
        %v8534 = vsel %vm8532, %v8533, %v8531
        %v8535 = vclz %v8534
        %v8536 = vsub.s32 %v8535, 2
        %vm8537 = vcmp.gt.s32.totalorder 0, %v8536
        %v8538 = vsel %vm8537, 0, %v8536
        %v8539 = vsub.s32 32, %v8538
        %v8540 = vshll.u32 %v8531, %v8538
        %v8541 = vshrl.u32 %v8523, %v8539
        %v8542 = vor.u32 %v8540, %v8541
        %v8543 = vsub.s32 4294967266, %v8538
        %v8544 = vadd.s32 %v8543, 127
        %v8545 = vshll.u32 %v8544, 23
        %v8546 = vor.u32 4788187, %v8545
        %v8547 = vand.u32 2147483647, %v8546
        %v8549 = vcvt.s32.f32 %v8542
        %v8550 = vmul.f32 %v8549, %v8547
        %v8551 = vxor.u32 %v8550, 2147483648
        %v8552 = vsel %vm8469, %v8551, %v8550
        %v8553 = vsub.s32 4, %v8529
        %v8554 = vsel %vm8469, %v8553, %v8529
        %v8555 = vsel %vm8468, %v7009, %v8552
        %v8556 = vsel %vm8468, 0, %v8554
        %v8557 = vcosq.f32.pop %v8555
        %v8558 = vsinq.f32.pop %v8555
        %vm8559 = vweird.f32 %v7009
        %v8560 = vadd.s32 %v8556, 3
        %v8561 = vand.u32 %v8560, 3
        %vm8562 = vcmp.lt.s32.totalorder %v8561, 2
        %vm8563 = vcmp.eq.s32.totalorder %v8561, 0
        %v8564 = vxor.u32 %v8558, 2147483648
        %v8565 = vsel %vm8563, %v8557, %v8564
        %vm8566 = vcmp.eq.s32.totalorder %v8561, 2
        %v8567 = vxor.u32 %v8557, 2147483648
        %v8568 = vsel %vm8566, %v8567, %v8558
        %v8569 = vsel %vm8562, %v8565, %v8568
        %v8570 = vsel %vm8559, nan, %v8569
        %v8571 = vand.u32 2147483647, %v7010
        %vm8572 = vcmp.le.f32.partialorder %v8571, 0.7853982
        %vm8573 = vcmp.lt.s32.totalorder %v7010, 0
        %v8574 = vand.u32 %v7010, 2139095040
        %v8575 = vshrl.u32 %v8574, 23
        %v8576 = vsub.s32 %v8575, 127
        %v8577 = vand.u32 2147483647, %v7010
        %v8578 = vand.u32 %v8577, 8388607
        %v8579 = vor.u32 %v8578, 8388608
        %v8580 = vsub.s32 0, %v8579
        %v8581 = vadd.s32 %v8576, 1
        %vm8582 = vcmp.gt.s32.totalorder %v8581, 0
        %v8583 = vsel %vm8582, %v8581, 0
        %v8584 = vshrl.u32 %v8583, 5
        %v8585 = vand.u32 %v8583, 31
        %v8586 = vsub.s32 32, %v8585
        %v8587 = vshrl.u32 683565275, %v8586
        %v8588 = vshll.u32 683565275, %v8585
        %v8589 = vshrl.u32 2475754826, %v8586
        %v8590 = vor.u32 %v8588, %v8589
        %v8591 = vshll.u32 2475754826, %v8585
        %v8592 = vshrl.u32 2131351028, %v8586
        %v8593 = vor.u32 %v8591, %v8592
        %v8594 = vshll.u32 2131351028, %v8585
        %v8595 = vshrl.u32 2102212464, %v8586
        %v8596 = vor.u32 %v8594, %v8595
        %v8597 = vshll.u32 2102212464, %v8585
        %v8598 = vshrl.u32 920167782, %v8586
        %v8599 = vor.u32 %v8597, %v8598
        %v8600 = vshll.u32 920167782, %v8585
        %v8601 = vshrl.u32 1326507024, %v8586
        %v8602 = vor.u32 %v8600, %v8601
        %vm8603 = vcmp.lt.s32.totalorder %v8584, 1
        %vm8604 = vcmp.lt.s32.totalorder %v8584, 2
        %vm8605 = vcmp.lt.s32.totalorder %v8584, 3
        %vm8606 = vcmp.lt.s32.totalorder %v8584, 4
        %v8607 = vsel %vm8603, %v8587, %v8590
        %v8608 = vsel %vm8606, %v8596, 2102212464
        %v8609 = vsel %vm8605, %v8593, %v8608
        %v8610 = vsel %vm8604, %v8607, %v8609
        %v8611 = vsel %vm8603, %v8590, %v8593
        %v8612 = vsel %vm8606, %v8599, 920167782
        %v8613 = vsel %vm8605, %v8596, %v8612
        %v8614 = vsel %vm8604, %v8611, %v8613
        %v8615 = vsel %vm8603, %v8593, %v8596
        %v8616 = vsel %vm8606, %v8602, 1326507024
        %v8617 = vsel %vm8605, %v8599, %v8616
        %v8618 = vsel %vm8604, %v8615, %v8617
        %v8619 = vshll.u32 %v8579, 8
        %v8620 = vmul.u32.u64.compose %v8619, %v8618
        %v8621 = vextract.low.u32 %v8620
        %v8622 = vextract.high.u32 %v8620
        %v8623 = vmul.u32.u64.compose %v8619, %v8614
        %v8624 = vextract.low.u32 %v8623
        %v8625 = vextract.high.u32 %v8623
        %v8626 = vmul.u32 %v8619, %v8610
        %v8627 = vadd.s32 %v8622, %v8624
        %vm8628 = vc.u32 %v8622, %v8624
        %v8629 = vadd.s32 %v8625, 1
        %v8630 = vsel %vm8628, %v8629, %v8625
        %v8631 = vadd.s32 %v8626, %v8630
        %v8632 = vadd.s32 %v8631, 536870912
        %v8633 = vshrl.u32 %v8632, 30
        %v8634 = vshll.u32 %v8633, 30
        %v8635 = vsub.s32 %v8631, %v8634
        %vm8636 = vcmp.lt.s32.totalorder %v8635, 0
        %v8637 = vsub.s32 0, %v8635
        %v8638 = vsel %vm8636, %v8637, %v8635
        %v8639 = vclz %v8638
        %v8640 = vsub.s32 %v8639, 2
        %vm8641 = vcmp.gt.s32.totalorder 0, %v8640
        %v8642 = vsel %vm8641, 0, %v8640
        %v8643 = vsub.s32 32, %v8642
        %v8644 = vshll.u32 %v8635, %v8642
        %v8645 = vshrl.u32 %v8627, %v8643
        %v8646 = vor.u32 %v8644, %v8645
        %v8647 = vsub.s32 4294967266, %v8642
        %v8648 = vadd.s32 %v8647, 127
        %v8649 = vshll.u32 %v8648, 23
        %v8650 = vor.u32 4788187, %v8649
        %v8651 = vand.u32 2147483647, %v8650
        %v8653 = vcvt.s32.f32 %v8646
        %v8654 = vmul.f32 %v8653, %v8651
        %v8655 = vxor.u32 %v8654, 2147483648
        %v8656 = vsel %vm8573, %v8655, %v8654
        %v8657 = vsub.s32 4, %v8633
        %v8658 = vsel %vm8573, %v8657, %v8633
        %v8659 = vsel %vm8572, %v7010, %v8656
        %v8660 = vsel %vm8572, 0, %v8658
        %v8661 = vcosq.f32.pop %v8659
        %v8662 = vsinq.f32.pop %v8659
        %vm8663 = vweird.f32 %v7010
        %v8664 = vadd.s32 %v8660, 3
        %v8665 = vand.u32 %v8664, 3
        %vm8666 = vcmp.lt.s32.totalorder %v8665, 2
        %vm8667 = vcmp.eq.s32.totalorder %v8665, 0
        %v8668 = vxor.u32 %v8662, 2147483648
        %v8669 = vsel %vm8667, %v8661, %v8668
        %vm8670 = vcmp.eq.s32.totalorder %v8665, 2
        %v8671 = vxor.u32 %v8661, 2147483648
        %v8672 = vsel %vm8670, %v8671, %v8662
        %v8673 = vsel %vm8666, %v8669, %v8672
        %v8674 = vsel %vm8663, nan, %v8673
        %v8675 = vmul.f32 %v6945, %v7114
        %v8676 = vmul.f32 %v6945, %v7218
        %v8677 = vmul.f32 %v6945, %v7322
        %v8678 = vmul.f32 %v6945, %v7426
        %v8679 = vmul.f32 %v6945, %v7530
        %v8680 = vmul.f32 %v6945, %v7634
        %v8681 = vmul.f32 %v6945, %v7738
        %v8682 = vmul.f32 %v6945, %v7842
        %v8683 = vmul.f32 %v6945, %v7946
        %v8684 = vmul.f32 %v6945, %v8050
        %v8685 = vmul.f32 %v6945, %v8154
        %v8686 = vmul.f32 %v6945, %v8258
        %v8687 = vmul.f32 %v6945, %v8362
        %v8688 = vmul.f32 %v6945, %v8466
        %v8689 = vmul.f32 %v6945, %v8570
        %v8690 = vmul.f32 %v6945, %v8674
        %v8691 = vadd.f32 %v8675, %v6945
        %v8692 = vadd.f32 %v8676, %v6945
        %v8693 = vadd.f32 %v8677, %v6945
        %v8694 = vadd.f32 %v8678, %v6945
        %v8695 = vadd.f32 %v8679, %v6945
        %v8696 = vadd.f32 %v8680, %v6945
        %v8697 = vadd.f32 %v8681, %v6945
        %v8698 = vadd.f32 %v8682, %v6945
        %v8699 = vadd.f32 %v8683, %v6945
        %v8700 = vadd.f32 %v8684, %v6945
        %v8701 = vadd.f32 %v8685, %v6945
        %v8702 = vadd.f32 %v8686, %v6945
        %v8703 = vadd.f32 %v8687, %v6945
        %v8704 = vadd.f32 %v8688, %v6945
        %v8705 = vadd.f32 %v8689, %v6945
        %v8706 = vadd.f32 %v8690, %v6945
        %v8707 = vmax.f32 %v6925, 0.0
        %v8708 = vmax.f32 %v6926, 0.0
        %v8709 = vmax.f32 %v6927, 0.0
        %v8710 = vmax.f32 %v6928, 0.0
        %v8711 = vmax.f32 %v6929, 0.0
        %v8712 = vmax.f32 %v6930, 0.0
        %v8713 = vmax.f32 %v6931, 0.0
        %v8714 = vmax.f32 %v6932, 0.0
        %v8715 = vmax.f32 %v6933, 0.0
        %v8716 = vmax.f32 %v6934, 0.0
        %v8717 = vmax.f32 %v6935, 0.0
        %v8718 = vmax.f32 %v6936, 0.0
        %v8719 = vmax.f32 %v6937, 0.0
        %v8720 = vmax.f32 %v6938, 0.0
        %v8721 = vmax.f32 %v6939, 0.0
        %v8722 = vmax.f32 %v6940, 0.0
        %vm8723 = vcmp.ge.f32.partialorder %v6925, %v6945
        %vm8724 = vcmp.ge.f32.partialorder %v6926, %v6945
        %vm8725 = vcmp.ge.f32.partialorder %v6927, %v6945
        %vm8726 = vcmp.ge.f32.partialorder %v6928, %v6945
        %vm8727 = vcmp.ge.f32.partialorder %v6929, %v6945
        %vm8728 = vcmp.ge.f32.partialorder %v6930, %v6945
        %vm8729 = vcmp.ge.f32.partialorder %v6931, %v6945
        %vm8730 = vcmp.ge.f32.partialorder %v6932, %v6945
        %vm8731 = vcmp.ge.f32.partialorder %v6933, %v6945
        %vm8732 = vcmp.ge.f32.partialorder %v6934, %v6945
        %vm8733 = vcmp.ge.f32.partialorder %v6935, %v6945
        %vm8734 = vcmp.ge.f32.partialorder %v6936, %v6945
        %vm8735 = vcmp.ge.f32.partialorder %v6937, %v6945
        %vm8736 = vcmp.ge.f32.partialorder %v6938, %v6945
        %vm8737 = vcmp.ge.f32.partialorder %v6939, %v6945
        %vm8738 = vcmp.ge.f32.partialorder %v6940, %v6945
        %v8739 = vsel %vm8723, %v8691, %v8707
        %v8740 = vsel %vm8724, %v8692, %v8708
        %v8741 = vsel %vm8725, %v8693, %v8709
        %v8742 = vsel %vm8726, %v8694, %v8710
        %v8743 = vsel %vm8727, %v8695, %v8711
        %v8744 = vsel %vm8728, %v8696, %v8712
        %v8745 = vsel %vm8729, %v8697, %v8713
        %v8746 = vsel %vm8730, %v8698, %v8714
        %v8747 = vsel %vm8731, %v8699, %v8715
        %v8748 = vsel %vm8732, %v8700, %v8716
        %v8749 = vsel %vm8733, %v8701, %v8717
        %v8750 = vsel %vm8734, %v8702, %v8718
        %v8751 = vsel %vm8735, %v8703, %v8719
        %v8752 = vsel %vm8736, %v8704, %v8720
        %v8753 = vsel %vm8737, %v8705, %v8721
        %v8754 = vsel %vm8738, %v8706, %v8722
        %v8755 = vstv %s6943
        %vm8756 = vcmp.ge.f32.partialorder %v6925, %v8755
        %vm8757 = vcmp.ge.f32.partialorder %v6926, %v8755
        %vm8758 = vcmp.ge.f32.partialorder %v6927, %v8755
        %vm8759 = vcmp.ge.f32.partialorder %v6928, %v8755
        %vm8760 = vcmp.ge.f32.partialorder %v6929, %v8755
        %vm8761 = vcmp.ge.f32.partialorder %v6930, %v8755
        %vm8762 = vcmp.ge.f32.partialorder %v6931, %v8755
        %vm8763 = vcmp.ge.f32.partialorder %v6932, %v8755
        %vm8764 = vcmp.ge.f32.partialorder %v6933, %v8755
        %vm8765 = vcmp.ge.f32.partialorder %v6934, %v8755
        %vm8766 = vcmp.ge.f32.partialorder %v6935, %v8755
        %vm8767 = vcmp.ge.f32.partialorder %v6936, %v8755
        %vm8768 = vcmp.ge.f32.partialorder %v6937, %v8755
        %vm8769 = vcmp.ge.f32.partialorder %v6938, %v8755
        %vm8770 = vcmp.ge.f32.partialorder %v6939, %v8755
        %vm8771 = vcmp.ge.f32.partialorder %v6940, %v8755
        %v8772 = vstv %s6944
        %v8773 = vsel %vm8756, %v8772, %v8739
        %v8774 = vsel %vm8757, %v8772, %v8740
        %v8775 = vsel %vm8758, %v8772, %v8741
        %v8776 = vsel %vm8759, %v8772, %v8742
        %v8777 = vsel %vm8760, %v8772, %v8743
        %v8778 = vsel %vm8761, %v8772, %v8744
        %v8779 = vsel %vm8762, %v8772, %v8745
        %v8780 = vsel %vm8763, %v8772, %v8746
        %v8781 = vsel %vm8764, %v8772, %v8747
        %v8782 = vsel %vm8765, %v8772, %v8748
        %v8783 = vsel %vm8766, %v8772, %v8749
        %v8784 = vsel %vm8767, %v8772, %v8750
        %v8785 = vsel %vm8768, %v8772, %v8751
        %v8786 = vsel %vm8769, %v8772, %v8752
        %v8787 = vsel %vm8770, %v8772, %v8753
        %v8788 = vsel %vm8771, %v8772, %v8754
        %8789 = vst.msk [vmem:[%s704] sm:$0xff] %vm738, %v8773
        %8790 = vst.msk [vmem:[%s704 + $0x8] sm:$0xff] %vm738, %v8774
        %8791 = vst.msk [vmem:[%s704 + $0x10] sm:$0xff] %vm738, %v8775
        %8792 = vst.msk [vmem:[%s704 + $0x18] sm:$0xff] %vm738, %v8776
        %8793 = vst.msk [vmem:[%s704 + $0x20] sm:$0xff] %vm738, %v8777
        %8794 = vst.msk [vmem:[%s704 + $0x28] sm:$0xff] %vm738, %v8778
        %8795 = vst.msk [vmem:[%s704 + $0x30] sm:$0xff] %vm738, %v8779
        %8796 = vst.msk [vmem:[%s704 + $0x38] sm:$0xff] %vm738, %v8780
        %8797 = vst.msk [vmem:[%s704 + $0x40] sm:$0xff] %vm738, %v8781
        %8798 = vst.msk [vmem:[%s704 + $0x48] sm:$0xff] %vm738, %v8782
        %8799 = vst.msk [vmem:[%s704 + $0x50] sm:$0xff] %vm738, %v8783
        %8800 = vst.msk [vmem:[%s704 + $0x58] sm:$0xff] %vm738, %v8784
        %8801 = vst.msk [vmem:[%s704 + $0x60] sm:$0xff] %vm738, %v8785
        %8802 = vst.msk [vmem:[%s704 + $0x68] sm:$0xff] %vm738, %v8786
        %8803 = vst.msk [vmem:[%s704 + $0x70] sm:$0xff] %vm738, %v8787
        %8804 = vst.msk [vmem:[%s704 + $0x78] sm:$0xff] %vm738, %v8788
        %s8805 = sand.u32 %s370, 1
        %s8806 = scalar_lea.sflag [#allocation5], %s8805
        %s8807 = sand.u32 %s370, 1
        %s8808 = smul.addr %s8807, 128
        %s8809 = scalar_lea.vmem [#allocation26], %s8808
        // Predicated region
        $region141: #{tpu_custom_call.1} parent=75 // pred_check
          %p8810 = pneg %p380
        $region142: #{tpu_custom_call.1} parent=75 // pred_check_branch
          %8812 = sbr.rel (%p8810) target = $region144
        $region143: #{tpu_custom_call.1} parent=75 // pred_region
          %s8813 = smul.u32 16, %s45
          %s8815 = ssub.s32 2048, 2048
          %8816 = vsyncadd %s8806, %s8815
          %s8817 = smul.addr %s44, 32
          %s8818 = sadd.s32 %s8813, %s8817
          %s8819 = smul.addr %s8818, 128
          %s8820 = scalar_lea.hbm %s14, %s8819
          %s8821 = sshll.u32 %s8809, 4
          %s8822 = int_to_ptr.vmem [resolvable:$true] %s8821
          %8827 = dma.vmem_to_hbm [thread:$0]  %s8822, 2048, %s8820, %s8806, 128, 128, 8
        $region144: #{tpu_custom_call.1} parent=75 // pred_fallthru
          _
      $region76: #{tpu_custom_call.1} parent=5 // pred_fallthru
        _
      %p8828 = scmp.le.s32.totalorder 2, %s35
      // Predicated region
      $region145: #{tpu_custom_call.1} parent=5 // pred_check
        %p8829 = pneg %p8828
      $region146: #{tpu_custom_call.1} parent=5 // pred_check_branch
        %8831 = sbr.rel (%p8829) target = $region148
      $region147: #{tpu_custom_call.1} parent=5 // pred_region
        %s8832 = ssub.s32 %s35, 2
        // Predicated region
        $region149: #{tpu_custom_call.1} parent=147 // pred_check
          %p8833 = pneg %p386
        $region150: #{tpu_custom_call.1} parent=147 // pred_check_branch
          %8835 = sbr.rel (%p8833) target = $region152
        $region151: #{tpu_custom_call.1} parent=147 // pred_region
          %s8836 = sand.u32 %s371, 1
          %s8837 = scalar_lea.sflag [#allocation5], %s8836
          %s8838 = sand.u32 %s371, 1
          %s8839 = smul.addr %s8838, 128
          %s8840 = scalar_lea.vmem [#allocation26], %s8839
          %8841 = dma.done %s8837, 2048
        $region152: #{tpu_custom_call.1} parent=147 // pred_fallthru
          _
      $region148: #{tpu_custom_call.1} parent=5 // pred_fallthru
        _
    $region6: #{tpu_custom_call.1} parent=1 // loop_footer
      %s39 = sadd.s32 1, %s35
    $region7: #{tpu_custom_call.1} parent=1 // loop_footer_branch
      %34 = sbr.rel target = $region3
    $region8: #{tpu_custom_call.1} parent=1 // loop_exit
      _
    %8842 = vsyncpa [#allocation4], 1
    %s8843 = scalar_lea.sflag [#allocation4], 1
    %8844 = vsyncpa %s8843, 1
    %8845 = vsyncpa [#allocation9], 1
    %s8846 = scalar_lea.sflag [#allocation9], 1
    %8847 = vsyncpa %s8846, 1
    %8848 = vsyncpa [#allocation12], 1
    %8849 = vsyncpa [#allocation15], 1
    %8850 = vsyncpa [#allocation18], 1
    %8851 = vsyncpa [#allocation21], 1
    %8852 = vsyncpa [#allocation24], 1
    %8853 = vsyncpa [#allocation5], 1
    %s8854 = scalar_lea.sflag [#allocation5], 1
    %8855 = vsyncpa %s8854, 1
    %8856 = vsyncpa [#allocation6], 1
    %s8857 = scalar_lea.sflag [#allocation6], 1
    %8858 = vsyncpa %s8857, 1

</llo_original>
